<compile_context>
chip_gen: v5e
topology: v5e:2x2
jax: 0.10.0
libtpu: 0.0.40
codegen_flags: <defaults>
</compile_context>

<pallas_src>
import functools
import math

import jax
import jax.numpy as jnp
from jax.experimental import pallas as pl
from jax.experimental.pallas import tpu as pltpu


# ----------------------------------------------------------------------------
# In-kernel helpers (plain f32 arrays, 2-D ops only)
# ----------------------------------------------------------------------------
def _dot(a, w):
    """MXU dot with f32 accumulation; casts the activation to the weight dtype
    (bf16 weights -> single-pass bf16 MXU, f32 weights -> plain f32 dot)."""
    return jnp.dot(a.astype(w.dtype), w, preferred_element_type=jnp.float32)


def _layernorm(y, g, b):
    mu = jnp.mean(y, axis=-1, keepdims=True)
    var = jnp.mean(jnp.square(y - mu), axis=-1, keepdims=True)
    return (y - mu) * jax.lax.rsqrt(var + 1e-5) * g + b


def _softmax_rows(s):
    s = s - jnp.max(s, axis=-1, keepdims=True)
    e = jnp.exp(s)
    return e * pl.reciprocal(jnp.sum(e, axis=-1, keepdims=True), approx=True)


def _attention(q, kT, v, wo, num_heads, *, return_attn):
    """Multi-head attention core on pre-projected Q / K^T / V.

    q: (Lq, E), kT: (E, Lk) (K transposed ONCE, sliced per head on sublanes),
    v: (Lk, E) or None, wo: (E, E) or None.
    Output projection is folded per head: concat_h(ctx_h) @ Wo ==
    sum_h ctx_h @ Wo[rows_h]   (no lane concat).
    Returns (o, attn_avg); attn_avg is None unless return_attn.
    """
    E = q.shape[1]
    hd = E // num_heads
    scale = 1.0 / math.sqrt(hd)
    attn = None
    o = None
    for h in range(num_heads):                        # static unroll, tiny H
        sl = slice(h * hd, (h + 1) * hd)
        p = _softmax_rows(
            jnp.dot(q[:, sl], kT[sl, :], preferred_element_type=jnp.float32) * scale)
        if return_attn:
            attn = p if attn is None else attn + p
        if v is not None:
            ctx = jnp.dot(p, v[:, sl], preferred_element_type=jnp.float32)  # (Lq, hd)
            oh = _dot(ctx, wo[sl, :])                                       # (Lq, E)
            o = oh if o is None else o + oh
    if return_attn:
        attn = attn * (1.0 / num_heads)
    return o, attn


def _ffn(x, w1, b1, w2, b2, g, b):
    hmid = jnp.maximum(_dot(x, w1) + b1, 0.0)
    return _layernorm(x + _dot(hmid, w2) + b2, g, b)


# ----------------------------------------------------------------------------
# Fused decoder kernel: full forward for one batch-block (1 or B elements)
# ----------------------------------------------------------------------------
def decoder_kernel(x_ref, kv_ref, pos_ref, posp_ref,
                   sa_wqkv, sa_bqkv, sa_wo, sa_bo, sa_g, sa_b,
                   ca_wq, ca_bq, ca_wkv, ca_bkv, ca_wo, ca_bo, ca_g, ca_b,
                   mlp_w1, mlp_b1, mlp_w2, mlp_b2, mlp_g, mlp_b,
                   fw_ref, fb_ref,
                   out_ref, *, num_heads, num_layers, block_batch, seq_q, seq_kv):
    Bb, T, S = block_batch, seq_q, seq_kv
    E = pos_ref.shape[1]

    h = x_ref[...].astype(jnp.float32)        # (Bb*T, E)  row-stacked batch
    kv = kv_ref[...].astype(jnp.float32)      # (Bb*S, E)
    pos = pos_ref[...].astype(jnp.float32)    # (Bb*T, E)  batch-tiled pos table

    for l in range(num_layers):               # static unroll over decoder blocks
        # ---- shared self-attention QKV projection (reused temporal+spatial) --
        qkv_h = _dot(h, sa_wqkv[l]) + sa_bqkv[l]        # h    @ Wqkv + b  (Bb*T,3E)
        qkv_pe = qkv_h + posp_ref[l]                    # (h+pos)@Wqkv + b
        pe = h + pos

        dec_rows = []
        for bb in range(Bb):                  # static; per-batch attention math
            r = slice(bb * T, (bb + 1) * T)
            # temporal self-attention (full MHA) on positionally encoded states
            q_t = qkv_pe[r, :E]
            kT_t = qkv_pe[r, E:2 * E].T                 # ONE XLU transpose / attn
            v_t = qkv_pe[r, 2 * E:]
            o_t, attn_t = _attention(q_t, kT_t, v_t, sa_wo[l], num_heads,
                                     return_attn=True)
            dec_t = _layernorm(pe[r] + o_t + sa_bo[l], sa_g[l], sa_b[l])
            # spatial self-attention: probabilities only (output was discarded)
            q_s = qkv_h[r, :E]
            kT_s = qkv_h[r, E:2 * E].T
            _, attn_s = _attention(q_s, kT_s, None, None, num_heads,
                                   return_attn=True)
            st = jnp.dot(attn_s, attn_t, preferred_element_type=jnp.float32)  # (T,T)
            dec_rows.append(jnp.dot(st, dec_t, preferred_element_type=jnp.float32))
        dec = dec_rows[0] if Bb == 1 else jnp.concatenate(dec_rows, axis=0)

        # ---- cross-attention vs encoder states (batched projections; Wq / Wkv
        #      are separate params -> no weight lane-slicing) -----------------
        q_c = _dot(dec, ca_wq[l]) + ca_bq[l]            # (Bb*T, E)
        kv_c = _dot(kv, ca_wkv[l]) + ca_bkv[l]          # (Bb*S, 2E)
        ca_rows = []
        for bb in range(Bb):
            rq = slice(bb * T, (bb + 1) * T)
            rk = slice(bb * S, (bb + 1) * S)
            kT_c = kv_c[rk, :E].T
            v_c = kv_c[rk, E:]
            o_c, _ = _attention(q_c[rq], kT_c, v_c, ca_wo[l], num_heads,
                                return_attn=False)      # dead attn matrix skipped
            ca_rows.append(_layernorm(dec[rq] + o_c + ca_bo[l], ca_g[l], ca_b[l]))
        ca = ca_rows[0] if Bb == 1 else jnp.concatenate(ca_rows, axis=0)

        # ---- feed-forward block (row-stacked batch) --------------------------
        h = _ffn(ca, mlp_w1[l], mlp_b1[l], mlp_w2[l], mlp_b2[l],
                 mlp_g[l], mlp_b[l])

    # final Linear(embed_dim -> channels); only this leaves the chip
    out = _dot(h, fw_ref[...]) + fb_ref[...]
    out_ref[...] = out.astype(out_ref.dtype)


# ----------------------------------------------------------------------------
# pallas_call wrapper: ONE launch for the whole decoder
# ----------------------------------------------------------------------------
def _has_two_tensorcores():
    # v7x packs 2 TensorCores per chip: keep one batch element per grid step so
    # dimension_semantics="parallel" splits the grid across cores.  v5e/v6e are
    # single-core -> fold the batch into one grid step instead.
    try:
        kind = jax.devices()[0].device_kind.lower()
    except Exception:
        return False
    return "v7" in kind


def decoder_forward(params, hidden_states, key_value_states, num_heads,
                    fold_batch=None):
    B, T, E = hidden_states.shape
    S = key_value_states.shape[1]
    L = params["sa_wqkv"].shape[0]
    F = params["mlp_w1"].shape[2]
    C = params["final_w"].shape[1]

    if fold_batch is None:
        fold_batch = not _has_two_tensorcores()
    Bb = B if fold_batch else 1        # batch elements per grid step
    steps = B // Bb

    # VMEM sanity: every layer-stacked weight block is double-buffered by the
    # BlockSpec pipeline; footprint here is <1 MiB, but v7x has only 64 MiB of
    # VMEM per TensorCore, so re-check if E/T/L/B scale.
    param_bytes = sum(int(v.size) * v.dtype.itemsize for v in params.values())
    assert 2 * param_bytes < 16 * 1024 * 1024, "weights too large for VMEM pipeline"

    pos = params["pos_table"].astype(jnp.float32)                    # (T, E)
    # pos @ Wqkv is constant over batch: precompute once per layer so the kernel
    # reuses the h @ Wqkv projection for both temporal and spatial attention.
    pos_proj = jnp.einsum("te,lef->ltf", pos,
                          params["sa_wqkv"].astype(jnp.float32))     # (L, T, 3E)
    pos_tiled = jnp.tile(pos, (Bb, 1))                               # (Bb*T, E)
    posp_tiled = jnp.tile(pos_proj, (1, Bb, 1))                      # (L, Bb*T, 3E)

    # Row-stack the batch outside the kernel (free, contiguous reshape) so all
    # projections inside the kernel run on (Bb*T, E) / (Bb*S, E) operands.
    x2 = hidden_states.reshape(B * T, E)
    kv2 = key_value_states.reshape(B * S, E)

    kernel = functools.partial(decoder_kernel, num_heads=num_heads,
                               num_layers=L, block_batch=Bb, seq_q=T, seq_kv=S)

    def full(*shape):                   # whole-array block, constant index map
        return pl.BlockSpec(shape, lambda i, _s=len(shape): (0,) * _s)

    def row(rows, cols):                # batch-sliced rows
        return pl.BlockSpec((rows, cols), lambda i: (i, 0))

    in_specs = [
        row(Bb * T, E),                          # hidden_states (row-stacked)
        row(Bb * S, E),                          # key_value_states
        full(Bb * T, E),                         # positional table (batch-tiled)
        full(L, Bb * T, 3 * E),                  # pos @ Wqkv per layer
        # self-attention params (stacked over layers)
        full(L, E, 3 * E), full(L, 1, 3 * E), full(L, E, E), full(L, 1, E),
        full(L, 1, E), full(L, 1, E),
        # cross-attention params (Wq / Wkv separate)
        full(L, E, E), full(L, 1, E), full(L, E, 2 * E), full(L, 1, 2 * E),
        full(L, E, E), full(L, 1, E), full(L, 1, E), full(L, 1, E),
        # MLP params
        full(L, E, F), full(L, 1, F), full(L, F, E), full(L, 1, E),
        full(L, 1, E), full(L, 1, E),
        # final projection
        full(E, C), full(1, C),
    ]

    out = pl.pallas_call(
        kernel,
        out_shape=jax.ShapeDtypeStruct((B * T, C), hidden_states.dtype),
        grid=(steps,),
        in_specs=in_specs,
        out_specs=row(Bb * T, C),
        compiler_params=pltpu.CompilerParams(
            dimension_semantics=("parallel",)),   # v7x: one TC per batch element
    )(x2, kv2, pos_tiled, posp_tiled,
      params["sa_wqkv"], params["sa_bqkv"], params["sa_wo"], params["sa_bo"],
      params["sa_g"], params["sa_b"],
      params["ca_wq"], params["ca_bq"], params["ca_wkv"], params["ca_bkv"],
      params["ca_wo"], params["ca_bo"], params["ca_g"], params["ca_b"],
      params["mlp_w1"], params["mlp_b1"], params["mlp_w2"], params["mlp_b2"],
      params["mlp_g"], params["mlp_b"],
      params["final_w"], params["final_b"])

    return out.reshape(B, T, C)


# ----------------------------------------------------------------------------
# Parameter construction (plain JAX)
# ----------------------------------------------------------------------------
def positional_encoding_table(n_position, d_model):
    pos = jnp.arange(n_position, dtype=jnp.float32)[:, None]
    i = jnp.arange(d_model, dtype=jnp.float32)[None, :]
    angle = pos / jnp.power(10000.0, (2.0 * jnp.floor(i / 2.0)) / d_model)
    even = (jnp.arange(d_model) % 2) == 0
    return jnp.where(even[None, :], jnp.sin(angle), jnp.cos(angle))


def init_decoder_params(key, cfg, *, matmul_dtype=jnp.bfloat16):
    E = cfg["embed_dim"]
    F = E * cfg["decoder_ff_expansion"]
    C = cfg["channels"]
    L = cfg["decoder_blocks"]
    ks = jax.random.split(key, 8)
    wdt = matmul_dtype

    def dense(k, shape, dtype):
        return (0.02 * jax.random.normal(k, shape, jnp.float32)).astype(dtype)

    ones = lambda shape: jnp.ones(shape, jnp.float32)
    zeros = lambda shape: jnp.zeros(shape, jnp.float32)

    return dict(
        # self-attention (QKV fused along output dim: [Wq | Wk | Wv])
        sa_wqkv=dense(ks[0], (L, E, 3 * E), wdt), sa_bqkv=zeros((L, 1, 3 * E)),
        # Wo stays f32: it is sliced per head on 8-row sublane boundaries,
        # which are tile-aligned for f32 but not for bf16 packing.
        sa_wo=dense(ks[1], (L, E, E), jnp.float32), sa_bo=zeros((L, 1, E)),
        sa_g=ones((L, 1, E)), sa_b=zeros((L, 1, E)),
        # cross-attention: separate Wq and fused [Wk | Wv]
        ca_wq=dense(ks[2], (L, E, E), wdt), ca_bq=zeros((L, 1, E)),
        ca_wkv=dense(ks[3], (L, E, 2 * E), wdt), ca_bkv=zeros((L, 1, 2 * E)),
        ca_wo=dense(ks[4], (L, E, E), jnp.float32), ca_bo=zeros((L, 1, E)),
        ca_g=ones((L, 1, E)), ca_b=zeros((L, 1, E)),
        # feed-forward block
        mlp_w1=dense(ks[5], (L, E, F), wdt), mlp_b1=zeros((L, 1, F)),
        mlp_w2=dense(ks[6], (L, F, E), wdt), mlp_b2=zeros((L, 1, E)),
        mlp_g=ones((L, 1, E)), mlp_b=zeros((L, 1, E)),
        # final Linear(embed_dim -> channels)
        final_w=dense(ks[7], (E, C), wdt), final_b=zeros((1, C)),
        pos_table=positional_encoding_table(cfg["prediction_length"], E),
    )


# ----------------------------------------------------------------------------
if __name__ == "__main__":
    cfg = dict(
        prediction_length=8,
        embed_dim=32,
        channels=4,
        decoder_attn_heads=4,
        decoder_ff_expansion=2,
        decoder_blocks=2,
        decoder_attn_dropout=0.0,
        decoder_ff_dropout=0.0,
    )
    B, S = 2, 16   # batch, encoder sequence length

    key = jax.random.PRNGKey(0)
    k_param, k_h, k_kv = jax.random.split(key, 3)
    params = init_decoder_params(k_param, cfg)

    hidden_states = jax.random.normal(
        k_h, (B, cfg["prediction_length"], cfg["embed_dim"]), jnp.float32)
    key_value_states = jax.random.normal(
        k_kv, (B, S, cfg["embed_dim"]), jnp.float32)

    out = decoder_forward(params, hidden_states, key_value_states,
                          cfg["decoder_attn_heads"])
    out = jax.block_until_ready(out)

    assert out.shape == (B, cfg["prediction_length"], cfg["channels"]), out.shape
    assert bool(jnp.all(jnp.isfinite(out)))
    print("KERNEL_OK")
</pallas_src>

<mosaic_0001>
module attributes {stable_mosaic.version = 11 : i64} {
  func.func @decoder_kernel(%arg0: i32, %arg1: memref<16x32xf32, #tpu.memory_space<vmem>>, %arg2: memref<32x32xf32, #tpu.memory_space<vmem>>, %arg3: memref<16x32xf32, #tpu.memory_space<vmem>>, %arg4: memref<2x16x96xf32, #tpu.memory_space<vmem>>, %arg5: memref<2x32x96xbf16, #tpu.memory_space<vmem>>, %arg6: memref<2x1x96xf32, #tpu.memory_space<vmem>>, %arg7: memref<2x32x32xf32, #tpu.memory_space<vmem>>, %arg8: memref<2x1x32xf32, #tpu.memory_space<vmem>>, %arg9: memref<2x1x32xf32, #tpu.memory_space<vmem>>, %arg10: memref<2x1x32xf32, #tpu.memory_space<vmem>>, %arg11: memref<2x32x32xbf16, #tpu.memory_space<vmem>>, %arg12: memref<2x1x32xf32, #tpu.memory_space<vmem>>, %arg13: memref<2x32x64xbf16, #tpu.memory_space<vmem>>, %arg14: memref<2x1x64xf32, #tpu.memory_space<vmem>>, %arg15: memref<2x32x32xf32, #tpu.memory_space<vmem>>, %arg16: memref<2x1x32xf32, #tpu.memory_space<vmem>>, %arg17: memref<2x1x32xf32, #tpu.memory_space<vmem>>, %arg18: memref<2x1x32xf32, #tpu.memory_space<vmem>>, %arg19: memref<2x32x64xbf16, #tpu.memory_space<vmem>>, %arg20: memref<2x1x64xf32, #tpu.memory_space<vmem>>, %arg21: memref<2x64x32xbf16, #tpu.memory_space<vmem>>, %arg22: memref<2x1x32xf32, #tpu.memory_space<vmem>>, %arg23: memref<2x1x32xf32, #tpu.memory_space<vmem>>, %arg24: memref<2x1x32xf32, #tpu.memory_space<vmem>>, %arg25: memref<32x4xbf16, #tpu.memory_space<vmem>>, %arg26: memref<1x4xf32, #tpu.memory_space<vmem>>, %arg27: memref<16x4xf32, #tpu.memory_space<vmem>>) attributes {dimension_semantics = [#tpu.dimension_semantics<parallel>], iteration_bounds = array<i64: 1>, scalar_prefetch = 0 : i64, scratch_operands = 0 : i64, tpu.core_type = #tpu.core_type<tc>, window_params = [{transform_indices = @transform_0, window_bounds = array<i64: 16, 32>}, {transform_indices = @transform_1, window_bounds = array<i64: 32, 32>}, {pipeline_mode = #tpu.pipeline_mode<synchronous>, transform_indices = @transform_2, window_bounds = array<i64: 16, 32>}, {pipeline_mode = #tpu.pipeline_mode<synchronous>, transform_indices = @transform_3, window_bounds = array<i64: 2, 16, 96>}, {pipeline_mode = #tpu.pipeline_mode<synchronous>, transform_indices = @transform_4, window_bounds = array<i64: 2, 32, 96>}, {pipeline_mode = #tpu.pipeline_mode<synchronous>, transform_indices = @transform_5, window_bounds = array<i64: 2, 1, 96>}, {pipeline_mode = #tpu.pipeline_mode<synchronous>, transform_indices = @transform_6, window_bounds = array<i64: 2, 32, 32>}, {pipeline_mode = #tpu.pipeline_mode<synchronous>, transform_indices = @transform_7, window_bounds = array<i64: 2, 1, 32>}, {pipeline_mode = #tpu.pipeline_mode<synchronous>, transform_indices = @transform_8, window_bounds = array<i64: 2, 1, 32>}, {pipeline_mode = #tpu.pipeline_mode<synchronous>, transform_indices = @transform_9, window_bounds = array<i64: 2, 1, 32>}, {pipeline_mode = #tpu.pipeline_mode<synchronous>, transform_indices = @transform_10, window_bounds = array<i64: 2, 32, 32>}, {pipeline_mode = #tpu.pipeline_mode<synchronous>, transform_indices = @transform_11, window_bounds = array<i64: 2, 1, 32>}, {pipeline_mode = #tpu.pipeline_mode<synchronous>, transform_indices = @transform_12, window_bounds = array<i64: 2, 32, 64>}, {pipeline_mode = #tpu.pipeline_mode<synchronous>, transform_indices = @transform_13, window_bounds = array<i64: 2, 1, 64>}, {pipeline_mode = #tpu.pipeline_mode<synchronous>, transform_indices = @transform_14, window_bounds = array<i64: 2, 32, 32>}, {pipeline_mode = #tpu.pipeline_mode<synchronous>, transform_indices = @transform_15, window_bounds = array<i64: 2, 1, 32>}, {pipeline_mode = #tpu.pipeline_mode<synchronous>, transform_indices = @transform_16, window_bounds = array<i64: 2, 1, 32>}, {pipeline_mode = #tpu.pipeline_mode<synchronous>, transform_indices = @transform_17, window_bounds = array<i64: 2, 1, 32>}, {pipeline_mode = #tpu.pipeline_mode<synchronous>, transform_indices = @transform_18, window_bounds = array<i64: 2, 32, 64>}, {pipeline_mode = #tpu.pipeline_mode<synchronous>, transform_indices = @transform_19, window_bounds = array<i64: 2, 1, 64>}, {pipeline_mode = #tpu.pipeline_mode<synchronous>, transform_indices = @transform_20, window_bounds = array<i64: 2, 64, 32>}, {pipeline_mode = #tpu.pipeline_mode<synchronous>, transform_indices = @transform_21, window_bounds = array<i64: 2, 1, 32>}, {pipeline_mode = #tpu.pipeline_mode<synchronous>, transform_indices = @transform_22, window_bounds = array<i64: 2, 1, 32>}, {pipeline_mode = #tpu.pipeline_mode<synchronous>, transform_indices = @transform_23, window_bounds = array<i64: 2, 1, 32>}, {pipeline_mode = #tpu.pipeline_mode<synchronous>, transform_indices = @transform_24, window_bounds = array<i64: 32, 4>}, {pipeline_mode = #tpu.pipeline_mode<synchronous>, transform_indices = @transform_25, window_bounds = array<i64: 1, 4>}, {transform_indices = @transform_26, window_bounds = array<i64: 16, 4>}]} {
    %c0 = arith.constant 0 : index
    %c0_0 = arith.constant 0 : index
    %0 = vector.load %arg1[%c0, %c0_0] : memref<16x32xf32, #tpu.memory_space<vmem>>, vector<16x32xf32>
    %c0_1 = arith.constant 0 : index
    %c0_2 = arith.constant 0 : index
    %1 = vector.load %arg2[%c0_1, %c0_2] : memref<32x32xf32, #tpu.memory_space<vmem>>, vector<32x32xf32>
    %c0_3 = arith.constant 0 : index
    %c0_4 = arith.constant 0 : index
    %2 = vector.load %arg3[%c0_3, %c0_4] : memref<16x32xf32, #tpu.memory_space<vmem>>, vector<16x32xf32>
    %c0_5 = arith.constant 0 : index
    %c0_6 = arith.constant 0 : index
    %c0_7 = arith.constant 0 : index
    %3 = vector.load %arg5[%c0_5, %c0_6, %c0_7] : memref<2x32x96xbf16, #tpu.memory_space<vmem>>, vector<1x32x96xbf16>
    %4 = vector.shape_cast %3 : vector<1x32x96xbf16> to vector<32x96xbf16>
    %5 = arith.truncf %0 : vector<16x32xf32> to vector<16x32xbf16>
    %cst = arith.constant dense<0.000000e+00> : vector<16x96xf32>
    %6 = tpu.matmul %5, %4, %cst {dimension_numbers = #tpu.dot_dimension_numbers<[1], [0], [0], [1], [0, 0, 1, 1], [], []>} : vector<16x32xbf16>, vector<32x96xbf16>, vector<16x96xf32> -> vector<16x96xf32>
    %c0_8 = arith.constant 0 : index
    %c0_9 = arith.constant 0 : index
    %c0_10 = arith.constant 0 : index
    %7 = vector.load %arg6[%c0_8, %c0_9, %c0_10] : memref<2x1x96xf32, #tpu.memory_space<vmem>>, vector<1x1x96xf32>
    %8 = vector.shape_cast %7 : vector<1x1x96xf32> to vector<1x96xf32>
    %9 = vector.broadcast %8 : vector<1x96xf32> to vector<16x96xf32>
    %10 = arith.addf %6, %9 : vector<16x96xf32>
    %c0_11 = arith.constant 0 : index
    %c0_12 = arith.constant 0 : index
    %c0_13 = arith.constant 0 : index
    %11 = vector.load %arg4[%c0_11, %c0_12, %c0_13] : memref<2x16x96xf32, #tpu.memory_space<vmem>>, vector<1x16x96xf32>
    %12 = vector.shape_cast %11 : vector<1x16x96xf32> to vector<16x96xf32>
    %13 = arith.addf %10, %12 : vector<16x96xf32>
    %14 = arith.addf %0, %2 : vector<16x32xf32>
    %15 = vector.extract_strided_slice %13 {offsets = [0, 0], sizes = [8, 32], strides = [1, 1]} : vector<16x96xf32> to vector<8x32xf32>
    %16 = vector.extract_strided_slice %13 {offsets = [0, 32], sizes = [8, 32], strides = [1, 1]} : vector<16x96xf32> to vector<8x32xf32>
    %17 = tpu.transpose %16, [1, 0] : vector<8x32xf32> -> vector<32x8xf32>
    %18 = vector.extract_strided_slice %13 {offsets = [0, 64], sizes = [8, 32], strides = [1, 1]} : vector<16x96xf32> to vector<8x32xf32>
    %c0_14 = arith.constant 0 : index
    %c0_15 = arith.constant 0 : index
    %c0_16 = arith.constant 0 : index
    %19 = vector.load %arg7[%c0_14, %c0_15, %c0_16] : memref<2x32x32xf32, #tpu.memory_space<vmem>>, vector<1x32x32xf32>
    %20 = vector.shape_cast %19 : vector<1x32x32xf32> to vector<32x32xf32>
    %21 = vector.extract_strided_slice %15 {offsets = [0, 0], sizes = [8, 8], strides = [1, 1]} : vector<8x32xf32> to vector<8x8xf32>
    %22 = vector.extract_strided_slice %17 {offsets = [0, 0], sizes = [8, 8], strides = [1, 1]} : vector<32x8xf32> to vector<8x8xf32>
    %cst_17 = arith.constant dense<0.000000e+00> : vector<8x8xf32>
    %23 = tpu.matmul %21, %22, %cst_17 {dimension_numbers = #tpu.dot_dimension_numbers<[1], [0], [0], [1], [0, 0, 1, 1], [], []>} : vector<8x8xf32>, vector<8x8xf32>, vector<8x8xf32> -> vector<8x8xf32>
    %cst_18 = arith.constant 0.353553385 : f32
    %24 = vector.broadcast %cst_18 : f32 to vector<8x8xf32>
    %25 = arith.mulf %23, %24 : vector<8x8xf32>
    %cst_19 = arith.constant dense<0xFF800000> : vector<8xf32>
    %26 = vector.multi_reduction <maximumf>, %25, %cst_19 [1] : vector<8x8xf32> to vector<8xf32>
    %27 = vector.shape_cast %26 : vector<8xf32> to vector<8x1xf32>
    %28 = vector.broadcast %27 : vector<8x1xf32> to vector<8x8xf32>
    %29 = arith.subf %25, %28 : vector<8x8xf32>
    %30 = math.exp %29 : vector<8x8xf32>
    %cst_20 = arith.constant dense<0.000000e+00> : vector<8xf32>
    %31 = vector.multi_reduction <add>, %30, %cst_20 [1] : vector<8x8xf32> to vector<8xf32>
    %32 = vector.shape_cast %31 : vector<8xf32> to vector<8x1xf32>
    %33 = tpu.reciprocal %32 {approx = true} : vector<8x1xf32> -> vector<8x1xf32>
    %34 = vector.broadcast %33 : vector<8x1xf32> to vector<8x8xf32>
    %35 = arith.mulf %30, %34 : vector<8x8xf32>
    %36 = vector.extract_strided_slice %18 {offsets = [0, 0], sizes = [8, 8], strides = [1, 1]} : vector<8x32xf32> to vector<8x8xf32>
    %cst_21 = arith.constant dense<0.000000e+00> : vector<8x8xf32>
    %37 = tpu.matmul %35, %36, %cst_21 {dimension_numbers = #tpu.dot_dimension_numbers<[1], [0], [0], [1], [0, 0, 1, 1], [], []>} : vector<8x8xf32>, vector<8x8xf32>, vector<8x8xf32> -> vector<8x8xf32>
    %38 = vector.extract_strided_slice %20 {offsets = [0, 0], sizes = [8, 32], strides = [1, 1]} : vector<32x32xf32> to vector<8x32xf32>
    %cst_22 = arith.constant dense<0.000000e+00> : vector<8x32xf32>
    %39 = tpu.matmul %37, %38, %cst_22 {dimension_numbers = #tpu.dot_dimension_numbers<[1], [0], [0], [1], [0, 0, 1, 1], [], []>} : vector<8x8xf32>, vector<8x32xf32>, vector<8x32xf32> -> vector<8x32xf32>
    %40 = vector.extract_strided_slice %15 {offsets = [0, 8], sizes = [8, 8], strides = [1, 1]} : vector<8x32xf32> to vector<8x8xf32>
    %41 = vector.extract_strided_slice %17 {offsets = [8, 0], sizes = [8, 8], strides = [1, 1]} : vector<32x8xf32> to vector<8x8xf32>
    %cst_23 = arith.constant dense<0.000000e+00> : vector<8x8xf32>
    %42 = tpu.matmul %40, %41, %cst_23 {dimension_numbers = #tpu.dot_dimension_numbers<[1], [0], [0], [1], [0, 0, 1, 1], [], []>} : vector<8x8xf32>, vector<8x8xf32>, vector<8x8xf32> -> vector<8x8xf32>
    %cst_24 = arith.constant 0.353553385 : f32
    %43 = vector.broadcast %cst_24 : f32 to vector<8x8xf32>
    %44 = arith.mulf %42, %43 : vector<8x8xf32>
    %cst_25 = arith.constant dense<0xFF800000> : vector<8xf32>
    %45 = vector.multi_reduction <maximumf>, %44, %cst_25 [1] : vector<8x8xf32> to vector<8xf32>
    %46 = vector.shape_cast %45 : vector<8xf32> to vector<8x1xf32>
    %47 = vector.broadcast %46 : vector<8x1xf32> to vector<8x8xf32>
    %48 = arith.subf %44, %47 : vector<8x8xf32>
    %49 = math.exp %48 : vector<8x8xf32>
    %cst_26 = arith.constant dense<0.000000e+00> : vector<8xf32>
    %50 = vector.multi_reduction <add>, %49, %cst_26 [1] : vector<8x8xf32> to vector<8xf32>
    %51 = vector.shape_cast %50 : vector<8xf32> to vector<8x1xf32>
    %52 = tpu.reciprocal %51 {approx = true} : vector<8x1xf32> -> vector<8x1xf32>
    %53 = vector.broadcast %52 : vector<8x1xf32> to vector<8x8xf32>
    %54 = arith.mulf %49, %53 : vector<8x8xf32>
    %55 = arith.addf %35, %54 : vector<8x8xf32>
    %56 = vector.extract_strided_slice %18 {offsets = [0, 8], sizes = [8, 8], strides = [1, 1]} : vector<8x32xf32> to vector<8x8xf32>
    %cst_27 = arith.constant dense<0.000000e+00> : vector<8x8xf32>
    %57 = tpu.matmul %54, %56, %cst_27 {dimension_numbers = #tpu.dot_dimension_numbers<[1], [0], [0], [1], [0, 0, 1, 1], [], []>} : vector<8x8xf32>, vector<8x8xf32>, vector<8x8xf32> -> vector<8x8xf32>
    %58 = vector.extract_strided_slice %20 {offsets = [8, 0], sizes = [8, 32], strides = [1, 1]} : vector<32x32xf32> to vector<8x32xf32>
    %cst_28 = arith.constant dense<0.000000e+00> : vector<8x32xf32>
    %59 = tpu.matmul %57, %58, %cst_28 {dimension_numbers = #tpu.dot_dimension_numbers<[1], [0], [0], [1], [0, 0, 1, 1], [], []>} : vector<8x8xf32>, vector<8x32xf32>, vector<8x32xf32> -> vector<8x32xf32>
    %60 = arith.addf %39, %59 : vector<8x32xf32>
    %61 = vector.extract_strided_slice %15 {offsets = [0, 16], sizes = [8, 8], strides = [1, 1]} : vector<8x32xf32> to vector<8x8xf32>
    %62 = vector.extract_strided_slice %17 {offsets = [16, 0], sizes = [8, 8], strides = [1, 1]} : vector<32x8xf32> to vector<8x8xf32>
    %cst_29 = arith.constant dense<0.000000e+00> : vector<8x8xf32>
    %63 = tpu.matmul %61, %62, %cst_29 {dimension_numbers = #tpu.dot_dimension_numbers<[1], [0], [0], [1], [0, 0, 1, 1], [], []>} : vector<8x8xf32>, vector<8x8xf32>, vector<8x8xf32> -> vector<8x8xf32>
    %cst_30 = arith.constant 0.353553385 : f32
    %64 = vector.broadcast %cst_30 : f32 to vector<8x8xf32>
    %65 = arith.mulf %63, %64 : vector<8x8xf32>
    %cst_31 = arith.constant dense<0xFF800000> : vector<8xf32>
    %66 = vector.multi_reduction <maximumf>, %65, %cst_31 [1] : vector<8x8xf32> to vector<8xf32>
    %67 = vector.shape_cast %66 : vector<8xf32> to vector<8x1xf32>
    %68 = vector.broadcast %67 : vector<8x1xf32> to vector<8x8xf32>
    %69 = arith.subf %65, %68 : vector<8x8xf32>
    %70 = math.exp %69 : vector<8x8xf32>
    %cst_32 = arith.constant dense<0.000000e+00> : vector<8xf32>
    %71 = vector.multi_reduction <add>, %70, %cst_32 [1] : vector<8x8xf32> to vector<8xf32>
    %72 = vector.shape_cast %71 : vector<8xf32> to vector<8x1xf32>
    %73 = tpu.reciprocal %72 {approx = true} : vector<8x1xf32> -> vector<8x1xf32>
    %74 = vector.broadcast %73 : vector<8x1xf32> to vector<8x8xf32>
    %75 = arith.mulf %70, %74 : vector<8x8xf32>
    %76 = arith.addf %55, %75 : vector<8x8xf32>
    %77 = vector.extract_strided_slice %18 {offsets = [0, 16], sizes = [8, 8], strides = [1, 1]} : vector<8x32xf32> to vector<8x8xf32>
    %cst_33 = arith.constant dense<0.000000e+00> : vector<8x8xf32>
    %78 = tpu.matmul %75, %77, %cst_33 {dimension_numbers = #tpu.dot_dimension_numbers<[1], [0], [0], [1], [0, 0, 1, 1], [], []>} : vector<8x8xf32>, vector<8x8xf32>, vector<8x8xf32> -> vector<8x8xf32>
    %79 = vector.extract_strided_slice %20 {offsets = [16, 0], sizes = [8, 32], strides = [1, 1]} : vector<32x32xf32> to vector<8x32xf32>
    %cst_34 = arith.constant dense<0.000000e+00> : vector<8x32xf32>
    %80 = tpu.matmul %78, %79, %cst_34 {dimension_numbers = #tpu.dot_dimension_numbers<[1], [0], [0], [1], [0, 0, 1, 1], [], []>} : vector<8x8xf32>, vector<8x32xf32>, vector<8x32xf32> -> vector<8x32xf32>
    %81 = arith.addf %60, %80 : vector<8x32xf32>
    %82 = vector.extract_strided_slice %15 {offsets = [0, 24], sizes = [8, 8], strides = [1, 1]} : vector<8x32xf32> to vector<8x8xf32>
    %83 = vector.extract_strided_slice %17 {offsets = [24, 0], sizes = [8, 8], strides = [1, 1]} : vector<32x8xf32> to vector<8x8xf32>
    %cst_35 = arith.constant dense<0.000000e+00> : vector<8x8xf32>
    %84 = tpu.matmul %82, %83, %cst_35 {dimension_numbers = #tpu.dot_dimension_numbers<[1], [0], [0], [1], [0, 0, 1, 1], [], []>} : vector<8x8xf32>, vector<8x8xf32>, vector<8x8xf32> -> vector<8x8xf32>
    %cst_36 = arith.constant 0.353553385 : f32
    %85 = vector.broadcast %cst_36 : f32 to vector<8x8xf32>
    %86 = arith.mulf %84, %85 : vector<8x8xf32>
    %cst_37 = arith.constant dense<0xFF800000> : vector<8xf32>
    %87 = vector.multi_reduction <maximumf>, %86, %cst_37 [1] : vector<8x8xf32> to vector<8xf32>
    %88 = vector.shape_cast %87 : vector<8xf32> to vector<8x1xf32>
    %89 = vector.broadcast %88 : vector<8x1xf32> to vector<8x8xf32>
    %90 = arith.subf %86, %89 : vector<8x8xf32>
    %91 = math.exp %90 : vector<8x8xf32>
    %cst_38 = arith.constant dense<0.000000e+00> : vector<8xf32>
    %92 = vector.multi_reduction <add>, %91, %cst_38 [1] : vector<8x8xf32> to vector<8xf32>
    %93 = vector.shape_cast %92 : vector<8xf32> to vector<8x1xf32>
    %94 = tpu.reciprocal %93 {approx = true} : vector<8x1xf32> -> vector<8x1xf32>
    %95 = vector.broadcast %94 : vector<8x1xf32> to vector<8x8xf32>
    %96 = arith.mulf %91, %95 : vector<8x8xf32>
    %97 = arith.addf %76, %96 : vector<8x8xf32>
    %98 = vector.extract_strided_slice %18 {offsets = [0, 24], sizes = [8, 8], strides = [1, 1]} : vector<8x32xf32> to vector<8x8xf32>
    %cst_39 = arith.constant dense<0.000000e+00> : vector<8x8xf32>
    %99 = tpu.matmul %96, %98, %cst_39 {dimension_numbers = #tpu.dot_dimension_numbers<[1], [0], [0], [1], [0, 0, 1, 1], [], []>} : vector<8x8xf32>, vector<8x8xf32>, vector<8x8xf32> -> vector<8x8xf32>
    %100 = vector.extract_strided_slice %20 {offsets = [24, 0], sizes = [8, 32], strides = [1, 1]} : vector<32x32xf32> to vector<8x32xf32>
    %cst_40 = arith.constant dense<0.000000e+00> : vector<8x32xf32>
    %101 = tpu.matmul %99, %100, %cst_40 {dimension_numbers = #tpu.dot_dimension_numbers<[1], [0], [0], [1], [0, 0, 1, 1], [], []>} : vector<8x8xf32>, vector<8x32xf32>, vector<8x32xf32> -> vector<8x32xf32>
    %102 = arith.addf %81, %101 : vector<8x32xf32>
    %cst_41 = arith.constant 2.500000e-01 : f32
    %103 = vector.broadcast %cst_41 : f32 to vector<8x8xf32>
    %104 = arith.mulf %97, %103 : vector<8x8xf32>
    %105 = vector.extract_strided_slice %14 {offsets = [0, 0], sizes = [8, 32], strides = [1, 1]} : vector<16x32xf32> to vector<8x32xf32>
    %106 = arith.addf %105, %102 : vector<8x32xf32>
    %c0_42 = arith.constant 0 : index
    %c0_43 = arith.constant 0 : index
    %c0_44 = arith.constant 0 : index
    %107 = vector.load %arg8[%c0_42, %c0_43, %c0_44] : memref<2x1x32xf32, #tpu.memory_space<vmem>>, vector<1x1x32xf32>
    %108 = vector.shape_cast %107 : vector<1x1x32xf32> to vector<1x32xf32>
    %109 = vector.broadcast %108 : vector<1x32xf32> to vector<8x32xf32>
    %110 = arith.addf %106, %109 : vector<8x32xf32>
    %c0_45 = arith.constant 0 : index
    %c0_46 = arith.constant 0 : index
    %c0_47 = arith.constant 0 : index
    %111 = vector.load %arg9[%c0_45, %c0_46, %c0_47] : memref<2x1x32xf32, #tpu.memory_space<vmem>>, vector<1x1x32xf32>
    %112 = vector.shape_cast %111 : vector<1x1x32xf32> to vector<1x32xf32>
    %c0_48 = arith.constant 0 : index
    %c0_49 = arith.constant 0 : index
    %c0_50 = arith.constant 0 : index
    %113 = vector.load %arg10[%c0_48, %c0_49, %c0_50] : memref<2x1x32xf32, #tpu.memory_space<vmem>>, vector<1x1x32xf32>
    %114 = vector.shape_cast %113 : vector<1x1x32xf32> to vector<1x32xf32>
    %cst_51 = arith.constant dense<0.000000e+00> : vector<8xf32>
    %115 = vector.multi_reduction <add>, %110, %cst_51 [1] : vector<8x32xf32> to vector<8xf32>
    %116 = vector.shape_cast %115 : vector<8xf32> to vector<8x1xf32>
    %cst_52 = arith.constant 3.200000e+01 : f32
    %117 = vector.broadcast %cst_52 : f32 to vector<8x1xf32>
    %118 = arith.divf %116, %117 : vector<8x1xf32>
    %119 = vector.broadcast %118 : vector<8x1xf32> to vector<8x32xf32>
    %120 = arith.subf %110, %119 : vector<8x32xf32>
    %121 = arith.mulf %120, %120 : vector<8x32xf32>
    %cst_53 = arith.constant dense<0.000000e+00> : vector<8xf32>
    %122 = vector.multi_reduction <add>, %121, %cst_53 [1] : vector<8x32xf32> to vector<8xf32>
    %123 = vector.shape_cast %122 : vector<8xf32> to vector<8x1xf32>
    %cst_54 = arith.constant 3.200000e+01 : f32
    %124 = vector.broadcast %cst_54 : f32 to vector<8x1xf32>
    %125 = arith.divf %123, %124 : vector<8x1xf32>
    %126 = vector.broadcast %118 : vector<8x1xf32> to vector<8x32xf32>
    %127 = arith.subf %110, %126 : vector<8x32xf32>
    %cst_55 = arith.constant 9.99999974E-6 : f32
    %128 = vector.broadcast %cst_55 : f32 to vector<8x1xf32>
    %129 = arith.addf %125, %128 : vector<8x1xf32>
    %130 = math.rsqrt %129 : vector<8x1xf32>
    %131 = vector.broadcast %130 : vector<8x1xf32> to vector<8x32xf32>
    %132 = arith.mulf %127, %131 : vector<8x32xf32>
    %133 = vector.broadcast %112 : vector<1x32xf32> to vector<8x32xf32>
    %134 = arith.mulf %132, %133 : vector<8x32xf32>
    %135 = vector.broadcast %114 : vector<1x32xf32> to vector<8x32xf32>
    %136 = arith.addf %134, %135 : vector<8x32xf32>
    %137 = vector.extract_strided_slice %10 {offsets = [0, 0], sizes = [8, 32], strides = [1, 1]} : vector<16x96xf32> to vector<8x32xf32>
    %138 = vector.extract_strided_slice %10 {offsets = [0, 32], sizes = [8, 32], strides = [1, 1]} : vector<16x96xf32> to vector<8x32xf32>
    %139 = tpu.transpose %138, [1, 0] : vector<8x32xf32> -> vector<32x8xf32>
    %140 = vector.extract_strided_slice %137 {offsets = [0, 0], sizes = [8, 8], strides = [1, 1]} : vector<8x32xf32> to vector<8x8xf32>
    %141 = vector.extract_strided_slice %139 {offsets = [0, 0], sizes = [8, 8], strides = [1, 1]} : vector<32x8xf32> to vector<8x8xf32>
    %cst_56 = arith.constant dense<0.000000e+00> : vector<8x8xf32>
    %142 = tpu.matmul %140, %141, %cst_56 {dimension_numbers = #tpu.dot_dimension_numbers<[1], [0], [0], [1], [0, 0, 1, 1], [], []>} : vector<8x8xf32>, vector<8x8xf32>, vector<8x8xf32> -> vector<8x8xf32>
    %cst_57 = arith.constant 0.353553385 : f32
    %143 = vector.broadcast %cst_57 : f32 to vector<8x8xf32>
    %144 = arith.mulf %142, %143 : vector<8x8xf32>
    %cst_58 = arith.constant dense<0xFF800000> : vector<8xf32>
    %145 = vector.multi_reduction <maximumf>, %144, %cst_58 [1] : vector<8x8xf32> to vector<8xf32>
    %146 = vector.shape_cast %145 : vector<8xf32> to vector<8x1xf32>
    %147 = vector.broadcast %146 : vector<8x1xf32> to vector<8x8xf32>
    %148 = arith.subf %144, %147 : vector<8x8xf32>
    %149 = math.exp %148 : vector<8x8xf32>
    %cst_59 = arith.constant dense<0.000000e+00> : vector<8xf32>
    %150 = vector.multi_reduction <add>, %149, %cst_59 [1] : vector<8x8xf32> to vector<8xf32>
    %151 = vector.shape_cast %150 : vector<8xf32> to vector<8x1xf32>
    %152 = tpu.reciprocal %151 {approx = true} : vector<8x1xf32> -> vector<8x1xf32>
    %153 = vector.broadcast %152 : vector<8x1xf32> to vector<8x8xf32>
    %154 = arith.mulf %149, %153 : vector<8x8xf32>
    %155 = vector.extract_strided_slice %137 {offsets = [0, 8], sizes = [8, 8], strides = [1, 1]} : vector<8x32xf32> to vector<8x8xf32>
    %156 = vector.extract_strided_slice %139 {offsets = [8, 0], sizes = [8, 8], strides = [1, 1]} : vector<32x8xf32> to vector<8x8xf32>
    %cst_60 = arith.constant dense<0.000000e+00> : vector<8x8xf32>
    %157 = tpu.matmul %155, %156, %cst_60 {dimension_numbers = #tpu.dot_dimension_numbers<[1], [0], [0], [1], [0, 0, 1, 1], [], []>} : vector<8x8xf32>, vector<8x8xf32>, vector<8x8xf32> -> vector<8x8xf32>
    %cst_61 = arith.constant 0.353553385 : f32
    %158 = vector.broadcast %cst_61 : f32 to vector<8x8xf32>
    %159 = arith.mulf %157, %158 : vector<8x8xf32>
    %cst_62 = arith.constant dense<0xFF800000> : vector<8xf32>
    %160 = vector.multi_reduction <maximumf>, %159, %cst_62 [1] : vector<8x8xf32> to vector<8xf32>
    %161 = vector.shape_cast %160 : vector<8xf32> to vector<8x1xf32>
    %162 = vector.broadcast %161 : vector<8x1xf32> to vector<8x8xf32>
    %163 = arith.subf %159, %162 : vector<8x8xf32>
    %164 = math.exp %163 : vector<8x8xf32>
    %cst_63 = arith.constant dense<0.000000e+00> : vector<8xf32>
    %165 = vector.multi_reduction <add>, %164, %cst_63 [1] : vector<8x8xf32> to vector<8xf32>
    %166 = vector.shape_cast %165 : vector<8xf32> to vector<8x1xf32>
    %167 = tpu.reciprocal %166 {approx = true} : vector<8x1xf32> -> vector<8x1xf32>
    %168 = vector.broadcast %167 : vector<8x1xf32> to vector<8x8xf32>
    %169 = arith.mulf %164, %168 : vector<8x8xf32>
    %170 = arith.addf %154, %169 : vector<8x8xf32>
    %171 = vector.extract_strided_slice %137 {offsets = [0, 16], sizes = [8, 8], strides = [1, 1]} : vector<8x32xf32> to vector<8x8xf32>
    %172 = vector.extract_strided_slice %139 {offsets = [16, 0], sizes = [8, 8], strides = [1, 1]} : vector<32x8xf32> to vector<8x8xf32>
    %cst_64 = arith.constant dense<0.000000e+00> : vector<8x8xf32>
    %173 = tpu.matmul %171, %172, %cst_64 {dimension_numbers = #tpu.dot_dimension_numbers<[1], [0], [0], [1], [0, 0, 1, 1], [], []>} : vector<8x8xf32>, vector<8x8xf32>, vector<8x8xf32> -> vector<8x8xf32>
    %cst_65 = arith.constant 0.353553385 : f32
    %174 = vector.broadcast %cst_65 : f32 to vector<8x8xf32>
    %175 = arith.mulf %173, %174 : vector<8x8xf32>
    %cst_66 = arith.constant dense<0xFF800000> : vector<8xf32>
    %176 = vector.multi_reduction <maximumf>, %175, %cst_66 [1] : vector<8x8xf32> to vector<8xf32>
    %177 = vector.shape_cast %176 : vector<8xf32> to vector<8x1xf32>
    %178 = vector.broadcast %177 : vector<8x1xf32> to vector<8x8xf32>
    %179 = arith.subf %175, %178 : vector<8x8xf32>
    %180 = math.exp %179 : vector<8x8xf32>
    %cst_67 = arith.constant dense<0.000000e+00> : vector<8xf32>
    %181 = vector.multi_reduction <add>, %180, %cst_67 [1] : vector<8x8xf32> to vector<8xf32>
    %182 = vector.shape_cast %181 : vector<8xf32> to vector<8x1xf32>
    %183 = tpu.reciprocal %182 {approx = true} : vector<8x1xf32> -> vector<8x1xf32>
    %184 = vector.broadcast %183 : vector<8x1xf32> to vector<8x8xf32>
    %185 = arith.mulf %180, %184 : vector<8x8xf32>
    %186 = arith.addf %170, %185 : vector<8x8xf32>
    %187 = vector.extract_strided_slice %137 {offsets = [0, 24], sizes = [8, 8], strides = [1, 1]} : vector<8x32xf32> to vector<8x8xf32>
    %188 = vector.extract_strided_slice %139 {offsets = [24, 0], sizes = [8, 8], strides = [1, 1]} : vector<32x8xf32> to vector<8x8xf32>
    %cst_68 = arith.constant dense<0.000000e+00> : vector<8x8xf32>
    %189 = tpu.matmul %187, %188, %cst_68 {dimension_numbers = #tpu.dot_dimension_numbers<[1], [0], [0], [1], [0, 0, 1, 1], [], []>} : vector<8x8xf32>, vector<8x8xf32>, vector<8x8xf32> -> vector<8x8xf32>
    %cst_69 = arith.constant 0.353553385 : f32
    %190 = vector.broadcast %cst_69 : f32 to vector<8x8xf32>
    %191 = arith.mulf %189, %190 : vector<8x8xf32>
    %cst_70 = arith.constant dense<0xFF800000> : vector<8xf32>
    %192 = vector.multi_reduction <maximumf>, %191, %cst_70 [1] : vector<8x8xf32> to vector<8xf32>
    %193 = vector.shape_cast %192 : vector<8xf32> to vector<8x1xf32>
    %194 = vector.broadcast %193 : vector<8x1xf32> to vector<8x8xf32>
    %195 = arith.subf %191, %194 : vector<8x8xf32>
    %196 = math.exp %195 : vector<8x8xf32>
    %cst_71 = arith.constant dense<0.000000e+00> : vector<8xf32>
    %197 = vector.multi_reduction <add>, %196, %cst_71 [1] : vector<8x8xf32> to vector<8xf32>
    %198 = vector.shape_cast %197 : vector<8xf32> to vector<8x1xf32>
    %199 = tpu.reciprocal %198 {approx = true} : vector<8x1xf32> -> vector<8x1xf32>
    %200 = vector.broadcast %199 : vector<8x1xf32> to vector<8x8xf32>
    %201 = arith.mulf %196, %200 : vector<8x8xf32>
    %202 = arith.addf %186, %201 : vector<8x8xf32>
    %cst_72 = arith.constant 2.500000e-01 : f32
    %203 = vector.broadcast %cst_72 : f32 to vector<8x8xf32>
    %204 = arith.mulf %202, %203 : vector<8x8xf32>
    %cst_73 = arith.constant dense<0.000000e+00> : vector<8x8xf32>
    %205 = tpu.matmul %204, %104, %cst_73 {dimension_numbers = #tpu.dot_dimension_numbers<[1], [0], [0], [1], [0, 0, 1, 1], [], []>} : vector<8x8xf32>, vector<8x8xf32>, vector<8x8xf32> -> vector<8x8xf32>
    %cst_74 = arith.constant dense<0.000000e+00> : vector<8x32xf32>
    %206 = tpu.matmul %205, %136, %cst_74 {dimension_numbers = #tpu.dot_dimension_numbers<[1], [0], [0], [1], [0, 0, 1, 1], [], []>} : vector<8x8xf32>, vector<8x32xf32>, vector<8x32xf32> -> vector<8x32xf32>
    %207 = vector.extract_strided_slice %13 {offsets = [8, 0], sizes = [8, 32], strides = [1, 1]} : vector<16x96xf32> to vector<8x32xf32>
    %208 = vector.extract_strided_slice %13 {offsets = [8, 32], sizes = [8, 32], strides = [1, 1]} : vector<16x96xf32> to vector<8x32xf32>
    %209 = tpu.transpose %208, [1, 0] : vector<8x32xf32> -> vector<32x8xf32>
    %210 = vector.extract_strided_slice %13 {offsets = [8, 64], sizes = [8, 32], strides = [1, 1]} : vector<16x96xf32> to vector<8x32xf32>
    %c0_75 = arith.constant 0 : index
    %c0_76 = arith.constant 0 : index
    %c0_77 = arith.constant 0 : index
    %211 = vector.load %arg7[%c0_75, %c0_76, %c0_77] : memref<2x32x32xf32, #tpu.memory_space<vmem>>, vector<1x32x32xf32>
    %212 = vector.shape_cast %211 : vector<1x32x32xf32> to vector<32x32xf32>
    %213 = vector.extract_strided_slice %207 {offsets = [0, 0], sizes = [8, 8], strides = [1, 1]} : vector<8x32xf32> to vector<8x8xf32>
    %214 = vector.extract_strided_slice %209 {offsets = [0, 0], sizes = [8, 8], strides = [1, 1]} : vector<32x8xf32> to vector<8x8xf32>
    %cst_78 = arith.constant dense<0.000000e+00> : vector<8x8xf32>
    %215 = tpu.matmul %213, %214, %cst_78 {dimension_numbers = #tpu.dot_dimension_numbers<[1], [0], [0], [1], [0, 0, 1, 1], [], []>} : vector<8x8xf32>, vector<8x8xf32>, vector<8x8xf32> -> vector<8x8xf32>
    %cst_79 = arith.constant 0.353553385 : f32
    %216 = vector.broadcast %cst_79 : f32 to vector<8x8xf32>
    %217 = arith.mulf %215, %216 : vector<8x8xf32>
    %cst_80 = arith.constant dense<0xFF800000> : vector<8xf32>
    %218 = vector.multi_reduction <maximumf>, %217, %cst_80 [1] : vector<8x8xf32> to vector<8xf32>
    %219 = vector.shape_cast %218 : vector<8xf32> to vector<8x1xf32>
    %220 = vector.broadcast %219 : vector<8x1xf32> to vector<8x8xf32>
    %221 = arith.subf %217, %220 : vector<8x8xf32>
    %222 = math.exp %221 : vector<8x8xf32>
    %cst_81 = arith.constant dense<0.000000e+00> : vector<8xf32>
    %223 = vector.multi_reduction <add>, %222, %cst_81 [1] : vector<8x8xf32> to vector<8xf32>
    %224 = vector.shape_cast %223 : vector<8xf32> to vector<8x1xf32>
    %225 = tpu.reciprocal %224 {approx = true} : vector<8x1xf32> -> vector<8x1xf32>
    %226 = vector.broadcast %225 : vector<8x1xf32> to vector<8x8xf32>
    %227 = arith.mulf %222, %226 : vector<8x8xf32>
    %228 = vector.extract_strided_slice %210 {offsets = [0, 0], sizes = [8, 8], strides = [1, 1]} : vector<8x32xf32> to vector<8x8xf32>
    %cst_82 = arith.constant dense<0.000000e+00> : vector<8x8xf32>
    %229 = tpu.matmul %227, %228, %cst_82 {dimension_numbers = #tpu.dot_dimension_numbers<[1], [0], [0], [1], [0, 0, 1, 1], [], []>} : vector<8x8xf32>, vector<8x8xf32>, vector<8x8xf32> -> vector<8x8xf32>
    %230 = vector.extract_strided_slice %212 {offsets = [0, 0], sizes = [8, 32], strides = [1, 1]} : vector<32x32xf32> to vector<8x32xf32>
    %cst_83 = arith.constant dense<0.000000e+00> : vector<8x32xf32>
    %231 = tpu.matmul %229, %230, %cst_83 {dimension_numbers = #tpu.dot_dimension_numbers<[1], [0], [0], [1], [0, 0, 1, 1], [], []>} : vector<8x8xf32>, vector<8x32xf32>, vector<8x32xf32> -> vector<8x32xf32>
    %232 = vector.extract_strided_slice %207 {offsets = [0, 8], sizes = [8, 8], strides = [1, 1]} : vector<8x32xf32> to vector<8x8xf32>
    %233 = vector.extract_strided_slice %209 {offsets = [8, 0], sizes = [8, 8], strides = [1, 1]} : vector<32x8xf32> to vector<8x8xf32>
    %cst_84 = arith.constant dense<0.000000e+00> : vector<8x8xf32>
    %234 = tpu.matmul %232, %233, %cst_84 {dimension_numbers = #tpu.dot_dimension_numbers<[1], [0], [0], [1], [0, 0, 1, 1], [], []>} : vector<8x8xf32>, vector<8x8xf32>, vector<8x8xf32> -> vector<8x8xf32>
    %cst_85 = arith.constant 0.353553385 : f32
    %235 = vector.broadcast %cst_85 : f32 to vector<8x8xf32>
    %236 = arith.mulf %234, %235 : vector<8x8xf32>
    %cst_86 = arith.constant dense<0xFF800000> : vector<8xf32>
    %237 = vector.multi_reduction <maximumf>, %236, %cst_86 [1] : vector<8x8xf32> to vector<8xf32>
    %238 = vector.shape_cast %237 : vector<8xf32> to vector<8x1xf32>
    %239 = vector.broadcast %238 : vector<8x1xf32> to vector<8x8xf32>
    %240 = arith.subf %236, %239 : vector<8x8xf32>
    %241 = math.exp %240 : vector<8x8xf32>
    %cst_87 = arith.constant dense<0.000000e+00> : vector<8xf32>
    %242 = vector.multi_reduction <add>, %241, %cst_87 [1] : vector<8x8xf32> to vector<8xf32>
    %243 = vector.shape_cast %242 : vector<8xf32> to vector<8x1xf32>
    %244 = tpu.reciprocal %243 {approx = true} : vector<8x1xf32> -> vector<8x1xf32>
    %245 = vector.broadcast %244 : vector<8x1xf32> to vector<8x8xf32>
    %246 = arith.mulf %241, %245 : vector<8x8xf32>
    %247 = arith.addf %227, %246 : vector<8x8xf32>
    %248 = vector.extract_strided_slice %210 {offsets = [0, 8], sizes = [8, 8], strides = [1, 1]} : vector<8x32xf32> to vector<8x8xf32>
    %cst_88 = arith.constant dense<0.000000e+00> : vector<8x8xf32>
    %249 = tpu.matmul %246, %248, %cst_88 {dimension_numbers = #tpu.dot_dimension_numbers<[1], [0], [0], [1], [0, 0, 1, 1], [], []>} : vector<8x8xf32>, vector<8x8xf32>, vector<8x8xf32> -> vector<8x8xf32>
    %250 = vector.extract_strided_slice %212 {offsets = [8, 0], sizes = [8, 32], strides = [1, 1]} : vector<32x32xf32> to vector<8x32xf32>
    %cst_89 = arith.constant dense<0.000000e+00> : vector<8x32xf32>
    %251 = tpu.matmul %249, %250, %cst_89 {dimension_numbers = #tpu.dot_dimension_numbers<[1], [0], [0], [1], [0, 0, 1, 1], [], []>} : vector<8x8xf32>, vector<8x32xf32>, vector<8x32xf32> -> vector<8x32xf32>
    %252 = arith.addf %231, %251 : vector<8x32xf32>
    %253 = vector.extract_strided_slice %207 {offsets = [0, 16], sizes = [8, 8], strides = [1, 1]} : vector<8x32xf32> to vector<8x8xf32>
    %254 = vector.extract_strided_slice %209 {offsets = [16, 0], sizes = [8, 8], strides = [1, 1]} : vector<32x8xf32> to vector<8x8xf32>
    %cst_90 = arith.constant dense<0.000000e+00> : vector<8x8xf32>
    %255 = tpu.matmul %253, %254, %cst_90 {dimension_numbers = #tpu.dot_dimension_numbers<[1], [0], [0], [1], [0, 0, 1, 1], [], []>} : vector<8x8xf32>, vector<8x8xf32>, vector<8x8xf32> -> vector<8x8xf32>
    %cst_91 = arith.constant 0.353553385 : f32
    %256 = vector.broadcast %cst_91 : f32 to vector<8x8xf32>
    %257 = arith.mulf %255, %256 : vector<8x8xf32>
    %cst_92 = arith.constant dense<0xFF800000> : vector<8xf32>
    %258 = vector.multi_reduction <maximumf>, %257, %cst_92 [1] : vector<8x8xf32> to vector<8xf32>
    %259 = vector.shape_cast %258 : vector<8xf32> to vector<8x1xf32>
    %260 = vector.broadcast %259 : vector<8x1xf32> to vector<8x8xf32>
    %261 = arith.subf %257, %260 : vector<8x8xf32>
    %262 = math.exp %261 : vector<8x8xf32>
    %cst_93 = arith.constant dense<0.000000e+00> : vector<8xf32>
    %263 = vector.multi_reduction <add>, %262, %cst_93 [1] : vector<8x8xf32> to vector<8xf32>
    %264 = vector.shape_cast %263 : vector<8xf32> to vector<8x1xf32>
    %265 = tpu.reciprocal %264 {approx = true} : vector<8x1xf32> -> vector<8x1xf32>
    %266 = vector.broadcast %265 : vector<8x1xf32> to vector<8x8xf32>
    %267 = arith.mulf %262, %266 : vector<8x8xf32>
    %268 = arith.addf %247, %267 : vector<8x8xf32>
    %269 = vector.extract_strided_slice %210 {offsets = [0, 16], sizes = [8, 8], strides = [1, 1]} : vector<8x32xf32> to vector<8x8xf32>
    %cst_94 = arith.constant dense<0.000000e+00> : vector<8x8xf32>
    %270 = tpu.matmul %267, %269, %cst_94 {dimension_numbers = #tpu.dot_dimension_numbers<[1], [0], [0], [1], [0, 0, 1, 1], [], []>} : vector<8x8xf32>, vector<8x8xf32>, vector<8x8xf32> -> vector<8x8xf32>
    %271 = vector.extract_strided_slice %212 {offsets = [16, 0], sizes = [8, 32], strides = [1, 1]} : vector<32x32xf32> to vector<8x32xf32>
    %cst_95 = arith.constant dense<0.000000e+00> : vector<8x32xf32>
    %272 = tpu.matmul %270, %271, %cst_95 {dimension_numbers = #tpu.dot_dimension_numbers<[1], [0], [0], [1], [0, 0, 1, 1], [], []>} : vector<8x8xf32>, vector<8x32xf32>, vector<8x32xf32> -> vector<8x32xf32>
    %273 = arith.addf %252, %272 : vector<8x32xf32>
    %274 = vector.extract_strided_slice %207 {offsets = [0, 24], sizes = [8, 8], strides = [1, 1]} : vector<8x32xf32> to vector<8x8xf32>
    %275 = vector.extract_strided_slice %209 {offsets = [24, 0], sizes = [8, 8], strides = [1, 1]} : vector<32x8xf32> to vector<8x8xf32>
    %cst_96 = arith.constant dense<0.000000e+00> : vector<8x8xf32>
    %276 = tpu.matmul %274, %275, %cst_96 {dimension_numbers = #tpu.dot_dimension_numbers<[1], [0], [0], [1], [0, 0, 1, 1], [], []>} : vector<8x8xf32>, vector<8x8xf32>, vector<8x8xf32> -> vector<8x8xf32>
    %cst_97 = arith.constant 0.353553385 : f32
    %277 = vector.broadcast %cst_97 : f32 to vector<8x8xf32>
    %278 = arith.mulf %276, %277 : vector<8x8xf32>
    %cst_98 = arith.constant dense<0xFF800000> : vector<8xf32>
    %279 = vector.multi_reduction <maximumf>, %278, %cst_98 [1] : vector<8x8xf32> to vector<8xf32>
    %280 = vector.shape_cast %279 : vector<8xf32> to vector<8x1xf32>
    %281 = vector.broadcast %280 : vector<8x1xf32> to vector<8x8xf32>
    %282 = arith.subf %278, %281 : vector<8x8xf32>
    %283 = math.exp %282 : vector<8x8xf32>
    %cst_99 = arith.constant dense<0.000000e+00> : vector<8xf32>
    %284 = vector.multi_reduction <add>, %283, %cst_99 [1] : vector<8x8xf32> to vector<8xf32>
    %285 = vector.shape_cast %284 : vector<8xf32> to vector<8x1xf32>
    %286 = tpu.reciprocal %285 {approx = true} : vector<8x1xf32> -> vector<8x1xf32>
    %287 = vector.broadcast %286 : vector<8x1xf32> to vector<8x8xf32>
    %288 = arith.mulf %283, %287 : vector<8x8xf32>
    %289 = arith.addf %268, %288 : vector<8x8xf32>
    %290 = vector.extract_strided_slice %210 {offsets = [0, 24], sizes = [8, 8], strides = [1, 1]} : vector<8x32xf32> to vector<8x8xf32>
    %cst_100 = arith.constant dense<0.000000e+00> : vector<8x8xf32>
    %291 = tpu.matmul %288, %290, %cst_100 {dimension_numbers = #tpu.dot_dimension_numbers<[1], [0], [0], [1], [0, 0, 1, 1], [], []>} : vector<8x8xf32>, vector<8x8xf32>, vector<8x8xf32> -> vector<8x8xf32>
    %292 = vector.extract_strided_slice %212 {offsets = [24, 0], sizes = [8, 32], strides = [1, 1]} : vector<32x32xf32> to vector<8x32xf32>
    %cst_101 = arith.constant dense<0.000000e+00> : vector<8x32xf32>
    %293 = tpu.matmul %291, %292, %cst_101 {dimension_numbers = #tpu.dot_dimension_numbers<[1], [0], [0], [1], [0, 0, 1, 1], [], []>} : vector<8x8xf32>, vector<8x32xf32>, vector<8x32xf32> -> vector<8x32xf32>
    %294 = arith.addf %273, %293 : vector<8x32xf32>
    %cst_102 = arith.constant 2.500000e-01 : f32
    %295 = vector.broadcast %cst_102 : f32 to vector<8x8xf32>
    %296 = arith.mulf %289, %295 : vector<8x8xf32>
    %297 = vector.extract_strided_slice %14 {offsets = [8, 0], sizes = [8, 32], strides = [1, 1]} : vector<16x32xf32> to vector<8x32xf32>
    %298 = arith.addf %297, %294 : vector<8x32xf32>
    %c0_103 = arith.constant 0 : index
    %c0_104 = arith.constant 0 : index
    %c0_105 = arith.constant 0 : index
    %299 = vector.load %arg8[%c0_103, %c0_104, %c0_105] : memref<2x1x32xf32, #tpu.memory_space<vmem>>, vector<1x1x32xf32>
    %300 = vector.shape_cast %299 : vector<1x1x32xf32> to vector<1x32xf32>
    %301 = vector.broadcast %300 : vector<1x32xf32> to vector<8x32xf32>
    %302 = arith.addf %298, %301 : vector<8x32xf32>
    %c0_106 = arith.constant 0 : index
    %c0_107 = arith.constant 0 : index
    %c0_108 = arith.constant 0 : index
    %303 = vector.load %arg9[%c0_106, %c0_107, %c0_108] : memref<2x1x32xf32, #tpu.memory_space<vmem>>, vector<1x1x32xf32>
    %304 = vector.shape_cast %303 : vector<1x1x32xf32> to vector<1x32xf32>
    %c0_109 = arith.constant 0 : index
    %c0_110 = arith.constant 0 : index
    %c0_111 = arith.constant 0 : index
    %305 = vector.load %arg10[%c0_109, %c0_110, %c0_111] : memref<2x1x32xf32, #tpu.memory_space<vmem>>, vector<1x1x32xf32>
    %306 = vector.shape_cast %305 : vector<1x1x32xf32> to vector<1x32xf32>
    %cst_112 = arith.constant dense<0.000000e+00> : vector<8xf32>
    %307 = vector.multi_reduction <add>, %302, %cst_112 [1] : vector<8x32xf32> to vector<8xf32>
    %308 = vector.shape_cast %307 : vector<8xf32> to vector<8x1xf32>
    %cst_113 = arith.constant 3.200000e+01 : f32
    %309 = vector.broadcast %cst_113 : f32 to vector<8x1xf32>
    %310 = arith.divf %308, %309 : vector<8x1xf32>
    %311 = vector.broadcast %310 : vector<8x1xf32> to vector<8x32xf32>
    %312 = arith.subf %302, %311 : vector<8x32xf32>
    %313 = arith.mulf %312, %312 : vector<8x32xf32>
    %cst_114 = arith.constant dense<0.000000e+00> : vector<8xf32>
    %314 = vector.multi_reduction <add>, %313, %cst_114 [1] : vector<8x32xf32> to vector<8xf32>
    %315 = vector.shape_cast %314 : vector<8xf32> to vector<8x1xf32>
    %cst_115 = arith.constant 3.200000e+01 : f32
    %316 = vector.broadcast %cst_115 : f32 to vector<8x1xf32>
    %317 = arith.divf %315, %316 : vector<8x1xf32>
    %318 = vector.broadcast %310 : vector<8x1xf32> to vector<8x32xf32>
    %319 = arith.subf %302, %318 : vector<8x32xf32>
    %cst_116 = arith.constant 9.99999974E-6 : f32
    %320 = vector.broadcast %cst_116 : f32 to vector<8x1xf32>
    %321 = arith.addf %317, %320 : vector<8x1xf32>
    %322 = math.rsqrt %321 : vector<8x1xf32>
    %323 = vector.broadcast %322 : vector<8x1xf32> to vector<8x32xf32>
    %324 = arith.mulf %319, %323 : vector<8x32xf32>
    %325 = vector.broadcast %304 : vector<1x32xf32> to vector<8x32xf32>
    %326 = arith.mulf %324, %325 : vector<8x32xf32>
    %327 = vector.broadcast %306 : vector<1x32xf32> to vector<8x32xf32>
    %328 = arith.addf %326, %327 : vector<8x32xf32>
    %329 = vector.extract_strided_slice %10 {offsets = [8, 0], sizes = [8, 32], strides = [1, 1]} : vector<16x96xf32> to vector<8x32xf32>
    %330 = vector.extract_strided_slice %10 {offsets = [8, 32], sizes = [8, 32], strides = [1, 1]} : vector<16x96xf32> to vector<8x32xf32>
    %331 = tpu.transpose %330, [1, 0] : vector<8x32xf32> -> vector<32x8xf32>
    %332 = vector.extract_strided_slice %329 {offsets = [0, 0], sizes = [8, 8], strides = [1, 1]} : vector<8x32xf32> to vector<8x8xf32>
    %333 = vector.extract_strided_slice %331 {offsets = [0, 0], sizes = [8, 8], strides = [1, 1]} : vector<32x8xf32> to vector<8x8xf32>
    %cst_117 = arith.constant dense<0.000000e+00> : vector<8x8xf32>
    %334 = tpu.matmul %332, %333, %cst_117 {dimension_numbers = #tpu.dot_dimension_numbers<[1], [0], [0], [1], [0, 0, 1, 1], [], []>} : vector<8x8xf32>, vector<8x8xf32>, vector<8x8xf32> -> vector<8x8xf32>
    %cst_118 = arith.constant 0.353553385 : f32
    %335 = vector.broadcast %cst_118 : f32 to vector<8x8xf32>
    %336 = arith.mulf %334, %335 : vector<8x8xf32>
    %cst_119 = arith.constant dense<0xFF800000> : vector<8xf32>
    %337 = vector.multi_reduction <maximumf>, %336, %cst_119 [1] : vector<8x8xf32> to vector<8xf32>
    %338 = vector.shape_cast %337 : vector<8xf32> to vector<8x1xf32>
    %339 = vector.broadcast %338 : vector<8x1xf32> to vector<8x8xf32>
    %340 = arith.subf %336, %339 : vector<8x8xf32>
    %341 = math.exp %340 : vector<8x8xf32>
    %cst_120 = arith.constant dense<0.000000e+00> : vector<8xf32>
    %342 = vector.multi_reduction <add>, %341, %cst_120 [1] : vector<8x8xf32> to vector<8xf32>
    %343 = vector.shape_cast %342 : vector<8xf32> to vector<8x1xf32>
    %344 = tpu.reciprocal %343 {approx = true} : vector<8x1xf32> -> vector<8x1xf32>
    %345 = vector.broadcast %344 : vector<8x1xf32> to vector<8x8xf32>
    %346 = arith.mulf %341, %345 : vector<8x8xf32>
    %347 = vector.extract_strided_slice %329 {offsets = [0, 8], sizes = [8, 8], strides = [1, 1]} : vector<8x32xf32> to vector<8x8xf32>
    %348 = vector.extract_strided_slice %331 {offsets = [8, 0], sizes = [8, 8], strides = [1, 1]} : vector<32x8xf32> to vector<8x8xf32>
    %cst_121 = arith.constant dense<0.000000e+00> : vector<8x8xf32>
    %349 = tpu.matmul %347, %348, %cst_121 {dimension_numbers = #tpu.dot_dimension_numbers<[1], [0], [0], [1], [0, 0, 1, 1], [], []>} : vector<8x8xf32>, vector<8x8xf32>, vector<8x8xf32> -> vector<8x8xf32>
    %cst_122 = arith.constant 0.353553385 : f32
    %350 = vector.broadcast %cst_122 : f32 to vector<8x8xf32>
    %351 = arith.mulf %349, %350 : vector<8x8xf32>
    %cst_123 = arith.constant dense<0xFF800000> : vector<8xf32>
    %352 = vector.multi_reduction <maximumf>, %351, %cst_123 [1] : vector<8x8xf32> to vector<8xf32>
    %353 = vector.shape_cast %352 : vector<8xf32> to vector<8x1xf32>
    %354 = vector.broadcast %353 : vector<8x1xf32> to vector<8x8xf32>
    %355 = arith.subf %351, %354 : vector<8x8xf32>
    %356 = math.exp %355 : vector<8x8xf32>
    %cst_124 = arith.constant dense<0.000000e+00> : vector<8xf32>
    %357 = vector.multi_reduction <add>, %356, %cst_124 [1] : vector<8x8xf32> to vector<8xf32>
    %358 = vector.shape_cast %357 : vector<8xf32> to vector<8x1xf32>
    %359 = tpu.reciprocal %358 {approx = true} : vector<8x1xf32> -> vector<8x1xf32>
    %360 = vector.broadcast %359 : vector<8x1xf32> to vector<8x8xf32>
    %361 = arith.mulf %356, %360 : vector<8x8xf32>
    %362 = arith.addf %346, %361 : vector<8x8xf32>
    %363 = vector.extract_strided_slice %329 {offsets = [0, 16], sizes = [8, 8], strides = [1, 1]} : vector<8x32xf32> to vector<8x8xf32>
    %364 = vector.extract_strided_slice %331 {offsets = [16, 0], sizes = [8, 8], strides = [1, 1]} : vector<32x8xf32> to vector<8x8xf32>
    %cst_125 = arith.constant dense<0.000000e+00> : vector<8x8xf32>
    %365 = tpu.matmul %363, %364, %cst_125 {dimension_numbers = #tpu.dot_dimension_numbers<[1], [0], [0], [1], [0, 0, 1, 1], [], []>} : vector<8x8xf32>, vector<8x8xf32>, vector<8x8xf32> -> vector<8x8xf32>
    %cst_126 = arith.constant 0.353553385 : f32
    %366 = vector.broadcast %cst_126 : f32 to vector<8x8xf32>
    %367 = arith.mulf %365, %366 : vector<8x8xf32>
    %cst_127 = arith.constant dense<0xFF800000> : vector<8xf32>
    %368 = vector.multi_reduction <maximumf>, %367, %cst_127 [1] : vector<8x8xf32> to vector<8xf32>
    %369 = vector.shape_cast %368 : vector<8xf32> to vector<8x1xf32>
    %370 = vector.broadcast %369 : vector<8x1xf32> to vector<8x8xf32>
    %371 = arith.subf %367, %370 : vector<8x8xf32>
    %372 = math.exp %371 : vector<8x8xf32>
    %cst_128 = arith.constant dense<0.000000e+00> : vector<8xf32>
    %373 = vector.multi_reduction <add>, %372, %cst_128 [1] : vector<8x8xf32> to vector<8xf32>
    %374 = vector.shape_cast %373 : vector<8xf32> to vector<8x1xf32>
    %375 = tpu.reciprocal %374 {approx = true} : vector<8x1xf32> -> vector<8x1xf32>
    %376 = vector.broadcast %375 : vector<8x1xf32> to vector<8x8xf32>
    %377 = arith.mulf %372, %376 : vector<8x8xf32>
    %378 = arith.addf %362, %377 : vector<8x8xf32>
    %379 = vector.extract_strided_slice %329 {offsets = [0, 24], sizes = [8, 8], strides = [1, 1]} : vector<8x32xf32> to vector<8x8xf32>
    %380 = vector.extract_strided_slice %331 {offsets = [24, 0], sizes = [8, 8], strides = [1, 1]} : vector<32x8xf32> to vector<8x8xf32>
    %cst_129 = arith.constant dense<0.000000e+00> : vector<8x8xf32>
    %381 = tpu.matmul %379, %380, %cst_129 {dimension_numbers = #tpu.dot_dimension_numbers<[1], [0], [0], [1], [0, 0, 1, 1], [], []>} : vector<8x8xf32>, vector<8x8xf32>, vector<8x8xf32> -> vector<8x8xf32>
    %cst_130 = arith.constant 0.353553385 : f32
    %382 = vector.broadcast %cst_130 : f32 to vector<8x8xf32>
    %383 = arith.mulf %381, %382 : vector<8x8xf32>
    %cst_131 = arith.constant dense<0xFF800000> : vector<8xf32>
    %384 = vector.multi_reduction <maximumf>, %383, %cst_131 [1] : vector<8x8xf32> to vector<8xf32>
    %385 = vector.shape_cast %384 : vector<8xf32> to vector<8x1xf32>
    %386 = vector.broadcast %385 : vector<8x1xf32> to vector<8x8xf32>
    %387 = arith.subf %383, %386 : vector<8x8xf32>
    %388 = math.exp %387 : vector<8x8xf32>
    %cst_132 = arith.constant dense<0.000000e+00> : vector<8xf32>
    %389 = vector.multi_reduction <add>, %388, %cst_132 [1] : vector<8x8xf32> to vector<8xf32>
    %390 = vector.shape_cast %389 : vector<8xf32> to vector<8x1xf32>
    %391 = tpu.reciprocal %390 {approx = true} : vector<8x1xf32> -> vector<8x1xf32>
    %392 = vector.broadcast %391 : vector<8x1xf32> to vector<8x8xf32>
    %393 = arith.mulf %388, %392 : vector<8x8xf32>
    %394 = arith.addf %378, %393 : vector<8x8xf32>
    %cst_133 = arith.constant 2.500000e-01 : f32
    %395 = vector.broadcast %cst_133 : f32 to vector<8x8xf32>
    %396 = arith.mulf %394, %395 : vector<8x8xf32>
    %cst_134 = arith.constant dense<0.000000e+00> : vector<8x8xf32>
    %397 = tpu.matmul %396, %296, %cst_134 {dimension_numbers = #tpu.dot_dimension_numbers<[1], [0], [0], [1], [0, 0, 1, 1], [], []>} : vector<8x8xf32>, vector<8x8xf32>, vector<8x8xf32> -> vector<8x8xf32>
    %cst_135 = arith.constant dense<0.000000e+00> : vector<8x32xf32>
    %398 = tpu.matmul %397, %328, %cst_135 {dimension_numbers = #tpu.dot_dimension_numbers<[1], [0], [0], [1], [0, 0, 1, 1], [], []>} : vector<8x8xf32>, vector<8x32xf32>, vector<8x32xf32> -> vector<8x32xf32>
    %399 = tpu.concatenate %206, %398 in 0 : vector<8x32xf32>, vector<8x32xf32> -> vector<16x32xf32>
    %c0_136 = arith.constant 0 : index
    %c0_137 = arith.constant 0 : index
    %c0_138 = arith.constant 0 : index
    %400 = vector.load %arg11[%c0_136, %c0_137, %c0_138] : memref<2x32x32xbf16, #tpu.memory_space<vmem>>, vector<1x32x32xbf16>
    %401 = vector.shape_cast %400 : vector<1x32x32xbf16> to vector<32x32xbf16>
    %402 = arith.truncf %399 : vector<16x32xf32> to vector<16x32xbf16>
    %cst_139 = arith.constant dense<0.000000e+00> : vector<16x32xf32>
    %403 = tpu.matmul %402, %401, %cst_139 {dimension_numbers = #tpu.dot_dimension_numbers<[1], [0], [0], [1], [0, 0, 1, 1], [], []>} : vector<16x32xbf16>, vector<32x32xbf16>, vector<16x32xf32> -> vector<16x32xf32>
    %c0_140 = arith.constant 0 : index
    %c0_141 = arith.constant 0 : index
    %c0_142 = arith.constant 0 : index
    %404 = vector.load %arg12[%c0_140, %c0_141, %c0_142] : memref<2x1x32xf32, #tpu.memory_space<vmem>>, vector<1x1x32xf32>
    %405 = vector.shape_cast %404 : vector<1x1x32xf32> to vector<1x32xf32>
    %406 = vector.broadcast %405 : vector<1x32xf32> to vector<16x32xf32>
    %407 = arith.addf %403, %406 : vector<16x32xf32>
    %c0_143 = arith.constant 0 : index
    %c0_144 = arith.constant 0 : index
    %c0_145 = arith.constant 0 : index
    %408 = vector.load %arg13[%c0_143, %c0_144, %c0_145] : memref<2x32x64xbf16, #tpu.memory_space<vmem>>, vector<1x32x64xbf16>
    %409 = vector.shape_cast %408 : vector<1x32x64xbf16> to vector<32x64xbf16>
    %410 = arith.truncf %1 : vector<32x32xf32> to vector<32x32xbf16>
    %cst_146 = arith.constant dense<0.000000e+00> : vector<32x64xf32>
    %411 = tpu.matmul %410, %409, %cst_146 {dimension_numbers = #tpu.dot_dimension_numbers<[1], [0], [0], [1], [0, 0, 1, 1], [], []>} : vector<32x32xbf16>, vector<32x64xbf16>, vector<32x64xf32> -> vector<32x64xf32>
    %c0_147 = arith.constant 0 : index
    %c0_148 = arith.constant 0 : index
    %c0_149 = arith.constant 0 : index
    %412 = vector.load %arg14[%c0_147, %c0_148, %c0_149] : memref<2x1x64xf32, #tpu.memory_space<vmem>>, vector<1x1x64xf32>
    %413 = vector.shape_cast %412 : vector<1x1x64xf32> to vector<1x64xf32>
    %414 = vector.broadcast %413 : vector<1x64xf32> to vector<32x64xf32>
    %415 = arith.addf %411, %414 : vector<32x64xf32>
    %416 = vector.extract_strided_slice %415 {offsets = [0, 0], sizes = [16, 32], strides = [1, 1]} : vector<32x64xf32> to vector<16x32xf32>
    %417 = tpu.transpose %416, [1, 0] : vector<16x32xf32> -> vector<32x16xf32>
    %418 = vector.extract_strided_slice %415 {offsets = [0, 32], sizes = [16, 32], strides = [1, 1]} : vector<32x64xf32> to vector<16x32xf32>
    %419 = vector.extract_strided_slice %407 {offsets = [0, 0], sizes = [8, 32], strides = [1, 1]} : vector<16x32xf32> to vector<8x32xf32>
    %c0_150 = arith.constant 0 : index
    %c0_151 = arith.constant 0 : index
    %c0_152 = arith.constant 0 : index
    %420 = vector.load %arg15[%c0_150, %c0_151, %c0_152] : memref<2x32x32xf32, #tpu.memory_space<vmem>>, vector<1x32x32xf32>
    %421 = vector.shape_cast %420 : vector<1x32x32xf32> to vector<32x32xf32>
    %422 = vector.extract_strided_slice %419 {offsets = [0, 0], sizes = [8, 8], strides = [1, 1]} : vector<8x32xf32> to vector<8x8xf32>
    %423 = vector.extract_strided_slice %417 {offsets = [0, 0], sizes = [8, 16], strides = [1, 1]} : vector<32x16xf32> to vector<8x16xf32>
    %cst_153 = arith.constant dense<0.000000e+00> : vector<8x16xf32>
    %424 = tpu.matmul %422, %423, %cst_153 {dimension_numbers = #tpu.dot_dimension_numbers<[1], [0], [0], [1], [0, 0, 1, 1], [], []>} : vector<8x8xf32>, vector<8x16xf32>, vector<8x16xf32> -> vector<8x16xf32>
    %cst_154 = arith.constant 0.353553385 : f32
    %425 = vector.broadcast %cst_154 : f32 to vector<8x16xf32>
    %426 = arith.mulf %424, %425 : vector<8x16xf32>
    %cst_155 = arith.constant dense<0xFF800000> : vector<8xf32>
    %427 = vector.multi_reduction <maximumf>, %426, %cst_155 [1] : vector<8x16xf32> to vector<8xf32>
    %428 = vector.shape_cast %427 : vector<8xf32> to vector<8x1xf32>
    %429 = vector.broadcast %428 : vector<8x1xf32> to vector<8x16xf32>
    %430 = arith.subf %426, %429 : vector<8x16xf32>
    %431 = math.exp %430 : vector<8x16xf32>
    %cst_156 = arith.constant dense<0.000000e+00> : vector<8xf32>
    %432 = vector.multi_reduction <add>, %431, %cst_156 [1] : vector<8x16xf32> to vector<8xf32>
    %433 = vector.shape_cast %432 : vector<8xf32> to vector<8x1xf32>
    %434 = tpu.reciprocal %433 {approx = true} : vector<8x1xf32> -> vector<8x1xf32>
    %435 = vector.broadcast %434 : vector<8x1xf32> to vector<8x16xf32>
    %436 = arith.mulf %431, %435 : vector<8x16xf32>
    %437 = vector.extract_strided_slice %418 {offsets = [0, 0], sizes = [16, 8], strides = [1, 1]} : vector<16x32xf32> to vector<16x8xf32>
    %cst_157 = arith.constant dense<0.000000e+00> : vector<8x8xf32>
    %438 = tpu.matmul %436, %437, %cst_157 {dimension_numbers = #tpu.dot_dimension_numbers<[1], [0], [0], [1], [0, 0, 1, 1], [], []>} : vector<8x16xf32>, vector<16x8xf32>, vector<8x8xf32> -> vector<8x8xf32>
    %439 = vector.extract_strided_slice %421 {offsets = [0, 0], sizes = [8, 32], strides = [1, 1]} : vector<32x32xf32> to vector<8x32xf32>
    %cst_158 = arith.constant dense<0.000000e+00> : vector<8x32xf32>
    %440 = tpu.matmul %438, %439, %cst_158 {dimension_numbers = #tpu.dot_dimension_numbers<[1], [0], [0], [1], [0, 0, 1, 1], [], []>} : vector<8x8xf32>, vector<8x32xf32>, vector<8x32xf32> -> vector<8x32xf32>
    %441 = vector.extract_strided_slice %419 {offsets = [0, 8], sizes = [8, 8], strides = [1, 1]} : vector<8x32xf32> to vector<8x8xf32>
    %442 = vector.extract_strided_slice %417 {offsets = [8, 0], sizes = [8, 16], strides = [1, 1]} : vector<32x16xf32> to vector<8x16xf32>
    %cst_159 = arith.constant dense<0.000000e+00> : vector<8x16xf32>
    %443 = tpu.matmul %441, %442, %cst_159 {dimension_numbers = #tpu.dot_dimension_numbers<[1], [0], [0], [1], [0, 0, 1, 1], [], []>} : vector<8x8xf32>, vector<8x16xf32>, vector<8x16xf32> -> vector<8x16xf32>
    %cst_160 = arith.constant 0.353553385 : f32
    %444 = vector.broadcast %cst_160 : f32 to vector<8x16xf32>
    %445 = arith.mulf %443, %444 : vector<8x16xf32>
    %cst_161 = arith.constant dense<0xFF800000> : vector<8xf32>
    %446 = vector.multi_reduction <maximumf>, %445, %cst_161 [1] : vector<8x16xf32> to vector<8xf32>
    %447 = vector.shape_cast %446 : vector<8xf32> to vector<8x1xf32>
    %448 = vector.broadcast %447 : vector<8x1xf32> to vector<8x16xf32>
    %449 = arith.subf %445, %448 : vector<8x16xf32>
    %450 = math.exp %449 : vector<8x16xf32>
    %cst_162 = arith.constant dense<0.000000e+00> : vector<8xf32>
    %451 = vector.multi_reduction <add>, %450, %cst_162 [1] : vector<8x16xf32> to vector<8xf32>
    %452 = vector.shape_cast %451 : vector<8xf32> to vector<8x1xf32>
    %453 = tpu.reciprocal %452 {approx = true} : vector<8x1xf32> -> vector<8x1xf32>
    %454 = vector.broadcast %453 : vector<8x1xf32> to vector<8x16xf32>
    %455 = arith.mulf %450, %454 : vector<8x16xf32>
    %456 = vector.extract_strided_slice %418 {offsets = [0, 8], sizes = [16, 8], strides = [1, 1]} : vector<16x32xf32> to vector<16x8xf32>
    %cst_163 = arith.constant dense<0.000000e+00> : vector<8x8xf32>
    %457 = tpu.matmul %455, %456, %cst_163 {dimension_numbers = #tpu.dot_dimension_numbers<[1], [0], [0], [1], [0, 0, 1, 1], [], []>} : vector<8x16xf32>, vector<16x8xf32>, vector<8x8xf32> -> vector<8x8xf32>
    %458 = vector.extract_strided_slice %421 {offsets = [8, 0], sizes = [8, 32], strides = [1, 1]} : vector<32x32xf32> to vector<8x32xf32>
    %cst_164 = arith.constant dense<0.000000e+00> : vector<8x32xf32>
    %459 = tpu.matmul %457, %458, %cst_164 {dimension_numbers = #tpu.dot_dimension_numbers<[1], [0], [0], [1], [0, 0, 1, 1], [], []>} : vector<8x8xf32>, vector<8x32xf32>, vector<8x32xf32> -> vector<8x32xf32>
    %460 = arith.addf %440, %459 : vector<8x32xf32>
    %461 = vector.extract_strided_slice %419 {offsets = [0, 16], sizes = [8, 8], strides = [1, 1]} : vector<8x32xf32> to vector<8x8xf32>
    %462 = vector.extract_strided_slice %417 {offsets = [16, 0], sizes = [8, 16], strides = [1, 1]} : vector<32x16xf32> to vector<8x16xf32>
    %cst_165 = arith.constant dense<0.000000e+00> : vector<8x16xf32>
    %463 = tpu.matmul %461, %462, %cst_165 {dimension_numbers = #tpu.dot_dimension_numbers<[1], [0], [0], [1], [0, 0, 1, 1], [], []>} : vector<8x8xf32>, vector<8x16xf32>, vector<8x16xf32> -> vector<8x16xf32>
    %cst_166 = arith.constant 0.353553385 : f32
    %464 = vector.broadcast %cst_166 : f32 to vector<8x16xf32>
    %465 = arith.mulf %463, %464 : vector<8x16xf32>
    %cst_167 = arith.constant dense<0xFF800000> : vector<8xf32>
    %466 = vector.multi_reduction <maximumf>, %465, %cst_167 [1] : vector<8x16xf32> to vector<8xf32>
    %467 = vector.shape_cast %466 : vector<8xf32> to vector<8x1xf32>
    %468 = vector.broadcast %467 : vector<8x1xf32> to vector<8x16xf32>
    %469 = arith.subf %465, %468 : vector<8x16xf32>
    %470 = math.exp %469 : vector<8x16xf32>
    %cst_168 = arith.constant dense<0.000000e+00> : vector<8xf32>
    %471 = vector.multi_reduction <add>, %470, %cst_168 [1] : vector<8x16xf32> to vector<8xf32>
    %472 = vector.shape_cast %471 : vector<8xf32> to vector<8x1xf32>
    %473 = tpu.reciprocal %472 {approx = true} : vector<8x1xf32> -> vector<8x1xf32>
    %474 = vector.broadcast %473 : vector<8x1xf32> to vector<8x16xf32>
    %475 = arith.mulf %470, %474 : vector<8x16xf32>
    %476 = vector.extract_strided_slice %418 {offsets = [0, 16], sizes = [16, 8], strides = [1, 1]} : vector<16x32xf32> to vector<16x8xf32>
    %cst_169 = arith.constant dense<0.000000e+00> : vector<8x8xf32>
    %477 = tpu.matmul %475, %476, %cst_169 {dimension_numbers = #tpu.dot_dimension_numbers<[1], [0], [0], [1], [0, 0, 1, 1], [], []>} : vector<8x16xf32>, vector<16x8xf32>, vector<8x8xf32> -> vector<8x8xf32>
    %478 = vector.extract_strided_slice %421 {offsets = [16, 0], sizes = [8, 32], strides = [1, 1]} : vector<32x32xf32> to vector<8x32xf32>
    %cst_170 = arith.constant dense<0.000000e+00> : vector<8x32xf32>
    %479 = tpu.matmul %477, %478, %cst_170 {dimension_numbers = #tpu.dot_dimension_numbers<[1], [0], [0], [1], [0, 0, 1, 1], [], []>} : vector<8x8xf32>, vector<8x32xf32>, vector<8x32xf32> -> vector<8x32xf32>
    %480 = arith.addf %460, %479 : vector<8x32xf32>
    %481 = vector.extract_strided_slice %419 {offsets = [0, 24], sizes = [8, 8], strides = [1, 1]} : vector<8x32xf32> to vector<8x8xf32>
    %482 = vector.extract_strided_slice %417 {offsets = [24, 0], sizes = [8, 16], strides = [1, 1]} : vector<32x16xf32> to vector<8x16xf32>
    %cst_171 = arith.constant dense<0.000000e+00> : vector<8x16xf32>
    %483 = tpu.matmul %481, %482, %cst_171 {dimension_numbers = #tpu.dot_dimension_numbers<[1], [0], [0], [1], [0, 0, 1, 1], [], []>} : vector<8x8xf32>, vector<8x16xf32>, vector<8x16xf32> -> vector<8x16xf32>
    %cst_172 = arith.constant 0.353553385 : f32
    %484 = vector.broadcast %cst_172 : f32 to vector<8x16xf32>
    %485 = arith.mulf %483, %484 : vector<8x16xf32>
    %cst_173 = arith.constant dense<0xFF800000> : vector<8xf32>
    %486 = vector.multi_reduction <maximumf>, %485, %cst_173 [1] : vector<8x16xf32> to vector<8xf32>
    %487 = vector.shape_cast %486 : vector<8xf32> to vector<8x1xf32>
    %488 = vector.broadcast %487 : vector<8x1xf32> to vector<8x16xf32>
    %489 = arith.subf %485, %488 : vector<8x16xf32>
    %490 = math.exp %489 : vector<8x16xf32>
    %cst_174 = arith.constant dense<0.000000e+00> : vector<8xf32>
    %491 = vector.multi_reduction <add>, %490, %cst_174 [1] : vector<8x16xf32> to vector<8xf32>
    %492 = vector.shape_cast %491 : vector<8xf32> to vector<8x1xf32>
    %493 = tpu.reciprocal %492 {approx = true} : vector<8x1xf32> -> vector<8x1xf32>
    %494 = vector.broadcast %493 : vector<8x1xf32> to vector<8x16xf32>
    %495 = arith.mulf %490, %494 : vector<8x16xf32>
    %496 = vector.extract_strided_slice %418 {offsets = [0, 24], sizes = [16, 8], strides = [1, 1]} : vector<16x32xf32> to vector<16x8xf32>
    %cst_175 = arith.constant dense<0.000000e+00> : vector<8x8xf32>
    %497 = tpu.matmul %495, %496, %cst_175 {dimension_numbers = #tpu.dot_dimension_numbers<[1], [0], [0], [1], [0, 0, 1, 1], [], []>} : vector<8x16xf32>, vector<16x8xf32>, vector<8x8xf32> -> vector<8x8xf32>
    %498 = vector.extract_strided_slice %421 {offsets = [24, 0], sizes = [8, 32], strides = [1, 1]} : vector<32x32xf32> to vector<8x32xf32>
    %cst_176 = arith.constant dense<0.000000e+00> : vector<8x32xf32>
    %499 = tpu.matmul %497, %498, %cst_176 {dimension_numbers = #tpu.dot_dimension_numbers<[1], [0], [0], [1], [0, 0, 1, 1], [], []>} : vector<8x8xf32>, vector<8x32xf32>, vector<8x32xf32> -> vector<8x32xf32>
    %500 = arith.addf %480, %499 : vector<8x32xf32>
    %501 = vector.extract_strided_slice %399 {offsets = [0, 0], sizes = [8, 32], strides = [1, 1]} : vector<16x32xf32> to vector<8x32xf32>
    %502 = arith.addf %501, %500 : vector<8x32xf32>
    %c0_177 = arith.constant 0 : index
    %c0_178 = arith.constant 0 : index
    %c0_179 = arith.constant 0 : index
    %503 = vector.load %arg16[%c0_177, %c0_178, %c0_179] : memref<2x1x32xf32, #tpu.memory_space<vmem>>, vector<1x1x32xf32>
    %504 = vector.shape_cast %503 : vector<1x1x32xf32> to vector<1x32xf32>
    %505 = vector.broadcast %504 : vector<1x32xf32> to vector<8x32xf32>
    %506 = arith.addf %502, %505 : vector<8x32xf32>
    %c0_180 = arith.constant 0 : index
    %c0_181 = arith.constant 0 : index
    %c0_182 = arith.constant 0 : index
    %507 = vector.load %arg17[%c0_180, %c0_181, %c0_182] : memref<2x1x32xf32, #tpu.memory_space<vmem>>, vector<1x1x32xf32>
    %508 = vector.shape_cast %507 : vector<1x1x32xf32> to vector<1x32xf32>
    %c0_183 = arith.constant 0 : index
    %c0_184 = arith.constant 0 : index
    %c0_185 = arith.constant 0 : index
    %509 = vector.load %arg18[%c0_183, %c0_184, %c0_185] : memref<2x1x32xf32, #tpu.memory_space<vmem>>, vector<1x1x32xf32>
    %510 = vector.shape_cast %509 : vector<1x1x32xf32> to vector<1x32xf32>
    %cst_186 = arith.constant dense<0.000000e+00> : vector<8xf32>
    %511 = vector.multi_reduction <add>, %506, %cst_186 [1] : vector<8x32xf32> to vector<8xf32>
    %512 = vector.shape_cast %511 : vector<8xf32> to vector<8x1xf32>
    %cst_187 = arith.constant 3.200000e+01 : f32
    %513 = vector.broadcast %cst_187 : f32 to vector<8x1xf32>
    %514 = arith.divf %512, %513 : vector<8x1xf32>
    %515 = vector.broadcast %514 : vector<8x1xf32> to vector<8x32xf32>
    %516 = arith.subf %506, %515 : vector<8x32xf32>
    %517 = arith.mulf %516, %516 : vector<8x32xf32>
    %cst_188 = arith.constant dense<0.000000e+00> : vector<8xf32>
    %518 = vector.multi_reduction <add>, %517, %cst_188 [1] : vector<8x32xf32> to vector<8xf32>
    %519 = vector.shape_cast %518 : vector<8xf32> to vector<8x1xf32>
    %cst_189 = arith.constant 3.200000e+01 : f32
    %520 = vector.broadcast %cst_189 : f32 to vector<8x1xf32>
    %521 = arith.divf %519, %520 : vector<8x1xf32>
    %522 = vector.broadcast %514 : vector<8x1xf32> to vector<8x32xf32>
    %523 = arith.subf %506, %522 : vector<8x32xf32>
    %cst_190 = arith.constant 9.99999974E-6 : f32
    %524 = vector.broadcast %cst_190 : f32 to vector<8x1xf32>
    %525 = arith.addf %521, %524 : vector<8x1xf32>
    %526 = math.rsqrt %525 : vector<8x1xf32>
    %527 = vector.broadcast %526 : vector<8x1xf32> to vector<8x32xf32>
    %528 = arith.mulf %523, %527 : vector<8x32xf32>
    %529 = vector.broadcast %508 : vector<1x32xf32> to vector<8x32xf32>
    %530 = arith.mulf %528, %529 : vector<8x32xf32>
    %531 = vector.broadcast %510 : vector<1x32xf32> to vector<8x32xf32>
    %532 = arith.addf %530, %531 : vector<8x32xf32>
    %533 = vector.extract_strided_slice %415 {offsets = [16, 0], sizes = [16, 32], strides = [1, 1]} : vector<32x64xf32> to vector<16x32xf32>
    %534 = tpu.transpose %533, [1, 0] : vector<16x32xf32> -> vector<32x16xf32>
    %535 = vector.extract_strided_slice %415 {offsets = [16, 32], sizes = [16, 32], strides = [1, 1]} : vector<32x64xf32> to vector<16x32xf32>
    %536 = vector.extract_strided_slice %407 {offsets = [8, 0], sizes = [8, 32], strides = [1, 1]} : vector<16x32xf32> to vector<8x32xf32>
    %c0_191 = arith.constant 0 : index
    %c0_192 = arith.constant 0 : index
    %c0_193 = arith.constant 0 : index
    %537 = vector.load %arg15[%c0_191, %c0_192, %c0_193] : memref<2x32x32xf32, #tpu.memory_space<vmem>>, vector<1x32x32xf32>
    %538 = vector.shape_cast %537 : vector<1x32x32xf32> to vector<32x32xf32>
    %539 = vector.extract_strided_slice %536 {offsets = [0, 0], sizes = [8, 8], strides = [1, 1]} : vector<8x32xf32> to vector<8x8xf32>
    %540 = vector.extract_strided_slice %534 {offsets = [0, 0], sizes = [8, 16], strides = [1, 1]} : vector<32x16xf32> to vector<8x16xf32>
    %cst_194 = arith.constant dense<0.000000e+00> : vector<8x16xf32>
    %541 = tpu.matmul %539, %540, %cst_194 {dimension_numbers = #tpu.dot_dimension_numbers<[1], [0], [0], [1], [0, 0, 1, 1], [], []>} : vector<8x8xf32>, vector<8x16xf32>, vector<8x16xf32> -> vector<8x16xf32>
    %cst_195 = arith.constant 0.353553385 : f32
    %542 = vector.broadcast %cst_195 : f32 to vector<8x16xf32>
    %543 = arith.mulf %541, %542 : vector<8x16xf32>
    %cst_196 = arith.constant dense<0xFF800000> : vector<8xf32>
    %544 = vector.multi_reduction <maximumf>, %543, %cst_196 [1] : vector<8x16xf32> to vector<8xf32>
    %545 = vector.shape_cast %544 : vector<8xf32> to vector<8x1xf32>
    %546 = vector.broadcast %545 : vector<8x1xf32> to vector<8x16xf32>
    %547 = arith.subf %543, %546 : vector<8x16xf32>
    %548 = math.exp %547 : vector<8x16xf32>
    %cst_197 = arith.constant dense<0.000000e+00> : vector<8xf32>
    %549 = vector.multi_reduction <add>, %548, %cst_197 [1] : vector<8x16xf32> to vector<8xf32>
    %550 = vector.shape_cast %549 : vector<8xf32> to vector<8x1xf32>
    %551 = tpu.reciprocal %550 {approx = true} : vector<8x1xf32> -> vector<8x1xf32>
    %552 = vector.broadcast %551 : vector<8x1xf32> to vector<8x16xf32>
    %553 = arith.mulf %548, %552 : vector<8x16xf32>
    %554 = vector.extract_strided_slice %535 {offsets = [0, 0], sizes = [16, 8], strides = [1, 1]} : vector<16x32xf32> to vector<16x8xf32>
    %cst_198 = arith.constant dense<0.000000e+00> : vector<8x8xf32>
    %555 = tpu.matmul %553, %554, %cst_198 {dimension_numbers = #tpu.dot_dimension_numbers<[1], [0], [0], [1], [0, 0, 1, 1], [], []>} : vector<8x16xf32>, vector<16x8xf32>, vector<8x8xf32> -> vector<8x8xf32>
    %556 = vector.extract_strided_slice %538 {offsets = [0, 0], sizes = [8, 32], strides = [1, 1]} : vector<32x32xf32> to vector<8x32xf32>
    %cst_199 = arith.constant dense<0.000000e+00> : vector<8x32xf32>
    %557 = tpu.matmul %555, %556, %cst_199 {dimension_numbers = #tpu.dot_dimension_numbers<[1], [0], [0], [1], [0, 0, 1, 1], [], []>} : vector<8x8xf32>, vector<8x32xf32>, vector<8x32xf32> -> vector<8x32xf32>
    %558 = vector.extract_strided_slice %536 {offsets = [0, 8], sizes = [8, 8], strides = [1, 1]} : vector<8x32xf32> to vector<8x8xf32>
    %559 = vector.extract_strided_slice %534 {offsets = [8, 0], sizes = [8, 16], strides = [1, 1]} : vector<32x16xf32> to vector<8x16xf32>
    %cst_200 = arith.constant dense<0.000000e+00> : vector<8x16xf32>
    %560 = tpu.matmul %558, %559, %cst_200 {dimension_numbers = #tpu.dot_dimension_numbers<[1], [0], [0], [1], [0, 0, 1, 1], [], []>} : vector<8x8xf32>, vector<8x16xf32>, vector<8x16xf32> -> vector<8x16xf32>
    %cst_201 = arith.constant 0.353553385 : f32
    %561 = vector.broadcast %cst_201 : f32 to vector<8x16xf32>
    %562 = arith.mulf %560, %561 : vector<8x16xf32>
    %cst_202 = arith.constant dense<0xFF800000> : vector<8xf32>
    %563 = vector.multi_reduction <maximumf>, %562, %cst_202 [1] : vector<8x16xf32> to vector<8xf32>
    %564 = vector.shape_cast %563 : vector<8xf32> to vector<8x1xf32>
    %565 = vector.broadcast %564 : vector<8x1xf32> to vector<8x16xf32>
    %566 = arith.subf %562, %565 : vector<8x16xf32>
    %567 = math.exp %566 : vector<8x16xf32>
    %cst_203 = arith.constant dense<0.000000e+00> : vector<8xf32>
    %568 = vector.multi_reduction <add>, %567, %cst_203 [1] : vector<8x16xf32> to vector<8xf32>
    %569 = vector.shape_cast %568 : vector<8xf32> to vector<8x1xf32>
    %570 = tpu.reciprocal %569 {approx = true} : vector<8x1xf32> -> vector<8x1xf32>
    %571 = vector.broadcast %570 : vector<8x1xf32> to vector<8x16xf32>
    %572 = arith.mulf %567, %571 : vector<8x16xf32>
    %573 = vector.extract_strided_slice %535 {offsets = [0, 8], sizes = [16, 8], strides = [1, 1]} : vector<16x32xf32> to vector<16x8xf32>
    %cst_204 = arith.constant dense<0.000000e+00> : vector<8x8xf32>
    %574 = tpu.matmul %572, %573, %cst_204 {dimension_numbers = #tpu.dot_dimension_numbers<[1], [0], [0], [1], [0, 0, 1, 1], [], []>} : vector<8x16xf32>, vector<16x8xf32>, vector<8x8xf32> -> vector<8x8xf32>
    %575 = vector.extract_strided_slice %538 {offsets = [8, 0], sizes = [8, 32], strides = [1, 1]} : vector<32x32xf32> to vector<8x32xf32>
    %cst_205 = arith.constant dense<0.000000e+00> : vector<8x32xf32>
    %576 = tpu.matmul %574, %575, %cst_205 {dimension_numbers = #tpu.dot_dimension_numbers<[1], [0], [0], [1], [0, 0, 1, 1], [], []>} : vector<8x8xf32>, vector<8x32xf32>, vector<8x32xf32> -> vector<8x32xf32>
    %577 = arith.addf %557, %576 : vector<8x32xf32>
    %578 = vector.extract_strided_slice %536 {offsets = [0, 16], sizes = [8, 8], strides = [1, 1]} : vector<8x32xf32> to vector<8x8xf32>
    %579 = vector.extract_strided_slice %534 {offsets = [16, 0], sizes = [8, 16], strides = [1, 1]} : vector<32x16xf32> to vector<8x16xf32>
    %cst_206 = arith.constant dense<0.000000e+00> : vector<8x16xf32>
    %580 = tpu.matmul %578, %579, %cst_206 {dimension_numbers = #tpu.dot_dimension_numbers<[1], [0], [0], [1], [0, 0, 1, 1], [], []>} : vector<8x8xf32>, vector<8x16xf32>, vector<8x16xf32> -> vector<8x16xf32>
    %cst_207 = arith.constant 0.353553385 : f32
    %581 = vector.broadcast %cst_207 : f32 to vector<8x16xf32>
    %582 = arith.mulf %580, %581 : vector<8x16xf32>
    %cst_208 = arith.constant dense<0xFF800000> : vector<8xf32>
    %583 = vector.multi_reduction <maximumf>, %582, %cst_208 [1] : vector<8x16xf32> to vector<8xf32>
    %584 = vector.shape_cast %583 : vector<8xf32> to vector<8x1xf32>
    %585 = vector.broadcast %584 : vector<8x1xf32> to vector<8x16xf32>
    %586 = arith.subf %582, %585 : vector<8x16xf32>
    %587 = math.exp %586 : vector<8x16xf32>
    %cst_209 = arith.constant dense<0.000000e+00> : vector<8xf32>
    %588 = vector.multi_reduction <add>, %587, %cst_209 [1] : vector<8x16xf32> to vector<8xf32>
    %589 = vector.shape_cast %588 : vector<8xf32> to vector<8x1xf32>
    %590 = tpu.reciprocal %589 {approx = true} : vector<8x1xf32> -> vector<8x1xf32>
    %591 = vector.broadcast %590 : vector<8x1xf32> to vector<8x16xf32>
    %592 = arith.mulf %587, %591 : vector<8x16xf32>
    %593 = vector.extract_strided_slice %535 {offsets = [0, 16], sizes = [16, 8], strides = [1, 1]} : vector<16x32xf32> to vector<16x8xf32>
    %cst_210 = arith.constant dense<0.000000e+00> : vector<8x8xf32>
    %594 = tpu.matmul %592, %593, %cst_210 {dimension_numbers = #tpu.dot_dimension_numbers<[1], [0], [0], [1], [0, 0, 1, 1], [], []>} : vector<8x16xf32>, vector<16x8xf32>, vector<8x8xf32> -> vector<8x8xf32>
    %595 = vector.extract_strided_slice %538 {offsets = [16, 0], sizes = [8, 32], strides = [1, 1]} : vector<32x32xf32> to vector<8x32xf32>
    %cst_211 = arith.constant dense<0.000000e+00> : vector<8x32xf32>
    %596 = tpu.matmul %594, %595, %cst_211 {dimension_numbers = #tpu.dot_dimension_numbers<[1], [0], [0], [1], [0, 0, 1, 1], [], []>} : vector<8x8xf32>, vector<8x32xf32>, vector<8x32xf32> -> vector<8x32xf32>
    %597 = arith.addf %577, %596 : vector<8x32xf32>
    %598 = vector.extract_strided_slice %536 {offsets = [0, 24], sizes = [8, 8], strides = [1, 1]} : vector<8x32xf32> to vector<8x8xf32>
    %599 = vector.extract_strided_slice %534 {offsets = [24, 0], sizes = [8, 16], strides = [1, 1]} : vector<32x16xf32> to vector<8x16xf32>
    %cst_212 = arith.constant dense<0.000000e+00> : vector<8x16xf32>
    %600 = tpu.matmul %598, %599, %cst_212 {dimension_numbers = #tpu.dot_dimension_numbers<[1], [0], [0], [1], [0, 0, 1, 1], [], []>} : vector<8x8xf32>, vector<8x16xf32>, vector<8x16xf32> -> vector<8x16xf32>
    %cst_213 = arith.constant 0.353553385 : f32
    %601 = vector.broadcast %cst_213 : f32 to vector<8x16xf32>
    %602 = arith.mulf %600, %601 : vector<8x16xf32>
    %cst_214 = arith.constant dense<0xFF800000> : vector<8xf32>
    %603 = vector.multi_reduction <maximumf>, %602, %cst_214 [1] : vector<8x16xf32> to vector<8xf32>
    %604 = vector.shape_cast %603 : vector<8xf32> to vector<8x1xf32>
    %605 = vector.broadcast %604 : vector<8x1xf32> to vector<8x16xf32>
    %606 = arith.subf %602, %605 : vector<8x16xf32>
    %607 = math.exp %606 : vector<8x16xf32>
    %cst_215 = arith.constant dense<0.000000e+00> : vector<8xf32>
    %608 = vector.multi_reduction <add>, %607, %cst_215 [1] : vector<8x16xf32> to vector<8xf32>
    %609 = vector.shape_cast %608 : vector<8xf32> to vector<8x1xf32>
    %610 = tpu.reciprocal %609 {approx = true} : vector<8x1xf32> -> vector<8x1xf32>
    %611 = vector.broadcast %610 : vector<8x1xf32> to vector<8x16xf32>
    %612 = arith.mulf %607, %611 : vector<8x16xf32>
    %613 = vector.extract_strided_slice %535 {offsets = [0, 24], sizes = [16, 8], strides = [1, 1]} : vector<16x32xf32> to vector<16x8xf32>
    %cst_216 = arith.constant dense<0.000000e+00> : vector<8x8xf32>
    %614 = tpu.matmul %612, %613, %cst_216 {dimension_numbers = #tpu.dot_dimension_numbers<[1], [0], [0], [1], [0, 0, 1, 1], [], []>} : vector<8x16xf32>, vector<16x8xf32>, vector<8x8xf32> -> vector<8x8xf32>
    %615 = vector.extract_strided_slice %538 {offsets = [24, 0], sizes = [8, 32], strides = [1, 1]} : vector<32x32xf32> to vector<8x32xf32>
    %cst_217 = arith.constant dense<0.000000e+00> : vector<8x32xf32>
    %616 = tpu.matmul %614, %615, %cst_217 {dimension_numbers = #tpu.dot_dimension_numbers<[1], [0], [0], [1], [0, 0, 1, 1], [], []>} : vector<8x8xf32>, vector<8x32xf32>, vector<8x32xf32> -> vector<8x32xf32>
    %617 = arith.addf %597, %616 : vector<8x32xf32>
    %618 = vector.extract_strided_slice %399 {offsets = [8, 0], sizes = [8, 32], strides = [1, 1]} : vector<16x32xf32> to vector<8x32xf32>
    %619 = arith.addf %618, %617 : vector<8x32xf32>
    %c0_218 = arith.constant 0 : index
    %c0_219 = arith.constant 0 : index
    %c0_220 = arith.constant 0 : index
    %620 = vector.load %arg16[%c0_218, %c0_219, %c0_220] : memref<2x1x32xf32, #tpu.memory_space<vmem>>, vector<1x1x32xf32>
    %621 = vector.shape_cast %620 : vector<1x1x32xf32> to vector<1x32xf32>
    %622 = vector.broadcast %621 : vector<1x32xf32> to vector<8x32xf32>
    %623 = arith.addf %619, %622 : vector<8x32xf32>
    %c0_221 = arith.constant 0 : index
    %c0_222 = arith.constant 0 : index
    %c0_223 = arith.constant 0 : index
    %624 = vector.load %arg17[%c0_221, %c0_222, %c0_223] : memref<2x1x32xf32, #tpu.memory_space<vmem>>, vector<1x1x32xf32>
    %625 = vector.shape_cast %624 : vector<1x1x32xf32> to vector<1x32xf32>
    %c0_224 = arith.constant 0 : index
    %c0_225 = arith.constant 0 : index
    %c0_226 = arith.constant 0 : index
    %626 = vector.load %arg18[%c0_224, %c0_225, %c0_226] : memref<2x1x32xf32, #tpu.memory_space<vmem>>, vector<1x1x32xf32>
    %627 = vector.shape_cast %626 : vector<1x1x32xf32> to vector<1x32xf32>
    %cst_227 = arith.constant dense<0.000000e+00> : vector<8xf32>
    %628 = vector.multi_reduction <add>, %623, %cst_227 [1] : vector<8x32xf32> to vector<8xf32>
    %629 = vector.shape_cast %628 : vector<8xf32> to vector<8x1xf32>
    %cst_228 = arith.constant 3.200000e+01 : f32
    %630 = vector.broadcast %cst_228 : f32 to vector<8x1xf32>
    %631 = arith.divf %629, %630 : vector<8x1xf32>
    %632 = vector.broadcast %631 : vector<8x1xf32> to vector<8x32xf32>
    %633 = arith.subf %623, %632 : vector<8x32xf32>
    %634 = arith.mulf %633, %633 : vector<8x32xf32>
    %cst_229 = arith.constant dense<0.000000e+00> : vector<8xf32>
    %635 = vector.multi_reduction <add>, %634, %cst_229 [1] : vector<8x32xf32> to vector<8xf32>
    %636 = vector.shape_cast %635 : vector<8xf32> to vector<8x1xf32>
    %cst_230 = arith.constant 3.200000e+01 : f32
    %637 = vector.broadcast %cst_230 : f32 to vector<8x1xf32>
    %638 = arith.divf %636, %637 : vector<8x1xf32>
    %639 = vector.broadcast %631 : vector<8x1xf32> to vector<8x32xf32>
    %640 = arith.subf %623, %639 : vector<8x32xf32>
    %cst_231 = arith.constant 9.99999974E-6 : f32
    %641 = vector.broadcast %cst_231 : f32 to vector<8x1xf32>
    %642 = arith.addf %638, %641 : vector<8x1xf32>
    %643 = math.rsqrt %642 : vector<8x1xf32>
    %644 = vector.broadcast %643 : vector<8x1xf32> to vector<8x32xf32>
    %645 = arith.mulf %640, %644 : vector<8x32xf32>
    %646 = vector.broadcast %625 : vector<1x32xf32> to vector<8x32xf32>
    %647 = arith.mulf %645, %646 : vector<8x32xf32>
    %648 = vector.broadcast %627 : vector<1x32xf32> to vector<8x32xf32>
    %649 = arith.addf %647, %648 : vector<8x32xf32>
    %650 = tpu.concatenate %532, %649 in 0 : vector<8x32xf32>, vector<8x32xf32> -> vector<16x32xf32>
    %c0_232 = arith.constant 0 : index
    %c0_233 = arith.constant 0 : index
    %c0_234 = arith.constant 0 : index
    %651 = vector.load %arg19[%c0_232, %c0_233, %c0_234] : memref<2x32x64xbf16, #tpu.memory_space<vmem>>, vector<1x32x64xbf16>
    %652 = vector.shape_cast %651 : vector<1x32x64xbf16> to vector<32x64xbf16>
    %c0_235 = arith.constant 0 : index
    %c0_236 = arith.constant 0 : index
    %c0_237 = arith.constant 0 : index
    %653 = vector.load %arg20[%c0_235, %c0_236, %c0_237] : memref<2x1x64xf32, #tpu.memory_space<vmem>>, vector<1x1x64xf32>
    %654 = vector.shape_cast %653 : vector<1x1x64xf32> to vector<1x64xf32>
    %c0_238 = arith.constant 0 : index
    %c0_239 = arith.constant 0 : index
    %c0_240 = arith.constant 0 : index
    %655 = vector.load %arg21[%c0_238, %c0_239, %c0_240] : memref<2x64x32xbf16, #tpu.memory_space<vmem>>, vector<1x64x32xbf16>
    %656 = vector.shape_cast %655 : vector<1x64x32xbf16> to vector<64x32xbf16>
    %c0_241 = arith.constant 0 : index
    %c0_242 = arith.constant 0 : index
    %c0_243 = arith.constant 0 : index
    %657 = vector.load %arg22[%c0_241, %c0_242, %c0_243] : memref<2x1x32xf32, #tpu.memory_space<vmem>>, vector<1x1x32xf32>
    %658 = vector.shape_cast %657 : vector<1x1x32xf32> to vector<1x32xf32>
    %c0_244 = arith.constant 0 : index
    %c0_245 = arith.constant 0 : index
    %c0_246 = arith.constant 0 : index
    %659 = vector.load %arg23[%c0_244, %c0_245, %c0_246] : memref<2x1x32xf32, #tpu.memory_space<vmem>>, vector<1x1x32xf32>
    %660 = vector.shape_cast %659 : vector<1x1x32xf32> to vector<1x32xf32>
    %c0_247 = arith.constant 0 : index
    %c0_248 = arith.constant 0 : index
    %c0_249 = arith.constant 0 : index
    %661 = vector.load %arg24[%c0_247, %c0_248, %c0_249] : memref<2x1x32xf32, #tpu.memory_space<vmem>>, vector<1x1x32xf32>
    %662 = vector.shape_cast %661 : vector<1x1x32xf32> to vector<1x32xf32>
    %663 = arith.truncf %650 : vector<16x32xf32> to vector<16x32xbf16>
    %cst_250 = arith.constant dense<0.000000e+00> : vector<16x64xf32>
    %664 = tpu.matmul %663, %652, %cst_250 {dimension_numbers = #tpu.dot_dimension_numbers<[1], [0], [0], [1], [0, 0, 1, 1], [], []>} : vector<16x32xbf16>, vector<32x64xbf16>, vector<16x64xf32> -> vector<16x64xf32>
    %665 = vector.broadcast %654 : vector<1x64xf32> to vector<16x64xf32>
    %666 = arith.addf %664, %665 : vector<16x64xf32>
    %cst_251 = arith.constant 0.000000e+00 : f32
    %667 = vector.broadcast %cst_251 : f32 to vector<16x64xf32>
    %668 = arith.maximumf %666, %667 : vector<16x64xf32>
    %669 = arith.truncf %668 : vector<16x64xf32> to vector<16x64xbf16>
    %cst_252 = arith.constant dense<0.000000e+00> : vector<16x32xf32>
    %670 = tpu.matmul %669, %656, %cst_252 {dimension_numbers = #tpu.dot_dimension_numbers<[1], [0], [0], [1], [0, 0, 1, 1], [], []>} : vector<16x64xbf16>, vector<64x32xbf16>, vector<16x32xf32> -> vector<16x32xf32>
    %671 = arith.addf %650, %670 : vector<16x32xf32>
    %672 = vector.broadcast %658 : vector<1x32xf32> to vector<16x32xf32>
    %673 = arith.addf %671, %672 : vector<16x32xf32>
    %cst_253 = arith.constant dense<0.000000e+00> : vector<16xf32>
    %674 = vector.multi_reduction <add>, %673, %cst_253 [1] : vector<16x32xf32> to vector<16xf32>
    %675 = vector.shape_cast %674 : vector<16xf32> to vector<16x1xf32>
    %cst_254 = arith.constant 3.200000e+01 : f32
    %676 = vector.broadcast %cst_254 : f32 to vector<16x1xf32>
    %677 = arith.divf %675, %676 : vector<16x1xf32>
    %678 = vector.broadcast %677 : vector<16x1xf32> to vector<16x32xf32>
    %679 = arith.subf %673, %678 : vector<16x32xf32>
    %680 = arith.mulf %679, %679 : vector<16x32xf32>
    %cst_255 = arith.constant dense<0.000000e+00> : vector<16xf32>
    %681 = vector.multi_reduction <add>, %680, %cst_255 [1] : vector<16x32xf32> to vector<16xf32>
    %682 = vector.shape_cast %681 : vector<16xf32> to vector<16x1xf32>
    %cst_256 = arith.constant 3.200000e+01 : f32
    %683 = vector.broadcast %cst_256 : f32 to vector<16x1xf32>
    %684 = arith.divf %682, %683 : vector<16x1xf32>
    %685 = vector.broadcast %677 : vector<16x1xf32> to vector<16x32xf32>
    %686 = arith.subf %673, %685 : vector<16x32xf32>
    %cst_257 = arith.constant 9.99999974E-6 : f32
    %687 = vector.broadcast %cst_257 : f32 to vector<16x1xf32>
    %688 = arith.addf %684, %687 : vector<16x1xf32>
    %689 = math.rsqrt %688 : vector<16x1xf32>
    %690 = vector.broadcast %689 : vector<16x1xf32> to vector<16x32xf32>
    %691 = arith.mulf %686, %690 : vector<16x32xf32>
    %692 = vector.broadcast %660 : vector<1x32xf32> to vector<16x32xf32>
    %693 = arith.mulf %691, %692 : vector<16x32xf32>
    %694 = vector.broadcast %662 : vector<1x32xf32> to vector<16x32xf32>
    %695 = arith.addf %693, %694 : vector<16x32xf32>
    %c1 = arith.constant 1 : index
    %c0_258 = arith.constant 0 : index
    %c0_259 = arith.constant 0 : index
    %696 = vector.load %arg5[%c1, %c0_258, %c0_259] : memref<2x32x96xbf16, #tpu.memory_space<vmem>>, vector<1x32x96xbf16>
    %697 = vector.shape_cast %696 : vector<1x32x96xbf16> to vector<32x96xbf16>
    %698 = arith.truncf %695 : vector<16x32xf32> to vector<16x32xbf16>
    %cst_260 = arith.constant dense<0.000000e+00> : vector<16x96xf32>
    %699 = tpu.matmul %698, %697, %cst_260 {dimension_numbers = #tpu.dot_dimension_numbers<[1], [0], [0], [1], [0, 0, 1, 1], [], []>} : vector<16x32xbf16>, vector<32x96xbf16>, vector<16x96xf32> -> vector<16x96xf32>
    %c1_261 = arith.constant 1 : index
    %c0_262 = arith.constant 0 : index
    %c0_263 = arith.constant 0 : index
    %700 = vector.load %arg6[%c1_261, %c0_262, %c0_263] : memref<2x1x96xf32, #tpu.memory_space<vmem>>, vector<1x1x96xf32>
    %701 = vector.shape_cast %700 : vector<1x1x96xf32> to vector<1x96xf32>
    %702 = vector.broadcast %701 : vector<1x96xf32> to vector<16x96xf32>
    %703 = arith.addf %699, %702 : vector<16x96xf32>
    %c1_264 = arith.constant 1 : index
    %c0_265 = arith.constant 0 : index
    %c0_266 = arith.constant 0 : index
    %704 = vector.load %arg4[%c1_264, %c0_265, %c0_266] : memref<2x16x96xf32, #tpu.memory_space<vmem>>, vector<1x16x96xf32>
    %705 = vector.shape_cast %704 : vector<1x16x96xf32> to vector<16x96xf32>
    %706 = arith.addf %703, %705 : vector<16x96xf32>
    %707 = arith.addf %695, %2 : vector<16x32xf32>
    %708 = vector.extract_strided_slice %706 {offsets = [0, 0], sizes = [8, 32], strides = [1, 1]} : vector<16x96xf32> to vector<8x32xf32>
    %709 = vector.extract_strided_slice %706 {offsets = [0, 32], sizes = [8, 32], strides = [1, 1]} : vector<16x96xf32> to vector<8x32xf32>
    %710 = tpu.transpose %709, [1, 0] : vector<8x32xf32> -> vector<32x8xf32>
    %711 = vector.extract_strided_slice %706 {offsets = [0, 64], sizes = [8, 32], strides = [1, 1]} : vector<16x96xf32> to vector<8x32xf32>
    %c1_267 = arith.constant 1 : index
    %c0_268 = arith.constant 0 : index
    %c0_269 = arith.constant 0 : index
    %712 = vector.load %arg7[%c1_267, %c0_268, %c0_269] : memref<2x32x32xf32, #tpu.memory_space<vmem>>, vector<1x32x32xf32>
    %713 = vector.shape_cast %712 : vector<1x32x32xf32> to vector<32x32xf32>
    %714 = vector.extract_strided_slice %708 {offsets = [0, 0], sizes = [8, 8], strides = [1, 1]} : vector<8x32xf32> to vector<8x8xf32>
    %715 = vector.extract_strided_slice %710 {offsets = [0, 0], sizes = [8, 8], strides = [1, 1]} : vector<32x8xf32> to vector<8x8xf32>
    %cst_270 = arith.constant dense<0.000000e+00> : vector<8x8xf32>
    %716 = tpu.matmul %714, %715, %cst_270 {dimension_numbers = #tpu.dot_dimension_numbers<[1], [0], [0], [1], [0, 0, 1, 1], [], []>} : vector<8x8xf32>, vector<8x8xf32>, vector<8x8xf32> -> vector<8x8xf32>
    %cst_271 = arith.constant 0.353553385 : f32
    %717 = vector.broadcast %cst_271 : f32 to vector<8x8xf32>
    %718 = arith.mulf %716, %717 : vector<8x8xf32>
    %cst_272 = arith.constant dense<0xFF800000> : vector<8xf32>
    %719 = vector.multi_reduction <maximumf>, %718, %cst_272 [1] : vector<8x8xf32> to vector<8xf32>
    %720 = vector.shape_cast %719 : vector<8xf32> to vector<8x1xf32>
    %721 = vector.broadcast %720 : vector<8x1xf32> to vector<8x8xf32>
    %722 = arith.subf %718, %721 : vector<8x8xf32>
    %723 = math.exp %722 : vector<8x8xf32>
    %cst_273 = arith.constant dense<0.000000e+00> : vector<8xf32>
    %724 = vector.multi_reduction <add>, %723, %cst_273 [1] : vector<8x8xf32> to vector<8xf32>
    %725 = vector.shape_cast %724 : vector<8xf32> to vector<8x1xf32>
    %726 = tpu.reciprocal %725 {approx = true} : vector<8x1xf32> -> vector<8x1xf32>
    %727 = vector.broadcast %726 : vector<8x1xf32> to vector<8x8xf32>
    %728 = arith.mulf %723, %727 : vector<8x8xf32>
    %729 = vector.extract_strided_slice %711 {offsets = [0, 0], sizes = [8, 8], strides = [1, 1]} : vector<8x32xf32> to vector<8x8xf32>
    %cst_274 = arith.constant dense<0.000000e+00> : vector<8x8xf32>
    %730 = tpu.matmul %728, %729, %cst_274 {dimension_numbers = #tpu.dot_dimension_numbers<[1], [0], [0], [1], [0, 0, 1, 1], [], []>} : vector<8x8xf32>, vector<8x8xf32>, vector<8x8xf32> -> vector<8x8xf32>
    %731 = vector.extract_strided_slice %713 {offsets = [0, 0], sizes = [8, 32], strides = [1, 1]} : vector<32x32xf32> to vector<8x32xf32>
    %cst_275 = arith.constant dense<0.000000e+00> : vector<8x32xf32>
    %732 = tpu.matmul %730, %731, %cst_275 {dimension_numbers = #tpu.dot_dimension_numbers<[1], [0], [0], [1], [0, 0, 1, 1], [], []>} : vector<8x8xf32>, vector<8x32xf32>, vector<8x32xf32> -> vector<8x32xf32>
    %733 = vector.extract_strided_slice %708 {offsets = [0, 8], sizes = [8, 8], strides = [1, 1]} : vector<8x32xf32> to vector<8x8xf32>
    %734 = vector.extract_strided_slice %710 {offsets = [8, 0], sizes = [8, 8], strides = [1, 1]} : vector<32x8xf32> to vector<8x8xf32>
    %cst_276 = arith.constant dense<0.000000e+00> : vector<8x8xf32>
    %735 = tpu.matmul %733, %734, %cst_276 {dimension_numbers = #tpu.dot_dimension_numbers<[1], [0], [0], [1], [0, 0, 1, 1], [], []>} : vector<8x8xf32>, vector<8x8xf32>, vector<8x8xf32> -> vector<8x8xf32>
    %cst_277 = arith.constant 0.353553385 : f32
    %736 = vector.broadcast %cst_277 : f32 to vector<8x8xf32>
    %737 = arith.mulf %735, %736 : vector<8x8xf32>
    %cst_278 = arith.constant dense<0xFF800000> : vector<8xf32>
    %738 = vector.multi_reduction <maximumf>, %737, %cst_278 [1] : vector<8x8xf32> to vector<8xf32>
    %739 = vector.shape_cast %738 : vector<8xf32> to vector<8x1xf32>
    %740 = vector.broadcast %739 : vector<8x1xf32> to vector<8x8xf32>
    %741 = arith.subf %737, %740 : vector<8x8xf32>
    %742 = math.exp %741 : vector<8x8xf32>
    %cst_279 = arith.constant dense<0.000000e+00> : vector<8xf32>
    %743 = vector.multi_reduction <add>, %742, %cst_279 [1] : vector<8x8xf32> to vector<8xf32>
    %744 = vector.shape_cast %743 : vector<8xf32> to vector<8x1xf32>
    %745 = tpu.reciprocal %744 {approx = true} : vector<8x1xf32> -> vector<8x1xf32>
    %746 = vector.broadcast %745 : vector<8x1xf32> to vector<8x8xf32>
    %747 = arith.mulf %742, %746 : vector<8x8xf32>
    %748 = arith.addf %728, %747 : vector<8x8xf32>
    %749 = vector.extract_strided_slice %711 {offsets = [0, 8], sizes = [8, 8], strides = [1, 1]} : vector<8x32xf32> to vector<8x8xf32>
    %cst_280 = arith.constant dense<0.000000e+00> : vector<8x8xf32>
    %750 = tpu.matmul %747, %749, %cst_280 {dimension_numbers = #tpu.dot_dimension_numbers<[1], [0], [0], [1], [0, 0, 1, 1], [], []>} : vector<8x8xf32>, vector<8x8xf32>, vector<8x8xf32> -> vector<8x8xf32>
    %751 = vector.extract_strided_slice %713 {offsets = [8, 0], sizes = [8, 32], strides = [1, 1]} : vector<32x32xf32> to vector<8x32xf32>
    %cst_281 = arith.constant dense<0.000000e+00> : vector<8x32xf32>
    %752 = tpu.matmul %750, %751, %cst_281 {dimension_numbers = #tpu.dot_dimension_numbers<[1], [0], [0], [1], [0, 0, 1, 1], [], []>} : vector<8x8xf32>, vector<8x32xf32>, vector<8x32xf32> -> vector<8x32xf32>
    %753 = arith.addf %732, %752 : vector<8x32xf32>
    %754 = vector.extract_strided_slice %708 {offsets = [0, 16], sizes = [8, 8], strides = [1, 1]} : vector<8x32xf32> to vector<8x8xf32>
    %755 = vector.extract_strided_slice %710 {offsets = [16, 0], sizes = [8, 8], strides = [1, 1]} : vector<32x8xf32> to vector<8x8xf32>
    %cst_282 = arith.constant dense<0.000000e+00> : vector<8x8xf32>
    %756 = tpu.matmul %754, %755, %cst_282 {dimension_numbers = #tpu.dot_dimension_numbers<[1], [0], [0], [1], [0, 0, 1, 1], [], []>} : vector<8x8xf32>, vector<8x8xf32>, vector<8x8xf32> -> vector<8x8xf32>
    %cst_283 = arith.constant 0.353553385 : f32
    %757 = vector.broadcast %cst_283 : f32 to vector<8x8xf32>
    %758 = arith.mulf %756, %757 : vector<8x8xf32>
    %cst_284 = arith.constant dense<0xFF800000> : vector<8xf32>
    %759 = vector.multi_reduction <maximumf>, %758, %cst_284 [1] : vector<8x8xf32> to vector<8xf32>
    %760 = vector.shape_cast %759 : vector<8xf32> to vector<8x1xf32>
    %761 = vector.broadcast %760 : vector<8x1xf32> to vector<8x8xf32>
    %762 = arith.subf %758, %761 : vector<8x8xf32>
    %763 = math.exp %762 : vector<8x8xf32>
    %cst_285 = arith.constant dense<0.000000e+00> : vector<8xf32>
    %764 = vector.multi_reduction <add>, %763, %cst_285 [1] : vector<8x8xf32> to vector<8xf32>
    %765 = vector.shape_cast %764 : vector<8xf32> to vector<8x1xf32>
    %766 = tpu.reciprocal %765 {approx = true} : vector<8x1xf32> -> vector<8x1xf32>
    %767 = vector.broadcast %766 : vector<8x1xf32> to vector<8x8xf32>
    %768 = arith.mulf %763, %767 : vector<8x8xf32>
    %769 = arith.addf %748, %768 : vector<8x8xf32>
    %770 = vector.extract_strided_slice %711 {offsets = [0, 16], sizes = [8, 8], strides = [1, 1]} : vector<8x32xf32> to vector<8x8xf32>
    %cst_286 = arith.constant dense<0.000000e+00> : vector<8x8xf32>
    %771 = tpu.matmul %768, %770, %cst_286 {dimension_numbers = #tpu.dot_dimension_numbers<[1], [0], [0], [1], [0, 0, 1, 1], [], []>} : vector<8x8xf32>, vector<8x8xf32>, vector<8x8xf32> -> vector<8x8xf32>
    %772 = vector.extract_strided_slice %713 {offsets = [16, 0], sizes = [8, 32], strides = [1, 1]} : vector<32x32xf32> to vector<8x32xf32>
    %cst_287 = arith.constant dense<0.000000e+00> : vector<8x32xf32>
    %773 = tpu.matmul %771, %772, %cst_287 {dimension_numbers = #tpu.dot_dimension_numbers<[1], [0], [0], [1], [0, 0, 1, 1], [], []>} : vector<8x8xf32>, vector<8x32xf32>, vector<8x32xf32> -> vector<8x32xf32>
    %774 = arith.addf %753, %773 : vector<8x32xf32>
    %775 = vector.extract_strided_slice %708 {offsets = [0, 24], sizes = [8, 8], strides = [1, 1]} : vector<8x32xf32> to vector<8x8xf32>
    %776 = vector.extract_strided_slice %710 {offsets = [24, 0], sizes = [8, 8], strides = [1, 1]} : vector<32x8xf32> to vector<8x8xf32>
    %cst_288 = arith.constant dense<0.000000e+00> : vector<8x8xf32>
    %777 = tpu.matmul %775, %776, %cst_288 {dimension_numbers = #tpu.dot_dimension_numbers<[1], [0], [0], [1], [0, 0, 1, 1], [], []>} : vector<8x8xf32>, vector<8x8xf32>, vector<8x8xf32> -> vector<8x8xf32>
    %cst_289 = arith.constant 0.353553385 : f32
    %778 = vector.broadcast %cst_289 : f32 to vector<8x8xf32>
    %779 = arith.mulf %777, %778 : vector<8x8xf32>
    %cst_290 = arith.constant dense<0xFF800000> : vector<8xf32>
    %780 = vector.multi_reduction <maximumf>, %779, %cst_290 [1] : vector<8x8xf32> to vector<8xf32>
    %781 = vector.shape_cast %780 : vector<8xf32> to vector<8x1xf32>
    %782 = vector.broadcast %781 : vector<8x1xf32> to vector<8x8xf32>
    %783 = arith.subf %779, %782 : vector<8x8xf32>
    %784 = math.exp %783 : vector<8x8xf32>
    %cst_291 = arith.constant dense<0.000000e+00> : vector<8xf32>
    %785 = vector.multi_reduction <add>, %784, %cst_291 [1] : vector<8x8xf32> to vector<8xf32>
    %786 = vector.shape_cast %785 : vector<8xf32> to vector<8x1xf32>
    %787 = tpu.reciprocal %786 {approx = true} : vector<8x1xf32> -> vector<8x1xf32>
    %788 = vector.broadcast %787 : vector<8x1xf32> to vector<8x8xf32>
    %789 = arith.mulf %784, %788 : vector<8x8xf32>
    %790 = arith.addf %769, %789 : vector<8x8xf32>
    %791 = vector.extract_strided_slice %711 {offsets = [0, 24], sizes = [8, 8], strides = [1, 1]} : vector<8x32xf32> to vector<8x8xf32>
    %cst_292 = arith.constant dense<0.000000e+00> : vector<8x8xf32>
    %792 = tpu.matmul %789, %791, %cst_292 {dimension_numbers = #tpu.dot_dimension_numbers<[1], [0], [0], [1], [0, 0, 1, 1], [], []>} : vector<8x8xf32>, vector<8x8xf32>, vector<8x8xf32> -> vector<8x8xf32>
    %793 = vector.extract_strided_slice %713 {offsets = [24, 0], sizes = [8, 32], strides = [1, 1]} : vector<32x32xf32> to vector<8x32xf32>
    %cst_293 = arith.constant dense<0.000000e+00> : vector<8x32xf32>
    %794 = tpu.matmul %792, %793, %cst_293 {dimension_numbers = #tpu.dot_dimension_numbers<[1], [0], [0], [1], [0, 0, 1, 1], [], []>} : vector<8x8xf32>, vector<8x32xf32>, vector<8x32xf32> -> vector<8x32xf32>
    %795 = arith.addf %774, %794 : vector<8x32xf32>
    %cst_294 = arith.constant 2.500000e-01 : f32
    %796 = vector.broadcast %cst_294 : f32 to vector<8x8xf32>
    %797 = arith.mulf %790, %796 : vector<8x8xf32>
    %798 = vector.extract_strided_slice %707 {offsets = [0, 0], sizes = [8, 32], strides = [1, 1]} : vector<16x32xf32> to vector<8x32xf32>
    %799 = arith.addf %798, %795 : vector<8x32xf32>
    %c1_295 = arith.constant 1 : index
    %c0_296 = arith.constant 0 : index
    %c0_297 = arith.constant 0 : index
    %800 = vector.load %arg8[%c1_295, %c0_296, %c0_297] : memref<2x1x32xf32, #tpu.memory_space<vmem>>, vector<1x1x32xf32>
    %801 = vector.shape_cast %800 : vector<1x1x32xf32> to vector<1x32xf32>
    %802 = vector.broadcast %801 : vector<1x32xf32> to vector<8x32xf32>
    %803 = arith.addf %799, %802 : vector<8x32xf32>
    %c1_298 = arith.constant 1 : index
    %c0_299 = arith.constant 0 : index
    %c0_300 = arith.constant 0 : index
    %804 = vector.load %arg9[%c1_298, %c0_299, %c0_300] : memref<2x1x32xf32, #tpu.memory_space<vmem>>, vector<1x1x32xf32>
    %805 = vector.shape_cast %804 : vector<1x1x32xf32> to vector<1x32xf32>
    %c1_301 = arith.constant 1 : index
    %c0_302 = arith.constant 0 : index
    %c0_303 = arith.constant 0 : index
    %806 = vector.load %arg10[%c1_301, %c0_302, %c0_303] : memref<2x1x32xf32, #tpu.memory_space<vmem>>, vector<1x1x32xf32>
    %807 = vector.shape_cast %806 : vector<1x1x32xf32> to vector<1x32xf32>
    %cst_304 = arith.constant dense<0.000000e+00> : vector<8xf32>
    %808 = vector.multi_reduction <add>, %803, %cst_304 [1] : vector<8x32xf32> to vector<8xf32>
    %809 = vector.shape_cast %808 : vector<8xf32> to vector<8x1xf32>
    %cst_305 = arith.constant 3.200000e+01 : f32
    %810 = vector.broadcast %cst_305 : f32 to vector<8x1xf32>
    %811 = arith.divf %809, %810 : vector<8x1xf32>
    %812 = vector.broadcast %811 : vector<8x1xf32> to vector<8x32xf32>
    %813 = arith.subf %803, %812 : vector<8x32xf32>
    %814 = arith.mulf %813, %813 : vector<8x32xf32>
    %cst_306 = arith.constant dense<0.000000e+00> : vector<8xf32>
    %815 = vector.multi_reduction <add>, %814, %cst_306 [1] : vector<8x32xf32> to vector<8xf32>
    %816 = vector.shape_cast %815 : vector<8xf32> to vector<8x1xf32>
    %cst_307 = arith.constant 3.200000e+01 : f32
    %817 = vector.broadcast %cst_307 : f32 to vector<8x1xf32>
    %818 = arith.divf %816, %817 : vector<8x1xf32>
    %819 = vector.broadcast %811 : vector<8x1xf32> to vector<8x32xf32>
    %820 = arith.subf %803, %819 : vector<8x32xf32>
    %cst_308 = arith.constant 9.99999974E-6 : f32
    %821 = vector.broadcast %cst_308 : f32 to vector<8x1xf32>
    %822 = arith.addf %818, %821 : vector<8x1xf32>
    %823 = math.rsqrt %822 : vector<8x1xf32>
    %824 = vector.broadcast %823 : vector<8x1xf32> to vector<8x32xf32>
    %825 = arith.mulf %820, %824 : vector<8x32xf32>
    %826 = vector.broadcast %805 : vector<1x32xf32> to vector<8x32xf32>
    %827 = arith.mulf %825, %826 : vector<8x32xf32>
    %828 = vector.broadcast %807 : vector<1x32xf32> to vector<8x32xf32>
    %829 = arith.addf %827, %828 : vector<8x32xf32>
    %830 = vector.extract_strided_slice %703 {offsets = [0, 0], sizes = [8, 32], strides = [1, 1]} : vector<16x96xf32> to vector<8x32xf32>
    %831 = vector.extract_strided_slice %703 {offsets = [0, 32], sizes = [8, 32], strides = [1, 1]} : vector<16x96xf32> to vector<8x32xf32>
    %832 = tpu.transpose %831, [1, 0] : vector<8x32xf32> -> vector<32x8xf32>
    %833 = vector.extract_strided_slice %830 {offsets = [0, 0], sizes = [8, 8], strides = [1, 1]} : vector<8x32xf32> to vector<8x8xf32>
    %834 = vector.extract_strided_slice %832 {offsets = [0, 0], sizes = [8, 8], strides = [1, 1]} : vector<32x8xf32> to vector<8x8xf32>
    %cst_309 = arith.constant dense<0.000000e+00> : vector<8x8xf32>
    %835 = tpu.matmul %833, %834, %cst_309 {dimension_numbers = #tpu.dot_dimension_numbers<[1], [0], [0], [1], [0, 0, 1, 1], [], []>} : vector<8x8xf32>, vector<8x8xf32>, vector<8x8xf32> -> vector<8x8xf32>
    %cst_310 = arith.constant 0.353553385 : f32
    %836 = vector.broadcast %cst_310 : f32 to vector<8x8xf32>
    %837 = arith.mulf %835, %836 : vector<8x8xf32>
    %cst_311 = arith.constant dense<0xFF800000> : vector<8xf32>
    %838 = vector.multi_reduction <maximumf>, %837, %cst_311 [1] : vector<8x8xf32> to vector<8xf32>
    %839 = vector.shape_cast %838 : vector<8xf32> to vector<8x1xf32>
    %840 = vector.broadcast %839 : vector<8x1xf32> to vector<8x8xf32>
    %841 = arith.subf %837, %840 : vector<8x8xf32>
    %842 = math.exp %841 : vector<8x8xf32>
    %cst_312 = arith.constant dense<0.000000e+00> : vector<8xf32>
    %843 = vector.multi_reduction <add>, %842, %cst_312 [1] : vector<8x8xf32> to vector<8xf32>
    %844 = vector.shape_cast %843 : vector<8xf32> to vector<8x1xf32>
    %845 = tpu.reciprocal %844 {approx = true} : vector<8x1xf32> -> vector<8x1xf32>
    %846 = vector.broadcast %845 : vector<8x1xf32> to vector<8x8xf32>
    %847 = arith.mulf %842, %846 : vector<8x8xf32>
    %848 = vector.extract_strided_slice %830 {offsets = [0, 8], sizes = [8, 8], strides = [1, 1]} : vector<8x32xf32> to vector<8x8xf32>
    %849 = vector.extract_strided_slice %832 {offsets = [8, 0], sizes = [8, 8], strides = [1, 1]} : vector<32x8xf32> to vector<8x8xf32>
    %cst_313 = arith.constant dense<0.000000e+00> : vector<8x8xf32>
    %850 = tpu.matmul %848, %849, %cst_313 {dimension_numbers = #tpu.dot_dimension_numbers<[1], [0], [0], [1], [0, 0, 1, 1], [], []>} : vector<8x8xf32>, vector<8x8xf32>, vector<8x8xf32> -> vector<8x8xf32>
    %cst_314 = arith.constant 0.353553385 : f32
    %851 = vector.broadcast %cst_314 : f32 to vector<8x8xf32>
    %852 = arith.mulf %850, %851 : vector<8x8xf32>
    %cst_315 = arith.constant dense<0xFF800000> : vector<8xf32>
    %853 = vector.multi_reduction <maximumf>, %852, %cst_315 [1] : vector<8x8xf32> to vector<8xf32>
    %854 = vector.shape_cast %853 : vector<8xf32> to vector<8x1xf32>
    %855 = vector.broadcast %854 : vector<8x1xf32> to vector<8x8xf32>
    %856 = arith.subf %852, %855 : vector<8x8xf32>
    %857 = math.exp %856 : vector<8x8xf32>
    %cst_316 = arith.constant dense<0.000000e+00> : vector<8xf32>
    %858 = vector.multi_reduction <add>, %857, %cst_316 [1] : vector<8x8xf32> to vector<8xf32>
    %859 = vector.shape_cast %858 : vector<8xf32> to vector<8x1xf32>
    %860 = tpu.reciprocal %859 {approx = true} : vector<8x1xf32> -> vector<8x1xf32>
    %861 = vector.broadcast %860 : vector<8x1xf32> to vector<8x8xf32>
    %862 = arith.mulf %857, %861 : vector<8x8xf32>
    %863 = arith.addf %847, %862 : vector<8x8xf32>
    %864 = vector.extract_strided_slice %830 {offsets = [0, 16], sizes = [8, 8], strides = [1, 1]} : vector<8x32xf32> to vector<8x8xf32>
    %865 = vector.extract_strided_slice %832 {offsets = [16, 0], sizes = [8, 8], strides = [1, 1]} : vector<32x8xf32> to vector<8x8xf32>
    %cst_317 = arith.constant dense<0.000000e+00> : vector<8x8xf32>
    %866 = tpu.matmul %864, %865, %cst_317 {dimension_numbers = #tpu.dot_dimension_numbers<[1], [0], [0], [1], [0, 0, 1, 1], [], []>} : vector<8x8xf32>, vector<8x8xf32>, vector<8x8xf32> -> vector<8x8xf32>
    %cst_318 = arith.constant 0.353553385 : f32
    %867 = vector.broadcast %cst_318 : f32 to vector<8x8xf32>
    %868 = arith.mulf %866, %867 : vector<8x8xf32>
    %cst_319 = arith.constant dense<0xFF800000> : vector<8xf32>
    %869 = vector.multi_reduction <maximumf>, %868, %cst_319 [1] : vector<8x8xf32> to vector<8xf32>
    %870 = vector.shape_cast %869 : vector<8xf32> to vector<8x1xf32>
    %871 = vector.broadcast %870 : vector<8x1xf32> to vector<8x8xf32>
    %872 = arith.subf %868, %871 : vector<8x8xf32>
    %873 = math.exp %872 : vector<8x8xf32>
    %cst_320 = arith.constant dense<0.000000e+00> : vector<8xf32>
    %874 = vector.multi_reduction <add>, %873, %cst_320 [1] : vector<8x8xf32> to vector<8xf32>
    %875 = vector.shape_cast %874 : vector<8xf32> to vector<8x1xf32>
    %876 = tpu.reciprocal %875 {approx = true} : vector<8x1xf32> -> vector<8x1xf32>
    %877 = vector.broadcast %876 : vector<8x1xf32> to vector<8x8xf32>
    %878 = arith.mulf %873, %877 : vector<8x8xf32>
    %879 = arith.addf %863, %878 : vector<8x8xf32>
    %880 = vector.extract_strided_slice %830 {offsets = [0, 24], sizes = [8, 8], strides = [1, 1]} : vector<8x32xf32> to vector<8x8xf32>
    %881 = vector.extract_strided_slice %832 {offsets = [24, 0], sizes = [8, 8], strides = [1, 1]} : vector<32x8xf32> to vector<8x8xf32>
    %cst_321 = arith.constant dense<0.000000e+00> : vector<8x8xf32>
    %882 = tpu.matmul %880, %881, %cst_321 {dimension_numbers = #tpu.dot_dimension_numbers<[1], [0], [0], [1], [0, 0, 1, 1], [], []>} : vector<8x8xf32>, vector<8x8xf32>, vector<8x8xf32> -> vector<8x8xf32>
    %cst_322 = arith.constant 0.353553385 : f32
    %883 = vector.broadcast %cst_322 : f32 to vector<8x8xf32>
    %884 = arith.mulf %882, %883 : vector<8x8xf32>
    %cst_323 = arith.constant dense<0xFF800000> : vector<8xf32>
    %885 = vector.multi_reduction <maximumf>, %884, %cst_323 [1] : vector<8x8xf32> to vector<8xf32>
    %886 = vector.shape_cast %885 : vector<8xf32> to vector<8x1xf32>
    %887 = vector.broadcast %886 : vector<8x1xf32> to vector<8x8xf32>
    %888 = arith.subf %884, %887 : vector<8x8xf32>
    %889 = math.exp %888 : vector<8x8xf32>
    %cst_324 = arith.constant dense<0.000000e+00> : vector<8xf32>
    %890 = vector.multi_reduction <add>, %889, %cst_324 [1] : vector<8x8xf32> to vector<8xf32>
    %891 = vector.shape_cast %890 : vector<8xf32> to vector<8x1xf32>
    %892 = tpu.reciprocal %891 {approx = true} : vector<8x1xf32> -> vector<8x1xf32>
    %893 = vector.broadcast %892 : vector<8x1xf32> to vector<8x8xf32>
    %894 = arith.mulf %889, %893 : vector<8x8xf32>
    %895 = arith.addf %879, %894 : vector<8x8xf32>
    %cst_325 = arith.constant 2.500000e-01 : f32
    %896 = vector.broadcast %cst_325 : f32 to vector<8x8xf32>
    %897 = arith.mulf %895, %896 : vector<8x8xf32>
    %cst_326 = arith.constant dense<0.000000e+00> : vector<8x8xf32>
    %898 = tpu.matmul %897, %797, %cst_326 {dimension_numbers = #tpu.dot_dimension_numbers<[1], [0], [0], [1], [0, 0, 1, 1], [], []>} : vector<8x8xf32>, vector<8x8xf32>, vector<8x8xf32> -> vector<8x8xf32>
    %cst_327 = arith.constant dense<0.000000e+00> : vector<8x32xf32>
    %899 = tpu.matmul %898, %829, %cst_327 {dimension_numbers = #tpu.dot_dimension_numbers<[1], [0], [0], [1], [0, 0, 1, 1], [], []>} : vector<8x8xf32>, vector<8x32xf32>, vector<8x32xf32> -> vector<8x32xf32>
    %900 = vector.extract_strided_slice %706 {offsets = [8, 0], sizes = [8, 32], strides = [1, 1]} : vector<16x96xf32> to vector<8x32xf32>
    %901 = vector.extract_strided_slice %706 {offsets = [8, 32], sizes = [8, 32], strides = [1, 1]} : vector<16x96xf32> to vector<8x32xf32>
    %902 = tpu.transpose %901, [1, 0] : vector<8x32xf32> -> vector<32x8xf32>
    %903 = vector.extract_strided_slice %706 {offsets = [8, 64], sizes = [8, 32], strides = [1, 1]} : vector<16x96xf32> to vector<8x32xf32>
    %c1_328 = arith.constant 1 : index
    %c0_329 = arith.constant 0 : index
    %c0_330 = arith.constant 0 : index
    %904 = vector.load %arg7[%c1_328, %c0_329, %c0_330] : memref<2x32x32xf32, #tpu.memory_space<vmem>>, vector<1x32x32xf32>
    %905 = vector.shape_cast %904 : vector<1x32x32xf32> to vector<32x32xf32>
    %906 = vector.extract_strided_slice %900 {offsets = [0, 0], sizes = [8, 8], strides = [1, 1]} : vector<8x32xf32> to vector<8x8xf32>
    %907 = vector.extract_strided_slice %902 {offsets = [0, 0], sizes = [8, 8], strides = [1, 1]} : vector<32x8xf32> to vector<8x8xf32>
    %cst_331 = arith.constant dense<0.000000e+00> : vector<8x8xf32>
    %908 = tpu.matmul %906, %907, %cst_331 {dimension_numbers = #tpu.dot_dimension_numbers<[1], [0], [0], [1], [0, 0, 1, 1], [], []>} : vector<8x8xf32>, vector<8x8xf32>, vector<8x8xf32> -> vector<8x8xf32>
    %cst_332 = arith.constant 0.353553385 : f32
    %909 = vector.broadcast %cst_332 : f32 to vector<8x8xf32>
    %910 = arith.mulf %908, %909 : vector<8x8xf32>
    %cst_333 = arith.constant dense<0xFF800000> : vector<8xf32>
    %911 = vector.multi_reduction <maximumf>, %910, %cst_333 [1] : vector<8x8xf32> to vector<8xf32>
    %912 = vector.shape_cast %911 : vector<8xf32> to vector<8x1xf32>
    %913 = vector.broadcast %912 : vector<8x1xf32> to vector<8x8xf32>
    %914 = arith.subf %910, %913 : vector<8x8xf32>
    %915 = math.exp %914 : vector<8x8xf32>
    %cst_334 = arith.constant dense<0.000000e+00> : vector<8xf32>
    %916 = vector.multi_reduction <add>, %915, %cst_334 [1] : vector<8x8xf32> to vector<8xf32>
    %917 = vector.shape_cast %916 : vector<8xf32> to vector<8x1xf32>
    %918 = tpu.reciprocal %917 {approx = true} : vector<8x1xf32> -> vector<8x1xf32>
    %919 = vector.broadcast %918 : vector<8x1xf32> to vector<8x8xf32>
    %920 = arith.mulf %915, %919 : vector<8x8xf32>
    %921 = vector.extract_strided_slice %903 {offsets = [0, 0], sizes = [8, 8], strides = [1, 1]} : vector<8x32xf32> to vector<8x8xf32>
    %cst_335 = arith.constant dense<0.000000e+00> : vector<8x8xf32>
    %922 = tpu.matmul %920, %921, %cst_335 {dimension_numbers = #tpu.dot_dimension_numbers<[1], [0], [0], [1], [0, 0, 1, 1], [], []>} : vector<8x8xf32>, vector<8x8xf32>, vector<8x8xf32> -> vector<8x8xf32>
    %923 = vector.extract_strided_slice %905 {offsets = [0, 0], sizes = [8, 32], strides = [1, 1]} : vector<32x32xf32> to vector<8x32xf32>
    %cst_336 = arith.constant dense<0.000000e+00> : vector<8x32xf32>
    %924 = tpu.matmul %922, %923, %cst_336 {dimension_numbers = #tpu.dot_dimension_numbers<[1], [0], [0], [1], [0, 0, 1, 1], [], []>} : vector<8x8xf32>, vector<8x32xf32>, vector<8x32xf32> -> vector<8x32xf32>
    %925 = vector.extract_strided_slice %900 {offsets = [0, 8], sizes = [8, 8], strides = [1, 1]} : vector<8x32xf32> to vector<8x8xf32>
    %926 = vector.extract_strided_slice %902 {offsets = [8, 0], sizes = [8, 8], strides = [1, 1]} : vector<32x8xf32> to vector<8x8xf32>
    %cst_337 = arith.constant dense<0.000000e+00> : vector<8x8xf32>
    %927 = tpu.matmul %925, %926, %cst_337 {dimension_numbers = #tpu.dot_dimension_numbers<[1], [0], [0], [1], [0, 0, 1, 1], [], []>} : vector<8x8xf32>, vector<8x8xf32>, vector<8x8xf32> -> vector<8x8xf32>
    %cst_338 = arith.constant 0.353553385 : f32
    %928 = vector.broadcast %cst_338 : f32 to vector<8x8xf32>
    %929 = arith.mulf %927, %928 : vector<8x8xf32>
    %cst_339 = arith.constant dense<0xFF800000> : vector<8xf32>
    %930 = vector.multi_reduction <maximumf>, %929, %cst_339 [1] : vector<8x8xf32> to vector<8xf32>
    %931 = vector.shape_cast %930 : vector<8xf32> to vector<8x1xf32>
    %932 = vector.broadcast %931 : vector<8x1xf32> to vector<8x8xf32>
    %933 = arith.subf %929, %932 : vector<8x8xf32>
    %934 = math.exp %933 : vector<8x8xf32>
    %cst_340 = arith.constant dense<0.000000e+00> : vector<8xf32>
    %935 = vector.multi_reduction <add>, %934, %cst_340 [1] : vector<8x8xf32> to vector<8xf32>
    %936 = vector.shape_cast %935 : vector<8xf32> to vector<8x1xf32>
    %937 = tpu.reciprocal %936 {approx = true} : vector<8x1xf32> -> vector<8x1xf32>
    %938 = vector.broadcast %937 : vector<8x1xf32> to vector<8x8xf32>
    %939 = arith.mulf %934, %938 : vector<8x8xf32>
    %940 = arith.addf %920, %939 : vector<8x8xf32>
    %941 = vector.extract_strided_slice %903 {offsets = [0, 8], sizes = [8, 8], strides = [1, 1]} : vector<8x32xf32> to vector<8x8xf32>
    %cst_341 = arith.constant dense<0.000000e+00> : vector<8x8xf32>
    %942 = tpu.matmul %939, %941, %cst_341 {dimension_numbers = #tpu.dot_dimension_numbers<[1], [0], [0], [1], [0, 0, 1, 1], [], []>} : vector<8x8xf32>, vector<8x8xf32>, vector<8x8xf32> -> vector<8x8xf32>
    %943 = vector.extract_strided_slice %905 {offsets = [8, 0], sizes = [8, 32], strides = [1, 1]} : vector<32x32xf32> to vector<8x32xf32>
    %cst_342 = arith.constant dense<0.000000e+00> : vector<8x32xf32>
    %944 = tpu.matmul %942, %943, %cst_342 {dimension_numbers = #tpu.dot_dimension_numbers<[1], [0], [0], [1], [0, 0, 1, 1], [], []>} : vector<8x8xf32>, vector<8x32xf32>, vector<8x32xf32> -> vector<8x32xf32>
    %945 = arith.addf %924, %944 : vector<8x32xf32>
    %946 = vector.extract_strided_slice %900 {offsets = [0, 16], sizes = [8, 8], strides = [1, 1]} : vector<8x32xf32> to vector<8x8xf32>
    %947 = vector.extract_strided_slice %902 {offsets = [16, 0], sizes = [8, 8], strides = [1, 1]} : vector<32x8xf32> to vector<8x8xf32>
    %cst_343 = arith.constant dense<0.000000e+00> : vector<8x8xf32>
    %948 = tpu.matmul %946, %947, %cst_343 {dimension_numbers = #tpu.dot_dimension_numbers<[1], [0], [0], [1], [0, 0, 1, 1], [], []>} : vector<8x8xf32>, vector<8x8xf32>, vector<8x8xf32> -> vector<8x8xf32>
    %cst_344 = arith.constant 0.353553385 : f32
    %949 = vector.broadcast %cst_344 : f32 to vector<8x8xf32>
    %950 = arith.mulf %948, %949 : vector<8x8xf32>
    %cst_345 = arith.constant dense<0xFF800000> : vector<8xf32>
    %951 = vector.multi_reduction <maximumf>, %950, %cst_345 [1] : vector<8x8xf32> to vector<8xf32>
    %952 = vector.shape_cast %951 : vector<8xf32> to vector<8x1xf32>
    %953 = vector.broadcast %952 : vector<8x1xf32> to vector<8x8xf32>
    %954 = arith.subf %950, %953 : vector<8x8xf32>
    %955 = math.exp %954 : vector<8x8xf32>
    %cst_346 = arith.constant dense<0.000000e+00> : vector<8xf32>
    %956 = vector.multi_reduction <add>, %955, %cst_346 [1] : vector<8x8xf32> to vector<8xf32>
    %957 = vector.shape_cast %956 : vector<8xf32> to vector<8x1xf32>
    %958 = tpu.reciprocal %957 {approx = true} : vector<8x1xf32> -> vector<8x1xf32>
    %959 = vector.broadcast %958 : vector<8x1xf32> to vector<8x8xf32>
    %960 = arith.mulf %955, %959 : vector<8x8xf32>
    %961 = arith.addf %940, %960 : vector<8x8xf32>
    %962 = vector.extract_strided_slice %903 {offsets = [0, 16], sizes = [8, 8], strides = [1, 1]} : vector<8x32xf32> to vector<8x8xf32>
    %cst_347 = arith.constant dense<0.000000e+00> : vector<8x8xf32>
    %963 = tpu.matmul %960, %962, %cst_347 {dimension_numbers = #tpu.dot_dimension_numbers<[1], [0], [0], [1], [0, 0, 1, 1], [], []>} : vector<8x8xf32>, vector<8x8xf32>, vector<8x8xf32> -> vector<8x8xf32>
    %964 = vector.extract_strided_slice %905 {offsets = [16, 0], sizes = [8, 32], strides = [1, 1]} : vector<32x32xf32> to vector<8x32xf32>
    %cst_348 = arith.constant dense<0.000000e+00> : vector<8x32xf32>
    %965 = tpu.matmul %963, %964, %cst_348 {dimension_numbers = #tpu.dot_dimension_numbers<[1], [0], [0], [1], [0, 0, 1, 1], [], []>} : vector<8x8xf32>, vector<8x32xf32>, vector<8x32xf32> -> vector<8x32xf32>
    %966 = arith.addf %945, %965 : vector<8x32xf32>
    %967 = vector.extract_strided_slice %900 {offsets = [0, 24], sizes = [8, 8], strides = [1, 1]} : vector<8x32xf32> to vector<8x8xf32>
    %968 = vector.extract_strided_slice %902 {offsets = [24, 0], sizes = [8, 8], strides = [1, 1]} : vector<32x8xf32> to vector<8x8xf32>
    %cst_349 = arith.constant dense<0.000000e+00> : vector<8x8xf32>
    %969 = tpu.matmul %967, %968, %cst_349 {dimension_numbers = #tpu.dot_dimension_numbers<[1], [0], [0], [1], [0, 0, 1, 1], [], []>} : vector<8x8xf32>, vector<8x8xf32>, vector<8x8xf32> -> vector<8x8xf32>
    %cst_350 = arith.constant 0.353553385 : f32
    %970 = vector.broadcast %cst_350 : f32 to vector<8x8xf32>
    %971 = arith.mulf %969, %970 : vector<8x8xf32>
    %cst_351 = arith.constant dense<0xFF800000> : vector<8xf32>
    %972 = vector.multi_reduction <maximumf>, %971, %cst_351 [1] : vector<8x8xf32> to vector<8xf32>
    %973 = vector.shape_cast %972 : vector<8xf32> to vector<8x1xf32>
    %974 = vector.broadcast %973 : vector<8x1xf32> to vector<8x8xf32>
    %975 = arith.subf %971, %974 : vector<8x8xf32>
    %976 = math.exp %975 : vector<8x8xf32>
    %cst_352 = arith.constant dense<0.000000e+00> : vector<8xf32>
    %977 = vector.multi_reduction <add>, %976, %cst_352 [1] : vector<8x8xf32> to vector<8xf32>
    %978 = vector.shape_cast %977 : vector<8xf32> to vector<8x1xf32>
    %979 = tpu.reciprocal %978 {approx = true} : vector<8x1xf32> -> vector<8x1xf32>
    %980 = vector.broadcast %979 : vector<8x1xf32> to vector<8x8xf32>
    %981 = arith.mulf %976, %980 : vector<8x8xf32>
    %982 = arith.addf %961, %981 : vector<8x8xf32>
    %983 = vector.extract_strided_slice %903 {offsets = [0, 24], sizes = [8, 8], strides = [1, 1]} : vector<8x32xf32> to vector<8x8xf32>
    %cst_353 = arith.constant dense<0.000000e+00> : vector<8x8xf32>
    %984 = tpu.matmul %981, %983, %cst_353 {dimension_numbers = #tpu.dot_dimension_numbers<[1], [0], [0], [1], [0, 0, 1, 1], [], []>} : vector<8x8xf32>, vector<8x8xf32>, vector<8x8xf32> -> vector<8x8xf32>
    %985 = vector.extract_strided_slice %905 {offsets = [24, 0], sizes = [8, 32], strides = [1, 1]} : vector<32x32xf32> to vector<8x32xf32>
    %cst_354 = arith.constant dense<0.000000e+00> : vector<8x32xf32>
    %986 = tpu.matmul %984, %985, %cst_354 {dimension_numbers = #tpu.dot_dimension_numbers<[1], [0], [0], [1], [0, 0, 1, 1], [], []>} : vector<8x8xf32>, vector<8x32xf32>, vector<8x32xf32> -> vector<8x32xf32>
    %987 = arith.addf %966, %986 : vector<8x32xf32>
    %cst_355 = arith.constant 2.500000e-01 : f32
    %988 = vector.broadcast %cst_355 : f32 to vector<8x8xf32>
    %989 = arith.mulf %982, %988 : vector<8x8xf32>
    %990 = vector.extract_strided_slice %707 {offsets = [8, 0], sizes = [8, 32], strides = [1, 1]} : vector<16x32xf32> to vector<8x32xf32>
    %991 = arith.addf %990, %987 : vector<8x32xf32>
    %c1_356 = arith.constant 1 : index
    %c0_357 = arith.constant 0 : index
    %c0_358 = arith.constant 0 : index
    %992 = vector.load %arg8[%c1_356, %c0_357, %c0_358] : memref<2x1x32xf32, #tpu.memory_space<vmem>>, vector<1x1x32xf32>
    %993 = vector.shape_cast %992 : vector<1x1x32xf32> to vector<1x32xf32>
    %994 = vector.broadcast %993 : vector<1x32xf32> to vector<8x32xf32>
    %995 = arith.addf %991, %994 : vector<8x32xf32>
    %c1_359 = arith.constant 1 : index
    %c0_360 = arith.constant 0 : index
    %c0_361 = arith.constant 0 : index
    %996 = vector.load %arg9[%c1_359, %c0_360, %c0_361] : memref<2x1x32xf32, #tpu.memory_space<vmem>>, vector<1x1x32xf32>
    %997 = vector.shape_cast %996 : vector<1x1x32xf32> to vector<1x32xf32>
    %c1_362 = arith.constant 1 : index
    %c0_363 = arith.constant 0 : index
    %c0_364 = arith.constant 0 : index
    %998 = vector.load %arg10[%c1_362, %c0_363, %c0_364] : memref<2x1x32xf32, #tpu.memory_space<vmem>>, vector<1x1x32xf32>
    %999 = vector.shape_cast %998 : vector<1x1x32xf32> to vector<1x32xf32>
    %cst_365 = arith.constant dense<0.000000e+00> : vector<8xf32>
    %1000 = vector.multi_reduction <add>, %995, %cst_365 [1] : vector<8x32xf32> to vector<8xf32>
    %1001 = vector.shape_cast %1000 : vector<8xf32> to vector<8x1xf32>
    %cst_366 = arith.constant 3.200000e+01 : f32
    %1002 = vector.broadcast %cst_366 : f32 to vector<8x1xf32>
    %1003 = arith.divf %1001, %1002 : vector<8x1xf32>
    %1004 = vector.broadcast %1003 : vector<8x1xf32> to vector<8x32xf32>
    %1005 = arith.subf %995, %1004 : vector<8x32xf32>
    %1006 = arith.mulf %1005, %1005 : vector<8x32xf32>
    %cst_367 = arith.constant dense<0.000000e+00> : vector<8xf32>
    %1007 = vector.multi_reduction <add>, %1006, %cst_367 [1] : vector<8x32xf32> to vector<8xf32>
    %1008 = vector.shape_cast %1007 : vector<8xf32> to vector<8x1xf32>
    %cst_368 = arith.constant 3.200000e+01 : f32
    %1009 = vector.broadcast %cst_368 : f32 to vector<8x1xf32>
    %1010 = arith.divf %1008, %1009 : vector<8x1xf32>
    %1011 = vector.broadcast %1003 : vector<8x1xf32> to vector<8x32xf32>
    %1012 = arith.subf %995, %1011 : vector<8x32xf32>
    %cst_369 = arith.constant 9.99999974E-6 : f32
    %1013 = vector.broadcast %cst_369 : f32 to vector<8x1xf32>
    %1014 = arith.addf %1010, %1013 : vector<8x1xf32>
    %1015 = math.rsqrt %1014 : vector<8x1xf32>
    %1016 = vector.broadcast %1015 : vector<8x1xf32> to vector<8x32xf32>
    %1017 = arith.mulf %1012, %1016 : vector<8x32xf32>
    %1018 = vector.broadcast %997 : vector<1x32xf32> to vector<8x32xf32>
    %1019 = arith.mulf %1017, %1018 : vector<8x32xf32>
    %1020 = vector.broadcast %999 : vector<1x32xf32> to vector<8x32xf32>
    %1021 = arith.addf %1019, %1020 : vector<8x32xf32>
    %1022 = vector.extract_strided_slice %703 {offsets = [8, 0], sizes = [8, 32], strides = [1, 1]} : vector<16x96xf32> to vector<8x32xf32>
    %1023 = vector.extract_strided_slice %703 {offsets = [8, 32], sizes = [8, 32], strides = [1, 1]} : vector<16x96xf32> to vector<8x32xf32>
    %1024 = tpu.transpose %1023, [1, 0] : vector<8x32xf32> -> vector<32x8xf32>
    %1025 = vector.extract_strided_slice %1022 {offsets = [0, 0], sizes = [8, 8], strides = [1, 1]} : vector<8x32xf32> to vector<8x8xf32>
    %1026 = vector.extract_strided_slice %1024 {offsets = [0, 0], sizes = [8, 8], strides = [1, 1]} : vector<32x8xf32> to vector<8x8xf32>
    %cst_370 = arith.constant dense<0.000000e+00> : vector<8x8xf32>
    %1027 = tpu.matmul %1025, %1026, %cst_370 {dimension_numbers = #tpu.dot_dimension_numbers<[1], [0], [0], [1], [0, 0, 1, 1], [], []>} : vector<8x8xf32>, vector<8x8xf32>, vector<8x8xf32> -> vector<8x8xf32>
    %cst_371 = arith.constant 0.353553385 : f32
    %1028 = vector.broadcast %cst_371 : f32 to vector<8x8xf32>
    %1029 = arith.mulf %1027, %1028 : vector<8x8xf32>
    %cst_372 = arith.constant dense<0xFF800000> : vector<8xf32>
    %1030 = vector.multi_reduction <maximumf>, %1029, %cst_372 [1] : vector<8x8xf32> to vector<8xf32>
    %1031 = vector.shape_cast %1030 : vector<8xf32> to vector<8x1xf32>
    %1032 = vector.broadcast %1031 : vector<8x1xf32> to vector<8x8xf32>
    %1033 = arith.subf %1029, %1032 : vector<8x8xf32>
    %1034 = math.exp %1033 : vector<8x8xf32>
    %cst_373 = arith.constant dense<0.000000e+00> : vector<8xf32>
    %1035 = vector.multi_reduction <add>, %1034, %cst_373 [1] : vector<8x8xf32> to vector<8xf32>
    %1036 = vector.shape_cast %1035 : vector<8xf32> to vector<8x1xf32>
    %1037 = tpu.reciprocal %1036 {approx = true} : vector<8x1xf32> -> vector<8x1xf32>
    %1038 = vector.broadcast %1037 : vector<8x1xf32> to vector<8x8xf32>
    %1039 = arith.mulf %1034, %1038 : vector<8x8xf32>
    %1040 = vector.extract_strided_slice %1022 {offsets = [0, 8], sizes = [8, 8], strides = [1, 1]} : vector<8x32xf32> to vector<8x8xf32>
    %1041 = vector.extract_strided_slice %1024 {offsets = [8, 0], sizes = [8, 8], strides = [1, 1]} : vector<32x8xf32> to vector<8x8xf32>
    %cst_374 = arith.constant dense<0.000000e+00> : vector<8x8xf32>
    %1042 = tpu.matmul %1040, %1041, %cst_374 {dimension_numbers = #tpu.dot_dimension_numbers<[1], [0], [0], [1], [0, 0, 1, 1], [], []>} : vector<8x8xf32>, vector<8x8xf32>, vector<8x8xf32> -> vector<8x8xf32>
    %cst_375 = arith.constant 0.353553385 : f32
    %1043 = vector.broadcast %cst_375 : f32 to vector<8x8xf32>
    %1044 = arith.mulf %1042, %1043 : vector<8x8xf32>
    %cst_376 = arith.constant dense<0xFF800000> : vector<8xf32>
    %1045 = vector.multi_reduction <maximumf>, %1044, %cst_376 [1] : vector<8x8xf32> to vector<8xf32>
    %1046 = vector.shape_cast %1045 : vector<8xf32> to vector<8x1xf32>
    %1047 = vector.broadcast %1046 : vector<8x1xf32> to vector<8x8xf32>
    %1048 = arith.subf %1044, %1047 : vector<8x8xf32>
    %1049 = math.exp %1048 : vector<8x8xf32>
    %cst_377 = arith.constant dense<0.000000e+00> : vector<8xf32>
    %1050 = vector.multi_reduction <add>, %1049, %cst_377 [1] : vector<8x8xf32> to vector<8xf32>
    %1051 = vector.shape_cast %1050 : vector<8xf32> to vector<8x1xf32>
    %1052 = tpu.reciprocal %1051 {approx = true} : vector<8x1xf32> -> vector<8x1xf32>
    %1053 = vector.broadcast %1052 : vector<8x1xf32> to vector<8x8xf32>
    %1054 = arith.mulf %1049, %1053 : vector<8x8xf32>
    %1055 = arith.addf %1039, %1054 : vector<8x8xf32>
    %1056 = vector.extract_strided_slice %1022 {offsets = [0, 16], sizes = [8, 8], strides = [1, 1]} : vector<8x32xf32> to vector<8x8xf32>
    %1057 = vector.extract_strided_slice %1024 {offsets = [16, 0], sizes = [8, 8], strides = [1, 1]} : vector<32x8xf32> to vector<8x8xf32>
    %cst_378 = arith.constant dense<0.000000e+00> : vector<8x8xf32>
    %1058 = tpu.matmul %1056, %1057, %cst_378 {dimension_numbers = #tpu.dot_dimension_numbers<[1], [0], [0], [1], [0, 0, 1, 1], [], []>} : vector<8x8xf32>, vector<8x8xf32>, vector<8x8xf32> -> vector<8x8xf32>
    %cst_379 = arith.constant 0.353553385 : f32
    %1059 = vector.broadcast %cst_379 : f32 to vector<8x8xf32>
    %1060 = arith.mulf %1058, %1059 : vector<8x8xf32>
    %cst_380 = arith.constant dense<0xFF800000> : vector<8xf32>
    %1061 = vector.multi_reduction <maximumf>, %1060, %cst_380 [1] : vector<8x8xf32> to vector<8xf32>
    %1062 = vector.shape_cast %1061 : vector<8xf32> to vector<8x1xf32>
    %1063 = vector.broadcast %1062 : vector<8x1xf32> to vector<8x8xf32>
    %1064 = arith.subf %1060, %1063 : vector<8x8xf32>
    %1065 = math.exp %1064 : vector<8x8xf32>
    %cst_381 = arith.constant dense<0.000000e+00> : vector<8xf32>
    %1066 = vector.multi_reduction <add>, %1065, %cst_381 [1] : vector<8x8xf32> to vector<8xf32>
    %1067 = vector.shape_cast %1066 : vector<8xf32> to vector<8x1xf32>
    %1068 = tpu.reciprocal %1067 {approx = true} : vector<8x1xf32> -> vector<8x1xf32>
    %1069 = vector.broadcast %1068 : vector<8x1xf32> to vector<8x8xf32>
    %1070 = arith.mulf %1065, %1069 : vector<8x8xf32>
    %1071 = arith.addf %1055, %1070 : vector<8x8xf32>
    %1072 = vector.extract_strided_slice %1022 {offsets = [0, 24], sizes = [8, 8], strides = [1, 1]} : vector<8x32xf32> to vector<8x8xf32>
    %1073 = vector.extract_strided_slice %1024 {offsets = [24, 0], sizes = [8, 8], strides = [1, 1]} : vector<32x8xf32> to vector<8x8xf32>
    %cst_382 = arith.constant dense<0.000000e+00> : vector<8x8xf32>
    %1074 = tpu.matmul %1072, %1073, %cst_382 {dimension_numbers = #tpu.dot_dimension_numbers<[1], [0], [0], [1], [0, 0, 1, 1], [], []>} : vector<8x8xf32>, vector<8x8xf32>, vector<8x8xf32> -> vector<8x8xf32>
    %cst_383 = arith.constant 0.353553385 : f32
    %1075 = vector.broadcast %cst_383 : f32 to vector<8x8xf32>
    %1076 = arith.mulf %1074, %1075 : vector<8x8xf32>
    %cst_384 = arith.constant dense<0xFF800000> : vector<8xf32>
    %1077 = vector.multi_reduction <maximumf>, %1076, %cst_384 [1] : vector<8x8xf32> to vector<8xf32>
    %1078 = vector.shape_cast %1077 : vector<8xf32> to vector<8x1xf32>
    %1079 = vector.broadcast %1078 : vector<8x1xf32> to vector<8x8xf32>
    %1080 = arith.subf %1076, %1079 : vector<8x8xf32>
    %1081 = math.exp %1080 : vector<8x8xf32>
    %cst_385 = arith.constant dense<0.000000e+00> : vector<8xf32>
    %1082 = vector.multi_reduction <add>, %1081, %cst_385 [1] : vector<8x8xf32> to vector<8xf32>
    %1083 = vector.shape_cast %1082 : vector<8xf32> to vector<8x1xf32>
    %1084 = tpu.reciprocal %1083 {approx = true} : vector<8x1xf32> -> vector<8x1xf32>
    %1085 = vector.broadcast %1084 : vector<8x1xf32> to vector<8x8xf32>
    %1086 = arith.mulf %1081, %1085 : vector<8x8xf32>
    %1087 = arith.addf %1071, %1086 : vector<8x8xf32>
    %cst_386 = arith.constant 2.500000e-01 : f32
    %1088 = vector.broadcast %cst_386 : f32 to vector<8x8xf32>
    %1089 = arith.mulf %1087, %1088 : vector<8x8xf32>
    %cst_387 = arith.constant dense<0.000000e+00> : vector<8x8xf32>
    %1090 = tpu.matmul %1089, %989, %cst_387 {dimension_numbers = #tpu.dot_dimension_numbers<[1], [0], [0], [1], [0, 0, 1, 1], [], []>} : vector<8x8xf32>, vector<8x8xf32>, vector<8x8xf32> -> vector<8x8xf32>
    %cst_388 = arith.constant dense<0.000000e+00> : vector<8x32xf32>
    %1091 = tpu.matmul %1090, %1021, %cst_388 {dimension_numbers = #tpu.dot_dimension_numbers<[1], [0], [0], [1], [0, 0, 1, 1], [], []>} : vector<8x8xf32>, vector<8x32xf32>, vector<8x32xf32> -> vector<8x32xf32>
    %1092 = tpu.concatenate %899, %1091 in 0 : vector<8x32xf32>, vector<8x32xf32> -> vector<16x32xf32>
    %c1_389 = arith.constant 1 : index
    %c0_390 = arith.constant 0 : index
    %c0_391 = arith.constant 0 : index
    %1093 = vector.load %arg11[%c1_389, %c0_390, %c0_391] : memref<2x32x32xbf16, #tpu.memory_space<vmem>>, vector<1x32x32xbf16>
    %1094 = vector.shape_cast %1093 : vector<1x32x32xbf16> to vector<32x32xbf16>
    %1095 = arith.truncf %1092 : vector<16x32xf32> to vector<16x32xbf16>
    %cst_392 = arith.constant dense<0.000000e+00> : vector<16x32xf32>
    %1096 = tpu.matmul %1095, %1094, %cst_392 {dimension_numbers = #tpu.dot_dimension_numbers<[1], [0], [0], [1], [0, 0, 1, 1], [], []>} : vector<16x32xbf16>, vector<32x32xbf16>, vector<16x32xf32> -> vector<16x32xf32>
    %c1_393 = arith.constant 1 : index
    %c0_394 = arith.constant 0 : index
    %c0_395 = arith.constant 0 : index
    %1097 = vector.load %arg12[%c1_393, %c0_394, %c0_395] : memref<2x1x32xf32, #tpu.memory_space<vmem>>, vector<1x1x32xf32>
    %1098 = vector.shape_cast %1097 : vector<1x1x32xf32> to vector<1x32xf32>
    %1099 = vector.broadcast %1098 : vector<1x32xf32> to vector<16x32xf32>
    %1100 = arith.addf %1096, %1099 : vector<16x32xf32>
    %c1_396 = arith.constant 1 : index
    %c0_397 = arith.constant 0 : index
    %c0_398 = arith.constant 0 : index
    %1101 = vector.load %arg13[%c1_396, %c0_397, %c0_398] : memref<2x32x64xbf16, #tpu.memory_space<vmem>>, vector<1x32x64xbf16>
    %1102 = vector.shape_cast %1101 : vector<1x32x64xbf16> to vector<32x64xbf16>
    %1103 = arith.truncf %1 : vector<32x32xf32> to vector<32x32xbf16>
    %cst_399 = arith.constant dense<0.000000e+00> : vector<32x64xf32>
    %1104 = tpu.matmul %1103, %1102, %cst_399 {dimension_numbers = #tpu.dot_dimension_numbers<[1], [0], [0], [1], [0, 0, 1, 1], [], []>} : vector<32x32xbf16>, vector<32x64xbf16>, vector<32x64xf32> -> vector<32x64xf32>
    %c1_400 = arith.constant 1 : index
    %c0_401 = arith.constant 0 : index
    %c0_402 = arith.constant 0 : index
    %1105 = vector.load %arg14[%c1_400, %c0_401, %c0_402] : memref<2x1x64xf32, #tpu.memory_space<vmem>>, vector<1x1x64xf32>
    %1106 = vector.shape_cast %1105 : vector<1x1x64xf32> to vector<1x64xf32>
    %1107 = vector.broadcast %1106 : vector<1x64xf32> to vector<32x64xf32>
    %1108 = arith.addf %1104, %1107 : vector<32x64xf32>
    %1109 = vector.extract_strided_slice %1108 {offsets = [0, 0], sizes = [16, 32], strides = [1, 1]} : vector<32x64xf32> to vector<16x32xf32>
    %1110 = tpu.transpose %1109, [1, 0] : vector<16x32xf32> -> vector<32x16xf32>
    %1111 = vector.extract_strided_slice %1108 {offsets = [0, 32], sizes = [16, 32], strides = [1, 1]} : vector<32x64xf32> to vector<16x32xf32>
    %1112 = vector.extract_strided_slice %1100 {offsets = [0, 0], sizes = [8, 32], strides = [1, 1]} : vector<16x32xf32> to vector<8x32xf32>
    %c1_403 = arith.constant 1 : index
    %c0_404 = arith.constant 0 : index
    %c0_405 = arith.constant 0 : index
    %1113 = vector.load %arg15[%c1_403, %c0_404, %c0_405] : memref<2x32x32xf32, #tpu.memory_space<vmem>>, vector<1x32x32xf32>
    %1114 = vector.shape_cast %1113 : vector<1x32x32xf32> to vector<32x32xf32>
    %1115 = vector.extract_strided_slice %1112 {offsets = [0, 0], sizes = [8, 8], strides = [1, 1]} : vector<8x32xf32> to vector<8x8xf32>
    %1116 = vector.extract_strided_slice %1110 {offsets = [0, 0], sizes = [8, 16], strides = [1, 1]} : vector<32x16xf32> to vector<8x16xf32>
    %cst_406 = arith.constant dense<0.000000e+00> : vector<8x16xf32>
    %1117 = tpu.matmul %1115, %1116, %cst_406 {dimension_numbers = #tpu.dot_dimension_numbers<[1], [0], [0], [1], [0, 0, 1, 1], [], []>} : vector<8x8xf32>, vector<8x16xf32>, vector<8x16xf32> -> vector<8x16xf32>
    %cst_407 = arith.constant 0.353553385 : f32
    %1118 = vector.broadcast %cst_407 : f32 to vector<8x16xf32>
    %1119 = arith.mulf %1117, %1118 : vector<8x16xf32>
    %cst_408 = arith.constant dense<0xFF800000> : vector<8xf32>
    %1120 = vector.multi_reduction <maximumf>, %1119, %cst_408 [1] : vector<8x16xf32> to vector<8xf32>
    %1121 = vector.shape_cast %1120 : vector<8xf32> to vector<8x1xf32>
    %1122 = vector.broadcast %1121 : vector<8x1xf32> to vector<8x16xf32>
    %1123 = arith.subf %1119, %1122 : vector<8x16xf32>
    %1124 = math.exp %1123 : vector<8x16xf32>
    %cst_409 = arith.constant dense<0.000000e+00> : vector<8xf32>
    %1125 = vector.multi_reduction <add>, %1124, %cst_409 [1] : vector<8x16xf32> to vector<8xf32>
    %1126 = vector.shape_cast %1125 : vector<8xf32> to vector<8x1xf32>
    %1127 = tpu.reciprocal %1126 {approx = true} : vector<8x1xf32> -> vector<8x1xf32>
    %1128 = vector.broadcast %1127 : vector<8x1xf32> to vector<8x16xf32>
    %1129 = arith.mulf %1124, %1128 : vector<8x16xf32>
    %1130 = vector.extract_strided_slice %1111 {offsets = [0, 0], sizes = [16, 8], strides = [1, 1]} : vector<16x32xf32> to vector<16x8xf32>
    %cst_410 = arith.constant dense<0.000000e+00> : vector<8x8xf32>
    %1131 = tpu.matmul %1129, %1130, %cst_410 {dimension_numbers = #tpu.dot_dimension_numbers<[1], [0], [0], [1], [0, 0, 1, 1], [], []>} : vector<8x16xf32>, vector<16x8xf32>, vector<8x8xf32> -> vector<8x8xf32>
    %1132 = vector.extract_strided_slice %1114 {offsets = [0, 0], sizes = [8, 32], strides = [1, 1]} : vector<32x32xf32> to vector<8x32xf32>
    %cst_411 = arith.constant dense<0.000000e+00> : vector<8x32xf32>
    %1133 = tpu.matmul %1131, %1132, %cst_411 {dimension_numbers = #tpu.dot_dimension_numbers<[1], [0], [0], [1], [0, 0, 1, 1], [], []>} : vector<8x8xf32>, vector<8x32xf32>, vector<8x32xf32> -> vector<8x32xf32>
    %1134 = vector.extract_strided_slice %1112 {offsets = [0, 8], sizes = [8, 8], strides = [1, 1]} : vector<8x32xf32> to vector<8x8xf32>
    %1135 = vector.extract_strided_slice %1110 {offsets = [8, 0], sizes = [8, 16], strides = [1, 1]} : vector<32x16xf32> to vector<8x16xf32>
    %cst_412 = arith.constant dense<0.000000e+00> : vector<8x16xf32>
    %1136 = tpu.matmul %1134, %1135, %cst_412 {dimension_numbers = #tpu.dot_dimension_numbers<[1], [0], [0], [1], [0, 0, 1, 1], [], []>} : vector<8x8xf32>, vector<8x16xf32>, vector<8x16xf32> -> vector<8x16xf32>
    %cst_413 = arith.constant 0.353553385 : f32
    %1137 = vector.broadcast %cst_413 : f32 to vector<8x16xf32>
    %1138 = arith.mulf %1136, %1137 : vector<8x16xf32>
    %cst_414 = arith.constant dense<0xFF800000> : vector<8xf32>
    %1139 = vector.multi_reduction <maximumf>, %1138, %cst_414 [1] : vector<8x16xf32> to vector<8xf32>
    %1140 = vector.shape_cast %1139 : vector<8xf32> to vector<8x1xf32>
    %1141 = vector.broadcast %1140 : vector<8x1xf32> to vector<8x16xf32>
    %1142 = arith.subf %1138, %1141 : vector<8x16xf32>
    %1143 = math.exp %1142 : vector<8x16xf32>
    %cst_415 = arith.constant dense<0.000000e+00> : vector<8xf32>
    %1144 = vector.multi_reduction <add>, %1143, %cst_415 [1] : vector<8x16xf32> to vector<8xf32>
    %1145 = vector.shape_cast %1144 : vector<8xf32> to vector<8x1xf32>
    %1146 = tpu.reciprocal %1145 {approx = true} : vector<8x1xf32> -> vector<8x1xf32>
    %1147 = vector.broadcast %1146 : vector<8x1xf32> to vector<8x16xf32>
    %1148 = arith.mulf %1143, %1147 : vector<8x16xf32>
    %1149 = vector.extract_strided_slice %1111 {offsets = [0, 8], sizes = [16, 8], strides = [1, 1]} : vector<16x32xf32> to vector<16x8xf32>
    %cst_416 = arith.constant dense<0.000000e+00> : vector<8x8xf32>
    %1150 = tpu.matmul %1148, %1149, %cst_416 {dimension_numbers = #tpu.dot_dimension_numbers<[1], [0], [0], [1], [0, 0, 1, 1], [], []>} : vector<8x16xf32>, vector<16x8xf32>, vector<8x8xf32> -> vector<8x8xf32>
    %1151 = vector.extract_strided_slice %1114 {offsets = [8, 0], sizes = [8, 32], strides = [1, 1]} : vector<32x32xf32> to vector<8x32xf32>
    %cst_417 = arith.constant dense<0.000000e+00> : vector<8x32xf32>
    %1152 = tpu.matmul %1150, %1151, %cst_417 {dimension_numbers = #tpu.dot_dimension_numbers<[1], [0], [0], [1], [0, 0, 1, 1], [], []>} : vector<8x8xf32>, vector<8x32xf32>, vector<8x32xf32> -> vector<8x32xf32>
    %1153 = arith.addf %1133, %1152 : vector<8x32xf32>
    %1154 = vector.extract_strided_slice %1112 {offsets = [0, 16], sizes = [8, 8], strides = [1, 1]} : vector<8x32xf32> to vector<8x8xf32>
    %1155 = vector.extract_strided_slice %1110 {offsets = [16, 0], sizes = [8, 16], strides = [1, 1]} : vector<32x16xf32> to vector<8x16xf32>
    %cst_418 = arith.constant dense<0.000000e+00> : vector<8x16xf32>
    %1156 = tpu.matmul %1154, %1155, %cst_418 {dimension_numbers = #tpu.dot_dimension_numbers<[1], [0], [0], [1], [0, 0, 1, 1], [], []>} : vector<8x8xf32>, vector<8x16xf32>, vector<8x16xf32> -> vector<8x16xf32>
    %cst_419 = arith.constant 0.353553385 : f32
    %1157 = vector.broadcast %cst_419 : f32 to vector<8x16xf32>
    %1158 = arith.mulf %1156, %1157 : vector<8x16xf32>
    %cst_420 = arith.constant dense<0xFF800000> : vector<8xf32>
    %1159 = vector.multi_reduction <maximumf>, %1158, %cst_420 [1] : vector<8x16xf32> to vector<8xf32>
    %1160 = vector.shape_cast %1159 : vector<8xf32> to vector<8x1xf32>
    %1161 = vector.broadcast %1160 : vector<8x1xf32> to vector<8x16xf32>
    %1162 = arith.subf %1158, %1161 : vector<8x16xf32>
    %1163 = math.exp %1162 : vector<8x16xf32>
    %cst_421 = arith.constant dense<0.000000e+00> : vector<8xf32>
    %1164 = vector.multi_reduction <add>, %1163, %cst_421 [1] : vector<8x16xf32> to vector<8xf32>
    %1165 = vector.shape_cast %1164 : vector<8xf32> to vector<8x1xf32>
    %1166 = tpu.reciprocal %1165 {approx = true} : vector<8x1xf32> -> vector<8x1xf32>
    %1167 = vector.broadcast %1166 : vector<8x1xf32> to vector<8x16xf32>
    %1168 = arith.mulf %1163, %1167 : vector<8x16xf32>
    %1169 = vector.extract_strided_slice %1111 {offsets = [0, 16], sizes = [16, 8], strides = [1, 1]} : vector<16x32xf32> to vector<16x8xf32>
    %cst_422 = arith.constant dense<0.000000e+00> : vector<8x8xf32>
    %1170 = tpu.matmul %1168, %1169, %cst_422 {dimension_numbers = #tpu.dot_dimension_numbers<[1], [0], [0], [1], [0, 0, 1, 1], [], []>} : vector<8x16xf32>, vector<16x8xf32>, vector<8x8xf32> -> vector<8x8xf32>
    %1171 = vector.extract_strided_slice %1114 {offsets = [16, 0], sizes = [8, 32], strides = [1, 1]} : vector<32x32xf32> to vector<8x32xf32>
    %cst_423 = arith.constant dense<0.000000e+00> : vector<8x32xf32>
    %1172 = tpu.matmul %1170, %1171, %cst_423 {dimension_numbers = #tpu.dot_dimension_numbers<[1], [0], [0], [1], [0, 0, 1, 1], [], []>} : vector<8x8xf32>, vector<8x32xf32>, vector<8x32xf32> -> vector<8x32xf32>
    %1173 = arith.addf %1153, %1172 : vector<8x32xf32>
    %1174 = vector.extract_strided_slice %1112 {offsets = [0, 24], sizes = [8, 8], strides = [1, 1]} : vector<8x32xf32> to vector<8x8xf32>
    %1175 = vector.extract_strided_slice %1110 {offsets = [24, 0], sizes = [8, 16], strides = [1, 1]} : vector<32x16xf32> to vector<8x16xf32>
    %cst_424 = arith.constant dense<0.000000e+00> : vector<8x16xf32>
    %1176 = tpu.matmul %1174, %1175, %cst_424 {dimension_numbers = #tpu.dot_dimension_numbers<[1], [0], [0], [1], [0, 0, 1, 1], [], []>} : vector<8x8xf32>, vector<8x16xf32>, vector<8x16xf32> -> vector<8x16xf32>
    %cst_425 = arith.constant 0.353553385 : f32
    %1177 = vector.broadcast %cst_425 : f32 to vector<8x16xf32>
    %1178 = arith.mulf %1176, %1177 : vector<8x16xf32>
    %cst_426 = arith.constant dense<0xFF800000> : vector<8xf32>
    %1179 = vector.multi_reduction <maximumf>, %1178, %cst_426 [1] : vector<8x16xf32> to vector<8xf32>
    %1180 = vector.shape_cast %1179 : vector<8xf32> to vector<8x1xf32>
    %1181 = vector.broadcast %1180 : vector<8x1xf32> to vector<8x16xf32>
    %1182 = arith.subf %1178, %1181 : vector<8x16xf32>
    %1183 = math.exp %1182 : vector<8x16xf32>
    %cst_427 = arith.constant dense<0.000000e+00> : vector<8xf32>
    %1184 = vector.multi_reduction <add>, %1183, %cst_427 [1] : vector<8x16xf32> to vector<8xf32>
    %1185 = vector.shape_cast %1184 : vector<8xf32> to vector<8x1xf32>
    %1186 = tpu.reciprocal %1185 {approx = true} : vector<8x1xf32> -> vector<8x1xf32>
    %1187 = vector.broadcast %1186 : vector<8x1xf32> to vector<8x16xf32>
    %1188 = arith.mulf %1183, %1187 : vector<8x16xf32>
    %1189 = vector.extract_strided_slice %1111 {offsets = [0, 24], sizes = [16, 8], strides = [1, 1]} : vector<16x32xf32> to vector<16x8xf32>
    %cst_428 = arith.constant dense<0.000000e+00> : vector<8x8xf32>
    %1190 = tpu.matmul %1188, %1189, %cst_428 {dimension_numbers = #tpu.dot_dimension_numbers<[1], [0], [0], [1], [0, 0, 1, 1], [], []>} : vector<8x16xf32>, vector<16x8xf32>, vector<8x8xf32> -> vector<8x8xf32>
    %1191 = vector.extract_strided_slice %1114 {offsets = [24, 0], sizes = [8, 32], strides = [1, 1]} : vector<32x32xf32> to vector<8x32xf32>
    %cst_429 = arith.constant dense<0.000000e+00> : vector<8x32xf32>
    %1192 = tpu.matmul %1190, %1191, %cst_429 {dimension_numbers = #tpu.dot_dimension_numbers<[1], [0], [0], [1], [0, 0, 1, 1], [], []>} : vector<8x8xf32>, vector<8x32xf32>, vector<8x32xf32> -> vector<8x32xf32>
    %1193 = arith.addf %1173, %1192 : vector<8x32xf32>
    %1194 = vector.extract_strided_slice %1092 {offsets = [0, 0], sizes = [8, 32], strides = [1, 1]} : vector<16x32xf32> to vector<8x32xf32>
    %1195 = arith.addf %1194, %1193 : vector<8x32xf32>
    %c1_430 = arith.constant 1 : index
    %c0_431 = arith.constant 0 : index
    %c0_432 = arith.constant 0 : index
    %1196 = vector.load %arg16[%c1_430, %c0_431, %c0_432] : memref<2x1x32xf32, #tpu.memory_space<vmem>>, vector<1x1x32xf32>
    %1197 = vector.shape_cast %1196 : vector<1x1x32xf32> to vector<1x32xf32>
    %1198 = vector.broadcast %1197 : vector<1x32xf32> to vector<8x32xf32>
    %1199 = arith.addf %1195, %1198 : vector<8x32xf32>
    %c1_433 = arith.constant 1 : index
    %c0_434 = arith.constant 0 : index
    %c0_435 = arith.constant 0 : index
    %1200 = vector.load %arg17[%c1_433, %c0_434, %c0_435] : memref<2x1x32xf32, #tpu.memory_space<vmem>>, vector<1x1x32xf32>
    %1201 = vector.shape_cast %1200 : vector<1x1x32xf32> to vector<1x32xf32>
    %c1_436 = arith.constant 1 : index
    %c0_437 = arith.constant 0 : index
    %c0_438 = arith.constant 0 : index
    %1202 = vector.load %arg18[%c1_436, %c0_437, %c0_438] : memref<2x1x32xf32, #tpu.memory_space<vmem>>, vector<1x1x32xf32>
    %1203 = vector.shape_cast %1202 : vector<1x1x32xf32> to vector<1x32xf32>
    %cst_439 = arith.constant dense<0.000000e+00> : vector<8xf32>
    %1204 = vector.multi_reduction <add>, %1199, %cst_439 [1] : vector<8x32xf32> to vector<8xf32>
    %1205 = vector.shape_cast %1204 : vector<8xf32> to vector<8x1xf32>
    %cst_440 = arith.constant 3.200000e+01 : f32
    %1206 = vector.broadcast %cst_440 : f32 to vector<8x1xf32>
    %1207 = arith.divf %1205, %1206 : vector<8x1xf32>
    %1208 = vector.broadcast %1207 : vector<8x1xf32> to vector<8x32xf32>
    %1209 = arith.subf %1199, %1208 : vector<8x32xf32>
    %1210 = arith.mulf %1209, %1209 : vector<8x32xf32>
    %cst_441 = arith.constant dense<0.000000e+00> : vector<8xf32>
    %1211 = vector.multi_reduction <add>, %1210, %cst_441 [1] : vector<8x32xf32> to vector<8xf32>
    %1212 = vector.shape_cast %1211 : vector<8xf32> to vector<8x1xf32>
    %cst_442 = arith.constant 3.200000e+01 : f32
    %1213 = vector.broadcast %cst_442 : f32 to vector<8x1xf32>
    %1214 = arith.divf %1212, %1213 : vector<8x1xf32>
    %1215 = vector.broadcast %1207 : vector<8x1xf32> to vector<8x32xf32>
    %1216 = arith.subf %1199, %1215 : vector<8x32xf32>
    %cst_443 = arith.constant 9.99999974E-6 : f32
    %1217 = vector.broadcast %cst_443 : f32 to vector<8x1xf32>
    %1218 = arith.addf %1214, %1217 : vector<8x1xf32>
    %1219 = math.rsqrt %1218 : vector<8x1xf32>
    %1220 = vector.broadcast %1219 : vector<8x1xf32> to vector<8x32xf32>
    %1221 = arith.mulf %1216, %1220 : vector<8x32xf32>
    %1222 = vector.broadcast %1201 : vector<1x32xf32> to vector<8x32xf32>
    %1223 = arith.mulf %1221, %1222 : vector<8x32xf32>
    %1224 = vector.broadcast %1203 : vector<1x32xf32> to vector<8x32xf32>
    %1225 = arith.addf %1223, %1224 : vector<8x32xf32>
    %1226 = vector.extract_strided_slice %1108 {offsets = [16, 0], sizes = [16, 32], strides = [1, 1]} : vector<32x64xf32> to vector<16x32xf32>
    %1227 = tpu.transpose %1226, [1, 0] : vector<16x32xf32> -> vector<32x16xf32>
    %1228 = vector.extract_strided_slice %1108 {offsets = [16, 32], sizes = [16, 32], strides = [1, 1]} : vector<32x64xf32> to vector<16x32xf32>
    %1229 = vector.extract_strided_slice %1100 {offsets = [8, 0], sizes = [8, 32], strides = [1, 1]} : vector<16x32xf32> to vector<8x32xf32>
    %c1_444 = arith.constant 1 : index
    %c0_445 = arith.constant 0 : index
    %c0_446 = arith.constant 0 : index
    %1230 = vector.load %arg15[%c1_444, %c0_445, %c0_446] : memref<2x32x32xf32, #tpu.memory_space<vmem>>, vector<1x32x32xf32>
    %1231 = vector.shape_cast %1230 : vector<1x32x32xf32> to vector<32x32xf32>
    %1232 = vector.extract_strided_slice %1229 {offsets = [0, 0], sizes = [8, 8], strides = [1, 1]} : vector<8x32xf32> to vector<8x8xf32>
    %1233 = vector.extract_strided_slice %1227 {offsets = [0, 0], sizes = [8, 16], strides = [1, 1]} : vector<32x16xf32> to vector<8x16xf32>
    %cst_447 = arith.constant dense<0.000000e+00> : vector<8x16xf32>
    %1234 = tpu.matmul %1232, %1233, %cst_447 {dimension_numbers = #tpu.dot_dimension_numbers<[1], [0], [0], [1], [0, 0, 1, 1], [], []>} : vector<8x8xf32>, vector<8x16xf32>, vector<8x16xf32> -> vector<8x16xf32>
    %cst_448 = arith.constant 0.353553385 : f32
    %1235 = vector.broadcast %cst_448 : f32 to vector<8x16xf32>
    %1236 = arith.mulf %1234, %1235 : vector<8x16xf32>
    %cst_449 = arith.constant dense<0xFF800000> : vector<8xf32>
    %1237 = vector.multi_reduction <maximumf>, %1236, %cst_449 [1] : vector<8x16xf32> to vector<8xf32>
    %1238 = vector.shape_cast %1237 : vector<8xf32> to vector<8x1xf32>
    %1239 = vector.broadcast %1238 : vector<8x1xf32> to vector<8x16xf32>
    %1240 = arith.subf %1236, %1239 : vector<8x16xf32>
    %1241 = math.exp %1240 : vector<8x16xf32>
    %cst_450 = arith.constant dense<0.000000e+00> : vector<8xf32>
    %1242 = vector.multi_reduction <add>, %1241, %cst_450 [1] : vector<8x16xf32> to vector<8xf32>
    %1243 = vector.shape_cast %1242 : vector<8xf32> to vector<8x1xf32>
    %1244 = tpu.reciprocal %1243 {approx = true} : vector<8x1xf32> -> vector<8x1xf32>
    %1245 = vector.broadcast %1244 : vector<8x1xf32> to vector<8x16xf32>
    %1246 = arith.mulf %1241, %1245 : vector<8x16xf32>
    %1247 = vector.extract_strided_slice %1228 {offsets = [0, 0], sizes = [16, 8], strides = [1, 1]} : vector<16x32xf32> to vector<16x8xf32>
    %cst_451 = arith.constant dense<0.000000e+00> : vector<8x8xf32>
    %1248 = tpu.matmul %1246, %1247, %cst_451 {dimension_numbers = #tpu.dot_dimension_numbers<[1], [0], [0], [1], [0, 0, 1, 1], [], []>} : vector<8x16xf32>, vector<16x8xf32>, vector<8x8xf32> -> vector<8x8xf32>
    %1249 = vector.extract_strided_slice %1231 {offsets = [0, 0], sizes = [8, 32], strides = [1, 1]} : vector<32x32xf32> to vector<8x32xf32>
    %cst_452 = arith.constant dense<0.000000e+00> : vector<8x32xf32>
    %1250 = tpu.matmul %1248, %1249, %cst_452 {dimension_numbers = #tpu.dot_dimension_numbers<[1], [0], [0], [1], [0, 0, 1, 1], [], []>} : vector<8x8xf32>, vector<8x32xf32>, vector<8x32xf32> -> vector<8x32xf32>
    %1251 = vector.extract_strided_slice %1229 {offsets = [0, 8], sizes = [8, 8], strides = [1, 1]} : vector<8x32xf32> to vector<8x8xf32>
    %1252 = vector.extract_strided_slice %1227 {offsets = [8, 0], sizes = [8, 16], strides = [1, 1]} : vector<32x16xf32> to vector<8x16xf32>
    %cst_453 = arith.constant dense<0.000000e+00> : vector<8x16xf32>
    %1253 = tpu.matmul %1251, %1252, %cst_453 {dimension_numbers = #tpu.dot_dimension_numbers<[1], [0], [0], [1], [0, 0, 1, 1], [], []>} : vector<8x8xf32>, vector<8x16xf32>, vector<8x16xf32> -> vector<8x16xf32>
    %cst_454 = arith.constant 0.353553385 : f32
    %1254 = vector.broadcast %cst_454 : f32 to vector<8x16xf32>
    %1255 = arith.mulf %1253, %1254 : vector<8x16xf32>
    %cst_455 = arith.constant dense<0xFF800000> : vector<8xf32>
    %1256 = vector.multi_reduction <maximumf>, %1255, %cst_455 [1] : vector<8x16xf32> to vector<8xf32>
    %1257 = vector.shape_cast %1256 : vector<8xf32> to vector<8x1xf32>
    %1258 = vector.broadcast %1257 : vector<8x1xf32> to vector<8x16xf32>
    %1259 = arith.subf %1255, %1258 : vector<8x16xf32>
    %1260 = math.exp %1259 : vector<8x16xf32>
    %cst_456 = arith.constant dense<0.000000e+00> : vector<8xf32>
    %1261 = vector.multi_reduction <add>, %1260, %cst_456 [1] : vector<8x16xf32> to vector<8xf32>
    %1262 = vector.shape_cast %1261 : vector<8xf32> to vector<8x1xf32>
    %1263 = tpu.reciprocal %1262 {approx = true} : vector<8x1xf32> -> vector<8x1xf32>
    %1264 = vector.broadcast %1263 : vector<8x1xf32> to vector<8x16xf32>
    %1265 = arith.mulf %1260, %1264 : vector<8x16xf32>
    %1266 = vector.extract_strided_slice %1228 {offsets = [0, 8], sizes = [16, 8], strides = [1, 1]} : vector<16x32xf32> to vector<16x8xf32>
    %cst_457 = arith.constant dense<0.000000e+00> : vector<8x8xf32>
    %1267 = tpu.matmul %1265, %1266, %cst_457 {dimension_numbers = #tpu.dot_dimension_numbers<[1], [0], [0], [1], [0, 0, 1, 1], [], []>} : vector<8x16xf32>, vector<16x8xf32>, vector<8x8xf32> -> vector<8x8xf32>
    %1268 = vector.extract_strided_slice %1231 {offsets = [8, 0], sizes = [8, 32], strides = [1, 1]} : vector<32x32xf32> to vector<8x32xf32>
    %cst_458 = arith.constant dense<0.000000e+00> : vector<8x32xf32>
    %1269 = tpu.matmul %1267, %1268, %cst_458 {dimension_numbers = #tpu.dot_dimension_numbers<[1], [0], [0], [1], [0, 0, 1, 1], [], []>} : vector<8x8xf32>, vector<8x32xf32>, vector<8x32xf32> -> vector<8x32xf32>
    %1270 = arith.addf %1250, %1269 : vector<8x32xf32>
    %1271 = vector.extract_strided_slice %1229 {offsets = [0, 16], sizes = [8, 8], strides = [1, 1]} : vector<8x32xf32> to vector<8x8xf32>
    %1272 = vector.extract_strided_slice %1227 {offsets = [16, 0], sizes = [8, 16], strides = [1, 1]} : vector<32x16xf32> to vector<8x16xf32>
    %cst_459 = arith.constant dense<0.000000e+00> : vector<8x16xf32>
    %1273 = tpu.matmul %1271, %1272, %cst_459 {dimension_numbers = #tpu.dot_dimension_numbers<[1], [0], [0], [1], [0, 0, 1, 1], [], []>} : vector<8x8xf32>, vector<8x16xf32>, vector<8x16xf32> -> vector<8x16xf32>
    %cst_460 = arith.constant 0.353553385 : f32
    %1274 = vector.broadcast %cst_460 : f32 to vector<8x16xf32>
    %1275 = arith.mulf %1273, %1274 : vector<8x16xf32>
    %cst_461 = arith.constant dense<0xFF800000> : vector<8xf32>
    %1276 = vector.multi_reduction <maximumf>, %1275, %cst_461 [1] : vector<8x16xf32> to vector<8xf32>
    %1277 = vector.shape_cast %1276 : vector<8xf32> to vector<8x1xf32>
    %1278 = vector.broadcast %1277 : vector<8x1xf32> to vector<8x16xf32>
    %1279 = arith.subf %1275, %1278 : vector<8x16xf32>
    %1280 = math.exp %1279 : vector<8x16xf32>
    %cst_462 = arith.constant dense<0.000000e+00> : vector<8xf32>
    %1281 = vector.multi_reduction <add>, %1280, %cst_462 [1] : vector<8x16xf32> to vector<8xf32>
    %1282 = vector.shape_cast %1281 : vector<8xf32> to vector<8x1xf32>
    %1283 = tpu.reciprocal %1282 {approx = true} : vector<8x1xf32> -> vector<8x1xf32>
    %1284 = vector.broadcast %1283 : vector<8x1xf32> to vector<8x16xf32>
    %1285 = arith.mulf %1280, %1284 : vector<8x16xf32>
    %1286 = vector.extract_strided_slice %1228 {offsets = [0, 16], sizes = [16, 8], strides = [1, 1]} : vector<16x32xf32> to vector<16x8xf32>
    %cst_463 = arith.constant dense<0.000000e+00> : vector<8x8xf32>
    %1287 = tpu.matmul %1285, %1286, %cst_463 {dimension_numbers = #tpu.dot_dimension_numbers<[1], [0], [0], [1], [0, 0, 1, 1], [], []>} : vector<8x16xf32>, vector<16x8xf32>, vector<8x8xf32> -> vector<8x8xf32>
    %1288 = vector.extract_strided_slice %1231 {offsets = [16, 0], sizes = [8, 32], strides = [1, 1]} : vector<32x32xf32> to vector<8x32xf32>
    %cst_464 = arith.constant dense<0.000000e+00> : vector<8x32xf32>
    %1289 = tpu.matmul %1287, %1288, %cst_464 {dimension_numbers = #tpu.dot_dimension_numbers<[1], [0], [0], [1], [0, 0, 1, 1], [], []>} : vector<8x8xf32>, vector<8x32xf32>, vector<8x32xf32> -> vector<8x32xf32>
    %1290 = arith.addf %1270, %1289 : vector<8x32xf32>
    %1291 = vector.extract_strided_slice %1229 {offsets = [0, 24], sizes = [8, 8], strides = [1, 1]} : vector<8x32xf32> to vector<8x8xf32>
    %1292 = vector.extract_strided_slice %1227 {offsets = [24, 0], sizes = [8, 16], strides = [1, 1]} : vector<32x16xf32> to vector<8x16xf32>
    %cst_465 = arith.constant dense<0.000000e+00> : vector<8x16xf32>
    %1293 = tpu.matmul %1291, %1292, %cst_465 {dimension_numbers = #tpu.dot_dimension_numbers<[1], [0], [0], [1], [0, 0, 1, 1], [], []>} : vector<8x8xf32>, vector<8x16xf32>, vector<8x16xf32> -> vector<8x16xf32>
    %cst_466 = arith.constant 0.353553385 : f32
    %1294 = vector.broadcast %cst_466 : f32 to vector<8x16xf32>
    %1295 = arith.mulf %1293, %1294 : vector<8x16xf32>
    %cst_467 = arith.constant dense<0xFF800000> : vector<8xf32>
    %1296 = vector.multi_reduction <maximumf>, %1295, %cst_467 [1] : vector<8x16xf32> to vector<8xf32>
    %1297 = vector.shape_cast %1296 : vector<8xf32> to vector<8x1xf32>
    %1298 = vector.broadcast %1297 : vector<8x1xf32> to vector<8x16xf32>
    %1299 = arith.subf %1295, %1298 : vector<8x16xf32>
    %1300 = math.exp %1299 : vector<8x16xf32>
    %cst_468 = arith.constant dense<0.000000e+00> : vector<8xf32>
    %1301 = vector.multi_reduction <add>, %1300, %cst_468 [1] : vector<8x16xf32> to vector<8xf32>
    %1302 = vector.shape_cast %1301 : vector<8xf32> to vector<8x1xf32>
    %1303 = tpu.reciprocal %1302 {approx = true} : vector<8x1xf32> -> vector<8x1xf32>
    %1304 = vector.broadcast %1303 : vector<8x1xf32> to vector<8x16xf32>
    %1305 = arith.mulf %1300, %1304 : vector<8x16xf32>
    %1306 = vector.extract_strided_slice %1228 {offsets = [0, 24], sizes = [16, 8], strides = [1, 1]} : vector<16x32xf32> to vector<16x8xf32>
    %cst_469 = arith.constant dense<0.000000e+00> : vector<8x8xf32>
    %1307 = tpu.matmul %1305, %1306, %cst_469 {dimension_numbers = #tpu.dot_dimension_numbers<[1], [0], [0], [1], [0, 0, 1, 1], [], []>} : vector<8x16xf32>, vector<16x8xf32>, vector<8x8xf32> -> vector<8x8xf32>
    %1308 = vector.extract_strided_slice %1231 {offsets = [24, 0], sizes = [8, 32], strides = [1, 1]} : vector<32x32xf32> to vector<8x32xf32>
    %cst_470 = arith.constant dense<0.000000e+00> : vector<8x32xf32>
    %1309 = tpu.matmul %1307, %1308, %cst_470 {dimension_numbers = #tpu.dot_dimension_numbers<[1], [0], [0], [1], [0, 0, 1, 1], [], []>} : vector<8x8xf32>, vector<8x32xf32>, vector<8x32xf32> -> vector<8x32xf32>
    %1310 = arith.addf %1290, %1309 : vector<8x32xf32>
    %1311 = vector.extract_strided_slice %1092 {offsets = [8, 0], sizes = [8, 32], strides = [1, 1]} : vector<16x32xf32> to vector<8x32xf32>
    %1312 = arith.addf %1311, %1310 : vector<8x32xf32>
    %c1_471 = arith.constant 1 : index
    %c0_472 = arith.constant 0 : index
    %c0_473 = arith.constant 0 : index
    %1313 = vector.load %arg16[%c1_471, %c0_472, %c0_473] : memref<2x1x32xf32, #tpu.memory_space<vmem>>, vector<1x1x32xf32>
    %1314 = vector.shape_cast %1313 : vector<1x1x32xf32> to vector<1x32xf32>
    %1315 = vector.broadcast %1314 : vector<1x32xf32> to vector<8x32xf32>
    %1316 = arith.addf %1312, %1315 : vector<8x32xf32>
    %c1_474 = arith.constant 1 : index
    %c0_475 = arith.constant 0 : index
    %c0_476 = arith.constant 0 : index
    %1317 = vector.load %arg17[%c1_474, %c0_475, %c0_476] : memref<2x1x32xf32, #tpu.memory_space<vmem>>, vector<1x1x32xf32>
    %1318 = vector.shape_cast %1317 : vector<1x1x32xf32> to vector<1x32xf32>
    %c1_477 = arith.constant 1 : index
    %c0_478 = arith.constant 0 : index
    %c0_479 = arith.constant 0 : index
    %1319 = vector.load %arg18[%c1_477, %c0_478, %c0_479] : memref<2x1x32xf32, #tpu.memory_space<vmem>>, vector<1x1x32xf32>
    %1320 = vector.shape_cast %1319 : vector<1x1x32xf32> to vector<1x32xf32>
    %cst_480 = arith.constant dense<0.000000e+00> : vector<8xf32>
    %1321 = vector.multi_reduction <add>, %1316, %cst_480 [1] : vector<8x32xf32> to vector<8xf32>
    %1322 = vector.shape_cast %1321 : vector<8xf32> to vector<8x1xf32>
    %cst_481 = arith.constant 3.200000e+01 : f32
    %1323 = vector.broadcast %cst_481 : f32 to vector<8x1xf32>
    %1324 = arith.divf %1322, %1323 : vector<8x1xf32>
    %1325 = vector.broadcast %1324 : vector<8x1xf32> to vector<8x32xf32>
    %1326 = arith.subf %1316, %1325 : vector<8x32xf32>
    %1327 = arith.mulf %1326, %1326 : vector<8x32xf32>
    %cst_482 = arith.constant dense<0.000000e+00> : vector<8xf32>
    %1328 = vector.multi_reduction <add>, %1327, %cst_482 [1] : vector<8x32xf32> to vector<8xf32>
    %1329 = vector.shape_cast %1328 : vector<8xf32> to vector<8x1xf32>
    %cst_483 = arith.constant 3.200000e+01 : f32
    %1330 = vector.broadcast %cst_483 : f32 to vector<8x1xf32>
    %1331 = arith.divf %1329, %1330 : vector<8x1xf32>
    %1332 = vector.broadcast %1324 : vector<8x1xf32> to vector<8x32xf32>
    %1333 = arith.subf %1316, %1332 : vector<8x32xf32>
    %cst_484 = arith.constant 9.99999974E-6 : f32
    %1334 = vector.broadcast %cst_484 : f32 to vector<8x1xf32>
    %1335 = arith.addf %1331, %1334 : vector<8x1xf32>
    %1336 = math.rsqrt %1335 : vector<8x1xf32>
    %1337 = vector.broadcast %1336 : vector<8x1xf32> to vector<8x32xf32>
    %1338 = arith.mulf %1333, %1337 : vector<8x32xf32>
    %1339 = vector.broadcast %1318 : vector<1x32xf32> to vector<8x32xf32>
    %1340 = arith.mulf %1338, %1339 : vector<8x32xf32>
    %1341 = vector.broadcast %1320 : vector<1x32xf32> to vector<8x32xf32>
    %1342 = arith.addf %1340, %1341 : vector<8x32xf32>
    %1343 = tpu.concatenate %1225, %1342 in 0 : vector<8x32xf32>, vector<8x32xf32> -> vector<16x32xf32>
    %c1_485 = arith.constant 1 : index
    %c0_486 = arith.constant 0 : index
    %c0_487 = arith.constant 0 : index
    %1344 = vector.load %arg19[%c1_485, %c0_486, %c0_487] : memref<2x32x64xbf16, #tpu.memory_space<vmem>>, vector<1x32x64xbf16>
    %1345 = vector.shape_cast %1344 : vector<1x32x64xbf16> to vector<32x64xbf16>
    %c1_488 = arith.constant 1 : index
    %c0_489 = arith.constant 0 : index
    %c0_490 = arith.constant 0 : index
    %1346 = vector.load %arg20[%c1_488, %c0_489, %c0_490] : memref<2x1x64xf32, #tpu.memory_space<vmem>>, vector<1x1x64xf32>
    %1347 = vector.shape_cast %1346 : vector<1x1x64xf32> to vector<1x64xf32>
    %c1_491 = arith.constant 1 : index
    %c0_492 = arith.constant 0 : index
    %c0_493 = arith.constant 0 : index
    %1348 = vector.load %arg21[%c1_491, %c0_492, %c0_493] : memref<2x64x32xbf16, #tpu.memory_space<vmem>>, vector<1x64x32xbf16>
    %1349 = vector.shape_cast %1348 : vector<1x64x32xbf16> to vector<64x32xbf16>
    %c1_494 = arith.constant 1 : index
    %c0_495 = arith.constant 0 : index
    %c0_496 = arith.constant 0 : index
    %1350 = vector.load %arg22[%c1_494, %c0_495, %c0_496] : memref<2x1x32xf32, #tpu.memory_space<vmem>>, vector<1x1x32xf32>
    %1351 = vector.shape_cast %1350 : vector<1x1x32xf32> to vector<1x32xf32>
    %c1_497 = arith.constant 1 : index
    %c0_498 = arith.constant 0 : index
    %c0_499 = arith.constant 0 : index
    %1352 = vector.load %arg23[%c1_497, %c0_498, %c0_499] : memref<2x1x32xf32, #tpu.memory_space<vmem>>, vector<1x1x32xf32>
    %1353 = vector.shape_cast %1352 : vector<1x1x32xf32> to vector<1x32xf32>
    %c1_500 = arith.constant 1 : index
    %c0_501 = arith.constant 0 : index
    %c0_502 = arith.constant 0 : index
    %1354 = vector.load %arg24[%c1_500, %c0_501, %c0_502] : memref<2x1x32xf32, #tpu.memory_space<vmem>>, vector<1x1x32xf32>
    %1355 = vector.shape_cast %1354 : vector<1x1x32xf32> to vector<1x32xf32>
    %1356 = arith.truncf %1343 : vector<16x32xf32> to vector<16x32xbf16>
    %cst_503 = arith.constant dense<0.000000e+00> : vector<16x64xf32>
    %1357 = tpu.matmul %1356, %1345, %cst_503 {dimension_numbers = #tpu.dot_dimension_numbers<[1], [0], [0], [1], [0, 0, 1, 1], [], []>} : vector<16x32xbf16>, vector<32x64xbf16>, vector<16x64xf32> -> vector<16x64xf32>
    %1358 = vector.broadcast %1347 : vector<1x64xf32> to vector<16x64xf32>
    %1359 = arith.addf %1357, %1358 : vector<16x64xf32>
    %cst_504 = arith.constant 0.000000e+00 : f32
    %1360 = vector.broadcast %cst_504 : f32 to vector<16x64xf32>
    %1361 = arith.maximumf %1359, %1360 : vector<16x64xf32>
    %1362 = arith.truncf %1361 : vector<16x64xf32> to vector<16x64xbf16>
    %cst_505 = arith.constant dense<0.000000e+00> : vector<16x32xf32>
    %1363 = tpu.matmul %1362, %1349, %cst_505 {dimension_numbers = #tpu.dot_dimension_numbers<[1], [0], [0], [1], [0, 0, 1, 1], [], []>} : vector<16x64xbf16>, vector<64x32xbf16>, vector<16x32xf32> -> vector<16x32xf32>
    %1364 = arith.addf %1343, %1363 : vector<16x32xf32>
    %1365 = vector.broadcast %1351 : vector<1x32xf32> to vector<16x32xf32>
    %1366 = arith.addf %1364, %1365 : vector<16x32xf32>
    %cst_506 = arith.constant dense<0.000000e+00> : vector<16xf32>
    %1367 = vector.multi_reduction <add>, %1366, %cst_506 [1] : vector<16x32xf32> to vector<16xf32>
    %1368 = vector.shape_cast %1367 : vector<16xf32> to vector<16x1xf32>
    %cst_507 = arith.constant 3.200000e+01 : f32
    %1369 = vector.broadcast %cst_507 : f32 to vector<16x1xf32>
    %1370 = arith.divf %1368, %1369 : vector<16x1xf32>
    %1371 = vector.broadcast %1370 : vector<16x1xf32> to vector<16x32xf32>
    %1372 = arith.subf %1366, %1371 : vector<16x32xf32>
    %1373 = arith.mulf %1372, %1372 : vector<16x32xf32>
    %cst_508 = arith.constant dense<0.000000e+00> : vector<16xf32>
    %1374 = vector.multi_reduction <add>, %1373, %cst_508 [1] : vector<16x32xf32> to vector<16xf32>
    %1375 = vector.shape_cast %1374 : vector<16xf32> to vector<16x1xf32>
    %cst_509 = arith.constant 3.200000e+01 : f32
    %1376 = vector.broadcast %cst_509 : f32 to vector<16x1xf32>
    %1377 = arith.divf %1375, %1376 : vector<16x1xf32>
    %1378 = vector.broadcast %1370 : vector<16x1xf32> to vector<16x32xf32>
    %1379 = arith.subf %1366, %1378 : vector<16x32xf32>
    %cst_510 = arith.constant 9.99999974E-6 : f32
    %1380 = vector.broadcast %cst_510 : f32 to vector<16x1xf32>
    %1381 = arith.addf %1377, %1380 : vector<16x1xf32>
    %1382 = math.rsqrt %1381 : vector<16x1xf32>
    %1383 = vector.broadcast %1382 : vector<16x1xf32> to vector<16x32xf32>
    %1384 = arith.mulf %1379, %1383 : vector<16x32xf32>
    %1385 = vector.broadcast %1353 : vector<1x32xf32> to vector<16x32xf32>
    %1386 = arith.mulf %1384, %1385 : vector<16x32xf32>
    %1387 = vector.broadcast %1355 : vector<1x32xf32> to vector<16x32xf32>
    %1388 = arith.addf %1386, %1387 : vector<16x32xf32>
    %c0_511 = arith.constant 0 : index
    %c0_512 = arith.constant 0 : index
    %1389 = vector.load %arg25[%c0_511, %c0_512] : memref<32x4xbf16, #tpu.memory_space<vmem>>, vector<32x4xbf16>
    %1390 = arith.truncf %1388 : vector<16x32xf32> to vector<16x32xbf16>
    %cst_513 = arith.constant dense<0.000000e+00> : vector<16x4xf32>
    %1391 = tpu.matmul %1390, %1389, %cst_513 {dimension_numbers = #tpu.dot_dimension_numbers<[1], [0], [0], [1], [0, 0, 1, 1], [], []>} : vector<16x32xbf16>, vector<32x4xbf16>, vector<16x4xf32> -> vector<16x4xf32>
    %c0_514 = arith.constant 0 : index
    %c0_515 = arith.constant 0 : index
    %1392 = vector.load %arg26[%c0_514, %c0_515] : memref<1x4xf32, #tpu.memory_space<vmem>>, vector<1x4xf32>
    %1393 = vector.broadcast %1392 : vector<1x4xf32> to vector<16x4xf32>
    %1394 = arith.addf %1391, %1393 : vector<16x4xf32>
    %c0_516 = arith.constant 0 : index
    %c0_517 = arith.constant 0 : index
    %1395 = vector.load %arg27[%c0_516, %c0_517] : memref<16x4xf32, #tpu.memory_space<vmem>>, vector<16x4xf32>
    tpu.vector_store %arg27[%c0_516, %c0_517], %1394 {strides = array<i32>} : memref<16x4xf32, #tpu.memory_space<vmem>>, vector<16x4xf32>,
    return
  }
  func.func @transform_0(%arg0: i32) -> (i32, i32) {
    %c0_i32 = arith.constant 0 : i32
    %c0_i32_0 = arith.constant 0 : i32
    return %arg0, %c0_i32 : i32, i32
  }
  func.func @transform_1(%arg0: i32) -> (i32, i32) {
    %c0_i32 = arith.constant 0 : i32
    %c0_i32_0 = arith.constant 0 : i32
    return %arg0, %c0_i32 : i32, i32
  }
  func.func @transform_2(%arg0: i32) -> (i32, i32) {
    %c0_i32 = arith.constant 0 : i32
    %c0_i32_0 = arith.constant 0 : i32
    %c0_i32_1 = arith.constant 0 : i32
    return %c0_i32, %c0_i32_0 : i32, i32
  }
  func.func @transform_3(%arg0: i32) -> (i32, i32, i32) {
    %c0_i32 = arith.constant 0 : i32
    %c0_i32_0 = arith.constant 0 : i32
    %c0_i32_1 = arith.constant 0 : i32
    %c0_i32_2 = arith.constant 0 : i32
    return %c0_i32, %c0_i32_0, %c0_i32_1 : i32, i32, i32
  }
  func.func @transform_4(%arg0: i32) -> (i32, i32, i32) {
    %c0_i32 = arith.constant 0 : i32
    %c0_i32_0 = arith.constant 0 : i32
    %c0_i32_1 = arith.constant 0 : i32
    %c0_i32_2 = arith.constant 0 : i32
    return %c0_i32, %c0_i32_0, %c0_i32_1 : i32, i32, i32
  }
  func.func @transform_5(%arg0: i32) -> (i32, i32, i32) {
    %c0_i32 = arith.constant 0 : i32
    %c0_i32_0 = arith.constant 0 : i32
    %c0_i32_1 = arith.constant 0 : i32
    %c0_i32_2 = arith.constant 0 : i32
    return %c0_i32, %c0_i32_0, %c0_i32_1 : i32, i32, i32
  }
  func.func @transform_6(%arg0: i32) -> (i32, i32, i32) {
    %c0_i32 = arith.constant 0 : i32
    %c0_i32_0 = arith.constant 0 : i32
    %c0_i32_1 = arith.constant 0 : i32
    %c0_i32_2 = arith.constant 0 : i32
    return %c0_i32, %c0_i32_0, %c0_i32_1 : i32, i32, i32
  }
  func.func @transform_7(%arg0: i32) -> (i32, i32, i32) {
    %c0_i32 = arith.constant 0 : i32
    %c0_i32_0 = arith.constant 0 : i32
    %c0_i32_1 = arith.constant 0 : i32
    %c0_i32_2 = arith.constant 0 : i32
    return %c0_i32, %c0_i32_0, %c0_i32_1 : i32, i32, i32
  }
  func.func @transform_8(%arg0: i32) -> (i32, i32, i32) {
    %c0_i32 = arith.constant 0 : i32
    %c0_i32_0 = arith.constant 0 : i32
    %c0_i32_1 = arith.constant 0 : i32
    %c0_i32_2 = arith.constant 0 : i32
    return %c0_i32, %c0_i32_0, %c0_i32_1 : i32, i32, i32
  }
  func.func @transform_9(%arg0: i32) -> (i32, i32, i32) {
    %c0_i32 = arith.constant 0 : i32
    %c0_i32_0 = arith.constant 0 : i32
    %c0_i32_1 = arith.constant 0 : i32
    %c0_i32_2 = arith.constant 0 : i32
    return %c0_i32, %c0_i32_0, %c0_i32_1 : i32, i32, i32
  }
  func.func @transform_10(%arg0: i32) -> (i32, i32, i32) {
    %c0_i32 = arith.constant 0 : i32
    %c0_i32_0 = arith.constant 0 : i32
    %c0_i32_1 = arith.constant 0 : i32
    %c0_i32_2 = arith.constant 0 : i32
    return %c0_i32, %c0_i32_0, %c0_i32_1 : i32, i32, i32
  }
  func.func @transform_11(%arg0: i32) -> (i32, i32, i32) {
    %c0_i32 = arith.constant 0 : i32
    %c0_i32_0 = arith.constant 0 : i32
    %c0_i32_1 = arith.constant 0 : i32
    %c0_i32_2 = arith.constant 0 : i32
    return %c0_i32, %c0_i32_0, %c0_i32_1 : i32, i32, i32
  }
  func.func @transform_12(%arg0: i32) -> (i32, i32, i32) {
    %c0_i32 = arith.constant 0 : i32
    %c0_i32_0 = arith.constant 0 : i32
    %c0_i32_1 = arith.constant 0 : i32
    %c0_i32_2 = arith.constant 0 : i32
    return %c0_i32, %c0_i32_0, %c0_i32_1 : i32, i32, i32
  }
  func.func @transform_13(%arg0: i32) -> (i32, i32, i32) {
    %c0_i32 = arith.constant 0 : i32
    %c0_i32_0 = arith.constant 0 : i32
    %c0_i32_1 = arith.constant 0 : i32
    %c0_i32_2 = arith.constant 0 : i32
    return %c0_i32, %c0_i32_0, %c0_i32_1 : i32, i32, i32
  }
  func.func @transform_14(%arg0: i32) -> (i32, i32, i32) {
    %c0_i32 = arith.constant 0 : i32
    %c0_i32_0 = arith.constant 0 : i32
    %c0_i32_1 = arith.constant 0 : i32
    %c0_i32_2 = arith.constant 0 : i32
    return %c0_i32, %c0_i32_0, %c0_i32_1 : i32, i32, i32
  }
  func.func @transform_15(%arg0: i32) -> (i32, i32, i32) {
    %c0_i32 = arith.constant 0 : i32
    %c0_i32_0 = arith.constant 0 : i32
    %c0_i32_1 = arith.constant 0 : i32
    %c0_i32_2 = arith.constant 0 : i32
    return %c0_i32, %c0_i32_0, %c0_i32_1 : i32, i32, i32
  }
  func.func @transform_16(%arg0: i32) -> (i32, i32, i32) {
    %c0_i32 = arith.constant 0 : i32
    %c0_i32_0 = arith.constant 0 : i32
    %c0_i32_1 = arith.constant 0 : i32
    %c0_i32_2 = arith.constant 0 : i32
    return %c0_i32, %c0_i32_0, %c0_i32_1 : i32, i32, i32
  }
  func.func @transform_17(%arg0: i32) -> (i32, i32, i32) {
    %c0_i32 = arith.constant 0 : i32
    %c0_i32_0 = arith.constant 0 : i32
    %c0_i32_1 = arith.constant 0 : i32
    %c0_i32_2 = arith.constant 0 : i32
    return %c0_i32, %c0_i32_0, %c0_i32_1 : i32, i32, i32
  }
  func.func @transform_18(%arg0: i32) -> (i32, i32, i32) {
    %c0_i32 = arith.constant 0 : i32
    %c0_i32_0 = arith.constant 0 : i32
    %c0_i32_1 = arith.constant 0 : i32
    %c0_i32_2 = arith.constant 0 : i32
    return %c0_i32, %c0_i32_0, %c0_i32_1 : i32, i32, i32
  }
  func.func @transform_19(%arg0: i32) -> (i32, i32, i32) {
    %c0_i32 = arith.constant 0 : i32
    %c0_i32_0 = arith.constant 0 : i32
    %c0_i32_1 = arith.constant 0 : i32
    %c0_i32_2 = arith.constant 0 : i32
    return %c0_i32, %c0_i32_0, %c0_i32_1 : i32, i32, i32
  }
  func.func @transform_20(%arg0: i32) -> (i32, i32, i32) {
    %c0_i32 = arith.constant 0 : i32
    %c0_i32_0 = arith.constant 0 : i32
    %c0_i32_1 = arith.constant 0 : i32
    %c0_i32_2 = arith.constant 0 : i32
    return %c0_i32, %c0_i32_0, %c0_i32_1 : i32, i32, i32
  }
  func.func @transform_21(%arg0: i32) -> (i32, i32, i32) {
    %c0_i32 = arith.constant 0 : i32
    %c0_i32_0 = arith.constant 0 : i32
    %c0_i32_1 = arith.constant 0 : i32
    %c0_i32_2 = arith.constant 0 : i32
    return %c0_i32, %c0_i32_0, %c0_i32_1 : i32, i32, i32
  }
  func.func @transform_22(%arg0: i32) -> (i32, i32, i32) {
    %c0_i32 = arith.constant 0 : i32
    %c0_i32_0 = arith.constant 0 : i32
    %c0_i32_1 = arith.constant 0 : i32
    %c0_i32_2 = arith.constant 0 : i32
    return %c0_i32, %c0_i32_0, %c0_i32_1 : i32, i32, i32
  }
  func.func @transform_23(%arg0: i32) -> (i32, i32, i32) {
    %c0_i32 = arith.constant 0 : i32
    %c0_i32_0 = arith.constant 0 : i32
    %c0_i32_1 = arith.constant 0 : i32
    %c0_i32_2 = arith.constant 0 : i32
    return %c0_i32, %c0_i32_0, %c0_i32_1 : i32, i32, i32
  }
  func.func @transform_24(%arg0: i32) -> (i32, i32) {
    %c0_i32 = arith.constant 0 : i32
    %c0_i32_0 = arith.constant 0 : i32
    %c0_i32_1 = arith.constant 0 : i32
    return %c0_i32, %c0_i32_0 : i32, i32
  }
  func.func @transform_25(%arg0: i32) -> (i32, i32) {
    %c0_i32 = arith.constant 0 : i32
    %c0_i32_0 = arith.constant 0 : i32
    %c0_i32_1 = arith.constant 0 : i32
    return %c0_i32, %c0_i32_0 : i32, i32
  }
  func.func @transform_26(%arg0: i32) -> (i32, i32) {
    %c0_i32 = arith.constant 0 : i32
    %c0_i32_0 = arith.constant 0 : i32
    return %arg0, %c0_i32 : i32, i32
  }
}

</mosaic_0001>

<llo_original>
// kernel: tpu_custom_call.1
$region0: #{tpu_custom_call.1}
  #allocation0 [shape = 'u32[]', space=smem, size = 0x4, offset = 0x4, fixed_abs, tag = 'smem constant byte address 0x4 - core index']
  #allocation1 [shape = 'u32[72,128]{1,0:T(1,128)}', space=vmem, size = 0x9000, scoped, tag = 'internal scratch']
  %s0 = inlined_call_operand.hbm [shape: f32[16,32], index: 0, kind: input, shape index: {}]
  %s1 = inlined_call_operand.vmem [shape: f32[32,32], index: 1, kind: input, shape index: {}]
  %s2 = inlined_call_operand.hbm [shape: f32[16,32], index: 2, kind: input, shape index: {}]
  %s3 = inlined_call_operand.hbm [shape: f32[2,16,96], index: 3, kind: input, shape index: {}]
  %s4 = inlined_call_operand.hbm [shape: bf16[2,32,96], index: 4, kind: input, shape index: {}]
  %s5 = inlined_call_operand.vmem [shape: f32[2,1,96], index: 5, kind: input, shape index: {}]
  %s6 = inlined_call_operand.vmem [shape: f32[2,32,32], index: 6, kind: input, shape index: {}]
  %s7 = inlined_call_operand.vmem [shape: f32[2,1,32], index: 7, kind: input, shape index: {}]
  %s8 = inlined_call_operand.hbm [shape: f32[2,1,32], index: 8, kind: input, shape index: {}]
  %s9 = inlined_call_operand.hbm [shape: f32[2,1,32], index: 9, kind: input, shape index: {}]
  %s10 = inlined_call_operand.hbm [shape: bf16[2,32,32], index: 10, kind: input, shape index: {}]
  %s11 = inlined_call_operand.hbm [shape: f32[2,1,32], index: 11, kind: input, shape index: {}]
  %s12 = inlined_call_operand.hbm [shape: bf16[2,32,64], index: 12, kind: input, shape index: {}]
  %s13 = inlined_call_operand.hbm [shape: f32[2,1,64], index: 13, kind: input, shape index: {}]
  %s14 = inlined_call_operand.hbm [shape: f32[2,32,32], index: 14, kind: input, shape index: {}]
  %s15 = inlined_call_operand.hbm [shape: f32[2,1,32], index: 15, kind: input, shape index: {}]
  %s16 = inlined_call_operand.hbm [shape: f32[2,1,32], index: 16, kind: input, shape index: {}]
  %s17 = inlined_call_operand.hbm [shape: f32[2,1,32], index: 17, kind: input, shape index: {}]
  %s18 = inlined_call_operand.hbm [shape: bf16[2,32,64], index: 18, kind: input, shape index: {}]
  %s19 = inlined_call_operand.hbm [shape: f32[2,1,64], index: 19, kind: input, shape index: {}]
  %s20 = inlined_call_operand.vmem [shape: bf16[2,64,32], index: 20, kind: input, shape index: {}]
  %s21 = inlined_call_operand.hbm [shape: f32[2,1,32], index: 21, kind: input, shape index: {}]
  %s22 = inlined_call_operand.hbm [shape: f32[2,1,32], index: 22, kind: input, shape index: {}]
  %s23 = inlined_call_operand.hbm [shape: f32[2,1,32], index: 23, kind: input, shape index: {}]
  %s24 = inlined_call_operand.vmem [shape: bf16[32,4], index: 24, kind: input, shape index: {}]
  %s25 = inlined_call_operand.vmem [shape: f32[1,4], index: 25, kind: input, shape index: {}]
  %s26 = inlined_call_operand.vmem [shape: f32[16,4], index: 26, kind: output, shape index: {}]
  %s27 = sld [smem:[#allocation0]]
  $region190: #{tpu_custom_call.1} parent=0
    _
  %s29 = ssub.s32 1, %s27
  %s30 = scalar_select 0, %s29, %s27
  $region1: #{tpu_custom_call.1} parent=0
    #allocation2 [shape = 'u8[8192]{0}', space=vmem, size = 0x2000, scoped, tag = 'input window, operand 0, single buffered']
    #allocation3 [shape = 's32[1]{0}', space=sflag, size = 0x4, scoped, tag = 'scoped memory for tpu_custom_call.1']
    #allocation4 [shape = 'u8[8192]{0}', space=vmem, size = 0x2000, scoped, tag = 'input window, operand 2, single buffered']
    #allocation5 [shape = 's32[1]{0}', space=sflag, size = 0x4, scoped, tag = 'scoped memory for tpu_custom_call.1']
    #allocation6 [shape = 'u8[16384]{0}', space=vmem, size = 0x4000, scoped, tag = 'input window, operand 3, single buffered']
    #allocation7 [shape = 'u8[16384]{0}', space=vmem, size = 0x4000, scoped, tag = 'input window, operand 4, single buffered']
    #allocation8 [shape = 's32[1]{0}', space=sflag, size = 0x4, scoped, tag = 'scoped memory for tpu_custom_call.1']
    #allocation9 [shape = 'u8[1024]{0}', space=vmem, size = 0x400, scoped, tag = 'input window, operand 8, single buffered']
    #allocation10 [shape = 'u8[1024]{0}', space=vmem, size = 0x400, scoped, tag = 'input window, operand 9, single buffered']
    #allocation11 [shape = 's32[1]{0}', space=sflag, size = 0x4, scoped, tag = 'scoped memory for tpu_custom_call.1']
    #allocation12 [shape = 'u8[16384]{0}', space=vmem, size = 0x4000, scoped, tag = 'input window, operand 10, single buffered']
    #allocation13 [shape = 'u8[1024]{0}', space=vmem, size = 0x400, scoped, tag = 'input window, operand 11, single buffered']
    #allocation14 [shape = 's32[1]{0}', space=sflag, size = 0x4, scoped, tag = 'scoped memory for tpu_custom_call.1']
    #allocation15 [shape = 'u8[16384]{0}', space=vmem, size = 0x4000, scoped, tag = 'input window, operand 12, single buffered']
    #allocation16 [shape = 'u8[1024]{0}', space=vmem, size = 0x400, scoped, tag = 'input window, operand 13, single buffered']
    #allocation17 [shape = 's32[1]{0}', space=sflag, size = 0x4, scoped, tag = 'scoped memory for tpu_custom_call.1']
    #allocation18 [shape = 'u8[32768]{0}', space=vmem, size = 0x8000, scoped, tag = 'input window, operand 14, single buffered']
    #allocation19 [shape = 'u8[1024]{0}', space=vmem, size = 0x400, scoped, tag = 'input window, operand 15, single buffered']
    #allocation20 [shape = 's32[1]{0}', space=sflag, size = 0x4, scoped, tag = 'scoped memory for tpu_custom_call.1']
    #allocation21 [shape = 'u8[1024]{0}', space=vmem, size = 0x400, scoped, tag = 'input window, operand 16, single buffered']
    #allocation22 [shape = 'u8[1024]{0}', space=vmem, size = 0x400, scoped, tag = 'input window, operand 17, single buffered']
    #allocation23 [shape = 's32[1]{0}', space=sflag, size = 0x4, scoped, tag = 'scoped memory for tpu_custom_call.1']
    #allocation24 [shape = 'u8[16384]{0}', space=vmem, size = 0x4000, scoped, tag = 'input window, operand 18, single buffered']
    #allocation25 [shape = 'u8[1024]{0}', space=vmem, size = 0x400, scoped, tag = 'input window, operand 19, single buffered']
    #allocation26 [shape = 's32[1]{0}', space=sflag, size = 0x4, scoped, tag = 'scoped memory for tpu_custom_call.1']
    #allocation27 [shape = 'u8[1024]{0}', space=vmem, size = 0x400, scoped, tag = 'input window, operand 21, single buffered']
    #allocation28 [shape = 'u8[1024]{0}', space=vmem, size = 0x400, scoped, tag = 'input window, operand 22, single buffered']
    #allocation29 [shape = 's32[1]{0}', space=sflag, size = 0x4, scoped, tag = 'scoped memory for tpu_custom_call.1']
    #allocation30 [shape = 'u8[1024]{0}', space=vmem, size = 0x400, scoped, tag = 'input window, operand 23, single buffered']
    %31 = vsyncpa [#allocation3], 0
    %32 = vsyncpa [#allocation5], 0
    %33 = vsyncpa [#allocation8], 0
    %34 = vsyncpa [#allocation11], 0
    %35 = vsyncpa [#allocation14], 0
    %36 = vsyncpa [#allocation17], 0
    %37 = vsyncpa [#allocation20], 0
    %38 = vsyncpa [#allocation23], 0
    %39 = vsyncpa [#allocation26], 0
    %40 = vsyncpa [#allocation29], 0
    // Predicated region
    $region2: #{tpu_custom_call.1} parent=1 // pred_check
      _
    $region3: #{tpu_custom_call.1} parent=1 // pred_check_branch
      %42 = sbr.rel (0) target = $region5
    $region4: #{tpu_custom_call.1} parent=1 // pred_region
      %44 = vsyncadd [#allocation3], 0
      %s45 = sshll.u32 %s0, 4
      %s46 = int_to_ptr.hbm [resolvable:$true] %s45
      %s47 = sshll.u32 [#allocation2], 4
      %s48 = int_to_ptr.vmem [resolvable:$true] %s47
      %53 = dma.hbm_to_vmem [thread:$0]  %s46, 256, %s48, [#allocation3], 128, 128, 8
    $region5: #{tpu_custom_call.1} parent=1 // pred_fallthru
      _
    // Predicated region
    $region6: #{tpu_custom_call.1} parent=1 // pred_check
      _
    $region7: #{tpu_custom_call.1} parent=1 // pred_check_branch
      %55 = sbr.rel (0) target = $region9
    $region8: #{tpu_custom_call.1} parent=1 // pred_region
      _
    $region9: #{tpu_custom_call.1} parent=1 // pred_fallthru
      _
    // Predicated region
    $region10: #{tpu_custom_call.1} parent=1 // pred_check
      _
    $region11: #{tpu_custom_call.1} parent=1 // pred_check_branch
      %57 = sbr.rel (0) target = $region13
    $region12: #{tpu_custom_call.1} parent=1 // pred_region
      %59 = vsyncadd [#allocation5], 0
      %s60 = sshll.u32 %s2, 4
      %s61 = int_to_ptr.hbm [resolvable:$true] %s60
      %s62 = sshll.u32 [#allocation4], 4
      %s63 = int_to_ptr.vmem [resolvable:$true] %s62
      %68 = dma.hbm_to_vmem [thread:$0]  %s61, 256, %s63, [#allocation5], 128, 128, 8
    $region13: #{tpu_custom_call.1} parent=1 // pred_fallthru
      _
    // Predicated region
    $region14: #{tpu_custom_call.1} parent=1 // pred_check
      _
    $region15: #{tpu_custom_call.1} parent=1 // pred_check_branch
      %70 = sbr.rel (0) target = $region17
    $region16: #{tpu_custom_call.1} parent=1 // pred_region
      %72 = vsyncadd [#allocation5], 0
      %s73 = sshll.u32 %s3, 4
      %s74 = int_to_ptr.hbm [resolvable:$true] %s73
      %s75 = sshll.u32 [#allocation6], 4
      %s76 = int_to_ptr.vmem [resolvable:$true] %s75
      %81 = dma.hbm_to_vmem [thread:$0]  %s74, 512, %s76, [#allocation5], 128, 128, 8
    $region17: #{tpu_custom_call.1} parent=1 // pred_fallthru
      _
    // Predicated region
    $region18: #{tpu_custom_call.1} parent=1 // pred_check
      _
    $region19: #{tpu_custom_call.1} parent=1 // pred_check_branch
      %83 = sbr.rel (0) target = $region21
    $region20: #{tpu_custom_call.1} parent=1 // pred_region
      %85 = vsyncadd [#allocation8], 0
      %s86 = sshll.u32 %s4, 4
      %s87 = int_to_ptr.hbm [resolvable:$true] %s86
      %s88 = sshll.u32 [#allocation7], 4
      %s89 = int_to_ptr.vmem [resolvable:$true] %s88
      %94 = dma.hbm_to_vmem [thread:$0]  %s87, 512, %s89, [#allocation8], 64, 64, 4
    $region21: #{tpu_custom_call.1} parent=1 // pred_fallthru
      _
    // Predicated region
    $region22: #{tpu_custom_call.1} parent=1 // pred_check
      _
    $region23: #{tpu_custom_call.1} parent=1 // pred_check_branch
      %96 = sbr.rel (0) target = $region25
    $region24: #{tpu_custom_call.1} parent=1 // pred_region
      _
    $region25: #{tpu_custom_call.1} parent=1 // pred_fallthru
      _
    // Predicated region
    $region26: #{tpu_custom_call.1} parent=1 // pred_check
      _
    $region27: #{tpu_custom_call.1} parent=1 // pred_check_branch
      %98 = sbr.rel (0) target = $region29
    $region28: #{tpu_custom_call.1} parent=1 // pred_region
      _
    $region29: #{tpu_custom_call.1} parent=1 // pred_fallthru
      _
    // Predicated region
    $region30: #{tpu_custom_call.1} parent=1 // pred_check
      _
    $region31: #{tpu_custom_call.1} parent=1 // pred_check_branch
      %100 = sbr.rel (0) target = $region33
    $region32: #{tpu_custom_call.1} parent=1 // pred_region
      _
    $region33: #{tpu_custom_call.1} parent=1 // pred_fallthru
      _
    // Predicated region
    $region34: #{tpu_custom_call.1} parent=1 // pred_check
      _
    $region35: #{tpu_custom_call.1} parent=1 // pred_check_branch
      %102 = sbr.rel (0) target = $region37
    $region36: #{tpu_custom_call.1} parent=1 // pred_region
      %104 = vsyncadd [#allocation8], 0
      %s105 = sshll.u32 %s8, 4
      %s106 = int_to_ptr.hbm [resolvable:$true] %s105
      %s107 = sshll.u32 [#allocation9], 4
      %s108 = int_to_ptr.vmem [resolvable:$true] %s107
      %113 = dma.hbm_to_vmem [thread:$0]  %s106, 32, %s108, [#allocation8], 16, 16, 1
    $region37: #{tpu_custom_call.1} parent=1 // pred_fallthru
      _
    // Predicated region
    $region38: #{tpu_custom_call.1} parent=1 // pred_check
      _
    $region39: #{tpu_custom_call.1} parent=1 // pred_check_branch
      %115 = sbr.rel (0) target = $region41
    $region40: #{tpu_custom_call.1} parent=1 // pred_region
      %117 = vsyncadd [#allocation11], 0
      %s118 = sshll.u32 %s9, 4
      %s119 = int_to_ptr.hbm [resolvable:$true] %s118
      %s120 = sshll.u32 [#allocation10], 4
      %s121 = int_to_ptr.vmem [resolvable:$true] %s120
      %126 = dma.hbm_to_vmem [thread:$0]  %s119, 32, %s121, [#allocation11], 16, 16, 1
    $region41: #{tpu_custom_call.1} parent=1 // pred_fallthru
      _
    // Predicated region
    $region42: #{tpu_custom_call.1} parent=1 // pred_check
      _
    $region43: #{tpu_custom_call.1} parent=1 // pred_check_branch
      %128 = sbr.rel (0) target = $region45
    $region44: #{tpu_custom_call.1} parent=1 // pred_region
      %130 = vsyncadd [#allocation11], 0
      %s131 = sshll.u32 %s10, 4
      %s132 = int_to_ptr.hbm [resolvable:$true] %s131
      %s133 = sshll.u32 [#allocation12], 4
      %s134 = int_to_ptr.vmem [resolvable:$true] %s133
      %139 = dma.hbm_to_vmem [thread:$0]  %s132, 512, %s134, [#allocation11], 64, 64, 4
    $region45: #{tpu_custom_call.1} parent=1 // pred_fallthru
      _
    // Predicated region
    $region46: #{tpu_custom_call.1} parent=1 // pred_check
      _
    $region47: #{tpu_custom_call.1} parent=1 // pred_check_branch
      %141 = sbr.rel (0) target = $region49
    $region48: #{tpu_custom_call.1} parent=1 // pred_region
      %143 = vsyncadd [#allocation14], 0
      %s144 = sshll.u32 %s11, 4
      %s145 = int_to_ptr.hbm [resolvable:$true] %s144
      %s146 = sshll.u32 [#allocation13], 4
      %s147 = int_to_ptr.vmem [resolvable:$true] %s146
      %152 = dma.hbm_to_vmem [thread:$0]  %s145, 32, %s147, [#allocation14], 16, 16, 1
    $region49: #{tpu_custom_call.1} parent=1 // pred_fallthru
      _
    // Predicated region
    $region50: #{tpu_custom_call.1} parent=1 // pred_check
      _
    $region51: #{tpu_custom_call.1} parent=1 // pred_check_branch
      %154 = sbr.rel (0) target = $region53
    $region52: #{tpu_custom_call.1} parent=1 // pred_region
      %156 = vsyncadd [#allocation14], 0
      %s157 = sshll.u32 %s12, 4
      %s158 = int_to_ptr.hbm [resolvable:$true] %s157
      %s159 = sshll.u32 [#allocation15], 4
      %s160 = int_to_ptr.vmem [resolvable:$true] %s159
      %165 = dma.hbm_to_vmem [thread:$0]  %s158, 512, %s160, [#allocation14], 64, 64, 4
    $region53: #{tpu_custom_call.1} parent=1 // pred_fallthru
      _
    // Predicated region
    $region54: #{tpu_custom_call.1} parent=1 // pred_check
      _
    $region55: #{tpu_custom_call.1} parent=1 // pred_check_branch
      %167 = sbr.rel (0) target = $region57
    $region56: #{tpu_custom_call.1} parent=1 // pred_region
      %169 = vsyncadd [#allocation17], 0
      %s170 = sshll.u32 %s13, 4
      %s171 = int_to_ptr.hbm [resolvable:$true] %s170
      %s172 = sshll.u32 [#allocation16], 4
      %s173 = int_to_ptr.vmem [resolvable:$true] %s172
      %178 = dma.hbm_to_vmem [thread:$0]  %s171, 32, %s173, [#allocation17], 16, 16, 1
    $region57: #{tpu_custom_call.1} parent=1 // pred_fallthru
      _
    // Predicated region
    $region58: #{tpu_custom_call.1} parent=1 // pred_check
      _
    $region59: #{tpu_custom_call.1} parent=1 // pred_check_branch
      %180 = sbr.rel (0) target = $region61
    $region60: #{tpu_custom_call.1} parent=1 // pred_region
      %182 = vsyncadd [#allocation17], 0
      %s183 = sshll.u32 %s14, 4
      %s184 = int_to_ptr.hbm [resolvable:$true] %s183
      %s185 = sshll.u32 [#allocation18], 4
      %s186 = int_to_ptr.vmem [resolvable:$true] %s185
      %191 = dma.hbm_to_vmem [thread:$0]  %s184, 1024, %s186, [#allocation17], 128, 128, 8
    $region61: #{tpu_custom_call.1} parent=1 // pred_fallthru
      _
    // Predicated region
    $region62: #{tpu_custom_call.1} parent=1 // pred_check
      _
    $region63: #{tpu_custom_call.1} parent=1 // pred_check_branch
      %193 = sbr.rel (0) target = $region65
    $region64: #{tpu_custom_call.1} parent=1 // pred_region
      %195 = vsyncadd [#allocation20], 0
      %s196 = sshll.u32 %s15, 4
      %s197 = int_to_ptr.hbm [resolvable:$true] %s196
      %s198 = sshll.u32 [#allocation19], 4
      %s199 = int_to_ptr.vmem [resolvable:$true] %s198
      %204 = dma.hbm_to_vmem [thread:$0]  %s197, 32, %s199, [#allocation20], 16, 16, 1
    $region65: #{tpu_custom_call.1} parent=1 // pred_fallthru
      _
    // Predicated region
    $region66: #{tpu_custom_call.1} parent=1 // pred_check
      _
    $region67: #{tpu_custom_call.1} parent=1 // pred_check_branch
      %206 = sbr.rel (0) target = $region69
    $region68: #{tpu_custom_call.1} parent=1 // pred_region
      %208 = vsyncadd [#allocation20], 0
      %s209 = sshll.u32 %s16, 4
      %s210 = int_to_ptr.hbm [resolvable:$true] %s209
      %s211 = sshll.u32 [#allocation21], 4
      %s212 = int_to_ptr.vmem [resolvable:$true] %s211
      %217 = dma.hbm_to_vmem [thread:$0]  %s210, 32, %s212, [#allocation20], 16, 16, 1
    $region69: #{tpu_custom_call.1} parent=1 // pred_fallthru
      _
    // Predicated region
    $region70: #{tpu_custom_call.1} parent=1 // pred_check
      _
    $region71: #{tpu_custom_call.1} parent=1 // pred_check_branch
      %219 = sbr.rel (0) target = $region73
    $region72: #{tpu_custom_call.1} parent=1 // pred_region
      %221 = vsyncadd [#allocation23], 0
      %s222 = sshll.u32 %s17, 4
      %s223 = int_to_ptr.hbm [resolvable:$true] %s222
      %s224 = sshll.u32 [#allocation22], 4
      %s225 = int_to_ptr.vmem [resolvable:$true] %s224
      %230 = dma.hbm_to_vmem [thread:$0]  %s223, 32, %s225, [#allocation23], 16, 16, 1
    $region73: #{tpu_custom_call.1} parent=1 // pred_fallthru
      _
    // Predicated region
    $region74: #{tpu_custom_call.1} parent=1 // pred_check
      _
    $region75: #{tpu_custom_call.1} parent=1 // pred_check_branch
      %232 = sbr.rel (0) target = $region77
    $region76: #{tpu_custom_call.1} parent=1 // pred_region
      %234 = vsyncadd [#allocation23], 0
      %s235 = sshll.u32 %s18, 4
      %s236 = int_to_ptr.hbm [resolvable:$true] %s235
      %s237 = sshll.u32 [#allocation24], 4
      %s238 = int_to_ptr.vmem [resolvable:$true] %s237
      %243 = dma.hbm_to_vmem [thread:$0]  %s236, 512, %s238, [#allocation23], 64, 64, 4
    $region77: #{tpu_custom_call.1} parent=1 // pred_fallthru
      _
    // Predicated region
    $region78: #{tpu_custom_call.1} parent=1 // pred_check
      _
    $region79: #{tpu_custom_call.1} parent=1 // pred_check_branch
      %245 = sbr.rel (0) target = $region81
    $region80: #{tpu_custom_call.1} parent=1 // pred_region
      %247 = vsyncadd [#allocation26], 0
      %s248 = sshll.u32 %s19, 4
      %s249 = int_to_ptr.hbm [resolvable:$true] %s248
      %s250 = sshll.u32 [#allocation25], 4
      %s251 = int_to_ptr.vmem [resolvable:$true] %s250
      %256 = dma.hbm_to_vmem [thread:$0]  %s249, 32, %s251, [#allocation26], 16, 16, 1
    $region81: #{tpu_custom_call.1} parent=1 // pred_fallthru
      _
    // Predicated region
    $region82: #{tpu_custom_call.1} parent=1 // pred_check
      _
    $region83: #{tpu_custom_call.1} parent=1 // pred_check_branch
      %258 = sbr.rel (0) target = $region85
    $region84: #{tpu_custom_call.1} parent=1 // pred_region
      _
    $region85: #{tpu_custom_call.1} parent=1 // pred_fallthru
      _
    // Predicated region
    $region86: #{tpu_custom_call.1} parent=1 // pred_check
      _
    $region87: #{tpu_custom_call.1} parent=1 // pred_check_branch
      %260 = sbr.rel (0) target = $region89
    $region88: #{tpu_custom_call.1} parent=1 // pred_region
      %262 = vsyncadd [#allocation26], 0
      %s263 = sshll.u32 %s21, 4
      %s264 = int_to_ptr.hbm [resolvable:$true] %s263
      %s265 = sshll.u32 [#allocation27], 4
      %s266 = int_to_ptr.vmem [resolvable:$true] %s265
      %271 = dma.hbm_to_vmem [thread:$0]  %s264, 32, %s266, [#allocation26], 16, 16, 1
    $region89: #{tpu_custom_call.1} parent=1 // pred_fallthru
      _
    // Predicated region
    $region90: #{tpu_custom_call.1} parent=1 // pred_check
      _
    $region91: #{tpu_custom_call.1} parent=1 // pred_check_branch
      %273 = sbr.rel (0) target = $region93
    $region92: #{tpu_custom_call.1} parent=1 // pred_region
      %275 = vsyncadd [#allocation29], 0
      %s276 = sshll.u32 %s22, 4
      %s277 = int_to_ptr.hbm [resolvable:$true] %s276
      %s278 = sshll.u32 [#allocation28], 4
      %s279 = int_to_ptr.vmem [resolvable:$true] %s278
      %284 = dma.hbm_to_vmem [thread:$0]  %s277, 32, %s279, [#allocation29], 16, 16, 1
    $region93: #{tpu_custom_call.1} parent=1 // pred_fallthru
      _
    // Predicated region
    $region94: #{tpu_custom_call.1} parent=1 // pred_check
      _
    $region95: #{tpu_custom_call.1} parent=1 // pred_check_branch
      %286 = sbr.rel (0) target = $region97
    $region96: #{tpu_custom_call.1} parent=1 // pred_region
      %288 = vsyncadd [#allocation29], 0
      %s289 = sshll.u32 %s23, 4
      %s290 = int_to_ptr.hbm [resolvable:$true] %s289
      %s291 = sshll.u32 [#allocation30], 4
      %s292 = int_to_ptr.vmem [resolvable:$true] %s291
      %297 = dma.hbm_to_vmem [thread:$0]  %s290, 32, %s292, [#allocation29], 16, 16, 1
    $region97: #{tpu_custom_call.1} parent=1 // pred_fallthru
      _
    // Predicated region
    $region98: #{tpu_custom_call.1} parent=1 // pred_check
      _
    $region99: #{tpu_custom_call.1} parent=1 // pred_check_branch
      %299 = sbr.rel (0) target = $region101
    $region100: #{tpu_custom_call.1} parent=1 // pred_region
      _
    $region101: #{tpu_custom_call.1} parent=1 // pred_fallthru
      _
    // Predicated region
    $region102: #{tpu_custom_call.1} parent=1 // pred_check
      _
    $region103: #{tpu_custom_call.1} parent=1 // pred_check_branch
      %301 = sbr.rel (0) target = $region105
    $region104: #{tpu_custom_call.1} parent=1 // pred_region
      _
    $region105: #{tpu_custom_call.1} parent=1 // pred_fallthru
      _
    // Predicated region
    $region106: #{tpu_custom_call.1} parent=1 // pred_check
      _
    $region107: #{tpu_custom_call.1} parent=1 // pred_check_branch
      %303 = sbr.rel (0) target = $region109
    $region108: #{tpu_custom_call.1} parent=1 // pred_region
      %305 = dma.done [#allocation3], 256
    $region109: #{tpu_custom_call.1} parent=1 // pred_fallthru
      _
    // Predicated region
    $region110: #{tpu_custom_call.1} parent=1 // pred_check
      _
    $region111: #{tpu_custom_call.1} parent=1 // pred_check_branch
      %307 = sbr.rel (0) target = $region113
    $region112: #{tpu_custom_call.1} parent=1 // pred_region
      %309 = dma.done [#allocation5], 256
    $region113: #{tpu_custom_call.1} parent=1 // pred_fallthru
      _
    // Predicated region
    $region114: #{tpu_custom_call.1} parent=1 // pred_check
      _
    $region115: #{tpu_custom_call.1} parent=1 // pred_check_branch
      %311 = sbr.rel (0) target = $region117
    $region116: #{tpu_custom_call.1} parent=1 // pred_region
      %313 = dma.done [#allocation5], 512
    $region117: #{tpu_custom_call.1} parent=1 // pred_fallthru
      _
    // Predicated region
    $region118: #{tpu_custom_call.1} parent=1 // pred_check
      _
    $region119: #{tpu_custom_call.1} parent=1 // pred_check_branch
      %315 = sbr.rel (0) target = $region121
    $region120: #{tpu_custom_call.1} parent=1 // pred_region
      %317 = dma.done [#allocation8], 512
    $region121: #{tpu_custom_call.1} parent=1 // pred_fallthru
      _
    // Predicated region
    $region122: #{tpu_custom_call.1} parent=1 // pred_check
      _
    $region123: #{tpu_custom_call.1} parent=1 // pred_check_branch
      %319 = sbr.rel (0) target = $region125
    $region124: #{tpu_custom_call.1} parent=1 // pred_region
      %321 = dma.done [#allocation8], 32
    $region125: #{tpu_custom_call.1} parent=1 // pred_fallthru
      _
    // Predicated region
    $region126: #{tpu_custom_call.1} parent=1 // pred_check
      _
    $region127: #{tpu_custom_call.1} parent=1 // pred_check_branch
      %323 = sbr.rel (0) target = $region129
    $region128: #{tpu_custom_call.1} parent=1 // pred_region
      %325 = dma.done [#allocation11], 32
    $region129: #{tpu_custom_call.1} parent=1 // pred_fallthru
      _
    // Predicated region
    $region130: #{tpu_custom_call.1} parent=1 // pred_check
      _
    $region131: #{tpu_custom_call.1} parent=1 // pred_check_branch
      %327 = sbr.rel (0) target = $region133
    $region132: #{tpu_custom_call.1} parent=1 // pred_region
      %329 = dma.done [#allocation11], 512
    $region133: #{tpu_custom_call.1} parent=1 // pred_fallthru
      _
    // Predicated region
    $region134: #{tpu_custom_call.1} parent=1 // pred_check
      _
    $region135: #{tpu_custom_call.1} parent=1 // pred_check_branch
      %331 = sbr.rel (0) target = $region137
    $region136: #{tpu_custom_call.1} parent=1 // pred_region
      %333 = dma.done [#allocation14], 32
    $region137: #{tpu_custom_call.1} parent=1 // pred_fallthru
      _
    // Predicated region
    $region138: #{tpu_custom_call.1} parent=1 // pred_check
      _
    $region139: #{tpu_custom_call.1} parent=1 // pred_check_branch
      %335 = sbr.rel (0) target = $region141
    $region140: #{tpu_custom_call.1} parent=1 // pred_region
      %337 = dma.done [#allocation14], 512
    $region141: #{tpu_custom_call.1} parent=1 // pred_fallthru
      _
    // Predicated region
    $region142: #{tpu_custom_call.1} parent=1 // pred_check
      _
    $region143: #{tpu_custom_call.1} parent=1 // pred_check_branch
      %339 = sbr.rel (0) target = $region145
    $region144: #{tpu_custom_call.1} parent=1 // pred_region
      %341 = dma.done [#allocation17], 32
    $region145: #{tpu_custom_call.1} parent=1 // pred_fallthru
      _
    // Predicated region
    $region146: #{tpu_custom_call.1} parent=1 // pred_check
      _
    $region147: #{tpu_custom_call.1} parent=1 // pred_check_branch
      %343 = sbr.rel (0) target = $region149
    $region148: #{tpu_custom_call.1} parent=1 // pred_region
      %345 = dma.done [#allocation17], 1024
    $region149: #{tpu_custom_call.1} parent=1 // pred_fallthru
      _
    // Predicated region
    $region150: #{tpu_custom_call.1} parent=1 // pred_check
      _
    $region151: #{tpu_custom_call.1} parent=1 // pred_check_branch
      %347 = sbr.rel (0) target = $region153
    $region152: #{tpu_custom_call.1} parent=1 // pred_region
      %349 = dma.done [#allocation20], 32
    $region153: #{tpu_custom_call.1} parent=1 // pred_fallthru
      _
    // Predicated region
    $region154: #{tpu_custom_call.1} parent=1 // pred_check
      _
    $region155: #{tpu_custom_call.1} parent=1 // pred_check_branch
      %351 = sbr.rel (0) target = $region157
    $region156: #{tpu_custom_call.1} parent=1 // pred_region
      %353 = dma.done [#allocation20], 32
    $region157: #{tpu_custom_call.1} parent=1 // pred_fallthru
      _
    // Predicated region
    $region158: #{tpu_custom_call.1} parent=1 // pred_check
      _
    $region159: #{tpu_custom_call.1} parent=1 // pred_check_branch
      %355 = sbr.rel (0) target = $region161
    $region160: #{tpu_custom_call.1} parent=1 // pred_region
      %357 = dma.done [#allocation23], 32
    $region161: #{tpu_custom_call.1} parent=1 // pred_fallthru
      _
    // Predicated region
    $region162: #{tpu_custom_call.1} parent=1 // pred_check
      _
    $region163: #{tpu_custom_call.1} parent=1 // pred_check_branch
      %359 = sbr.rel (0) target = $region165
    $region164: #{tpu_custom_call.1} parent=1 // pred_region
      %361 = dma.done [#allocation23], 512
    $region165: #{tpu_custom_call.1} parent=1 // pred_fallthru
      _
    // Predicated region
    $region166: #{tpu_custom_call.1} parent=1 // pred_check
      _
    $region167: #{tpu_custom_call.1} parent=1 // pred_check_branch
      %363 = sbr.rel (0) target = $region169
    $region168: #{tpu_custom_call.1} parent=1 // pred_region
      %365 = dma.done [#allocation26], 32
    $region169: #{tpu_custom_call.1} parent=1 // pred_fallthru
      _
    // Predicated region
    $region170: #{tpu_custom_call.1} parent=1 // pred_check
      _
    $region171: #{tpu_custom_call.1} parent=1 // pred_check_branch
      %367 = sbr.rel (0) target = $region173
    $region172: #{tpu_custom_call.1} parent=1 // pred_region
      %369 = dma.done [#allocation26], 32
    $region173: #{tpu_custom_call.1} parent=1 // pred_fallthru
      _
    // Predicated region
    $region174: #{tpu_custom_call.1} parent=1 // pred_check
      _
    $region175: #{tpu_custom_call.1} parent=1 // pred_check_branch
      %371 = sbr.rel (0) target = $region177
    $region176: #{tpu_custom_call.1} parent=1 // pred_region
      %373 = dma.done [#allocation29], 32
    $region177: #{tpu_custom_call.1} parent=1 // pred_fallthru
      _
    // Predicated region
    $region178: #{tpu_custom_call.1} parent=1 // pred_check
      _
    $region179: #{tpu_custom_call.1} parent=1 // pred_check_branch
      %375 = sbr.rel (0) target = $region181
    $region180: #{tpu_custom_call.1} parent=1 // pred_region
      %377 = dma.done [#allocation29], 32
    $region181: #{tpu_custom_call.1} parent=1 // pred_fallthru
      _
    %v379 = vld [vmem:[#allocation2] sm:$0xff]
    %v380 = vld [vmem:[#allocation2 + $0x8] sm:$0xff]
    %v381 = vld [vmem:[%s1] sm:$0xff]
    %v382 = vld [vmem:[%s1 + $0x8] sm:$0xff]
    %v383 = vld [vmem:[%s1 + $0x10] sm:$0xff]
    %v384 = vld [vmem:[%s1 + $0x18] sm:$0xff]
    %v385 = vld [vmem:[#allocation4] sm:$0xff]
    %v386 = vld [vmem:[#allocation4 + $0x8] sm:$0xff]
    %v387 = vld [vmem:[#allocation7] sm:$0xf]
    %v388 = vld [vmem:[#allocation7 + $0x4] sm:$0xf]
    %v389 = vld [vmem:[#allocation7 + $0x8] sm:$0xf]
    %v390 = vld [vmem:[#allocation7 + $0xc] sm:$0xf]
    %v391 = vpack.c.bf16 %v380, %v379
    %v392 = vld [vmem:[%s5] sm:$0x1]
    %v394 = vperm.slane %v392, 0
    %v400 = vunpack.c.l.b16 %v387
    %v401 = vunpack.c.l.b16 %v388
    %v402 = vunpack.c.l.b16 %v389
    %v403 = vunpack.c.l.b16 %v390
    %v404 = vpack.c.b16 %v401, %v400
    %v405 = vpack.c.b16 %v403, %v402
    %vm408 = vcmask 261120
    %v410 = vsel %vm408, %v391, 0
    %412 = vmatpush.bf16.msra.mxu0 0
    %413 = vmatpush.bf16.msra.mxu0 0
    %414 = vmatpush.bf16.msra.mxu0 0
    %415 = vmatpush.bf16.msra.mxu0 0
    %416 = vmatpush.bf16.msra.mxu0 0
    %417 = vmatpush.bf16.msra.mxu0 0
    %418 = vmatpush.bf16.msra.mxu0 %v405
    %419 = vmatpush.bf16.msra.mxu0 %v404
    %420 = vmatmul.bf16.gmra.mxu0 %v410
    %v421 = vpop.f32.mrf.mxu0
    %v422 = vadd.f32 %v394, %v421
    %v423 = vpop.f32.mrf.mxu0
    %v424 = vadd.f32 %v394, %v423
    %425 = vdwg.mxu0
    %v426 = vld [vmem:[#allocation6] sm:$0xff]
    %v427 = vld [vmem:[#allocation6 + $0x8] sm:$0xff]
    %v428 = vadd.f32 %v422, %v426
    %v429 = vadd.f32 %v424, %v427
    %v430 = vadd.f32 %v379, %v385
    %v431 = vadd.f32 %v380, %v386
    %v432 = vld [vmem:[%s6] sm:$0xff]
    %v433 = vld [vmem:[%s6 + $0x8] sm:$0xff]
    %v434 = vld [vmem:[%s6 + $0x10] sm:$0xff]
    %v435 = vld [vmem:[%s6 + $0x18] sm:$0xff]
    %437 = vrot.lane.b32.xlu0 %v428, 96
    %v438 = vpop.permute.xlu0 %437
    %vm439 = vcmask 64512
    %v440 = vsel %vm439, %v428, 0
    %v442 = vsel %vm439, %v438, 0
    %444 = vmatpush.xpose.msra.mxu0 0.0
    %445 = vmatpush.xpose.msra.mxu0 0.0
    %446 = vmatpush.xpose.msra.mxu0 0.0
    %447 = vmatpush.xpose.msra.mxu0 0.0
    %448 = vmatpush.xpose.msra.mxu0 0.0
    %449 = vmatpush.xpose.msra.mxu0 0.0
    %450 = vmatpush.xpose.msra.mxu0 0.0
    %451 = vmatpush.xpose.msra.mxu0 0.0
    %452 = vmatpush.xpose.msra.mxu0 0.0
    %453 = vmatpush.xpose.msra.mxu0 0.0
    %454 = vmatpush.xpose.msra.mxu0 0.0
    %455 = vmatpush.xpose.msra.mxu0 0.0
    %456 = vmatpush.xpose.msra.mxu0 0.0
    %457 = vmatpush.xpose.msra.mxu0 0.0
    %458 = vmatpush.xpose.msra.mxu0 0.0
    %459 = vmatpush.xpose.msra.mxu0 %v442
    %460 = vmatmul.f32.gmra.mxu0 %v440
    %v461 = vpop.f32.mrf.mxu0
    %v462 = vadd.f32 0.0, %v461
    %463 = vdwg.mxu0
    %v464 = vmul.f32 %v462, 0.35355338
    %v465 = vsel %vm439, %v464, -inf
    %466 = vmax.xlane.f32.xlu0 %v465
    %v467 = vpop.xlane.xlu0 %466
    %v468 = vsub.f32 %v464, %v467
    %v469 = vmul.f32 %v468, 1.442695
    %v470 = vpow.pop %v469
    %v471 = vsel %vm439, %v470, 0.0
    %472 = vadd.xlane.f32.xlu0 %v471
    %v473 = vpop.xlane.xlu0 %472
    %v474 = vrcp.pop %v473
    %v475 = vmul.f32 %v470, %v474
    %476 = vrot.lane.b32.xlu0 %v428, 64
    %v477 = vpop.permute.xlu0 %476
    %v480 = vsel %vm439, %v475, 0
    %482 = vmatpush.msra.mxu0 0.0
    %483 = vmatpush.msra.mxu0 0.0
    %484 = vmatpush.msra.mxu0 0.0
    %485 = vmatpush.msra.mxu0 0.0
    %486 = vmatpush.msra.mxu0 0.0
    %487 = vmatpush.msra.mxu0 0.0
    %488 = vmatpush.msra.mxu0 0.0
    %489 = vmatpush.msra.mxu0 0.0
    %490 = vmatpush.msra.mxu0 0.0
    %491 = vmatpush.msra.mxu0 0.0
    %492 = vmatpush.msra.mxu0 0.0
    %493 = vmatpush.msra.mxu0 0.0
    %494 = vmatpush.msra.mxu0 0.0
    %495 = vmatpush.msra.mxu0 0.0
    %496 = vmatpush.msra.mxu0 0.0
    %497 = vmatpush.msra.mxu0 %v477
    %498 = vmatmul.f32.gmra.mxu0 %v480
    %v499 = vpop.f32.mrf.mxu0
    %v500 = vadd.f32 0.0, %v499
    %501 = vdwg.mxu0
    %502 = vrot.lane.b32.xlu0 %v428, 120
    %v503 = vpop.permute.xlu0 %502
    %504 = vrot.lane.b32.xlu0 %v428, 88
    %v505 = vpop.permute.xlu0 %504
    %v506 = vsel %vm439, %v503, 0
    %v508 = vsel %vm439, %v505, 0
    %510 = vmatpush.xpose.msra.mxu0 0.0
    %511 = vmatpush.xpose.msra.mxu0 0.0
    %512 = vmatpush.xpose.msra.mxu0 0.0
    %513 = vmatpush.xpose.msra.mxu0 0.0
    %514 = vmatpush.xpose.msra.mxu0 0.0
    %515 = vmatpush.xpose.msra.mxu0 0.0
    %516 = vmatpush.xpose.msra.mxu0 0.0
    %517 = vmatpush.xpose.msra.mxu0 0.0
    %518 = vmatpush.xpose.msra.mxu0 0.0
    %519 = vmatpush.xpose.msra.mxu0 0.0
    %520 = vmatpush.xpose.msra.mxu0 0.0
    %521 = vmatpush.xpose.msra.mxu0 0.0
    %522 = vmatpush.xpose.msra.mxu0 0.0
    %523 = vmatpush.xpose.msra.mxu0 0.0
    %524 = vmatpush.xpose.msra.mxu0 0.0
    %525 = vmatpush.xpose.msra.mxu0 %v508
    %526 = vmatmul.f32.gmra.mxu0 %v506
    %v527 = vpop.f32.mrf.mxu0
    %v528 = vadd.f32 0.0, %v527
    %529 = vdwg.mxu0
    %v530 = vmul.f32 %v528, 0.35355338
    %v531 = vsel %vm439, %v530, -inf
    %532 = vmax.xlane.f32.xlu0 %v531
    %v533 = vpop.xlane.xlu0 %532
    %v534 = vsub.f32 %v530, %v533
    %v535 = vmul.f32 %v534, 1.442695
    %v536 = vpow.pop %v535
    %v537 = vsel %vm439, %v536, 0.0
    %538 = vadd.xlane.f32.xlu0 %v537
    %v539 = vpop.xlane.xlu0 %538
    %v540 = vrcp.pop %v539
    %v541 = vmul.f32 %v536, %v540
    %v542 = vadd.f32 %v475, %v541
    %543 = vrot.lane.b32.xlu0 %v428, 56
    %v544 = vpop.permute.xlu0 %543
    %v547 = vsel %vm439, %v541, 0
    %549 = vmatpush.msra.mxu0 0.0
    %550 = vmatpush.msra.mxu0 0.0
    %551 = vmatpush.msra.mxu0 0.0
    %552 = vmatpush.msra.mxu0 0.0
    %553 = vmatpush.msra.mxu0 0.0
    %554 = vmatpush.msra.mxu0 0.0
    %555 = vmatpush.msra.mxu0 0.0
    %556 = vmatpush.msra.mxu0 0.0
    %557 = vmatpush.msra.mxu0 0.0
    %558 = vmatpush.msra.mxu0 0.0
    %559 = vmatpush.msra.mxu0 0.0
    %560 = vmatpush.msra.mxu0 0.0
    %561 = vmatpush.msra.mxu0 0.0
    %562 = vmatpush.msra.mxu0 0.0
    %563 = vmatpush.msra.mxu0 0.0
    %564 = vmatpush.msra.mxu0 %v544
    %565 = vmatmul.f32.gmra.mxu0 %v547
    %v566 = vpop.f32.mrf.mxu0
    %v567 = vadd.f32 0.0, %v566
    %568 = vdwg.mxu0
    %v570 = vsel %vm439, %v567, 0
    %572 = vmatpush.msra.mxu0 0.0
    %573 = vmatpush.msra.mxu0 0.0
    %574 = vmatpush.msra.mxu0 0.0
    %575 = vmatpush.msra.mxu0 0.0
    %576 = vmatpush.msra.mxu0 0.0
    %577 = vmatpush.msra.mxu0 0.0
    %578 = vmatpush.msra.mxu0 0.0
    %579 = vmatpush.msra.mxu0 0.0
    %580 = vmatpush.msra.mxu0 0.0
    %581 = vmatpush.msra.mxu0 0.0
    %582 = vmatpush.msra.mxu0 0.0
    %583 = vmatpush.msra.mxu0 0.0
    %584 = vmatpush.msra.mxu0 0.0
    %585 = vmatpush.msra.mxu0 0.0
    %586 = vmatpush.msra.mxu0 0.0
    %587 = vmatpush.msra.mxu0 %v433
    %588 = vmatmul.f32.gmra.mxu0 %v570
    %v589 = vpop.f32.mrf.mxu0
    %v590 = vadd.f32 0.0, %v589
    %591 = vdwg.mxu0
    %v593 = vsel %vm439, %v500, 0
    %595 = vmatpush.msra.mxu0 0.0
    %596 = vmatpush.msra.mxu0 0.0
    %597 = vmatpush.msra.mxu0 0.0
    %598 = vmatpush.msra.mxu0 0.0
    %599 = vmatpush.msra.mxu0 0.0
    %600 = vmatpush.msra.mxu0 0.0
    %601 = vmatpush.msra.mxu0 0.0
    %602 = vmatpush.msra.mxu0 0.0
    %603 = vmatpush.msra.mxu0 0.0
    %604 = vmatpush.msra.mxu0 0.0
    %605 = vmatpush.msra.mxu0 0.0
    %606 = vmatpush.msra.mxu0 0.0
    %607 = vmatpush.msra.mxu0 0.0
    %608 = vmatpush.msra.mxu0 0.0
    %609 = vmatpush.msra.mxu0 0.0
    %610 = vmatpush.msra.mxu0 %v432
    %611 = vmatmul.f32.gmra.mxu0 %v593
    %v612 = vpop.f32.mrf.mxu0
    %v613 = vadd.f32 %v590, %v612
    %614 = vdwg.mxu0
    %615 = vrot.lane.b32.xlu0 %v428, 112
    %v616 = vpop.permute.xlu0 %615
    %617 = vrot.lane.b32.xlu0 %v428, 80
    %v618 = vpop.permute.xlu0 %617
    %v619 = vsel %vm439, %v616, 0
    %v621 = vsel %vm439, %v618, 0
    %623 = vmatpush.xpose.msra.mxu0 0.0
    %624 = vmatpush.xpose.msra.mxu0 0.0
    %625 = vmatpush.xpose.msra.mxu0 0.0
    %626 = vmatpush.xpose.msra.mxu0 0.0
    %627 = vmatpush.xpose.msra.mxu0 0.0
    %628 = vmatpush.xpose.msra.mxu0 0.0
    %629 = vmatpush.xpose.msra.mxu0 0.0
    %630 = vmatpush.xpose.msra.mxu0 0.0
    %631 = vmatpush.xpose.msra.mxu0 0.0
    %632 = vmatpush.xpose.msra.mxu0 0.0
    %633 = vmatpush.xpose.msra.mxu0 0.0
    %634 = vmatpush.xpose.msra.mxu0 0.0
    %635 = vmatpush.xpose.msra.mxu0 0.0
    %636 = vmatpush.xpose.msra.mxu0 0.0
    %637 = vmatpush.xpose.msra.mxu0 0.0
    %638 = vmatpush.xpose.msra.mxu0 %v621
    %639 = vmatmul.f32.gmra.mxu0 %v619
    %v640 = vpop.f32.mrf.mxu0
    %v641 = vadd.f32 0.0, %v640
    %642 = vdwg.mxu0
    %v643 = vmul.f32 %v641, 0.35355338
    %v644 = vsel %vm439, %v643, -inf
    %645 = vmax.xlane.f32.xlu0 %v644
    %v646 = vpop.xlane.xlu0 %645
    %v647 = vsub.f32 %v643, %v646
    %v648 = vmul.f32 %v647, 1.442695
    %v649 = vpow.pop %v648
    %v650 = vsel %vm439, %v649, 0.0
    %651 = vadd.xlane.f32.xlu0 %v650
    %v652 = vpop.xlane.xlu0 %651
    %v653 = vrcp.pop %v652
    %v654 = vmul.f32 %v649, %v653
    %v655 = vadd.f32 %v542, %v654
    %656 = vrot.lane.b32.xlu0 %v428, 48
    %v657 = vpop.permute.xlu0 %656
    %v660 = vsel %vm439, %v654, 0
    %662 = vmatpush.msra.mxu0 0.0
    %663 = vmatpush.msra.mxu0 0.0
    %664 = vmatpush.msra.mxu0 0.0
    %665 = vmatpush.msra.mxu0 0.0
    %666 = vmatpush.msra.mxu0 0.0
    %667 = vmatpush.msra.mxu0 0.0
    %668 = vmatpush.msra.mxu0 0.0
    %669 = vmatpush.msra.mxu0 0.0
    %670 = vmatpush.msra.mxu0 0.0
    %671 = vmatpush.msra.mxu0 0.0
    %672 = vmatpush.msra.mxu0 0.0
    %673 = vmatpush.msra.mxu0 0.0
    %674 = vmatpush.msra.mxu0 0.0
    %675 = vmatpush.msra.mxu0 0.0
    %676 = vmatpush.msra.mxu0 0.0
    %677 = vmatpush.msra.mxu0 %v657
    %678 = vmatmul.f32.gmra.mxu0 %v660
    %v679 = vpop.f32.mrf.mxu0
    %v680 = vadd.f32 0.0, %v679
    %681 = vdwg.mxu0
    %v683 = vsel %vm439, %v680, 0
    %685 = vmatpush.msra.mxu0 0.0
    %686 = vmatpush.msra.mxu0 0.0
    %687 = vmatpush.msra.mxu0 0.0
    %688 = vmatpush.msra.mxu0 0.0
    %689 = vmatpush.msra.mxu0 0.0
    %690 = vmatpush.msra.mxu0 0.0
    %691 = vmatpush.msra.mxu0 0.0
    %692 = vmatpush.msra.mxu0 0.0
    %693 = vmatpush.msra.mxu0 0.0
    %694 = vmatpush.msra.mxu0 0.0
    %695 = vmatpush.msra.mxu0 0.0
    %696 = vmatpush.msra.mxu0 0.0
    %697 = vmatpush.msra.mxu0 0.0
    %698 = vmatpush.msra.mxu0 0.0
    %699 = vmatpush.msra.mxu0 0.0
    %700 = vmatpush.msra.mxu0 %v434
    %701 = vmatmul.f32.gmra.mxu0 %v683
    %v702 = vpop.f32.mrf.mxu0
    %v703 = vadd.f32 0.0, %v702
    %704 = vdwg.mxu0
    %v705 = vadd.f32 %v613, %v703
    %706 = vrot.lane.b32.xlu0 %v428, 104
    %v707 = vpop.permute.xlu0 %706
    %708 = vrot.lane.b32.xlu0 %v428, 72
    %v709 = vpop.permute.xlu0 %708
    %v710 = vsel %vm439, %v707, 0
    %v712 = vsel %vm439, %v709, 0
    %714 = vmatpush.xpose.msra.mxu0 0.0
    %715 = vmatpush.xpose.msra.mxu0 0.0
    %716 = vmatpush.xpose.msra.mxu0 0.0
    %717 = vmatpush.xpose.msra.mxu0 0.0
    %718 = vmatpush.xpose.msra.mxu0 0.0
    %719 = vmatpush.xpose.msra.mxu0 0.0
    %720 = vmatpush.xpose.msra.mxu0 0.0
    %721 = vmatpush.xpose.msra.mxu0 0.0
    %722 = vmatpush.xpose.msra.mxu0 0.0
    %723 = vmatpush.xpose.msra.mxu0 0.0
    %724 = vmatpush.xpose.msra.mxu0 0.0
    %725 = vmatpush.xpose.msra.mxu0 0.0
    %726 = vmatpush.xpose.msra.mxu0 0.0
    %727 = vmatpush.xpose.msra.mxu0 0.0
    %728 = vmatpush.xpose.msra.mxu0 0.0
    %729 = vmatpush.xpose.msra.mxu0 %v712
    %730 = vmatmul.f32.gmra.mxu0 %v710
    %v731 = vpop.f32.mrf.mxu0
    %v732 = vadd.f32 0.0, %v731
    %733 = vdwg.mxu0
    %v734 = vmul.f32 %v732, 0.35355338
    %v735 = vsel %vm439, %v734, -inf
    %736 = vmax.xlane.f32.xlu0 %v735
    %v737 = vpop.xlane.xlu0 %736
    %v738 = vsub.f32 %v734, %v737
    %v739 = vmul.f32 %v738, 1.442695
    %v740 = vpow.pop %v739
    %v741 = vsel %vm439, %v740, 0.0
    %742 = vadd.xlane.f32.xlu0 %v741
    %v743 = vpop.xlane.xlu0 %742
    %v744 = vrcp.pop %v743
    %v745 = vmul.f32 %v740, %v744
    %v746 = vadd.f32 %v655, %v745
    %747 = vrot.lane.b32.xlu0 %v428, 40
    %v748 = vpop.permute.xlu0 %747
    %v751 = vsel %vm439, %v745, 0
    %753 = vmatpush.msra.mxu0 0.0
    %754 = vmatpush.msra.mxu0 0.0
    %755 = vmatpush.msra.mxu0 0.0
    %756 = vmatpush.msra.mxu0 0.0
    %757 = vmatpush.msra.mxu0 0.0
    %758 = vmatpush.msra.mxu0 0.0
    %759 = vmatpush.msra.mxu0 0.0
    %760 = vmatpush.msra.mxu0 0.0
    %761 = vmatpush.msra.mxu0 0.0
    %762 = vmatpush.msra.mxu0 0.0
    %763 = vmatpush.msra.mxu0 0.0
    %764 = vmatpush.msra.mxu0 0.0
    %765 = vmatpush.msra.mxu0 0.0
    %766 = vmatpush.msra.mxu0 0.0
    %767 = vmatpush.msra.mxu0 0.0
    %768 = vmatpush.msra.mxu0 %v748
    %769 = vmatmul.f32.gmra.mxu0 %v751
    %v770 = vpop.f32.mrf.mxu0
    %v771 = vadd.f32 0.0, %v770
    %772 = vdwg.mxu0
    %v774 = vsel %vm439, %v771, 0
    %776 = vmatpush.msra.mxu0 0.0
    %777 = vmatpush.msra.mxu0 0.0
    %778 = vmatpush.msra.mxu0 0.0
    %779 = vmatpush.msra.mxu0 0.0
    %780 = vmatpush.msra.mxu0 0.0
    %781 = vmatpush.msra.mxu0 0.0
    %782 = vmatpush.msra.mxu0 0.0
    %783 = vmatpush.msra.mxu0 0.0
    %784 = vmatpush.msra.mxu0 0.0
    %785 = vmatpush.msra.mxu0 0.0
    %786 = vmatpush.msra.mxu0 0.0
    %787 = vmatpush.msra.mxu0 0.0
    %788 = vmatpush.msra.mxu0 0.0
    %789 = vmatpush.msra.mxu0 0.0
    %790 = vmatpush.msra.mxu0 0.0
    %791 = vmatpush.msra.mxu0 %v435
    %792 = vmatmul.f32.gmra.mxu0 %v774
    %v793 = vpop.f32.mrf.mxu0
    %v794 = vadd.f32 0.0, %v793
    %795 = vdwg.mxu0
    %v796 = vadd.f32 %v705, %v794
    %v797 = vmul.f32 %v746, 0.25
    %v798 = vadd.f32 %v430, %v796
    %v799 = vld [vmem:[%s7] sm:$0x1]
    %v801 = vperm.slane %v799, 0
    %v803 = vadd.f32 %v798, %v801
    %v804 = vld [vmem:[#allocation9] sm:$0x1]
    %v805 = vld [vmem:[#allocation10] sm:$0x1]
    %v806 = vsel %vm408, %v803, 0.0
    %807 = vadd.xlane.f32.xlu0 %v806
    %v808 = vpop.xlane.xlu0 %807
    %v809 = vrcp.pop 32.0
    %v810 = vmul.f32 32.0, %v809
    %v811 = vsub.f32 1.0, %v810
    %v812 = vmul.f32 %v809, %v811
    %v813 = vadd.f32 %v809, %v812
    %vm814 = vweird.f32 %v809
    %v815 = vsel %vm814, %v809, %v813
    %v816 = vmul.f32 %v808, %v815
    %v817 = vsub.f32 %v803, %v816
    %v818 = vmul.f32 %v817, %v817
    %v819 = vsel %vm408, %v818, 0.0
    %820 = vadd.xlane.f32.xlu0 %v819
    %v821 = vpop.xlane.xlu0 %820
    %v822 = vmul.f32 %v821, %v815
    %v823 = vadd.f32 %v822, 1e-05
    %v824 = vrsqrt.pop %v823
    %v825 = vmul.f32 %v824, %v823
    %v826 = vmul.f32 %v825, %v824
    %v827 = vmul.f32 0.5, %v826
    %v828 = vsub.f32 1.5, %v827
    %v829 = vmul.f32 %v824, %v828
    %vm830 = vweird.f32 %v823
    %vm831 = vweird.f32 %v824
    %vm832 = vmor %vm830, %vm831
    %v833 = vsel %vm832, %v824, %v829
    %v834 = vmul.f32 %v817, %v833
    %v836 = vperm.slane %v804, 0
    %v838 = vmul.f32 %v834, %v836
    %v840 = vperm.slane %v805, 0
    %v842 = vadd.f32 %v838, %v840
    %844 = vrot.lane.b32.xlu0 %v422, 96
    %v845 = vpop.permute.xlu0 %844
    %v846 = vsel %vm439, %v422, 0
    %v848 = vsel %vm439, %v845, 0
    %850 = vmatpush.xpose.msra.mxu0 0.0
    %851 = vmatpush.xpose.msra.mxu0 0.0
    %852 = vmatpush.xpose.msra.mxu0 0.0
    %853 = vmatpush.xpose.msra.mxu0 0.0
    %854 = vmatpush.xpose.msra.mxu0 0.0
    %855 = vmatpush.xpose.msra.mxu0 0.0
    %856 = vmatpush.xpose.msra.mxu0 0.0
    %857 = vmatpush.xpose.msra.mxu0 0.0
    %858 = vmatpush.xpose.msra.mxu0 0.0
    %859 = vmatpush.xpose.msra.mxu0 0.0
    %860 = vmatpush.xpose.msra.mxu0 0.0
    %861 = vmatpush.xpose.msra.mxu0 0.0
    %862 = vmatpush.xpose.msra.mxu0 0.0
    %863 = vmatpush.xpose.msra.mxu0 0.0
    %864 = vmatpush.xpose.msra.mxu0 0.0
    %865 = vmatpush.xpose.msra.mxu0 %v848
    %866 = vmatmul.f32.gmra.mxu0 %v846
    %v867 = vpop.f32.mrf.mxu0
    %v868 = vadd.f32 0.0, %v867
    %869 = vdwg.mxu0
    %v870 = vmul.f32 %v868, 0.35355338
    %v871 = vsel %vm439, %v870, -inf
    %872 = vmax.xlane.f32.xlu0 %v871
    %v873 = vpop.xlane.xlu0 %872
    %v874 = vsub.f32 %v870, %v873
    %v875 = vmul.f32 %v874, 1.442695
    %v876 = vpow.pop %v875
    %v877 = vsel %vm439, %v876, 0.0
    %878 = vadd.xlane.f32.xlu0 %v877
    %v879 = vpop.xlane.xlu0 %878
    %v880 = vrcp.pop %v879
    %v881 = vmul.f32 %v876, %v880
    %882 = vrot.lane.b32.xlu0 %v422, 120
    %v883 = vpop.permute.xlu0 %882
    %884 = vrot.lane.b32.xlu0 %v422, 88
    %v885 = vpop.permute.xlu0 %884
    %v886 = vsel %vm439, %v883, 0
    %v888 = vsel %vm439, %v885, 0
    %890 = vmatpush.xpose.msra.mxu0 0.0
    %891 = vmatpush.xpose.msra.mxu0 0.0
    %892 = vmatpush.xpose.msra.mxu0 0.0
    %893 = vmatpush.xpose.msra.mxu0 0.0
    %894 = vmatpush.xpose.msra.mxu0 0.0
    %895 = vmatpush.xpose.msra.mxu0 0.0
    %896 = vmatpush.xpose.msra.mxu0 0.0
    %897 = vmatpush.xpose.msra.mxu0 0.0
    %898 = vmatpush.xpose.msra.mxu0 0.0
    %899 = vmatpush.xpose.msra.mxu0 0.0
    %900 = vmatpush.xpose.msra.mxu0 0.0
    %901 = vmatpush.xpose.msra.mxu0 0.0
    %902 = vmatpush.xpose.msra.mxu0 0.0
    %903 = vmatpush.xpose.msra.mxu0 0.0
    %904 = vmatpush.xpose.msra.mxu0 0.0
    %905 = vmatpush.xpose.msra.mxu0 %v888
    %906 = vmatmul.f32.gmra.mxu0 %v886
    %v907 = vpop.f32.mrf.mxu0
    %v908 = vadd.f32 0.0, %v907
    %909 = vdwg.mxu0
    %v910 = vmul.f32 %v908, 0.35355338
    %v911 = vsel %vm439, %v910, -inf
    %912 = vmax.xlane.f32.xlu0 %v911
    %v913 = vpop.xlane.xlu0 %912
    %v914 = vsub.f32 %v910, %v913
    %v915 = vmul.f32 %v914, 1.442695
    %v916 = vpow.pop %v915
    %v917 = vsel %vm439, %v916, 0.0
    %918 = vadd.xlane.f32.xlu0 %v917
    %v919 = vpop.xlane.xlu0 %918
    %v920 = vrcp.pop %v919
    %v921 = vmul.f32 %v916, %v920
    %v922 = vadd.f32 %v881, %v921
    %923 = vrot.lane.b32.xlu0 %v422, 112
    %v924 = vpop.permute.xlu0 %923
    %925 = vrot.lane.b32.xlu0 %v422, 80
    %v926 = vpop.permute.xlu0 %925
    %v927 = vsel %vm439, %v924, 0
    %v929 = vsel %vm439, %v926, 0
    %931 = vmatpush.xpose.msra.mxu0 0.0
    %932 = vmatpush.xpose.msra.mxu0 0.0
    %933 = vmatpush.xpose.msra.mxu0 0.0
    %934 = vmatpush.xpose.msra.mxu0 0.0
    %935 = vmatpush.xpose.msra.mxu0 0.0
    %936 = vmatpush.xpose.msra.mxu0 0.0
    %937 = vmatpush.xpose.msra.mxu0 0.0
    %938 = vmatpush.xpose.msra.mxu0 0.0
    %939 = vmatpush.xpose.msra.mxu0 0.0
    %940 = vmatpush.xpose.msra.mxu0 0.0
    %941 = vmatpush.xpose.msra.mxu0 0.0
    %942 = vmatpush.xpose.msra.mxu0 0.0
    %943 = vmatpush.xpose.msra.mxu0 0.0
    %944 = vmatpush.xpose.msra.mxu0 0.0
    %945 = vmatpush.xpose.msra.mxu0 0.0
    %946 = vmatpush.xpose.msra.mxu0 %v929
    %947 = vmatmul.f32.gmra.mxu0 %v927
    %v948 = vpop.f32.mrf.mxu0
    %v949 = vadd.f32 0.0, %v948
    %950 = vdwg.mxu0
    %v951 = vmul.f32 %v949, 0.35355338
    %v952 = vsel %vm439, %v951, -inf
    %953 = vmax.xlane.f32.xlu0 %v952
    %v954 = vpop.xlane.xlu0 %953
    %v955 = vsub.f32 %v951, %v954
    %v956 = vmul.f32 %v955, 1.442695
    %v957 = vpow.pop %v956
    %v958 = vsel %vm439, %v957, 0.0
    %959 = vadd.xlane.f32.xlu0 %v958
    %v960 = vpop.xlane.xlu0 %959
    %v961 = vrcp.pop %v960
    %v962 = vmul.f32 %v957, %v961
    %v963 = vadd.f32 %v922, %v962
    %964 = vrot.lane.b32.xlu0 %v422, 104
    %v965 = vpop.permute.xlu0 %964
    %966 = vrot.lane.b32.xlu0 %v422, 72
    %v967 = vpop.permute.xlu0 %966
    %v968 = vsel %vm439, %v965, 0
    %v970 = vsel %vm439, %v967, 0
    %972 = vmatpush.xpose.msra.mxu0 0.0
    %973 = vmatpush.xpose.msra.mxu0 0.0
    %974 = vmatpush.xpose.msra.mxu0 0.0
    %975 = vmatpush.xpose.msra.mxu0 0.0
    %976 = vmatpush.xpose.msra.mxu0 0.0
    %977 = vmatpush.xpose.msra.mxu0 0.0
    %978 = vmatpush.xpose.msra.mxu0 0.0
    %979 = vmatpush.xpose.msra.mxu0 0.0
    %980 = vmatpush.xpose.msra.mxu0 0.0
    %981 = vmatpush.xpose.msra.mxu0 0.0
    %982 = vmatpush.xpose.msra.mxu0 0.0
    %983 = vmatpush.xpose.msra.mxu0 0.0
    %984 = vmatpush.xpose.msra.mxu0 0.0
    %985 = vmatpush.xpose.msra.mxu0 0.0
    %986 = vmatpush.xpose.msra.mxu0 0.0
    %987 = vmatpush.xpose.msra.mxu0 %v970
    %988 = vmatmul.f32.gmra.mxu0 %v968
    %v989 = vpop.f32.mrf.mxu0
    %v990 = vadd.f32 0.0, %v989
    %991 = vdwg.mxu0
    %v992 = vmul.f32 %v990, 0.35355338
    %v993 = vsel %vm439, %v992, -inf
    %994 = vmax.xlane.f32.xlu0 %v993
    %v995 = vpop.xlane.xlu0 %994
    %v996 = vsub.f32 %v992, %v995
    %v997 = vmul.f32 %v996, 1.442695
    %v998 = vpow.pop %v997
    %v999 = vsel %vm439, %v998, 0.0
    %1000 = vadd.xlane.f32.xlu0 %v999
    %v1001 = vpop.xlane.xlu0 %1000
    %v1002 = vrcp.pop %v1001
    %v1003 = vmul.f32 %v998, %v1002
    %v1004 = vadd.f32 %v963, %v1003
    %v1005 = vmul.f32 %v1004, 0.25
    %v1007 = vsel %vm439, %v1005, 0
    %1009 = vmatpush.msra.mxu0 0.0
    %1010 = vmatpush.msra.mxu0 0.0
    %1011 = vmatpush.msra.mxu0 0.0
    %1012 = vmatpush.msra.mxu0 0.0
    %1013 = vmatpush.msra.mxu0 0.0
    %1014 = vmatpush.msra.mxu0 0.0
    %1015 = vmatpush.msra.mxu0 0.0
    %1016 = vmatpush.msra.mxu0 0.0
    %1017 = vmatpush.msra.mxu0 0.0
    %1018 = vmatpush.msra.mxu0 0.0
    %1019 = vmatpush.msra.mxu0 0.0
    %1020 = vmatpush.msra.mxu0 0.0
    %1021 = vmatpush.msra.mxu0 0.0
    %1022 = vmatpush.msra.mxu0 0.0
    %1023 = vmatpush.msra.mxu0 0.0
    %1024 = vmatpush.msra.mxu0 %v797
    %1025 = vmatmul.f32.gmra.mxu0 %v1007
    %v1026 = vpop.f32.mrf.mxu0
    %v1027 = vadd.f32 0.0, %v1026
    %1028 = vdwg.mxu0
    %v1030 = vsel %vm439, %v1027, 0
    %1032 = vmatpush.msra.mxu0 0.0
    %1033 = vmatpush.msra.mxu0 0.0
    %1034 = vmatpush.msra.mxu0 0.0
    %1035 = vmatpush.msra.mxu0 0.0
    %1036 = vmatpush.msra.mxu0 0.0
    %1037 = vmatpush.msra.mxu0 0.0
    %1038 = vmatpush.msra.mxu0 0.0
    %1039 = vmatpush.msra.mxu0 0.0
    %1040 = vmatpush.msra.mxu0 0.0
    %1041 = vmatpush.msra.mxu0 0.0
    %1042 = vmatpush.msra.mxu0 0.0
    %1043 = vmatpush.msra.mxu0 0.0
    %1044 = vmatpush.msra.mxu0 0.0
    %1045 = vmatpush.msra.mxu0 0.0
    %1046 = vmatpush.msra.mxu0 0.0
    %1047 = vmatpush.msra.mxu0 %v842
    %1048 = vmatmul.f32.gmra.mxu0 %v1030
    %v1049 = vpop.f32.mrf.mxu0
    %v1050 = vadd.f32 0.0, %v1049
    %1051 = vdwg.mxu0
    %1053 = vrot.lane.b32.xlu0 %v429, 96
    %v1054 = vpop.permute.xlu0 %1053
    %v1055 = vsel %vm439, %v429, 0
    %v1057 = vsel %vm439, %v1054, 0
    %1059 = vmatpush.xpose.msra.mxu0 0.0
    %1060 = vmatpush.xpose.msra.mxu0 0.0
    %1061 = vmatpush.xpose.msra.mxu0 0.0
    %1062 = vmatpush.xpose.msra.mxu0 0.0
    %1063 = vmatpush.xpose.msra.mxu0 0.0
    %1064 = vmatpush.xpose.msra.mxu0 0.0
    %1065 = vmatpush.xpose.msra.mxu0 0.0
    %1066 = vmatpush.xpose.msra.mxu0 0.0
    %1067 = vmatpush.xpose.msra.mxu0 0.0
    %1068 = vmatpush.xpose.msra.mxu0 0.0
    %1069 = vmatpush.xpose.msra.mxu0 0.0
    %1070 = vmatpush.xpose.msra.mxu0 0.0
    %1071 = vmatpush.xpose.msra.mxu0 0.0
    %1072 = vmatpush.xpose.msra.mxu0 0.0
    %1073 = vmatpush.xpose.msra.mxu0 0.0
    %1074 = vmatpush.xpose.msra.mxu0 %v1057
    %1075 = vmatmul.f32.gmra.mxu0 %v1055
    %v1076 = vpop.f32.mrf.mxu0
    %v1077 = vadd.f32 0.0, %v1076
    %1078 = vdwg.mxu0
    %v1079 = vmul.f32 %v1077, 0.35355338
    %v1080 = vsel %vm439, %v1079, -inf
    %1081 = vmax.xlane.f32.xlu0 %v1080
    %v1082 = vpop.xlane.xlu0 %1081
    %v1083 = vsub.f32 %v1079, %v1082
    %v1084 = vmul.f32 %v1083, 1.442695
    %v1085 = vpow.pop %v1084
    %v1086 = vsel %vm439, %v1085, 0.0
    %1087 = vadd.xlane.f32.xlu0 %v1086
    %v1088 = vpop.xlane.xlu0 %1087
    %v1089 = vrcp.pop %v1088
    %v1090 = vmul.f32 %v1085, %v1089
    %1091 = vrot.lane.b32.xlu0 %v429, 64
    %v1092 = vpop.permute.xlu0 %1091
    %v1095 = vsel %vm439, %v1090, 0
    %1097 = vmatpush.msra.mxu0 0.0
    %1098 = vmatpush.msra.mxu0 0.0
    %1099 = vmatpush.msra.mxu0 0.0
    %1100 = vmatpush.msra.mxu0 0.0
    %1101 = vmatpush.msra.mxu0 0.0
    %1102 = vmatpush.msra.mxu0 0.0
    %1103 = vmatpush.msra.mxu0 0.0
    %1104 = vmatpush.msra.mxu0 0.0
    %1105 = vmatpush.msra.mxu0 0.0
    %1106 = vmatpush.msra.mxu0 0.0
    %1107 = vmatpush.msra.mxu0 0.0
    %1108 = vmatpush.msra.mxu0 0.0
    %1109 = vmatpush.msra.mxu0 0.0
    %1110 = vmatpush.msra.mxu0 0.0
    %1111 = vmatpush.msra.mxu0 0.0
    %1112 = vmatpush.msra.mxu0 %v1092
    %1113 = vmatmul.f32.gmra.mxu0 %v1095
    %v1114 = vpop.f32.mrf.mxu0
    %v1115 = vadd.f32 0.0, %v1114
    %1116 = vdwg.mxu0
    %1117 = vrot.lane.b32.xlu0 %v429, 120
    %v1118 = vpop.permute.xlu0 %1117
    %1119 = vrot.lane.b32.xlu0 %v429, 88
    %v1120 = vpop.permute.xlu0 %1119
    %v1121 = vsel %vm439, %v1118, 0
    %v1123 = vsel %vm439, %v1120, 0
    %1125 = vmatpush.xpose.msra.mxu0 0.0
    %1126 = vmatpush.xpose.msra.mxu0 0.0
    %1127 = vmatpush.xpose.msra.mxu0 0.0
    %1128 = vmatpush.xpose.msra.mxu0 0.0
    %1129 = vmatpush.xpose.msra.mxu0 0.0
    %1130 = vmatpush.xpose.msra.mxu0 0.0
    %1131 = vmatpush.xpose.msra.mxu0 0.0
    %1132 = vmatpush.xpose.msra.mxu0 0.0
    %1133 = vmatpush.xpose.msra.mxu0 0.0
    %1134 = vmatpush.xpose.msra.mxu0 0.0
    %1135 = vmatpush.xpose.msra.mxu0 0.0
    %1136 = vmatpush.xpose.msra.mxu0 0.0
    %1137 = vmatpush.xpose.msra.mxu0 0.0
    %1138 = vmatpush.xpose.msra.mxu0 0.0
    %1139 = vmatpush.xpose.msra.mxu0 0.0
    %1140 = vmatpush.xpose.msra.mxu0 %v1123
    %1141 = vmatmul.f32.gmra.mxu0 %v1121
    %v1142 = vpop.f32.mrf.mxu0
    %v1143 = vadd.f32 0.0, %v1142
    %1144 = vdwg.mxu0
    %v1145 = vmul.f32 %v1143, 0.35355338
    %v1146 = vsel %vm439, %v1145, -inf
    %1147 = vmax.xlane.f32.xlu0 %v1146
    %v1148 = vpop.xlane.xlu0 %1147
    %v1149 = vsub.f32 %v1145, %v1148
    %v1150 = vmul.f32 %v1149, 1.442695
    %v1151 = vpow.pop %v1150
    %v1152 = vsel %vm439, %v1151, 0.0
    %1153 = vadd.xlane.f32.xlu0 %v1152
    %v1154 = vpop.xlane.xlu0 %1153
    %v1155 = vrcp.pop %v1154
    %v1156 = vmul.f32 %v1151, %v1155
    %v1157 = vadd.f32 %v1090, %v1156
    %1158 = vrot.lane.b32.xlu0 %v429, 56
    %v1159 = vpop.permute.xlu0 %1158
    %v1162 = vsel %vm439, %v1156, 0
    %1164 = vmatpush.msra.mxu0 0.0
    %1165 = vmatpush.msra.mxu0 0.0
    %1166 = vmatpush.msra.mxu0 0.0
    %1167 = vmatpush.msra.mxu0 0.0
    %1168 = vmatpush.msra.mxu0 0.0
    %1169 = vmatpush.msra.mxu0 0.0
    %1170 = vmatpush.msra.mxu0 0.0
    %1171 = vmatpush.msra.mxu0 0.0
    %1172 = vmatpush.msra.mxu0 0.0
    %1173 = vmatpush.msra.mxu0 0.0
    %1174 = vmatpush.msra.mxu0 0.0
    %1175 = vmatpush.msra.mxu0 0.0
    %1176 = vmatpush.msra.mxu0 0.0
    %1177 = vmatpush.msra.mxu0 0.0
    %1178 = vmatpush.msra.mxu0 0.0
    %1179 = vmatpush.msra.mxu0 %v1159
    %1180 = vmatmul.f32.gmra.mxu0 %v1162
    %v1181 = vpop.f32.mrf.mxu0
    %v1182 = vadd.f32 0.0, %v1181
    %1183 = vdwg.mxu0
    %v1185 = vsel %vm439, %v1182, 0
    %1187 = vmatpush.msra.mxu0 0.0
    %1188 = vmatpush.msra.mxu0 0.0
    %1189 = vmatpush.msra.mxu0 0.0
    %1190 = vmatpush.msra.mxu0 0.0
    %1191 = vmatpush.msra.mxu0 0.0
    %1192 = vmatpush.msra.mxu0 0.0
    %1193 = vmatpush.msra.mxu0 0.0
    %1194 = vmatpush.msra.mxu0 0.0
    %1195 = vmatpush.msra.mxu0 0.0
    %1196 = vmatpush.msra.mxu0 0.0
    %1197 = vmatpush.msra.mxu0 0.0
    %1198 = vmatpush.msra.mxu0 0.0
    %1199 = vmatpush.msra.mxu0 0.0
    %1200 = vmatpush.msra.mxu0 0.0
    %1201 = vmatpush.msra.mxu0 0.0
    %1202 = vmatpush.msra.mxu0 %v433
    %1203 = vmatmul.f32.gmra.mxu0 %v1185
    %v1204 = vpop.f32.mrf.mxu0
    %v1205 = vadd.f32 0.0, %v1204
    %1206 = vdwg.mxu0
    %v1208 = vsel %vm439, %v1115, 0
    %1210 = vmatpush.msra.mxu0 0.0
    %1211 = vmatpush.msra.mxu0 0.0
    %1212 = vmatpush.msra.mxu0 0.0
    %1213 = vmatpush.msra.mxu0 0.0
    %1214 = vmatpush.msra.mxu0 0.0
    %1215 = vmatpush.msra.mxu0 0.0
    %1216 = vmatpush.msra.mxu0 0.0
    %1217 = vmatpush.msra.mxu0 0.0
    %1218 = vmatpush.msra.mxu0 0.0
    %1219 = vmatpush.msra.mxu0 0.0
    %1220 = vmatpush.msra.mxu0 0.0
    %1221 = vmatpush.msra.mxu0 0.0
    %1222 = vmatpush.msra.mxu0 0.0
    %1223 = vmatpush.msra.mxu0 0.0
    %1224 = vmatpush.msra.mxu0 0.0
    %1225 = vmatpush.msra.mxu0 %v432
    %1226 = vmatmul.f32.gmra.mxu0 %v1208
    %v1227 = vpop.f32.mrf.mxu0
    %v1228 = vadd.f32 %v1205, %v1227
    %1229 = vdwg.mxu0
    %1230 = vrot.lane.b32.xlu0 %v429, 112
    %v1231 = vpop.permute.xlu0 %1230
    %1232 = vrot.lane.b32.xlu0 %v429, 80
    %v1233 = vpop.permute.xlu0 %1232
    %v1234 = vsel %vm439, %v1231, 0
    %v1236 = vsel %vm439, %v1233, 0
    %1238 = vmatpush.xpose.msra.mxu0 0.0
    %1239 = vmatpush.xpose.msra.mxu0 0.0
    %1240 = vmatpush.xpose.msra.mxu0 0.0
    %1241 = vmatpush.xpose.msra.mxu0 0.0
    %1242 = vmatpush.xpose.msra.mxu0 0.0
    %1243 = vmatpush.xpose.msra.mxu0 0.0
    %1244 = vmatpush.xpose.msra.mxu0 0.0
    %1245 = vmatpush.xpose.msra.mxu0 0.0
    %1246 = vmatpush.xpose.msra.mxu0 0.0
    %1247 = vmatpush.xpose.msra.mxu0 0.0
    %1248 = vmatpush.xpose.msra.mxu0 0.0
    %1249 = vmatpush.xpose.msra.mxu0 0.0
    %1250 = vmatpush.xpose.msra.mxu0 0.0
    %1251 = vmatpush.xpose.msra.mxu0 0.0
    %1252 = vmatpush.xpose.msra.mxu0 0.0
    %1253 = vmatpush.xpose.msra.mxu0 %v1236
    %1254 = vmatmul.f32.gmra.mxu0 %v1234
    %v1255 = vpop.f32.mrf.mxu0
    %v1256 = vadd.f32 0.0, %v1255
    %1257 = vdwg.mxu0
    %v1258 = vmul.f32 %v1256, 0.35355338
    %v1259 = vsel %vm439, %v1258, -inf
    %1260 = vmax.xlane.f32.xlu0 %v1259
    %v1261 = vpop.xlane.xlu0 %1260
    %v1262 = vsub.f32 %v1258, %v1261
    %v1263 = vmul.f32 %v1262, 1.442695
    %v1264 = vpow.pop %v1263
    %v1265 = vsel %vm439, %v1264, 0.0
    %1266 = vadd.xlane.f32.xlu0 %v1265
    %v1267 = vpop.xlane.xlu0 %1266
    %v1268 = vrcp.pop %v1267
    %v1269 = vmul.f32 %v1264, %v1268
    %v1270 = vadd.f32 %v1157, %v1269
    %1271 = vrot.lane.b32.xlu0 %v429, 48
    %v1272 = vpop.permute.xlu0 %1271
    %v1275 = vsel %vm439, %v1269, 0
    %1277 = vmatpush.msra.mxu0 0.0
    %1278 = vmatpush.msra.mxu0 0.0
    %1279 = vmatpush.msra.mxu0 0.0
    %1280 = vmatpush.msra.mxu0 0.0
    %1281 = vmatpush.msra.mxu0 0.0
    %1282 = vmatpush.msra.mxu0 0.0
    %1283 = vmatpush.msra.mxu0 0.0
    %1284 = vmatpush.msra.mxu0 0.0
    %1285 = vmatpush.msra.mxu0 0.0
    %1286 = vmatpush.msra.mxu0 0.0
    %1287 = vmatpush.msra.mxu0 0.0
    %1288 = vmatpush.msra.mxu0 0.0
    %1289 = vmatpush.msra.mxu0 0.0
    %1290 = vmatpush.msra.mxu0 0.0
    %1291 = vmatpush.msra.mxu0 0.0
    %1292 = vmatpush.msra.mxu0 %v1272
    %1293 = vmatmul.f32.gmra.mxu0 %v1275
    %v1294 = vpop.f32.mrf.mxu0
    %v1295 = vadd.f32 0.0, %v1294
    %1296 = vdwg.mxu0
    %v1298 = vsel %vm439, %v1295, 0
    %1300 = vmatpush.msra.mxu0 0.0
    %1301 = vmatpush.msra.mxu0 0.0
    %1302 = vmatpush.msra.mxu0 0.0
    %1303 = vmatpush.msra.mxu0 0.0
    %1304 = vmatpush.msra.mxu0 0.0
    %1305 = vmatpush.msra.mxu0 0.0
    %1306 = vmatpush.msra.mxu0 0.0
    %1307 = vmatpush.msra.mxu0 0.0
    %1308 = vmatpush.msra.mxu0 0.0
    %1309 = vmatpush.msra.mxu0 0.0
    %1310 = vmatpush.msra.mxu0 0.0
    %1311 = vmatpush.msra.mxu0 0.0
    %1312 = vmatpush.msra.mxu0 0.0
    %1313 = vmatpush.msra.mxu0 0.0
    %1314 = vmatpush.msra.mxu0 0.0
    %1315 = vmatpush.msra.mxu0 %v434
    %1316 = vmatmul.f32.gmra.mxu0 %v1298
    %v1317 = vpop.f32.mrf.mxu0
    %v1318 = vadd.f32 0.0, %v1317
    %1319 = vdwg.mxu0
    %v1320 = vadd.f32 %v1228, %v1318
    %1321 = vrot.lane.b32.xlu0 %v429, 104
    %v1322 = vpop.permute.xlu0 %1321
    %1323 = vrot.lane.b32.xlu0 %v429, 72
    %v1324 = vpop.permute.xlu0 %1323
    %v1325 = vsel %vm439, %v1322, 0
    %v1327 = vsel %vm439, %v1324, 0
    %1329 = vmatpush.xpose.msra.mxu0 0.0
    %1330 = vmatpush.xpose.msra.mxu0 0.0
    %1331 = vmatpush.xpose.msra.mxu0 0.0
    %1332 = vmatpush.xpose.msra.mxu0 0.0
    %1333 = vmatpush.xpose.msra.mxu0 0.0
    %1334 = vmatpush.xpose.msra.mxu0 0.0
    %1335 = vmatpush.xpose.msra.mxu0 0.0
    %1336 = vmatpush.xpose.msra.mxu0 0.0
    %1337 = vmatpush.xpose.msra.mxu0 0.0
    %1338 = vmatpush.xpose.msra.mxu0 0.0
    %1339 = vmatpush.xpose.msra.mxu0 0.0
    %1340 = vmatpush.xpose.msra.mxu0 0.0
    %1341 = vmatpush.xpose.msra.mxu0 0.0
    %1342 = vmatpush.xpose.msra.mxu0 0.0
    %1343 = vmatpush.xpose.msra.mxu0 0.0
    %1344 = vmatpush.xpose.msra.mxu0 %v1327
    %1345 = vmatmul.f32.gmra.mxu0 %v1325
    %v1346 = vpop.f32.mrf.mxu0
    %v1347 = vadd.f32 0.0, %v1346
    %1348 = vdwg.mxu0
    %v1349 = vmul.f32 %v1347, 0.35355338
    %v1350 = vsel %vm439, %v1349, -inf
    %1351 = vmax.xlane.f32.xlu0 %v1350
    %v1352 = vpop.xlane.xlu0 %1351
    %v1353 = vsub.f32 %v1349, %v1352
    %v1354 = vmul.f32 %v1353, 1.442695
    %v1355 = vpow.pop %v1354
    %v1356 = vsel %vm439, %v1355, 0.0
    %1357 = vadd.xlane.f32.xlu0 %v1356
    %v1358 = vpop.xlane.xlu0 %1357
    %v1359 = vrcp.pop %v1358
    %v1360 = vmul.f32 %v1355, %v1359
    %v1361 = vadd.f32 %v1270, %v1360
    %1362 = vrot.lane.b32.xlu0 %v429, 40
    %v1363 = vpop.permute.xlu0 %1362
    %v1366 = vsel %vm439, %v1360, 0
    %1368 = vmatpush.msra.mxu0 0.0
    %1369 = vmatpush.msra.mxu0 0.0
    %1370 = vmatpush.msra.mxu0 0.0
    %1371 = vmatpush.msra.mxu0 0.0
    %1372 = vmatpush.msra.mxu0 0.0
    %1373 = vmatpush.msra.mxu0 0.0
    %1374 = vmatpush.msra.mxu0 0.0
    %1375 = vmatpush.msra.mxu0 0.0
    %1376 = vmatpush.msra.mxu0 0.0
    %1377 = vmatpush.msra.mxu0 0.0
    %1378 = vmatpush.msra.mxu0 0.0
    %1379 = vmatpush.msra.mxu0 0.0
    %1380 = vmatpush.msra.mxu0 0.0
    %1381 = vmatpush.msra.mxu0 0.0
    %1382 = vmatpush.msra.mxu0 0.0
    %1383 = vmatpush.msra.mxu0 %v1363
    %1384 = vmatmul.f32.gmra.mxu0 %v1366
    %v1385 = vpop.f32.mrf.mxu0
    %v1386 = vadd.f32 0.0, %v1385
    %1387 = vdwg.mxu0
    %v1389 = vsel %vm439, %v1386, 0
    %1391 = vmatpush.msra.mxu0 0.0
    %1392 = vmatpush.msra.mxu0 0.0
    %1393 = vmatpush.msra.mxu0 0.0
    %1394 = vmatpush.msra.mxu0 0.0
    %1395 = vmatpush.msra.mxu0 0.0
    %1396 = vmatpush.msra.mxu0 0.0
    %1397 = vmatpush.msra.mxu0 0.0
    %1398 = vmatpush.msra.mxu0 0.0
    %1399 = vmatpush.msra.mxu0 0.0
    %1400 = vmatpush.msra.mxu0 0.0
    %1401 = vmatpush.msra.mxu0 0.0
    %1402 = vmatpush.msra.mxu0 0.0
    %1403 = vmatpush.msra.mxu0 0.0
    %1404 = vmatpush.msra.mxu0 0.0
    %1405 = vmatpush.msra.mxu0 0.0
    %1406 = vmatpush.msra.mxu0 %v435
    %1407 = vmatmul.f32.gmra.mxu0 %v1389
    %v1408 = vpop.f32.mrf.mxu0
    %v1409 = vadd.f32 0.0, %v1408
    %1410 = vdwg.mxu0
    %v1411 = vadd.f32 %v1320, %v1409
    %v1412 = vmul.f32 %v1361, 0.25
    %v1413 = vadd.f32 %v431, %v1411
    %v1414 = vadd.f32 %v1413, %v801
    %v1415 = vsel %vm408, %v1414, 0.0
    %1416 = vadd.xlane.f32.xlu0 %v1415
    %v1417 = vpop.xlane.xlu0 %1416
    %v1418 = vmul.f32 %v1417, %v815
    %v1419 = vsub.f32 %v1414, %v1418
    %v1420 = vmul.f32 %v1419, %v1419
    %v1421 = vsel %vm408, %v1420, 0.0
    %1422 = vadd.xlane.f32.xlu0 %v1421
    %v1423 = vpop.xlane.xlu0 %1422
    %v1424 = vmul.f32 %v1423, %v815
    %v1425 = vadd.f32 %v1424, 1e-05
    %v1426 = vrsqrt.pop %v1425
    %v1427 = vmul.f32 %v1426, %v1425
    %v1428 = vmul.f32 %v1427, %v1426
    %v1429 = vmul.f32 0.5, %v1428
    %v1430 = vsub.f32 1.5, %v1429
    %v1431 = vmul.f32 %v1426, %v1430
    %vm1432 = vweird.f32 %v1425
    %vm1433 = vweird.f32 %v1426
    %vm1434 = vmor %vm1432, %vm1433
    %v1435 = vsel %vm1434, %v1426, %v1431
    %v1436 = vmul.f32 %v1419, %v1435
    %v1437 = vmul.f32 %v1436, %v836
    %v1438 = vadd.f32 %v1437, %v840
    %1440 = vrot.lane.b32.xlu0 %v424, 96
    %v1441 = vpop.permute.xlu0 %1440
    %v1442 = vsel %vm439, %v424, 0
    %v1444 = vsel %vm439, %v1441, 0
    %1446 = vmatpush.xpose.msra.mxu0 0.0
    %1447 = vmatpush.xpose.msra.mxu0 0.0
    %1448 = vmatpush.xpose.msra.mxu0 0.0
    %1449 = vmatpush.xpose.msra.mxu0 0.0
    %1450 = vmatpush.xpose.msra.mxu0 0.0
    %1451 = vmatpush.xpose.msra.mxu0 0.0
    %1452 = vmatpush.xpose.msra.mxu0 0.0
    %1453 = vmatpush.xpose.msra.mxu0 0.0
    %1454 = vmatpush.xpose.msra.mxu0 0.0
    %1455 = vmatpush.xpose.msra.mxu0 0.0
    %1456 = vmatpush.xpose.msra.mxu0 0.0
    %1457 = vmatpush.xpose.msra.mxu0 0.0
    %1458 = vmatpush.xpose.msra.mxu0 0.0
    %1459 = vmatpush.xpose.msra.mxu0 0.0
    %1460 = vmatpush.xpose.msra.mxu0 0.0
    %1461 = vmatpush.xpose.msra.mxu0 %v1444
    %1462 = vmatmul.f32.gmra.mxu0 %v1442
    %v1463 = vpop.f32.mrf.mxu0
    %v1464 = vadd.f32 0.0, %v1463
    %1465 = vdwg.mxu0
    %v1466 = vmul.f32 %v1464, 0.35355338
    %v1467 = vsel %vm439, %v1466, -inf
    %1468 = vmax.xlane.f32.xlu0 %v1467
    %v1469 = vpop.xlane.xlu0 %1468
    %v1470 = vsub.f32 %v1466, %v1469
    %v1471 = vmul.f32 %v1470, 1.442695
    %v1472 = vpow.pop %v1471
    %v1473 = vsel %vm439, %v1472, 0.0
    %1474 = vadd.xlane.f32.xlu0 %v1473
    %v1475 = vpop.xlane.xlu0 %1474
    %v1476 = vrcp.pop %v1475
    %v1477 = vmul.f32 %v1472, %v1476
    %1478 = vrot.lane.b32.xlu0 %v424, 120
    %v1479 = vpop.permute.xlu0 %1478
    %1480 = vrot.lane.b32.xlu0 %v424, 88
    %v1481 = vpop.permute.xlu0 %1480
    %v1482 = vsel %vm439, %v1479, 0
    %v1484 = vsel %vm439, %v1481, 0
    %1486 = vmatpush.xpose.msra.mxu0 0.0
    %1487 = vmatpush.xpose.msra.mxu0 0.0
    %1488 = vmatpush.xpose.msra.mxu0 0.0
    %1489 = vmatpush.xpose.msra.mxu0 0.0
    %1490 = vmatpush.xpose.msra.mxu0 0.0
    %1491 = vmatpush.xpose.msra.mxu0 0.0
    %1492 = vmatpush.xpose.msra.mxu0 0.0
    %1493 = vmatpush.xpose.msra.mxu0 0.0
    %1494 = vmatpush.xpose.msra.mxu0 0.0
    %1495 = vmatpush.xpose.msra.mxu0 0.0
    %1496 = vmatpush.xpose.msra.mxu0 0.0
    %1497 = vmatpush.xpose.msra.mxu0 0.0
    %1498 = vmatpush.xpose.msra.mxu0 0.0
    %1499 = vmatpush.xpose.msra.mxu0 0.0
    %1500 = vmatpush.xpose.msra.mxu0 0.0
    %1501 = vmatpush.xpose.msra.mxu0 %v1484
    %1502 = vmatmul.f32.gmra.mxu0 %v1482
    %v1503 = vpop.f32.mrf.mxu0
    %v1504 = vadd.f32 0.0, %v1503
    %1505 = vdwg.mxu0
    %v1506 = vmul.f32 %v1504, 0.35355338
    %v1507 = vsel %vm439, %v1506, -inf
    %1508 = vmax.xlane.f32.xlu0 %v1507
    %v1509 = vpop.xlane.xlu0 %1508
    %v1510 = vsub.f32 %v1506, %v1509
    %v1511 = vmul.f32 %v1510, 1.442695
    %v1512 = vpow.pop %v1511
    %v1513 = vsel %vm439, %v1512, 0.0
    %1514 = vadd.xlane.f32.xlu0 %v1513
    %v1515 = vpop.xlane.xlu0 %1514
    %v1516 = vrcp.pop %v1515
    %v1517 = vmul.f32 %v1512, %v1516
    %v1518 = vadd.f32 %v1477, %v1517
    %1519 = vrot.lane.b32.xlu0 %v424, 112
    %v1520 = vpop.permute.xlu0 %1519
    %1521 = vrot.lane.b32.xlu0 %v424, 80
    %v1522 = vpop.permute.xlu0 %1521
    %v1523 = vsel %vm439, %v1520, 0
    %v1525 = vsel %vm439, %v1522, 0
    %1527 = vmatpush.xpose.msra.mxu0 0.0
    %1528 = vmatpush.xpose.msra.mxu0 0.0
    %1529 = vmatpush.xpose.msra.mxu0 0.0
    %1530 = vmatpush.xpose.msra.mxu0 0.0
    %1531 = vmatpush.xpose.msra.mxu0 0.0
    %1532 = vmatpush.xpose.msra.mxu0 0.0
    %1533 = vmatpush.xpose.msra.mxu0 0.0
    %1534 = vmatpush.xpose.msra.mxu0 0.0
    %1535 = vmatpush.xpose.msra.mxu0 0.0
    %1536 = vmatpush.xpose.msra.mxu0 0.0
    %1537 = vmatpush.xpose.msra.mxu0 0.0
    %1538 = vmatpush.xpose.msra.mxu0 0.0
    %1539 = vmatpush.xpose.msra.mxu0 0.0
    %1540 = vmatpush.xpose.msra.mxu0 0.0
    %1541 = vmatpush.xpose.msra.mxu0 0.0
    %1542 = vmatpush.xpose.msra.mxu0 %v1525
    %1543 = vmatmul.f32.gmra.mxu0 %v1523
    %v1544 = vpop.f32.mrf.mxu0
    %v1545 = vadd.f32 0.0, %v1544
    %1546 = vdwg.mxu0
    %v1547 = vmul.f32 %v1545, 0.35355338
    %v1548 = vsel %vm439, %v1547, -inf
    %1549 = vmax.xlane.f32.xlu0 %v1548
    %v1550 = vpop.xlane.xlu0 %1549
    %v1551 = vsub.f32 %v1547, %v1550
    %v1552 = vmul.f32 %v1551, 1.442695
    %v1553 = vpow.pop %v1552
    %v1554 = vsel %vm439, %v1553, 0.0
    %1555 = vadd.xlane.f32.xlu0 %v1554
    %v1556 = vpop.xlane.xlu0 %1555
    %v1557 = vrcp.pop %v1556
    %v1558 = vmul.f32 %v1553, %v1557
    %v1559 = vadd.f32 %v1518, %v1558
    %1560 = vrot.lane.b32.xlu0 %v424, 104
    %v1561 = vpop.permute.xlu0 %1560
    %1562 = vrot.lane.b32.xlu0 %v424, 72
    %v1563 = vpop.permute.xlu0 %1562
    %v1564 = vsel %vm439, %v1561, 0
    %v1566 = vsel %vm439, %v1563, 0
    %1568 = vmatpush.xpose.msra.mxu0 0.0
    %1569 = vmatpush.xpose.msra.mxu0 0.0
    %1570 = vmatpush.xpose.msra.mxu0 0.0
    %1571 = vmatpush.xpose.msra.mxu0 0.0
    %1572 = vmatpush.xpose.msra.mxu0 0.0
    %1573 = vmatpush.xpose.msra.mxu0 0.0
    %1574 = vmatpush.xpose.msra.mxu0 0.0
    %1575 = vmatpush.xpose.msra.mxu0 0.0
    %1576 = vmatpush.xpose.msra.mxu0 0.0
    %1577 = vmatpush.xpose.msra.mxu0 0.0
    %1578 = vmatpush.xpose.msra.mxu0 0.0
    %1579 = vmatpush.xpose.msra.mxu0 0.0
    %1580 = vmatpush.xpose.msra.mxu0 0.0
    %1581 = vmatpush.xpose.msra.mxu0 0.0
    %1582 = vmatpush.xpose.msra.mxu0 0.0
    %1583 = vmatpush.xpose.msra.mxu0 %v1566
    %1584 = vmatmul.f32.gmra.mxu0 %v1564
    %v1585 = vpop.f32.mrf.mxu0
    %v1586 = vadd.f32 0.0, %v1585
    %1587 = vdwg.mxu0
    %v1588 = vmul.f32 %v1586, 0.35355338
    %v1589 = vsel %vm439, %v1588, -inf
    %1590 = vmax.xlane.f32.xlu0 %v1589
    %v1591 = vpop.xlane.xlu0 %1590
    %v1592 = vsub.f32 %v1588, %v1591
    %v1593 = vmul.f32 %v1592, 1.442695
    %v1594 = vpow.pop %v1593
    %v1595 = vsel %vm439, %v1594, 0.0
    %1596 = vadd.xlane.f32.xlu0 %v1595
    %v1597 = vpop.xlane.xlu0 %1596
    %v1598 = vrcp.pop %v1597
    %v1599 = vmul.f32 %v1594, %v1598
    %v1600 = vadd.f32 %v1559, %v1599
    %v1601 = vmul.f32 %v1600, 0.25
    %v1603 = vsel %vm439, %v1601, 0
    %1605 = vmatpush.msra.mxu0 0.0
    %1606 = vmatpush.msra.mxu0 0.0
    %1607 = vmatpush.msra.mxu0 0.0
    %1608 = vmatpush.msra.mxu0 0.0
    %1609 = vmatpush.msra.mxu0 0.0
    %1610 = vmatpush.msra.mxu0 0.0
    %1611 = vmatpush.msra.mxu0 0.0
    %1612 = vmatpush.msra.mxu0 0.0
    %1613 = vmatpush.msra.mxu0 0.0
    %1614 = vmatpush.msra.mxu0 0.0
    %1615 = vmatpush.msra.mxu0 0.0
    %1616 = vmatpush.msra.mxu0 0.0
    %1617 = vmatpush.msra.mxu0 0.0
    %1618 = vmatpush.msra.mxu0 0.0
    %1619 = vmatpush.msra.mxu0 0.0
    %1620 = vmatpush.msra.mxu0 %v1412
    %1621 = vmatmul.f32.gmra.mxu0 %v1603
    %v1622 = vpop.f32.mrf.mxu0
    %v1623 = vadd.f32 0.0, %v1622
    %1624 = vdwg.mxu0
    %v1626 = vsel %vm439, %v1623, 0
    %1628 = vmatpush.msra.mxu0 0.0
    %1629 = vmatpush.msra.mxu0 0.0
    %1630 = vmatpush.msra.mxu0 0.0
    %1631 = vmatpush.msra.mxu0 0.0
    %1632 = vmatpush.msra.mxu0 0.0
    %1633 = vmatpush.msra.mxu0 0.0
    %1634 = vmatpush.msra.mxu0 0.0
    %1635 = vmatpush.msra.mxu0 0.0
    %1636 = vmatpush.msra.mxu0 0.0
    %1637 = vmatpush.msra.mxu0 0.0
    %1638 = vmatpush.msra.mxu0 0.0
    %1639 = vmatpush.msra.mxu0 0.0
    %1640 = vmatpush.msra.mxu0 0.0
    %1641 = vmatpush.msra.mxu0 0.0
    %1642 = vmatpush.msra.mxu0 0.0
    %1643 = vmatpush.msra.mxu0 %v1438
    %1644 = vmatmul.f32.gmra.mxu0 %v1626
    %v1645 = vpop.f32.mrf.mxu0
    %v1646 = vadd.f32 0.0, %v1645
    %1647 = vdwg.mxu0
    %v1648 = vld [vmem:[#allocation12] sm:$0xf]
    %v1649 = vld [vmem:[#allocation12 + $0x4] sm:$0xf]
    %v1650 = vld [vmem:[#allocation12 + $0x8] sm:$0xf]
    %v1651 = vld [vmem:[#allocation12 + $0xc] sm:$0xf]
    %v1652 = vpack.c.bf16 %v1646, %v1050
    %v1653 = vld [vmem:[#allocation13] sm:$0x1]
    %v1655 = vperm.slane %v1653, 0
    %v1661 = vunpack.c.l.b16 %v1648
    %v1662 = vunpack.c.l.b16 %v1649
    %v1663 = vunpack.c.l.b16 %v1650
    %v1664 = vunpack.c.l.b16 %v1651
    %v1665 = vpack.c.b16 %v1662, %v1661
    %v1666 = vpack.c.b16 %v1664, %v1663
    %v1670 = vsel %vm408, %v1652, 0
    %1672 = vmatpush.bf16.msra.mxu0 0
    %1673 = vmatpush.bf16.msra.mxu0 0
    %1674 = vmatpush.bf16.msra.mxu0 0
    %1675 = vmatpush.bf16.msra.mxu0 0
    %1676 = vmatpush.bf16.msra.mxu0 0
    %1677 = vmatpush.bf16.msra.mxu0 0
    %1678 = vmatpush.bf16.msra.mxu0 %v1666
    %1679 = vmatpush.bf16.msra.mxu0 %v1665
    %1680 = vmatmul.bf16.gmra.mxu0 %v1670
    %v1681 = vpop.f32.mrf.mxu0
    %v1682 = vadd.f32 %v1655, %v1681
    %v1683 = vpop.f32.mrf.mxu0
    %v1684 = vadd.f32 %v1655, %v1683
    %1685 = vdwg.mxu0
    %v1686 = vld [vmem:[#allocation15] sm:$0xf]
    %v1687 = vld [vmem:[#allocation15 + $0x4] sm:$0xf]
    %v1688 = vld [vmem:[#allocation15 + $0x8] sm:$0xf]
    %v1689 = vld [vmem:[#allocation15 + $0xc] sm:$0xf]
    %v1690 = vpack.c.bf16 %v382, %v381
    %v1691 = vpack.c.bf16 %v384, %v383
    %v1692 = vld [vmem:[#allocation16] sm:$0x1]
    %v1694 = vperm.slane %v1692, 0
    %v1700 = vunpack.c.l.b16 %v1686
    %v1701 = vunpack.c.l.b16 %v1687
    %v1702 = vunpack.c.l.b16 %v1688
    %v1703 = vunpack.c.l.b16 %v1689
    %v1704 = vpack.c.b16 %v1701, %v1700
    %v1705 = vpack.c.b16 %v1703, %v1702
    %v1709 = vsel %vm408, %v1690, 0
    %v1712 = vsel %vm408, %v1691, 0
    %1714 = vmatpush.bf16.msra.mxu0 0
    %1715 = vmatpush.bf16.msra.mxu0 0
    %1716 = vmatpush.bf16.msra.mxu0 0
    %1717 = vmatpush.bf16.msra.mxu0 0
    %1718 = vmatpush.bf16.msra.mxu0 0
    %1719 = vmatpush.bf16.msra.mxu0 0
    %1720 = vmatpush.bf16.msra.mxu0 %v1705
    %1721 = vmatpush.bf16.msra.mxu0 %v1704
    %1722 = vmatmul.bf16.gmra.mxu0 %v1709
    %v1723 = vpop.f32.mrf.mxu0
    %v1724 = vadd.f32 %v1694, %v1723
    %v1725 = vpop.f32.mrf.mxu0
    %v1726 = vadd.f32 %v1694, %v1725
    %1727 = vmatmul.bf16.gmra.mxu0 %v1712
    %v1728 = vpop.f32.mrf.mxu0
    %v1729 = vadd.f32 %v1694, %v1728
    %v1730 = vpop.f32.mrf.mxu0
    %v1731 = vadd.f32 %v1694, %v1730
    %1732 = vdwg.mxu0
    %v1733 = vld [vmem:[#allocation18] sm:$0xff]
    %v1734 = vld [vmem:[#allocation18 + $0x8] sm:$0xff]
    %v1735 = vld [vmem:[#allocation18 + $0x10] sm:$0xff]
    %v1736 = vld [vmem:[#allocation18 + $0x18] sm:$0xff]
    %v1738 = vsel %vm439, %v1682, 0
    %v1741 = vsel %vm439, %v1724, 0
    %v1744 = vsel %vm439, %v1726, 0
    %1746 = vmatpush.xpose.msra.mxu0 0.0
    %1747 = vmatpush.xpose.msra.mxu0 0.0
    %1748 = vmatpush.xpose.msra.mxu0 0.0
    %1749 = vmatpush.xpose.msra.mxu0 0.0
    %1750 = vmatpush.xpose.msra.mxu0 0.0
    %1751 = vmatpush.xpose.msra.mxu0 0.0
    %1752 = vmatpush.xpose.msra.mxu0 0.0
    %1753 = vmatpush.xpose.msra.mxu0 0.0
    %1754 = vmatpush.xpose.msra.mxu0 0.0
    %1755 = vmatpush.xpose.msra.mxu0 0.0
    %1756 = vmatpush.xpose.msra.mxu0 0.0
    %1757 = vmatpush.xpose.msra.mxu0 0.0
    %1758 = vmatpush.xpose.msra.mxu0 0.0
    %1759 = vmatpush.xpose.msra.mxu0 0.0
    %1760 = vmatpush.xpose.msra.mxu0 %v1744
    %1761 = vmatpush.xpose.msra.mxu0 %v1741
    %1762 = vmatmul.f32.gmra.mxu0 %v1738
    %v1763 = vpop.f32.mrf.mxu0
    %v1764 = vadd.f32 0.0, %v1763
    %1765 = vdwg.mxu0
    %v1766 = vmul.f32 %v1764, 0.35355338
    %vm1767 = vcmask 130048
    %v1768 = vsel %vm1767, %v1766, -inf
    %1769 = vmax.xlane.f32.xlu0 %v1768
    %v1770 = vpop.xlane.xlu0 %1769
    %v1771 = vsub.f32 %v1766, %v1770
    %v1772 = vmul.f32 %v1771, 1.442695
    %v1773 = vpow.pop %v1772
    %v1774 = vsel %vm1767, %v1773, 0.0
    %1775 = vadd.xlane.f32.xlu0 %v1774
    %v1776 = vpop.xlane.xlu0 %1775
    %v1777 = vrcp.pop %v1776
    %v1778 = vmul.f32 %v1773, %v1777
    %1779 = vrot.lane.b32.xlu0 %v1724, 96
    %v1780 = vpop.permute.xlu0 %1779
    %1781 = vrot.lane.b32.xlu0 %v1726, 96
    %v1782 = vpop.permute.xlu0 %1781
    %v1786 = vsel %vm1767, %v1778, 0
    %1788 = vmatpush.msra.mxu0 0.0
    %1789 = vmatpush.msra.mxu0 0.0
    %1790 = vmatpush.msra.mxu0 0.0
    %1791 = vmatpush.msra.mxu0 0.0
    %1792 = vmatpush.msra.mxu0 0.0
    %1793 = vmatpush.msra.mxu0 0.0
    %1794 = vmatpush.msra.mxu0 0.0
    %1795 = vmatpush.msra.mxu0 0.0
    %1796 = vmatpush.msra.mxu0 0.0
    %1797 = vmatpush.msra.mxu0 0.0
    %1798 = vmatpush.msra.mxu0 0.0
    %1799 = vmatpush.msra.mxu0 0.0
    %1800 = vmatpush.msra.mxu0 0.0
    %1801 = vmatpush.msra.mxu0 0.0
    %1802 = vmatpush.msra.mxu0 %v1782
    %1803 = vmatpush.msra.mxu0 %v1780
    %1804 = vmatmul.f32.gmra.mxu0 %v1786
    %v1805 = vpop.f32.mrf.mxu0
    %v1806 = vadd.f32 0.0, %v1805
    %1807 = vdwg.mxu0
    %1808 = vrot.lane.b32.xlu0 %v1682, 120
    %v1809 = vpop.permute.xlu0 %1808
    %1810 = vrot.lane.b32.xlu0 %v1724, 120
    %v1811 = vpop.permute.xlu0 %1810
    %1812 = vrot.lane.b32.xlu0 %v1726, 120
    %v1813 = vpop.permute.xlu0 %1812
    %v1814 = vsel %vm439, %v1809, 0
    %v1816 = vsel %vm439, %v1811, 0
    %v1818 = vsel %vm439, %v1813, 0
    %1820 = vmatpush.xpose.msra.mxu0 0.0
    %1821 = vmatpush.xpose.msra.mxu0 0.0
    %1822 = vmatpush.xpose.msra.mxu0 0.0
    %1823 = vmatpush.xpose.msra.mxu0 0.0
    %1824 = vmatpush.xpose.msra.mxu0 0.0
    %1825 = vmatpush.xpose.msra.mxu0 0.0
    %1826 = vmatpush.xpose.msra.mxu0 0.0
    %1827 = vmatpush.xpose.msra.mxu0 0.0
    %1828 = vmatpush.xpose.msra.mxu0 0.0
    %1829 = vmatpush.xpose.msra.mxu0 0.0
    %1830 = vmatpush.xpose.msra.mxu0 0.0
    %1831 = vmatpush.xpose.msra.mxu0 0.0
    %1832 = vmatpush.xpose.msra.mxu0 0.0
    %1833 = vmatpush.xpose.msra.mxu0 0.0
    %1834 = vmatpush.xpose.msra.mxu0 %v1818
    %1835 = vmatpush.xpose.msra.mxu0 %v1816
    %1836 = vmatmul.f32.gmra.mxu0 %v1814
    %v1837 = vpop.f32.mrf.mxu0
    %v1838 = vadd.f32 0.0, %v1837
    %1839 = vdwg.mxu0
    %v1840 = vmul.f32 %v1838, 0.35355338
    %v1841 = vsel %vm1767, %v1840, -inf
    %1842 = vmax.xlane.f32.xlu0 %v1841
    %v1843 = vpop.xlane.xlu0 %1842
    %v1844 = vsub.f32 %v1840, %v1843
    %v1845 = vmul.f32 %v1844, 1.442695
    %v1846 = vpow.pop %v1845
    %v1847 = vsel %vm1767, %v1846, 0.0
    %1848 = vadd.xlane.f32.xlu0 %v1847
    %v1849 = vpop.xlane.xlu0 %1848
    %v1850 = vrcp.pop %v1849
    %v1851 = vmul.f32 %v1846, %v1850
    %1852 = vrot.lane.b32.xlu0 %v1724, 88
    %v1853 = vpop.permute.xlu0 %1852
    %1854 = vrot.lane.b32.xlu0 %v1726, 88
    %v1855 = vpop.permute.xlu0 %1854
    %v1859 = vsel %vm1767, %v1851, 0
    %1861 = vmatpush.msra.mxu0 0.0
    %1862 = vmatpush.msra.mxu0 0.0
    %1863 = vmatpush.msra.mxu0 0.0
    %1864 = vmatpush.msra.mxu0 0.0
    %1865 = vmatpush.msra.mxu0 0.0
    %1866 = vmatpush.msra.mxu0 0.0
    %1867 = vmatpush.msra.mxu0 0.0
    %1868 = vmatpush.msra.mxu0 0.0
    %1869 = vmatpush.msra.mxu0 0.0
    %1870 = vmatpush.msra.mxu0 0.0
    %1871 = vmatpush.msra.mxu0 0.0
    %1872 = vmatpush.msra.mxu0 0.0
    %1873 = vmatpush.msra.mxu0 0.0
    %1874 = vmatpush.msra.mxu0 0.0
    %1875 = vmatpush.msra.mxu0 %v1855
    %1876 = vmatpush.msra.mxu0 %v1853
    %1877 = vmatmul.f32.gmra.mxu0 %v1859
    %v1878 = vpop.f32.mrf.mxu0
    %v1879 = vadd.f32 0.0, %v1878
    %1880 = vdwg.mxu0
    %v1882 = vsel %vm439, %v1879, 0
    %1884 = vmatpush.msra.mxu0 0.0
    %1885 = vmatpush.msra.mxu0 0.0
    %1886 = vmatpush.msra.mxu0 0.0
    %1887 = vmatpush.msra.mxu0 0.0
    %1888 = vmatpush.msra.mxu0 0.0
    %1889 = vmatpush.msra.mxu0 0.0
    %1890 = vmatpush.msra.mxu0 0.0
    %1891 = vmatpush.msra.mxu0 0.0
    %1892 = vmatpush.msra.mxu0 0.0
    %1893 = vmatpush.msra.mxu0 0.0
    %1894 = vmatpush.msra.mxu0 0.0
    %1895 = vmatpush.msra.mxu0 0.0
    %1896 = vmatpush.msra.mxu0 0.0
    %1897 = vmatpush.msra.mxu0 0.0
    %1898 = vmatpush.msra.mxu0 0.0
    %1899 = vmatpush.msra.mxu0 %v1734
    %1900 = vmatmul.f32.gmra.mxu0 %v1882
    %v1901 = vpop.f32.mrf.mxu0
    %v1902 = vadd.f32 0.0, %v1901
    %1903 = vdwg.mxu0
    %v1905 = vsel %vm439, %v1806, 0
    %1907 = vmatpush.msra.mxu0 0.0
    %1908 = vmatpush.msra.mxu0 0.0
    %1909 = vmatpush.msra.mxu0 0.0
    %1910 = vmatpush.msra.mxu0 0.0
    %1911 = vmatpush.msra.mxu0 0.0
    %1912 = vmatpush.msra.mxu0 0.0
    %1913 = vmatpush.msra.mxu0 0.0
    %1914 = vmatpush.msra.mxu0 0.0
    %1915 = vmatpush.msra.mxu0 0.0
    %1916 = vmatpush.msra.mxu0 0.0
    %1917 = vmatpush.msra.mxu0 0.0
    %1918 = vmatpush.msra.mxu0 0.0
    %1919 = vmatpush.msra.mxu0 0.0
    %1920 = vmatpush.msra.mxu0 0.0
    %1921 = vmatpush.msra.mxu0 0.0
    %1922 = vmatpush.msra.mxu0 %v1733
    %1923 = vmatmul.f32.gmra.mxu0 %v1905
    %v1924 = vpop.f32.mrf.mxu0
    %v1925 = vadd.f32 %v1902, %v1924
    %1926 = vdwg.mxu0
    %1927 = vrot.lane.b32.xlu0 %v1682, 112
    %v1928 = vpop.permute.xlu0 %1927
    %1929 = vrot.lane.b32.xlu0 %v1724, 112
    %v1930 = vpop.permute.xlu0 %1929
    %1931 = vrot.lane.b32.xlu0 %v1726, 112
    %v1932 = vpop.permute.xlu0 %1931
    %v1933 = vsel %vm439, %v1928, 0
    %v1935 = vsel %vm439, %v1930, 0
    %v1937 = vsel %vm439, %v1932, 0
    %1939 = vmatpush.xpose.msra.mxu0 0.0
    %1940 = vmatpush.xpose.msra.mxu0 0.0
    %1941 = vmatpush.xpose.msra.mxu0 0.0
    %1942 = vmatpush.xpose.msra.mxu0 0.0
    %1943 = vmatpush.xpose.msra.mxu0 0.0
    %1944 = vmatpush.xpose.msra.mxu0 0.0
    %1945 = vmatpush.xpose.msra.mxu0 0.0
    %1946 = vmatpush.xpose.msra.mxu0 0.0
    %1947 = vmatpush.xpose.msra.mxu0 0.0
    %1948 = vmatpush.xpose.msra.mxu0 0.0
    %1949 = vmatpush.xpose.msra.mxu0 0.0
    %1950 = vmatpush.xpose.msra.mxu0 0.0
    %1951 = vmatpush.xpose.msra.mxu0 0.0
    %1952 = vmatpush.xpose.msra.mxu0 0.0
    %1953 = vmatpush.xpose.msra.mxu0 %v1937
    %1954 = vmatpush.xpose.msra.mxu0 %v1935
    %1955 = vmatmul.f32.gmra.mxu0 %v1933
    %v1956 = vpop.f32.mrf.mxu0
    %v1957 = vadd.f32 0.0, %v1956
    %1958 = vdwg.mxu0
    %v1959 = vmul.f32 %v1957, 0.35355338
    %v1960 = vsel %vm1767, %v1959, -inf
    %1961 = vmax.xlane.f32.xlu0 %v1960
    %v1962 = vpop.xlane.xlu0 %1961
    %v1963 = vsub.f32 %v1959, %v1962
    %v1964 = vmul.f32 %v1963, 1.442695
    %v1965 = vpow.pop %v1964
    %v1966 = vsel %vm1767, %v1965, 0.0
    %1967 = vadd.xlane.f32.xlu0 %v1966
    %v1968 = vpop.xlane.xlu0 %1967
    %v1969 = vrcp.pop %v1968
    %v1970 = vmul.f32 %v1965, %v1969
    %1971 = vrot.lane.b32.xlu0 %v1724, 80
    %v1972 = vpop.permute.xlu0 %1971
    %1973 = vrot.lane.b32.xlu0 %v1726, 80
    %v1974 = vpop.permute.xlu0 %1973
    %v1978 = vsel %vm1767, %v1970, 0
    %1980 = vmatpush.msra.mxu0 0.0
    %1981 = vmatpush.msra.mxu0 0.0
    %1982 = vmatpush.msra.mxu0 0.0
    %1983 = vmatpush.msra.mxu0 0.0
    %1984 = vmatpush.msra.mxu0 0.0
    %1985 = vmatpush.msra.mxu0 0.0
    %1986 = vmatpush.msra.mxu0 0.0
    %1987 = vmatpush.msra.mxu0 0.0
    %1988 = vmatpush.msra.mxu0 0.0
    %1989 = vmatpush.msra.mxu0 0.0
    %1990 = vmatpush.msra.mxu0 0.0
    %1991 = vmatpush.msra.mxu0 0.0
    %1992 = vmatpush.msra.mxu0 0.0
    %1993 = vmatpush.msra.mxu0 0.0
    %1994 = vmatpush.msra.mxu0 %v1974
    %1995 = vmatpush.msra.mxu0 %v1972
    %1996 = vmatmul.f32.gmra.mxu0 %v1978
    %v1997 = vpop.f32.mrf.mxu0
    %v1998 = vadd.f32 0.0, %v1997
    %1999 = vdwg.mxu0
    %v2001 = vsel %vm439, %v1998, 0
    %2003 = vmatpush.msra.mxu0 0.0
    %2004 = vmatpush.msra.mxu0 0.0
    %2005 = vmatpush.msra.mxu0 0.0
    %2006 = vmatpush.msra.mxu0 0.0
    %2007 = vmatpush.msra.mxu0 0.0
    %2008 = vmatpush.msra.mxu0 0.0
    %2009 = vmatpush.msra.mxu0 0.0
    %2010 = vmatpush.msra.mxu0 0.0
    %2011 = vmatpush.msra.mxu0 0.0
    %2012 = vmatpush.msra.mxu0 0.0
    %2013 = vmatpush.msra.mxu0 0.0
    %2014 = vmatpush.msra.mxu0 0.0
    %2015 = vmatpush.msra.mxu0 0.0
    %2016 = vmatpush.msra.mxu0 0.0
    %2017 = vmatpush.msra.mxu0 0.0
    %2018 = vmatpush.msra.mxu0 %v1735
    %2019 = vmatmul.f32.gmra.mxu0 %v2001
    %v2020 = vpop.f32.mrf.mxu0
    %v2021 = vadd.f32 0.0, %v2020
    %2022 = vdwg.mxu0
    %v2023 = vadd.f32 %v1925, %v2021
    %2024 = vrot.lane.b32.xlu0 %v1682, 104
    %v2025 = vpop.permute.xlu0 %2024
    %2026 = vrot.lane.b32.xlu0 %v1724, 104
    %v2027 = vpop.permute.xlu0 %2026
    %2028 = vrot.lane.b32.xlu0 %v1726, 104
    %v2029 = vpop.permute.xlu0 %2028
    %v2030 = vsel %vm439, %v2025, 0
    %v2032 = vsel %vm439, %v2027, 0
    %v2034 = vsel %vm439, %v2029, 0
    %2036 = vmatpush.xpose.msra.mxu0 0.0
    %2037 = vmatpush.xpose.msra.mxu0 0.0
    %2038 = vmatpush.xpose.msra.mxu0 0.0
    %2039 = vmatpush.xpose.msra.mxu0 0.0
    %2040 = vmatpush.xpose.msra.mxu0 0.0
    %2041 = vmatpush.xpose.msra.mxu0 0.0
    %2042 = vmatpush.xpose.msra.mxu0 0.0
    %2043 = vmatpush.xpose.msra.mxu0 0.0
    %2044 = vmatpush.xpose.msra.mxu0 0.0
    %2045 = vmatpush.xpose.msra.mxu0 0.0
    %2046 = vmatpush.xpose.msra.mxu0 0.0
    %2047 = vmatpush.xpose.msra.mxu0 0.0
    %2048 = vmatpush.xpose.msra.mxu0 0.0
    %2049 = vmatpush.xpose.msra.mxu0 0.0
    %2050 = vmatpush.xpose.msra.mxu0 %v2034
    %2051 = vmatpush.xpose.msra.mxu0 %v2032
    %2052 = vmatmul.f32.gmra.mxu0 %v2030
    %v2053 = vpop.f32.mrf.mxu0
    %v2054 = vadd.f32 0.0, %v2053
    %2055 = vdwg.mxu0
    %v2056 = vmul.f32 %v2054, 0.35355338
    %v2057 = vsel %vm1767, %v2056, -inf
    %2058 = vmax.xlane.f32.xlu0 %v2057
    %v2059 = vpop.xlane.xlu0 %2058
    %v2060 = vsub.f32 %v2056, %v2059
    %v2061 = vmul.f32 %v2060, 1.442695
    %v2062 = vpow.pop %v2061
    %v2063 = vsel %vm1767, %v2062, 0.0
    %2064 = vadd.xlane.f32.xlu0 %v2063
    %v2065 = vpop.xlane.xlu0 %2064
    %v2066 = vrcp.pop %v2065
    %v2067 = vmul.f32 %v2062, %v2066
    %2068 = vrot.lane.b32.xlu0 %v1724, 72
    %v2069 = vpop.permute.xlu0 %2068
    %2070 = vrot.lane.b32.xlu0 %v1726, 72
    %v2071 = vpop.permute.xlu0 %2070
    %v2075 = vsel %vm1767, %v2067, 0
    %2077 = vmatpush.msra.mxu0 0.0
    %2078 = vmatpush.msra.mxu0 0.0
    %2079 = vmatpush.msra.mxu0 0.0
    %2080 = vmatpush.msra.mxu0 0.0
    %2081 = vmatpush.msra.mxu0 0.0
    %2082 = vmatpush.msra.mxu0 0.0
    %2083 = vmatpush.msra.mxu0 0.0
    %2084 = vmatpush.msra.mxu0 0.0
    %2085 = vmatpush.msra.mxu0 0.0
    %2086 = vmatpush.msra.mxu0 0.0
    %2087 = vmatpush.msra.mxu0 0.0
    %2088 = vmatpush.msra.mxu0 0.0
    %2089 = vmatpush.msra.mxu0 0.0
    %2090 = vmatpush.msra.mxu0 0.0
    %2091 = vmatpush.msra.mxu0 %v2071
    %2092 = vmatpush.msra.mxu0 %v2069
    %2093 = vmatmul.f32.gmra.mxu0 %v2075
    %v2094 = vpop.f32.mrf.mxu0
    %v2095 = vadd.f32 0.0, %v2094
    %2096 = vdwg.mxu0
    %v2098 = vsel %vm439, %v2095, 0
    %2100 = vmatpush.msra.mxu0 0.0
    %2101 = vmatpush.msra.mxu0 0.0
    %2102 = vmatpush.msra.mxu0 0.0
    %2103 = vmatpush.msra.mxu0 0.0
    %2104 = vmatpush.msra.mxu0 0.0
    %2105 = vmatpush.msra.mxu0 0.0
    %2106 = vmatpush.msra.mxu0 0.0
    %2107 = vmatpush.msra.mxu0 0.0
    %2108 = vmatpush.msra.mxu0 0.0
    %2109 = vmatpush.msra.mxu0 0.0
    %2110 = vmatpush.msra.mxu0 0.0
    %2111 = vmatpush.msra.mxu0 0.0
    %2112 = vmatpush.msra.mxu0 0.0
    %2113 = vmatpush.msra.mxu0 0.0
    %2114 = vmatpush.msra.mxu0 0.0
    %2115 = vmatpush.msra.mxu0 %v1736
    %2116 = vmatmul.f32.gmra.mxu0 %v2098
    %v2117 = vpop.f32.mrf.mxu0
    %v2118 = vadd.f32 0.0, %v2117
    %2119 = vdwg.mxu0
    %v2120 = vadd.f32 %v2023, %v2118
    %v2121 = vadd.f32 %v1050, %v2120
    %v2122 = vld [vmem:[#allocation19] sm:$0x1]
    %v2124 = vperm.slane %v2122, 0
    %v2126 = vadd.f32 %v2121, %v2124
    %v2127 = vld [vmem:[#allocation21] sm:$0x1]
    %v2128 = vld [vmem:[#allocation22] sm:$0x1]
    %v2129 = vsel %vm408, %v2126, 0.0
    %2130 = vadd.xlane.f32.xlu0 %v2129
    %v2131 = vpop.xlane.xlu0 %2130
    %v2132 = vmul.f32 %v2131, %v815
    %v2133 = vsub.f32 %v2126, %v2132
    %v2134 = vmul.f32 %v2133, %v2133
    %v2135 = vsel %vm408, %v2134, 0.0
    %2136 = vadd.xlane.f32.xlu0 %v2135
    %v2137 = vpop.xlane.xlu0 %2136
    %v2138 = vmul.f32 %v2137, %v815
    %v2139 = vadd.f32 %v2138, 1e-05
    %v2140 = vrsqrt.pop %v2139
    %v2141 = vmul.f32 %v2140, %v2139
    %v2142 = vmul.f32 %v2141, %v2140
    %v2143 = vmul.f32 0.5, %v2142
    %v2144 = vsub.f32 1.5, %v2143
    %v2145 = vmul.f32 %v2140, %v2144
    %vm2146 = vweird.f32 %v2139
    %vm2147 = vweird.f32 %v2140
    %vm2148 = vmor %vm2146, %vm2147
    %v2149 = vsel %vm2148, %v2140, %v2145
    %v2150 = vmul.f32 %v2133, %v2149
    %v2152 = vperm.slane %v2127, 0
    %v2154 = vmul.f32 %v2150, %v2152
    %v2156 = vperm.slane %v2128, 0
    %v2158 = vadd.f32 %v2154, %v2156
    %v2160 = vsel %vm439, %v1684, 0
    %v2163 = vsel %vm439, %v1729, 0
    %v2166 = vsel %vm439, %v1731, 0
    %2168 = vmatpush.xpose.msra.mxu0 0.0
    %2169 = vmatpush.xpose.msra.mxu0 0.0
    %2170 = vmatpush.xpose.msra.mxu0 0.0
    %2171 = vmatpush.xpose.msra.mxu0 0.0
    %2172 = vmatpush.xpose.msra.mxu0 0.0
    %2173 = vmatpush.xpose.msra.mxu0 0.0
    %2174 = vmatpush.xpose.msra.mxu0 0.0
    %2175 = vmatpush.xpose.msra.mxu0 0.0
    %2176 = vmatpush.xpose.msra.mxu0 0.0
    %2177 = vmatpush.xpose.msra.mxu0 0.0
    %2178 = vmatpush.xpose.msra.mxu0 0.0
    %2179 = vmatpush.xpose.msra.mxu0 0.0
    %2180 = vmatpush.xpose.msra.mxu0 0.0
    %2181 = vmatpush.xpose.msra.mxu0 0.0
    %2182 = vmatpush.xpose.msra.mxu0 %v2166
    %2183 = vmatpush.xpose.msra.mxu0 %v2163
    %2184 = vmatmul.f32.gmra.mxu0 %v2160
    %v2185 = vpop.f32.mrf.mxu0
    %v2186 = vadd.f32 0.0, %v2185
    %2187 = vdwg.mxu0
    %v2188 = vmul.f32 %v2186, 0.35355338
    %v2189 = vsel %vm1767, %v2188, -inf
    %2190 = vmax.xlane.f32.xlu0 %v2189
    %v2191 = vpop.xlane.xlu0 %2190
    %v2192 = vsub.f32 %v2188, %v2191
    %v2193 = vmul.f32 %v2192, 1.442695
    %v2194 = vpow.pop %v2193
    %v2195 = vsel %vm1767, %v2194, 0.0
    %2196 = vadd.xlane.f32.xlu0 %v2195
    %v2197 = vpop.xlane.xlu0 %2196
    %v2198 = vrcp.pop %v2197
    %v2199 = vmul.f32 %v2194, %v2198
    %2200 = vrot.lane.b32.xlu0 %v1729, 96
    %v2201 = vpop.permute.xlu0 %2200
    %2202 = vrot.lane.b32.xlu0 %v1731, 96
    %v2203 = vpop.permute.xlu0 %2202
    %v2207 = vsel %vm1767, %v2199, 0
    %2209 = vmatpush.msra.mxu0 0.0
    %2210 = vmatpush.msra.mxu0 0.0
    %2211 = vmatpush.msra.mxu0 0.0
    %2212 = vmatpush.msra.mxu0 0.0
    %2213 = vmatpush.msra.mxu0 0.0
    %2214 = vmatpush.msra.mxu0 0.0
    %2215 = vmatpush.msra.mxu0 0.0
    %2216 = vmatpush.msra.mxu0 0.0
    %2217 = vmatpush.msra.mxu0 0.0
    %2218 = vmatpush.msra.mxu0 0.0
    %2219 = vmatpush.msra.mxu0 0.0
    %2220 = vmatpush.msra.mxu0 0.0
    %2221 = vmatpush.msra.mxu0 0.0
    %2222 = vmatpush.msra.mxu0 0.0
    %2223 = vmatpush.msra.mxu0 %v2203
    %2224 = vmatpush.msra.mxu0 %v2201
    %2225 = vmatmul.f32.gmra.mxu0 %v2207
    %v2226 = vpop.f32.mrf.mxu0
    %v2227 = vadd.f32 0.0, %v2226
    %2228 = vdwg.mxu0
    %2229 = vrot.lane.b32.xlu0 %v1684, 120
    %v2230 = vpop.permute.xlu0 %2229
    %2231 = vrot.lane.b32.xlu0 %v1729, 120
    %v2232 = vpop.permute.xlu0 %2231
    %2233 = vrot.lane.b32.xlu0 %v1731, 120
    %v2234 = vpop.permute.xlu0 %2233
    %v2235 = vsel %vm439, %v2230, 0
    %v2237 = vsel %vm439, %v2232, 0
    %v2239 = vsel %vm439, %v2234, 0
    %2241 = vmatpush.xpose.msra.mxu0 0.0
    %2242 = vmatpush.xpose.msra.mxu0 0.0
    %2243 = vmatpush.xpose.msra.mxu0 0.0
    %2244 = vmatpush.xpose.msra.mxu0 0.0
    %2245 = vmatpush.xpose.msra.mxu0 0.0
    %2246 = vmatpush.xpose.msra.mxu0 0.0
    %2247 = vmatpush.xpose.msra.mxu0 0.0
    %2248 = vmatpush.xpose.msra.mxu0 0.0
    %2249 = vmatpush.xpose.msra.mxu0 0.0
    %2250 = vmatpush.xpose.msra.mxu0 0.0
    %2251 = vmatpush.xpose.msra.mxu0 0.0
    %2252 = vmatpush.xpose.msra.mxu0 0.0
    %2253 = vmatpush.xpose.msra.mxu0 0.0
    %2254 = vmatpush.xpose.msra.mxu0 0.0
    %2255 = vmatpush.xpose.msra.mxu0 %v2239
    %2256 = vmatpush.xpose.msra.mxu0 %v2237
    %2257 = vmatmul.f32.gmra.mxu0 %v2235
    %v2258 = vpop.f32.mrf.mxu0
    %v2259 = vadd.f32 0.0, %v2258
    %2260 = vdwg.mxu0
    %v2261 = vmul.f32 %v2259, 0.35355338
    %v2262 = vsel %vm1767, %v2261, -inf
    %2263 = vmax.xlane.f32.xlu0 %v2262
    %v2264 = vpop.xlane.xlu0 %2263
    %v2265 = vsub.f32 %v2261, %v2264
    %v2266 = vmul.f32 %v2265, 1.442695
    %v2267 = vpow.pop %v2266
    %v2268 = vsel %vm1767, %v2267, 0.0
    %2269 = vadd.xlane.f32.xlu0 %v2268
    %v2270 = vpop.xlane.xlu0 %2269
    %v2271 = vrcp.pop %v2270
    %v2272 = vmul.f32 %v2267, %v2271
    %2273 = vrot.lane.b32.xlu0 %v1729, 88
    %v2274 = vpop.permute.xlu0 %2273
    %2275 = vrot.lane.b32.xlu0 %v1731, 88
    %v2276 = vpop.permute.xlu0 %2275
    %v2280 = vsel %vm1767, %v2272, 0
    %2282 = vmatpush.msra.mxu0 0.0
    %2283 = vmatpush.msra.mxu0 0.0
    %2284 = vmatpush.msra.mxu0 0.0
    %2285 = vmatpush.msra.mxu0 0.0
    %2286 = vmatpush.msra.mxu0 0.0
    %2287 = vmatpush.msra.mxu0 0.0
    %2288 = vmatpush.msra.mxu0 0.0
    %2289 = vmatpush.msra.mxu0 0.0
    %2290 = vmatpush.msra.mxu0 0.0
    %2291 = vmatpush.msra.mxu0 0.0
    %2292 = vmatpush.msra.mxu0 0.0
    %2293 = vmatpush.msra.mxu0 0.0
    %2294 = vmatpush.msra.mxu0 0.0
    %2295 = vmatpush.msra.mxu0 0.0
    %2296 = vmatpush.msra.mxu0 %v2276
    %2297 = vmatpush.msra.mxu0 %v2274
    %2298 = vmatmul.f32.gmra.mxu0 %v2280
    %v2299 = vpop.f32.mrf.mxu0
    %v2300 = vadd.f32 0.0, %v2299
    %2301 = vdwg.mxu0
    %v2303 = vsel %vm439, %v2300, 0
    %2305 = vmatpush.msra.mxu0 0.0
    %2306 = vmatpush.msra.mxu0 0.0
    %2307 = vmatpush.msra.mxu0 0.0
    %2308 = vmatpush.msra.mxu0 0.0
    %2309 = vmatpush.msra.mxu0 0.0
    %2310 = vmatpush.msra.mxu0 0.0
    %2311 = vmatpush.msra.mxu0 0.0
    %2312 = vmatpush.msra.mxu0 0.0
    %2313 = vmatpush.msra.mxu0 0.0
    %2314 = vmatpush.msra.mxu0 0.0
    %2315 = vmatpush.msra.mxu0 0.0
    %2316 = vmatpush.msra.mxu0 0.0
    %2317 = vmatpush.msra.mxu0 0.0
    %2318 = vmatpush.msra.mxu0 0.0
    %2319 = vmatpush.msra.mxu0 0.0
    %2320 = vmatpush.msra.mxu0 %v1734
    %2321 = vmatmul.f32.gmra.mxu0 %v2303
    %v2322 = vpop.f32.mrf.mxu0
    %v2323 = vadd.f32 0.0, %v2322
    %2324 = vdwg.mxu0
    %v2326 = vsel %vm439, %v2227, 0
    %2328 = vmatpush.msra.mxu0 0.0
    %2329 = vmatpush.msra.mxu0 0.0
    %2330 = vmatpush.msra.mxu0 0.0
    %2331 = vmatpush.msra.mxu0 0.0
    %2332 = vmatpush.msra.mxu0 0.0
    %2333 = vmatpush.msra.mxu0 0.0
    %2334 = vmatpush.msra.mxu0 0.0
    %2335 = vmatpush.msra.mxu0 0.0
    %2336 = vmatpush.msra.mxu0 0.0
    %2337 = vmatpush.msra.mxu0 0.0
    %2338 = vmatpush.msra.mxu0 0.0
    %2339 = vmatpush.msra.mxu0 0.0
    %2340 = vmatpush.msra.mxu0 0.0
    %2341 = vmatpush.msra.mxu0 0.0
    %2342 = vmatpush.msra.mxu0 0.0
    %2343 = vmatpush.msra.mxu0 %v1733
    %2344 = vmatmul.f32.gmra.mxu0 %v2326
    %v2345 = vpop.f32.mrf.mxu0
    %v2346 = vadd.f32 %v2323, %v2345
    %2347 = vdwg.mxu0
    %2348 = vrot.lane.b32.xlu0 %v1684, 112
    %v2349 = vpop.permute.xlu0 %2348
    %2350 = vrot.lane.b32.xlu0 %v1729, 112
    %v2351 = vpop.permute.xlu0 %2350
    %2352 = vrot.lane.b32.xlu0 %v1731, 112
    %v2353 = vpop.permute.xlu0 %2352
    %v2354 = vsel %vm439, %v2349, 0
    %v2356 = vsel %vm439, %v2351, 0
    %v2358 = vsel %vm439, %v2353, 0
    %2360 = vmatpush.xpose.msra.mxu0 0.0
    %2361 = vmatpush.xpose.msra.mxu0 0.0
    %2362 = vmatpush.xpose.msra.mxu0 0.0
    %2363 = vmatpush.xpose.msra.mxu0 0.0
    %2364 = vmatpush.xpose.msra.mxu0 0.0
    %2365 = vmatpush.xpose.msra.mxu0 0.0
    %2366 = vmatpush.xpose.msra.mxu0 0.0
    %2367 = vmatpush.xpose.msra.mxu0 0.0
    %2368 = vmatpush.xpose.msra.mxu0 0.0
    %2369 = vmatpush.xpose.msra.mxu0 0.0
    %2370 = vmatpush.xpose.msra.mxu0 0.0
    %2371 = vmatpush.xpose.msra.mxu0 0.0
    %2372 = vmatpush.xpose.msra.mxu0 0.0
    %2373 = vmatpush.xpose.msra.mxu0 0.0
    %2374 = vmatpush.xpose.msra.mxu0 %v2358
    %2375 = vmatpush.xpose.msra.mxu0 %v2356
    %2376 = vmatmul.f32.gmra.mxu0 %v2354
    %v2377 = vpop.f32.mrf.mxu0
    %v2378 = vadd.f32 0.0, %v2377
    %2379 = vdwg.mxu0
    %v2380 = vmul.f32 %v2378, 0.35355338
    %v2381 = vsel %vm1767, %v2380, -inf
    %2382 = vmax.xlane.f32.xlu0 %v2381
    %v2383 = vpop.xlane.xlu0 %2382
    %v2384 = vsub.f32 %v2380, %v2383
    %v2385 = vmul.f32 %v2384, 1.442695
    %v2386 = vpow.pop %v2385
    %v2387 = vsel %vm1767, %v2386, 0.0
    %2388 = vadd.xlane.f32.xlu0 %v2387
    %v2389 = vpop.xlane.xlu0 %2388
    %v2390 = vrcp.pop %v2389
    %v2391 = vmul.f32 %v2386, %v2390
    %2392 = vrot.lane.b32.xlu0 %v1729, 80
    %v2393 = vpop.permute.xlu0 %2392
    %2394 = vrot.lane.b32.xlu0 %v1731, 80
    %v2395 = vpop.permute.xlu0 %2394
    %v2399 = vsel %vm1767, %v2391, 0
    %2401 = vmatpush.msra.mxu0 0.0
    %2402 = vmatpush.msra.mxu0 0.0
    %2403 = vmatpush.msra.mxu0 0.0
    %2404 = vmatpush.msra.mxu0 0.0
    %2405 = vmatpush.msra.mxu0 0.0
    %2406 = vmatpush.msra.mxu0 0.0
    %2407 = vmatpush.msra.mxu0 0.0
    %2408 = vmatpush.msra.mxu0 0.0
    %2409 = vmatpush.msra.mxu0 0.0
    %2410 = vmatpush.msra.mxu0 0.0
    %2411 = vmatpush.msra.mxu0 0.0
    %2412 = vmatpush.msra.mxu0 0.0
    %2413 = vmatpush.msra.mxu0 0.0
    %2414 = vmatpush.msra.mxu0 0.0
    %2415 = vmatpush.msra.mxu0 %v2395
    %2416 = vmatpush.msra.mxu0 %v2393
    %2417 = vmatmul.f32.gmra.mxu0 %v2399
    %v2418 = vpop.f32.mrf.mxu0
    %v2419 = vadd.f32 0.0, %v2418
    %2420 = vdwg.mxu0
    %v2422 = vsel %vm439, %v2419, 0
    %2424 = vmatpush.msra.mxu0 0.0
    %2425 = vmatpush.msra.mxu0 0.0
    %2426 = vmatpush.msra.mxu0 0.0
    %2427 = vmatpush.msra.mxu0 0.0
    %2428 = vmatpush.msra.mxu0 0.0
    %2429 = vmatpush.msra.mxu0 0.0
    %2430 = vmatpush.msra.mxu0 0.0
    %2431 = vmatpush.msra.mxu0 0.0
    %2432 = vmatpush.msra.mxu0 0.0
    %2433 = vmatpush.msra.mxu0 0.0
    %2434 = vmatpush.msra.mxu0 0.0
    %2435 = vmatpush.msra.mxu0 0.0
    %2436 = vmatpush.msra.mxu0 0.0
    %2437 = vmatpush.msra.mxu0 0.0
    %2438 = vmatpush.msra.mxu0 0.0
    %2439 = vmatpush.msra.mxu0 %v1735
    %2440 = vmatmul.f32.gmra.mxu0 %v2422
    %v2441 = vpop.f32.mrf.mxu0
    %v2442 = vadd.f32 0.0, %v2441
    %2443 = vdwg.mxu0
    %v2444 = vadd.f32 %v2346, %v2442
    %2445 = vrot.lane.b32.xlu0 %v1684, 104
    %v2446 = vpop.permute.xlu0 %2445
    %2447 = vrot.lane.b32.xlu0 %v1729, 104
    %v2448 = vpop.permute.xlu0 %2447
    %2449 = vrot.lane.b32.xlu0 %v1731, 104
    %v2450 = vpop.permute.xlu0 %2449
    %v2451 = vsel %vm439, %v2446, 0
    %v2453 = vsel %vm439, %v2448, 0
    %v2455 = vsel %vm439, %v2450, 0
    %2457 = vmatpush.xpose.msra.mxu0 0.0
    %2458 = vmatpush.xpose.msra.mxu0 0.0
    %2459 = vmatpush.xpose.msra.mxu0 0.0
    %2460 = vmatpush.xpose.msra.mxu0 0.0
    %2461 = vmatpush.xpose.msra.mxu0 0.0
    %2462 = vmatpush.xpose.msra.mxu0 0.0
    %2463 = vmatpush.xpose.msra.mxu0 0.0
    %2464 = vmatpush.xpose.msra.mxu0 0.0
    %2465 = vmatpush.xpose.msra.mxu0 0.0
    %2466 = vmatpush.xpose.msra.mxu0 0.0
    %2467 = vmatpush.xpose.msra.mxu0 0.0
    %2468 = vmatpush.xpose.msra.mxu0 0.0
    %2469 = vmatpush.xpose.msra.mxu0 0.0
    %2470 = vmatpush.xpose.msra.mxu0 0.0
    %2471 = vmatpush.xpose.msra.mxu0 %v2455
    %2472 = vmatpush.xpose.msra.mxu0 %v2453
    %2473 = vmatmul.f32.gmra.mxu0 %v2451
    %v2474 = vpop.f32.mrf.mxu0
    %v2475 = vadd.f32 0.0, %v2474
    %2476 = vdwg.mxu0
    %v2477 = vmul.f32 %v2475, 0.35355338
    %v2478 = vsel %vm1767, %v2477, -inf
    %2479 = vmax.xlane.f32.xlu0 %v2478
    %v2480 = vpop.xlane.xlu0 %2479
    %v2481 = vsub.f32 %v2477, %v2480
    %v2482 = vmul.f32 %v2481, 1.442695
    %v2483 = vpow.pop %v2482
    %v2484 = vsel %vm1767, %v2483, 0.0
    %2485 = vadd.xlane.f32.xlu0 %v2484
    %v2486 = vpop.xlane.xlu0 %2485
    %v2487 = vrcp.pop %v2486
    %v2488 = vmul.f32 %v2483, %v2487
    %2489 = vrot.lane.b32.xlu0 %v1729, 72
    %v2490 = vpop.permute.xlu0 %2489
    %2491 = vrot.lane.b32.xlu0 %v1731, 72
    %v2492 = vpop.permute.xlu0 %2491
    %v2496 = vsel %vm1767, %v2488, 0
    %2498 = vmatpush.msra.mxu0 0.0
    %2499 = vmatpush.msra.mxu0 0.0
    %2500 = vmatpush.msra.mxu0 0.0
    %2501 = vmatpush.msra.mxu0 0.0
    %2502 = vmatpush.msra.mxu0 0.0
    %2503 = vmatpush.msra.mxu0 0.0
    %2504 = vmatpush.msra.mxu0 0.0
    %2505 = vmatpush.msra.mxu0 0.0
    %2506 = vmatpush.msra.mxu0 0.0
    %2507 = vmatpush.msra.mxu0 0.0
    %2508 = vmatpush.msra.mxu0 0.0
    %2509 = vmatpush.msra.mxu0 0.0
    %2510 = vmatpush.msra.mxu0 0.0
    %2511 = vmatpush.msra.mxu0 0.0
    %2512 = vmatpush.msra.mxu0 %v2492
    %2513 = vmatpush.msra.mxu0 %v2490
    %2514 = vmatmul.f32.gmra.mxu0 %v2496
    %v2515 = vpop.f32.mrf.mxu0
    %v2516 = vadd.f32 0.0, %v2515
    %2517 = vdwg.mxu0
    %v2519 = vsel %vm439, %v2516, 0
    %2521 = vmatpush.msra.mxu0 0.0
    %2522 = vmatpush.msra.mxu0 0.0
    %2523 = vmatpush.msra.mxu0 0.0
    %2524 = vmatpush.msra.mxu0 0.0
    %2525 = vmatpush.msra.mxu0 0.0
    %2526 = vmatpush.msra.mxu0 0.0
    %2527 = vmatpush.msra.mxu0 0.0
    %2528 = vmatpush.msra.mxu0 0.0
    %2529 = vmatpush.msra.mxu0 0.0
    %2530 = vmatpush.msra.mxu0 0.0
    %2531 = vmatpush.msra.mxu0 0.0
    %2532 = vmatpush.msra.mxu0 0.0
    %2533 = vmatpush.msra.mxu0 0.0
    %2534 = vmatpush.msra.mxu0 0.0
    %2535 = vmatpush.msra.mxu0 0.0
    %2536 = vmatpush.msra.mxu0 %v1736
    %2537 = vmatmul.f32.gmra.mxu0 %v2519
    %v2538 = vpop.f32.mrf.mxu0
    %v2539 = vadd.f32 0.0, %v2538
    %2540 = vdwg.mxu0
    %v2541 = vadd.f32 %v2444, %v2539
    %v2542 = vadd.f32 %v1646, %v2541
    %v2543 = vadd.f32 %v2542, %v2124
    %v2544 = vsel %vm408, %v2543, 0.0
    %2545 = vadd.xlane.f32.xlu0 %v2544
    %v2546 = vpop.xlane.xlu0 %2545
    %v2547 = vmul.f32 %v2546, %v815
    %v2548 = vsub.f32 %v2543, %v2547
    %v2549 = vmul.f32 %v2548, %v2548
    %v2550 = vsel %vm408, %v2549, 0.0
    %2551 = vadd.xlane.f32.xlu0 %v2550
    %v2552 = vpop.xlane.xlu0 %2551
    %v2553 = vmul.f32 %v2552, %v815
    %v2554 = vadd.f32 %v2553, 1e-05
    %v2555 = vrsqrt.pop %v2554
    %v2556 = vmul.f32 %v2555, %v2554
    %v2557 = vmul.f32 %v2556, %v2555
    %v2558 = vmul.f32 0.5, %v2557
    %v2559 = vsub.f32 1.5, %v2558
    %v2560 = vmul.f32 %v2555, %v2559
    %vm2561 = vweird.f32 %v2554
    %vm2562 = vweird.f32 %v2555
    %vm2563 = vmor %vm2561, %vm2562
    %v2564 = vsel %vm2563, %v2555, %v2560
    %v2565 = vmul.f32 %v2548, %v2564
    %v2566 = vmul.f32 %v2565, %v2152
    %v2567 = vadd.f32 %v2566, %v2156
    %v2568 = vld [vmem:[#allocation24] sm:$0xf]
    %v2569 = vld [vmem:[#allocation24 + $0x4] sm:$0xf]
    %v2570 = vld [vmem:[#allocation24 + $0x8] sm:$0xf]
    %v2571 = vld [vmem:[#allocation24 + $0xc] sm:$0xf]
    %v2572 = vld [vmem:[#allocation25] sm:$0x1]
    %v2573 = vld [vmem:[%s20] sm:$0xf]
    %v2574 = vld [vmem:[%s20 + $0x4] sm:$0xf]
    %v2575 = vld [vmem:[%s20 + $0x8] sm:$0xf]
    %v2576 = vld [vmem:[%s20 + $0xc] sm:$0xf]
    %v2577 = vld [vmem:[%s20 + $0x10] sm:$0xf]
    %v2578 = vld [vmem:[%s20 + $0x14] sm:$0xf]
    %v2579 = vld [vmem:[%s20 + $0x18] sm:$0xf]
    %v2580 = vld [vmem:[%s20 + $0x1c] sm:$0xf]
    %v2581 = vld [vmem:[#allocation27] sm:$0x1]
    %v2582 = vld [vmem:[#allocation28] sm:$0x1]
    %v2583 = vld [vmem:[#allocation30] sm:$0x1]
    %v2584 = vpack.c.bf16 %v2567, %v2158
    %v2586 = vperm.slane %v2572, 0
    %v2592 = vunpack.c.l.b16 %v2568
    %v2593 = vunpack.c.l.b16 %v2569
    %v2594 = vunpack.c.l.b16 %v2570
    %v2595 = vunpack.c.l.b16 %v2571
    %v2596 = vpack.c.b16 %v2593, %v2592
    %v2597 = vpack.c.b16 %v2595, %v2594
    %v2601 = vsel %vm408, %v2584, 0
    %2603 = vmatpush.bf16.msra.mxu0 0
    %2604 = vmatpush.bf16.msra.mxu0 0
    %2605 = vmatpush.bf16.msra.mxu0 0
    %2606 = vmatpush.bf16.msra.mxu0 0
    %2607 = vmatpush.bf16.msra.mxu0 0
    %2608 = vmatpush.bf16.msra.mxu0 0
    %2609 = vmatpush.bf16.msra.mxu0 %v2597
    %2610 = vmatpush.bf16.msra.mxu0 %v2596
    %2611 = vmatmul.bf16.gmra.mxu0 %v2601
    %v2612 = vpop.f32.mrf.mxu0
    %v2613 = vadd.f32 %v2586, %v2612
    %v2614 = vpop.f32.mrf.mxu0
    %v2615 = vadd.f32 %v2586, %v2614
    %2616 = vdwg.mxu0
    %v2617 = vmax.f32 %v2613, 0.0
    %v2618 = vmax.f32 %v2615, 0.0
    %v2619 = vpack.c.bf16 %v2618, %v2617
    %v2628 = vunpack.c.l.b16 %v2573
    %v2629 = vunpack.c.l.b16 %v2574
    %v2630 = vunpack.c.l.b16 %v2575
    %v2631 = vunpack.c.l.b16 %v2576
    %v2632 = vunpack.c.l.b16 %v2577
    %v2633 = vunpack.c.l.b16 %v2578
    %v2634 = vunpack.c.l.b16 %v2579
    %v2635 = vunpack.c.l.b16 %v2580
    %v2636 = vpack.c.b16 %v2629, %v2628
    %v2637 = vpack.c.b16 %v2631, %v2630
    %v2638 = vpack.c.b16 %v2633, %v2632
    %v2639 = vpack.c.b16 %v2635, %v2634
    %vm2644 = vcmask 523264
    %v2646 = vsel %vm2644, %v2619, 0
    %2648 = vmatpush.bf16.msra.mxu0 0
    %2649 = vmatpush.bf16.msra.mxu0 0
    %2650 = vmatpush.bf16.msra.mxu0 0
    %2651 = vmatpush.bf16.msra.mxu0 0
    %2652 = vmatpush.bf16.msra.mxu0 %v2639
    %2653 = vmatpush.bf16.msra.mxu0 %v2638
    %2654 = vmatpush.bf16.msra.mxu0 %v2637
    %2655 = vmatpush.bf16.msra.mxu0 %v2636
    %2656 = vmatmul.bf16.gmra.mxu0 %v2646
    %v2657 = vpop.f32.mrf.mxu0
    %v2658 = vadd.f32 0.0, %v2657
    %v2659 = vpop.f32.mrf.mxu0
    %v2660 = vadd.f32 0.0, %v2659
    %2661 = vdwg.mxu0
    %v2662 = vadd.f32 %v2158, %v2658
    %v2663 = vadd.f32 %v2567, %v2660
    %v2665 = vperm.slane %v2581, 0
    %v2667 = vadd.f32 %v2662, %v2665
    %v2668 = vadd.f32 %v2663, %v2665
    %v2669 = vsel %vm408, %v2667, 0.0
    %2670 = vadd.xlane.f32.xlu0 %v2669
    %v2671 = vpop.xlane.xlu0 %2670
    %v2672 = vsel %vm408, %v2668, 0.0
    %2673 = vadd.xlane.f32.xlu0 %v2672
    %v2674 = vpop.xlane.xlu0 %2673
    %v2675 = vmul.f32 %v2671, %v815
    %v2676 = vmul.f32 %v2674, %v815
    %v2677 = vsub.f32 %v2667, %v2675
    %v2678 = vsub.f32 %v2668, %v2676
    %v2679 = vmul.f32 %v2677, %v2677
    %v2680 = vmul.f32 %v2678, %v2678
    %v2681 = vsel %vm408, %v2679, 0.0
    %2682 = vadd.xlane.f32.xlu0 %v2681
    %v2683 = vpop.xlane.xlu0 %2682
    %v2684 = vsel %vm408, %v2680, 0.0
    %2685 = vadd.xlane.f32.xlu0 %v2684
    %v2686 = vpop.xlane.xlu0 %2685
    %v2687 = vmul.f32 %v2683, %v815
    %v2688 = vmul.f32 %v2686, %v815
    %v2689 = vadd.f32 %v2687, 1e-05
    %v2690 = vadd.f32 %v2688, 1e-05
    %v2691 = vrsqrt.pop %v2689
    %v2692 = vmul.f32 %v2691, %v2689
    %v2693 = vmul.f32 %v2692, %v2691
    %v2694 = vmul.f32 0.5, %v2693
    %v2695 = vsub.f32 1.5, %v2694
    %v2696 = vmul.f32 %v2691, %v2695
    %vm2697 = vweird.f32 %v2689
    %vm2698 = vweird.f32 %v2691
    %vm2699 = vmor %vm2697, %vm2698
    %v2700 = vsel %vm2699, %v2691, %v2696
    %v2701 = vrsqrt.pop %v2690
    %v2702 = vmul.f32 %v2701, %v2690
    %v2703 = vmul.f32 %v2702, %v2701
    %v2704 = vmul.f32 0.5, %v2703
    %v2705 = vsub.f32 1.5, %v2704
    %v2706 = vmul.f32 %v2701, %v2705
    %vm2707 = vweird.f32 %v2690
    %vm2708 = vweird.f32 %v2701
    %vm2709 = vmor %vm2707, %vm2708
    %v2710 = vsel %vm2709, %v2701, %v2706
    %v2711 = vmul.f32 %v2677, %v2700
    %v2712 = vmul.f32 %v2678, %v2710
    %v2714 = vperm.slane %v2582, 0
    %v2716 = vmul.f32 %v2711, %v2714
    %v2717 = vmul.f32 %v2712, %v2714
    %v2719 = vperm.slane %v2583, 0
    %v2721 = vadd.f32 %v2716, %v2719
    %v2722 = vadd.f32 %v2717, %v2719
    %s2723 = scalar_lea.vmem [#allocation7], 16
    %v2724 = vld [vmem:[%s2723] sm:$0xf]
    %v2725 = vld [vmem:[%s2723 + $0x4] sm:$0xf]
    %v2726 = vld [vmem:[%s2723 + $0x8] sm:$0xf]
    %v2727 = vld [vmem:[%s2723 + $0xc] sm:$0xf]
    %v2728 = vpack.c.bf16 %v2722, %v2721
    %s2729 = scalar_lea.vmem %s5, 1
    %v2730 = vld [vmem:[%s2729] sm:$0x1]
    %v2732 = vperm.slane %v2730, 0
    %v2738 = vunpack.c.l.b16 %v2724
    %v2739 = vunpack.c.l.b16 %v2725
    %v2740 = vunpack.c.l.b16 %v2726
    %v2741 = vunpack.c.l.b16 %v2727
    %v2742 = vpack.c.b16 %v2739, %v2738
    %v2743 = vpack.c.b16 %v2741, %v2740
    %v2747 = vsel %vm408, %v2728, 0
    %2749 = vmatpush.bf16.msra.mxu0 0
    %2750 = vmatpush.bf16.msra.mxu0 0
    %2751 = vmatpush.bf16.msra.mxu0 0
    %2752 = vmatpush.bf16.msra.mxu0 0
    %2753 = vmatpush.bf16.msra.mxu0 0
    %2754 = vmatpush.bf16.msra.mxu0 0
    %2755 = vmatpush.bf16.msra.mxu0 %v2743
    %2756 = vmatpush.bf16.msra.mxu0 %v2742
    %2757 = vmatmul.bf16.gmra.mxu0 %v2747
    %v2758 = vpop.f32.mrf.mxu0
    %v2759 = vadd.f32 %v2732, %v2758
    %v2760 = vpop.f32.mrf.mxu0
    %v2761 = vadd.f32 %v2732, %v2760
    %2762 = vdwg.mxu0
    %s2763 = scalar_lea.vmem [#allocation6], 16
    %v2764 = vld [vmem:[%s2763] sm:$0xff]
    %v2765 = vld [vmem:[%s2763 + $0x8] sm:$0xff]
    %v2766 = vadd.f32 %v2759, %v2764
    %v2767 = vadd.f32 %v2761, %v2765
    %v2768 = vadd.f32 %v2721, %v385
    %v2769 = vadd.f32 %v2722, %v386
    %s2770 = scalar_lea.vmem %s6, 32
    %v2771 = vld [vmem:[%s2770] sm:$0xff]
    %v2772 = vld [vmem:[%s2770 + $0x8] sm:$0xff]
    %v2773 = vld [vmem:[%s2770 + $0x10] sm:$0xff]
    %v2774 = vld [vmem:[%s2770 + $0x18] sm:$0xff]
    %2776 = vrot.lane.b32.xlu0 %v2766, 96
    %v2777 = vpop.permute.xlu0 %2776
    %v2778 = vsel %vm439, %v2766, 0
    %v2780 = vsel %vm439, %v2777, 0
    %2782 = vmatpush.xpose.msra.mxu0 0.0
    %2783 = vmatpush.xpose.msra.mxu0 0.0
    %2784 = vmatpush.xpose.msra.mxu0 0.0
    %2785 = vmatpush.xpose.msra.mxu0 0.0
    %2786 = vmatpush.xpose.msra.mxu0 0.0
    %2787 = vmatpush.xpose.msra.mxu0 0.0
    %2788 = vmatpush.xpose.msra.mxu0 0.0
    %2789 = vmatpush.xpose.msra.mxu0 0.0
    %2790 = vmatpush.xpose.msra.mxu0 0.0
    %2791 = vmatpush.xpose.msra.mxu0 0.0
    %2792 = vmatpush.xpose.msra.mxu0 0.0
    %2793 = vmatpush.xpose.msra.mxu0 0.0
    %2794 = vmatpush.xpose.msra.mxu0 0.0
    %2795 = vmatpush.xpose.msra.mxu0 0.0
    %2796 = vmatpush.xpose.msra.mxu0 0.0
    %2797 = vmatpush.xpose.msra.mxu0 %v2780
    %2798 = vmatmul.f32.gmra.mxu0 %v2778
    %v2799 = vpop.f32.mrf.mxu0
    %v2800 = vadd.f32 0.0, %v2799
    %2801 = vdwg.mxu0
    %v2802 = vmul.f32 %v2800, 0.35355338
    %v2803 = vsel %vm439, %v2802, -inf
    %2804 = vmax.xlane.f32.xlu0 %v2803
    %v2805 = vpop.xlane.xlu0 %2804
    %v2806 = vsub.f32 %v2802, %v2805
    %v2807 = vmul.f32 %v2806, 1.442695
    %v2808 = vpow.pop %v2807
    %v2809 = vsel %vm439, %v2808, 0.0
    %2810 = vadd.xlane.f32.xlu0 %v2809
    %v2811 = vpop.xlane.xlu0 %2810
    %v2812 = vrcp.pop %v2811
    %v2813 = vmul.f32 %v2808, %v2812
    %2814 = vrot.lane.b32.xlu0 %v2766, 64
    %v2815 = vpop.permute.xlu0 %2814
    %v2818 = vsel %vm439, %v2813, 0
    %2820 = vmatpush.msra.mxu0 0.0
    %2821 = vmatpush.msra.mxu0 0.0
    %2822 = vmatpush.msra.mxu0 0.0
    %2823 = vmatpush.msra.mxu0 0.0
    %2824 = vmatpush.msra.mxu0 0.0
    %2825 = vmatpush.msra.mxu0 0.0
    %2826 = vmatpush.msra.mxu0 0.0
    %2827 = vmatpush.msra.mxu0 0.0
    %2828 = vmatpush.msra.mxu0 0.0
    %2829 = vmatpush.msra.mxu0 0.0
    %2830 = vmatpush.msra.mxu0 0.0
    %2831 = vmatpush.msra.mxu0 0.0
    %2832 = vmatpush.msra.mxu0 0.0
    %2833 = vmatpush.msra.mxu0 0.0
    %2834 = vmatpush.msra.mxu0 0.0
    %2835 = vmatpush.msra.mxu0 %v2815
    %2836 = vmatmul.f32.gmra.mxu0 %v2818
    %v2837 = vpop.f32.mrf.mxu0
    %v2838 = vadd.f32 0.0, %v2837
    %2839 = vdwg.mxu0
    %2840 = vrot.lane.b32.xlu0 %v2766, 120
    %v2841 = vpop.permute.xlu0 %2840
    %2842 = vrot.lane.b32.xlu0 %v2766, 88
    %v2843 = vpop.permute.xlu0 %2842
    %v2844 = vsel %vm439, %v2841, 0
    %v2846 = vsel %vm439, %v2843, 0
    %2848 = vmatpush.xpose.msra.mxu0 0.0
    %2849 = vmatpush.xpose.msra.mxu0 0.0
    %2850 = vmatpush.xpose.msra.mxu0 0.0
    %2851 = vmatpush.xpose.msra.mxu0 0.0
    %2852 = vmatpush.xpose.msra.mxu0 0.0
    %2853 = vmatpush.xpose.msra.mxu0 0.0
    %2854 = vmatpush.xpose.msra.mxu0 0.0
    %2855 = vmatpush.xpose.msra.mxu0 0.0
    %2856 = vmatpush.xpose.msra.mxu0 0.0
    %2857 = vmatpush.xpose.msra.mxu0 0.0
    %2858 = vmatpush.xpose.msra.mxu0 0.0
    %2859 = vmatpush.xpose.msra.mxu0 0.0
    %2860 = vmatpush.xpose.msra.mxu0 0.0
    %2861 = vmatpush.xpose.msra.mxu0 0.0
    %2862 = vmatpush.xpose.msra.mxu0 0.0
    %2863 = vmatpush.xpose.msra.mxu0 %v2846
    %2864 = vmatmul.f32.gmra.mxu0 %v2844
    %v2865 = vpop.f32.mrf.mxu0
    %v2866 = vadd.f32 0.0, %v2865
    %2867 = vdwg.mxu0
    %v2868 = vmul.f32 %v2866, 0.35355338
    %v2869 = vsel %vm439, %v2868, -inf
    %2870 = vmax.xlane.f32.xlu0 %v2869
    %v2871 = vpop.xlane.xlu0 %2870
    %v2872 = vsub.f32 %v2868, %v2871
    %v2873 = vmul.f32 %v2872, 1.442695
    %v2874 = vpow.pop %v2873
    %v2875 = vsel %vm439, %v2874, 0.0
    %2876 = vadd.xlane.f32.xlu0 %v2875
    %v2877 = vpop.xlane.xlu0 %2876
    %v2878 = vrcp.pop %v2877
    %v2879 = vmul.f32 %v2874, %v2878
    %v2880 = vadd.f32 %v2813, %v2879
    %2881 = vrot.lane.b32.xlu0 %v2766, 56
    %v2882 = vpop.permute.xlu0 %2881
    %v2885 = vsel %vm439, %v2879, 0
    %2887 = vmatpush.msra.mxu0 0.0
    %2888 = vmatpush.msra.mxu0 0.0
    %2889 = vmatpush.msra.mxu0 0.0
    %2890 = vmatpush.msra.mxu0 0.0
    %2891 = vmatpush.msra.mxu0 0.0
    %2892 = vmatpush.msra.mxu0 0.0
    %2893 = vmatpush.msra.mxu0 0.0
    %2894 = vmatpush.msra.mxu0 0.0
    %2895 = vmatpush.msra.mxu0 0.0
    %2896 = vmatpush.msra.mxu0 0.0
    %2897 = vmatpush.msra.mxu0 0.0
    %2898 = vmatpush.msra.mxu0 0.0
    %2899 = vmatpush.msra.mxu0 0.0
    %2900 = vmatpush.msra.mxu0 0.0
    %2901 = vmatpush.msra.mxu0 0.0
    %2902 = vmatpush.msra.mxu0 %v2882
    %2903 = vmatmul.f32.gmra.mxu0 %v2885
    %v2904 = vpop.f32.mrf.mxu0
    %v2905 = vadd.f32 0.0, %v2904
    %2906 = vdwg.mxu0
    %v2908 = vsel %vm439, %v2905, 0
    %2910 = vmatpush.msra.mxu0 0.0
    %2911 = vmatpush.msra.mxu0 0.0
    %2912 = vmatpush.msra.mxu0 0.0
    %2913 = vmatpush.msra.mxu0 0.0
    %2914 = vmatpush.msra.mxu0 0.0
    %2915 = vmatpush.msra.mxu0 0.0
    %2916 = vmatpush.msra.mxu0 0.0
    %2917 = vmatpush.msra.mxu0 0.0
    %2918 = vmatpush.msra.mxu0 0.0
    %2919 = vmatpush.msra.mxu0 0.0
    %2920 = vmatpush.msra.mxu0 0.0
    %2921 = vmatpush.msra.mxu0 0.0
    %2922 = vmatpush.msra.mxu0 0.0
    %2923 = vmatpush.msra.mxu0 0.0
    %2924 = vmatpush.msra.mxu0 0.0
    %2925 = vmatpush.msra.mxu0 %v2772
    %2926 = vmatmul.f32.gmra.mxu0 %v2908
    %v2927 = vpop.f32.mrf.mxu0
    %v2928 = vadd.f32 0.0, %v2927
    %2929 = vdwg.mxu0
    %v2931 = vsel %vm439, %v2838, 0
    %2933 = vmatpush.msra.mxu0 0.0
    %2934 = vmatpush.msra.mxu0 0.0
    %2935 = vmatpush.msra.mxu0 0.0
    %2936 = vmatpush.msra.mxu0 0.0
    %2937 = vmatpush.msra.mxu0 0.0
    %2938 = vmatpush.msra.mxu0 0.0
    %2939 = vmatpush.msra.mxu0 0.0
    %2940 = vmatpush.msra.mxu0 0.0
    %2941 = vmatpush.msra.mxu0 0.0
    %2942 = vmatpush.msra.mxu0 0.0
    %2943 = vmatpush.msra.mxu0 0.0
    %2944 = vmatpush.msra.mxu0 0.0
    %2945 = vmatpush.msra.mxu0 0.0
    %2946 = vmatpush.msra.mxu0 0.0
    %2947 = vmatpush.msra.mxu0 0.0
    %2948 = vmatpush.msra.mxu0 %v2771
    %2949 = vmatmul.f32.gmra.mxu0 %v2931
    %v2950 = vpop.f32.mrf.mxu0
    %v2951 = vadd.f32 %v2928, %v2950
    %2952 = vdwg.mxu0
    %2953 = vrot.lane.b32.xlu0 %v2766, 112
    %v2954 = vpop.permute.xlu0 %2953
    %2955 = vrot.lane.b32.xlu0 %v2766, 80
    %v2956 = vpop.permute.xlu0 %2955
    %v2957 = vsel %vm439, %v2954, 0
    %v2959 = vsel %vm439, %v2956, 0
    %2961 = vmatpush.xpose.msra.mxu0 0.0
    %2962 = vmatpush.xpose.msra.mxu0 0.0
    %2963 = vmatpush.xpose.msra.mxu0 0.0
    %2964 = vmatpush.xpose.msra.mxu0 0.0
    %2965 = vmatpush.xpose.msra.mxu0 0.0
    %2966 = vmatpush.xpose.msra.mxu0 0.0
    %2967 = vmatpush.xpose.msra.mxu0 0.0
    %2968 = vmatpush.xpose.msra.mxu0 0.0
    %2969 = vmatpush.xpose.msra.mxu0 0.0
    %2970 = vmatpush.xpose.msra.mxu0 0.0
    %2971 = vmatpush.xpose.msra.mxu0 0.0
    %2972 = vmatpush.xpose.msra.mxu0 0.0
    %2973 = vmatpush.xpose.msra.mxu0 0.0
    %2974 = vmatpush.xpose.msra.mxu0 0.0
    %2975 = vmatpush.xpose.msra.mxu0 0.0
    %2976 = vmatpush.xpose.msra.mxu0 %v2959
    %2977 = vmatmul.f32.gmra.mxu0 %v2957
    %v2978 = vpop.f32.mrf.mxu0
    %v2979 = vadd.f32 0.0, %v2978
    %2980 = vdwg.mxu0
    %v2981 = vmul.f32 %v2979, 0.35355338
    %v2982 = vsel %vm439, %v2981, -inf
    %2983 = vmax.xlane.f32.xlu0 %v2982
    %v2984 = vpop.xlane.xlu0 %2983
    %v2985 = vsub.f32 %v2981, %v2984
    %v2986 = vmul.f32 %v2985, 1.442695
    %v2987 = vpow.pop %v2986
    %v2988 = vsel %vm439, %v2987, 0.0
    %2989 = vadd.xlane.f32.xlu0 %v2988
    %v2990 = vpop.xlane.xlu0 %2989
    %v2991 = vrcp.pop %v2990
    %v2992 = vmul.f32 %v2987, %v2991
    %v2993 = vadd.f32 %v2880, %v2992
    %2994 = vrot.lane.b32.xlu0 %v2766, 48
    %v2995 = vpop.permute.xlu0 %2994
    %v2998 = vsel %vm439, %v2992, 0
    %3000 = vmatpush.msra.mxu0 0.0
    %3001 = vmatpush.msra.mxu0 0.0
    %3002 = vmatpush.msra.mxu0 0.0
    %3003 = vmatpush.msra.mxu0 0.0
    %3004 = vmatpush.msra.mxu0 0.0
    %3005 = vmatpush.msra.mxu0 0.0
    %3006 = vmatpush.msra.mxu0 0.0
    %3007 = vmatpush.msra.mxu0 0.0
    %3008 = vmatpush.msra.mxu0 0.0
    %3009 = vmatpush.msra.mxu0 0.0
    %3010 = vmatpush.msra.mxu0 0.0
    %3011 = vmatpush.msra.mxu0 0.0
    %3012 = vmatpush.msra.mxu0 0.0
    %3013 = vmatpush.msra.mxu0 0.0
    %3014 = vmatpush.msra.mxu0 0.0
    %3015 = vmatpush.msra.mxu0 %v2995
    %3016 = vmatmul.f32.gmra.mxu0 %v2998
    %v3017 = vpop.f32.mrf.mxu0
    %v3018 = vadd.f32 0.0, %v3017
    %3019 = vdwg.mxu0
    %v3021 = vsel %vm439, %v3018, 0
    %3023 = vmatpush.msra.mxu0 0.0
    %3024 = vmatpush.msra.mxu0 0.0
    %3025 = vmatpush.msra.mxu0 0.0
    %3026 = vmatpush.msra.mxu0 0.0
    %3027 = vmatpush.msra.mxu0 0.0
    %3028 = vmatpush.msra.mxu0 0.0
    %3029 = vmatpush.msra.mxu0 0.0
    %3030 = vmatpush.msra.mxu0 0.0
    %3031 = vmatpush.msra.mxu0 0.0
    %3032 = vmatpush.msra.mxu0 0.0
    %3033 = vmatpush.msra.mxu0 0.0
    %3034 = vmatpush.msra.mxu0 0.0
    %3035 = vmatpush.msra.mxu0 0.0
    %3036 = vmatpush.msra.mxu0 0.0
    %3037 = vmatpush.msra.mxu0 0.0
    %3038 = vmatpush.msra.mxu0 %v2773
    %3039 = vmatmul.f32.gmra.mxu0 %v3021
    %v3040 = vpop.f32.mrf.mxu0
    %v3041 = vadd.f32 0.0, %v3040
    %3042 = vdwg.mxu0
    %v3043 = vadd.f32 %v2951, %v3041
    %3044 = vrot.lane.b32.xlu0 %v2766, 104
    %v3045 = vpop.permute.xlu0 %3044
    %3046 = vrot.lane.b32.xlu0 %v2766, 72
    %v3047 = vpop.permute.xlu0 %3046
    %v3048 = vsel %vm439, %v3045, 0
    %v3050 = vsel %vm439, %v3047, 0
    %3052 = vmatpush.xpose.msra.mxu0 0.0
    %3053 = vmatpush.xpose.msra.mxu0 0.0
    %3054 = vmatpush.xpose.msra.mxu0 0.0
    %3055 = vmatpush.xpose.msra.mxu0 0.0
    %3056 = vmatpush.xpose.msra.mxu0 0.0
    %3057 = vmatpush.xpose.msra.mxu0 0.0
    %3058 = vmatpush.xpose.msra.mxu0 0.0
    %3059 = vmatpush.xpose.msra.mxu0 0.0
    %3060 = vmatpush.xpose.msra.mxu0 0.0
    %3061 = vmatpush.xpose.msra.mxu0 0.0
    %3062 = vmatpush.xpose.msra.mxu0 0.0
    %3063 = vmatpush.xpose.msra.mxu0 0.0
    %3064 = vmatpush.xpose.msra.mxu0 0.0
    %3065 = vmatpush.xpose.msra.mxu0 0.0
    %3066 = vmatpush.xpose.msra.mxu0 0.0
    %3067 = vmatpush.xpose.msra.mxu0 %v3050
    %3068 = vmatmul.f32.gmra.mxu0 %v3048
    %v3069 = vpop.f32.mrf.mxu0
    %v3070 = vadd.f32 0.0, %v3069
    %3071 = vdwg.mxu0
    %v3072 = vmul.f32 %v3070, 0.35355338
    %v3073 = vsel %vm439, %v3072, -inf
    %3074 = vmax.xlane.f32.xlu0 %v3073
    %v3075 = vpop.xlane.xlu0 %3074
    %v3076 = vsub.f32 %v3072, %v3075
    %v3077 = vmul.f32 %v3076, 1.442695
    %v3078 = vpow.pop %v3077
    %v3079 = vsel %vm439, %v3078, 0.0
    %3080 = vadd.xlane.f32.xlu0 %v3079
    %v3081 = vpop.xlane.xlu0 %3080
    %v3082 = vrcp.pop %v3081
    %v3083 = vmul.f32 %v3078, %v3082
    %v3084 = vadd.f32 %v2993, %v3083
    %3085 = vrot.lane.b32.xlu0 %v2766, 40
    %v3086 = vpop.permute.xlu0 %3085
    %v3089 = vsel %vm439, %v3083, 0
    %3091 = vmatpush.msra.mxu0 0.0
    %3092 = vmatpush.msra.mxu0 0.0
    %3093 = vmatpush.msra.mxu0 0.0
    %3094 = vmatpush.msra.mxu0 0.0
    %3095 = vmatpush.msra.mxu0 0.0
    %3096 = vmatpush.msra.mxu0 0.0
    %3097 = vmatpush.msra.mxu0 0.0
    %3098 = vmatpush.msra.mxu0 0.0
    %3099 = vmatpush.msra.mxu0 0.0
    %3100 = vmatpush.msra.mxu0 0.0
    %3101 = vmatpush.msra.mxu0 0.0
    %3102 = vmatpush.msra.mxu0 0.0
    %3103 = vmatpush.msra.mxu0 0.0
    %3104 = vmatpush.msra.mxu0 0.0
    %3105 = vmatpush.msra.mxu0 0.0
    %3106 = vmatpush.msra.mxu0 %v3086
    %3107 = vmatmul.f32.gmra.mxu0 %v3089
    %v3108 = vpop.f32.mrf.mxu0
    %v3109 = vadd.f32 0.0, %v3108
    %3110 = vdwg.mxu0
    %v3112 = vsel %vm439, %v3109, 0
    %3114 = vmatpush.msra.mxu0 0.0
    %3115 = vmatpush.msra.mxu0 0.0
    %3116 = vmatpush.msra.mxu0 0.0
    %3117 = vmatpush.msra.mxu0 0.0
    %3118 = vmatpush.msra.mxu0 0.0
    %3119 = vmatpush.msra.mxu0 0.0
    %3120 = vmatpush.msra.mxu0 0.0
    %3121 = vmatpush.msra.mxu0 0.0
    %3122 = vmatpush.msra.mxu0 0.0
    %3123 = vmatpush.msra.mxu0 0.0
    %3124 = vmatpush.msra.mxu0 0.0
    %3125 = vmatpush.msra.mxu0 0.0
    %3126 = vmatpush.msra.mxu0 0.0
    %3127 = vmatpush.msra.mxu0 0.0
    %3128 = vmatpush.msra.mxu0 0.0
    %3129 = vmatpush.msra.mxu0 %v2774
    %3130 = vmatmul.f32.gmra.mxu0 %v3112
    %v3131 = vpop.f32.mrf.mxu0
    %v3132 = vadd.f32 0.0, %v3131
    %3133 = vdwg.mxu0
    %v3134 = vadd.f32 %v3043, %v3132
    %v3135 = vmul.f32 %v3084, 0.25
    %v3136 = vadd.f32 %v2768, %v3134
    %s3137 = scalar_lea.vmem %s7, 1
    %v3138 = vld [vmem:[%s3137] sm:$0x1]
    %v3140 = vperm.slane %v3138, 0
    %v3142 = vadd.f32 %v3136, %v3140
    %s3143 = scalar_lea.vmem [#allocation9], 1
    %v3144 = vld [vmem:[%s3143] sm:$0x1]
    %s3145 = scalar_lea.vmem [#allocation10], 1
    %v3146 = vld [vmem:[%s3145] sm:$0x1]
    %v3147 = vsel %vm408, %v3142, 0.0
    %3148 = vadd.xlane.f32.xlu0 %v3147
    %v3149 = vpop.xlane.xlu0 %3148
    %v3150 = vmul.f32 %v3149, %v815
    %v3151 = vsub.f32 %v3142, %v3150
    %v3152 = vmul.f32 %v3151, %v3151
    %v3153 = vsel %vm408, %v3152, 0.0
    %3154 = vadd.xlane.f32.xlu0 %v3153
    %v3155 = vpop.xlane.xlu0 %3154
    %v3156 = vmul.f32 %v3155, %v815
    %v3157 = vadd.f32 %v3156, 1e-05
    %v3158 = vrsqrt.pop %v3157
    %v3159 = vmul.f32 %v3158, %v3157
    %v3160 = vmul.f32 %v3159, %v3158
    %v3161 = vmul.f32 0.5, %v3160
    %v3162 = vsub.f32 1.5, %v3161
    %v3163 = vmul.f32 %v3158, %v3162
    %vm3164 = vweird.f32 %v3157
    %vm3165 = vweird.f32 %v3158
    %vm3166 = vmor %vm3164, %vm3165
    %v3167 = vsel %vm3166, %v3158, %v3163
    %v3168 = vmul.f32 %v3151, %v3167
    %v3170 = vperm.slane %v3144, 0
    %v3172 = vmul.f32 %v3168, %v3170
    %v3174 = vperm.slane %v3146, 0
    %v3176 = vadd.f32 %v3172, %v3174
    %3178 = vrot.lane.b32.xlu0 %v2759, 96
    %v3179 = vpop.permute.xlu0 %3178
    %v3180 = vsel %vm439, %v2759, 0
    %v3182 = vsel %vm439, %v3179, 0
    %3184 = vmatpush.xpose.msra.mxu0 0.0
    %3185 = vmatpush.xpose.msra.mxu0 0.0
    %3186 = vmatpush.xpose.msra.mxu0 0.0
    %3187 = vmatpush.xpose.msra.mxu0 0.0
    %3188 = vmatpush.xpose.msra.mxu0 0.0
    %3189 = vmatpush.xpose.msra.mxu0 0.0
    %3190 = vmatpush.xpose.msra.mxu0 0.0
    %3191 = vmatpush.xpose.msra.mxu0 0.0
    %3192 = vmatpush.xpose.msra.mxu0 0.0
    %3193 = vmatpush.xpose.msra.mxu0 0.0
    %3194 = vmatpush.xpose.msra.mxu0 0.0
    %3195 = vmatpush.xpose.msra.mxu0 0.0
    %3196 = vmatpush.xpose.msra.mxu0 0.0
    %3197 = vmatpush.xpose.msra.mxu0 0.0
    %3198 = vmatpush.xpose.msra.mxu0 0.0
    %3199 = vmatpush.xpose.msra.mxu0 %v3182
    %3200 = vmatmul.f32.gmra.mxu0 %v3180
    %v3201 = vpop.f32.mrf.mxu0
    %v3202 = vadd.f32 0.0, %v3201
    %3203 = vdwg.mxu0
    %v3204 = vmul.f32 %v3202, 0.35355338
    %v3205 = vsel %vm439, %v3204, -inf
    %3206 = vmax.xlane.f32.xlu0 %v3205
    %v3207 = vpop.xlane.xlu0 %3206
    %v3208 = vsub.f32 %v3204, %v3207
    %v3209 = vmul.f32 %v3208, 1.442695
    %v3210 = vpow.pop %v3209
    %v3211 = vsel %vm439, %v3210, 0.0
    %3212 = vadd.xlane.f32.xlu0 %v3211
    %v3213 = vpop.xlane.xlu0 %3212
    %v3214 = vrcp.pop %v3213
    %v3215 = vmul.f32 %v3210, %v3214
    %3216 = vrot.lane.b32.xlu0 %v2759, 120
    %v3217 = vpop.permute.xlu0 %3216
    %3218 = vrot.lane.b32.xlu0 %v2759, 88
    %v3219 = vpop.permute.xlu0 %3218
    %v3220 = vsel %vm439, %v3217, 0
    %v3222 = vsel %vm439, %v3219, 0
    %3224 = vmatpush.xpose.msra.mxu0 0.0
    %3225 = vmatpush.xpose.msra.mxu0 0.0
    %3226 = vmatpush.xpose.msra.mxu0 0.0
    %3227 = vmatpush.xpose.msra.mxu0 0.0
    %3228 = vmatpush.xpose.msra.mxu0 0.0
    %3229 = vmatpush.xpose.msra.mxu0 0.0
    %3230 = vmatpush.xpose.msra.mxu0 0.0
    %3231 = vmatpush.xpose.msra.mxu0 0.0
    %3232 = vmatpush.xpose.msra.mxu0 0.0
    %3233 = vmatpush.xpose.msra.mxu0 0.0
    %3234 = vmatpush.xpose.msra.mxu0 0.0
    %3235 = vmatpush.xpose.msra.mxu0 0.0
    %3236 = vmatpush.xpose.msra.mxu0 0.0
    %3237 = vmatpush.xpose.msra.mxu0 0.0
    %3238 = vmatpush.xpose.msra.mxu0 0.0
    %3239 = vmatpush.xpose.msra.mxu0 %v3222
    %3240 = vmatmul.f32.gmra.mxu0 %v3220
    %v3241 = vpop.f32.mrf.mxu0
    %v3242 = vadd.f32 0.0, %v3241
    %3243 = vdwg.mxu0
    %v3244 = vmul.f32 %v3242, 0.35355338
    %v3245 = vsel %vm439, %v3244, -inf
    %3246 = vmax.xlane.f32.xlu0 %v3245
    %v3247 = vpop.xlane.xlu0 %3246
    %v3248 = vsub.f32 %v3244, %v3247
    %v3249 = vmul.f32 %v3248, 1.442695
    %v3250 = vpow.pop %v3249
    %v3251 = vsel %vm439, %v3250, 0.0
    %3252 = vadd.xlane.f32.xlu0 %v3251
    %v3253 = vpop.xlane.xlu0 %3252
    %v3254 = vrcp.pop %v3253
    %v3255 = vmul.f32 %v3250, %v3254
    %v3256 = vadd.f32 %v3215, %v3255
    %3257 = vrot.lane.b32.xlu0 %v2759, 112
    %v3258 = vpop.permute.xlu0 %3257
    %3259 = vrot.lane.b32.xlu0 %v2759, 80
    %v3260 = vpop.permute.xlu0 %3259
    %v3261 = vsel %vm439, %v3258, 0
    %v3263 = vsel %vm439, %v3260, 0
    %3265 = vmatpush.xpose.msra.mxu0 0.0
    %3266 = vmatpush.xpose.msra.mxu0 0.0
    %3267 = vmatpush.xpose.msra.mxu0 0.0
    %3268 = vmatpush.xpose.msra.mxu0 0.0
    %3269 = vmatpush.xpose.msra.mxu0 0.0
    %3270 = vmatpush.xpose.msra.mxu0 0.0
    %3271 = vmatpush.xpose.msra.mxu0 0.0
    %3272 = vmatpush.xpose.msra.mxu0 0.0
    %3273 = vmatpush.xpose.msra.mxu0 0.0
    %3274 = vmatpush.xpose.msra.mxu0 0.0
    %3275 = vmatpush.xpose.msra.mxu0 0.0
    %3276 = vmatpush.xpose.msra.mxu0 0.0
    %3277 = vmatpush.xpose.msra.mxu0 0.0
    %3278 = vmatpush.xpose.msra.mxu0 0.0
    %3279 = vmatpush.xpose.msra.mxu0 0.0
    %3280 = vmatpush.xpose.msra.mxu0 %v3263
    %3281 = vmatmul.f32.gmra.mxu0 %v3261
    %v3282 = vpop.f32.mrf.mxu0
    %v3283 = vadd.f32 0.0, %v3282
    %3284 = vdwg.mxu0
    %v3285 = vmul.f32 %v3283, 0.35355338
    %v3286 = vsel %vm439, %v3285, -inf
    %3287 = vmax.xlane.f32.xlu0 %v3286
    %v3288 = vpop.xlane.xlu0 %3287
    %v3289 = vsub.f32 %v3285, %v3288
    %v3290 = vmul.f32 %v3289, 1.442695
    %v3291 = vpow.pop %v3290
    %v3292 = vsel %vm439, %v3291, 0.0
    %3293 = vadd.xlane.f32.xlu0 %v3292
    %v3294 = vpop.xlane.xlu0 %3293
    %v3295 = vrcp.pop %v3294
    %v3296 = vmul.f32 %v3291, %v3295
    %v3297 = vadd.f32 %v3256, %v3296
    %3298 = vrot.lane.b32.xlu0 %v2759, 104
    %v3299 = vpop.permute.xlu0 %3298
    %3300 = vrot.lane.b32.xlu0 %v2759, 72
    %v3301 = vpop.permute.xlu0 %3300
    %v3302 = vsel %vm439, %v3299, 0
    %v3304 = vsel %vm439, %v3301, 0
    %3306 = vmatpush.xpose.msra.mxu0 0.0
    %3307 = vmatpush.xpose.msra.mxu0 0.0
    %3308 = vmatpush.xpose.msra.mxu0 0.0
    %3309 = vmatpush.xpose.msra.mxu0 0.0
    %3310 = vmatpush.xpose.msra.mxu0 0.0
    %3311 = vmatpush.xpose.msra.mxu0 0.0
    %3312 = vmatpush.xpose.msra.mxu0 0.0
    %3313 = vmatpush.xpose.msra.mxu0 0.0
    %3314 = vmatpush.xpose.msra.mxu0 0.0
    %3315 = vmatpush.xpose.msra.mxu0 0.0
    %3316 = vmatpush.xpose.msra.mxu0 0.0
    %3317 = vmatpush.xpose.msra.mxu0 0.0
    %3318 = vmatpush.xpose.msra.mxu0 0.0
    %3319 = vmatpush.xpose.msra.mxu0 0.0
    %3320 = vmatpush.xpose.msra.mxu0 0.0
    %3321 = vmatpush.xpose.msra.mxu0 %v3304
    %3322 = vmatmul.f32.gmra.mxu0 %v3302
    %v3323 = vpop.f32.mrf.mxu0
    %v3324 = vadd.f32 0.0, %v3323
    %3325 = vdwg.mxu0
    %v3326 = vmul.f32 %v3324, 0.35355338
    %v3327 = vsel %vm439, %v3326, -inf
    %3328 = vmax.xlane.f32.xlu0 %v3327
    %v3329 = vpop.xlane.xlu0 %3328
    %v3330 = vsub.f32 %v3326, %v3329
    %v3331 = vmul.f32 %v3330, 1.442695
    %v3332 = vpow.pop %v3331
    %v3333 = vsel %vm439, %v3332, 0.0
    %3334 = vadd.xlane.f32.xlu0 %v3333
    %v3335 = vpop.xlane.xlu0 %3334
    %v3336 = vrcp.pop %v3335
    %v3337 = vmul.f32 %v3332, %v3336
    %v3338 = vadd.f32 %v3297, %v3337
    %v3339 = vmul.f32 %v3338, 0.25
    %v3341 = vsel %vm439, %v3339, 0
    %3343 = vmatpush.msra.mxu0 0.0
    %3344 = vmatpush.msra.mxu0 0.0
    %3345 = vmatpush.msra.mxu0 0.0
    %3346 = vmatpush.msra.mxu0 0.0
    %3347 = vmatpush.msra.mxu0 0.0
    %3348 = vmatpush.msra.mxu0 0.0
    %3349 = vmatpush.msra.mxu0 0.0
    %3350 = vmatpush.msra.mxu0 0.0
    %3351 = vmatpush.msra.mxu0 0.0
    %3352 = vmatpush.msra.mxu0 0.0
    %3353 = vmatpush.msra.mxu0 0.0
    %3354 = vmatpush.msra.mxu0 0.0
    %3355 = vmatpush.msra.mxu0 0.0
    %3356 = vmatpush.msra.mxu0 0.0
    %3357 = vmatpush.msra.mxu0 0.0
    %3358 = vmatpush.msra.mxu0 %v3135
    %3359 = vmatmul.f32.gmra.mxu0 %v3341
    %v3360 = vpop.f32.mrf.mxu0
    %v3361 = vadd.f32 0.0, %v3360
    %3362 = vdwg.mxu0
    %v3364 = vsel %vm439, %v3361, 0
    %3366 = vmatpush.msra.mxu0 0.0
    %3367 = vmatpush.msra.mxu0 0.0
    %3368 = vmatpush.msra.mxu0 0.0
    %3369 = vmatpush.msra.mxu0 0.0
    %3370 = vmatpush.msra.mxu0 0.0
    %3371 = vmatpush.msra.mxu0 0.0
    %3372 = vmatpush.msra.mxu0 0.0
    %3373 = vmatpush.msra.mxu0 0.0
    %3374 = vmatpush.msra.mxu0 0.0
    %3375 = vmatpush.msra.mxu0 0.0
    %3376 = vmatpush.msra.mxu0 0.0
    %3377 = vmatpush.msra.mxu0 0.0
    %3378 = vmatpush.msra.mxu0 0.0
    %3379 = vmatpush.msra.mxu0 0.0
    %3380 = vmatpush.msra.mxu0 0.0
    %3381 = vmatpush.msra.mxu0 %v3176
    %3382 = vmatmul.f32.gmra.mxu0 %v3364
    %v3383 = vpop.f32.mrf.mxu0
    %v3384 = vadd.f32 0.0, %v3383
    %3385 = vdwg.mxu0
    %3387 = vrot.lane.b32.xlu0 %v2767, 96
    %v3388 = vpop.permute.xlu0 %3387
    %v3389 = vsel %vm439, %v2767, 0
    %v3391 = vsel %vm439, %v3388, 0
    %3393 = vmatpush.xpose.msra.mxu0 0.0
    %3394 = vmatpush.xpose.msra.mxu0 0.0
    %3395 = vmatpush.xpose.msra.mxu0 0.0
    %3396 = vmatpush.xpose.msra.mxu0 0.0
    %3397 = vmatpush.xpose.msra.mxu0 0.0
    %3398 = vmatpush.xpose.msra.mxu0 0.0
    %3399 = vmatpush.xpose.msra.mxu0 0.0
    %3400 = vmatpush.xpose.msra.mxu0 0.0
    %3401 = vmatpush.xpose.msra.mxu0 0.0
    %3402 = vmatpush.xpose.msra.mxu0 0.0
    %3403 = vmatpush.xpose.msra.mxu0 0.0
    %3404 = vmatpush.xpose.msra.mxu0 0.0
    %3405 = vmatpush.xpose.msra.mxu0 0.0
    %3406 = vmatpush.xpose.msra.mxu0 0.0
    %3407 = vmatpush.xpose.msra.mxu0 0.0
    %3408 = vmatpush.xpose.msra.mxu0 %v3391
    %3409 = vmatmul.f32.gmra.mxu0 %v3389
    %v3410 = vpop.f32.mrf.mxu0
    %v3411 = vadd.f32 0.0, %v3410
    %3412 = vdwg.mxu0
    %v3413 = vmul.f32 %v3411, 0.35355338
    %v3414 = vsel %vm439, %v3413, -inf
    %3415 = vmax.xlane.f32.xlu0 %v3414
    %v3416 = vpop.xlane.xlu0 %3415
    %v3417 = vsub.f32 %v3413, %v3416
    %v3418 = vmul.f32 %v3417, 1.442695
    %v3419 = vpow.pop %v3418
    %v3420 = vsel %vm439, %v3419, 0.0
    %3421 = vadd.xlane.f32.xlu0 %v3420
    %v3422 = vpop.xlane.xlu0 %3421
    %v3423 = vrcp.pop %v3422
    %v3424 = vmul.f32 %v3419, %v3423
    %3425 = vrot.lane.b32.xlu0 %v2767, 64
    %v3426 = vpop.permute.xlu0 %3425
    %v3429 = vsel %vm439, %v3424, 0
    %3431 = vmatpush.msra.mxu0 0.0
    %3432 = vmatpush.msra.mxu0 0.0
    %3433 = vmatpush.msra.mxu0 0.0
    %3434 = vmatpush.msra.mxu0 0.0
    %3435 = vmatpush.msra.mxu0 0.0
    %3436 = vmatpush.msra.mxu0 0.0
    %3437 = vmatpush.msra.mxu0 0.0
    %3438 = vmatpush.msra.mxu0 0.0
    %3439 = vmatpush.msra.mxu0 0.0
    %3440 = vmatpush.msra.mxu0 0.0
    %3441 = vmatpush.msra.mxu0 0.0
    %3442 = vmatpush.msra.mxu0 0.0
    %3443 = vmatpush.msra.mxu0 0.0
    %3444 = vmatpush.msra.mxu0 0.0
    %3445 = vmatpush.msra.mxu0 0.0
    %3446 = vmatpush.msra.mxu0 %v3426
    %3447 = vmatmul.f32.gmra.mxu0 %v3429
    %v3448 = vpop.f32.mrf.mxu0
    %v3449 = vadd.f32 0.0, %v3448
    %3450 = vdwg.mxu0
    %3451 = vrot.lane.b32.xlu0 %v2767, 120
    %v3452 = vpop.permute.xlu0 %3451
    %3453 = vrot.lane.b32.xlu0 %v2767, 88
    %v3454 = vpop.permute.xlu0 %3453
    %v3455 = vsel %vm439, %v3452, 0
    %v3457 = vsel %vm439, %v3454, 0
    %3459 = vmatpush.xpose.msra.mxu0 0.0
    %3460 = vmatpush.xpose.msra.mxu0 0.0
    %3461 = vmatpush.xpose.msra.mxu0 0.0
    %3462 = vmatpush.xpose.msra.mxu0 0.0
    %3463 = vmatpush.xpose.msra.mxu0 0.0
    %3464 = vmatpush.xpose.msra.mxu0 0.0
    %3465 = vmatpush.xpose.msra.mxu0 0.0
    %3466 = vmatpush.xpose.msra.mxu0 0.0
    %3467 = vmatpush.xpose.msra.mxu0 0.0
    %3468 = vmatpush.xpose.msra.mxu0 0.0
    %3469 = vmatpush.xpose.msra.mxu0 0.0
    %3470 = vmatpush.xpose.msra.mxu0 0.0
    %3471 = vmatpush.xpose.msra.mxu0 0.0
    %3472 = vmatpush.xpose.msra.mxu0 0.0
    %3473 = vmatpush.xpose.msra.mxu0 0.0
    %3474 = vmatpush.xpose.msra.mxu0 %v3457
    %3475 = vmatmul.f32.gmra.mxu0 %v3455
    %v3476 = vpop.f32.mrf.mxu0
    %v3477 = vadd.f32 0.0, %v3476
    %3478 = vdwg.mxu0
    %v3479 = vmul.f32 %v3477, 0.35355338
    %v3480 = vsel %vm439, %v3479, -inf
    %3481 = vmax.xlane.f32.xlu0 %v3480
    %v3482 = vpop.xlane.xlu0 %3481
    %v3483 = vsub.f32 %v3479, %v3482
    %v3484 = vmul.f32 %v3483, 1.442695
    %v3485 = vpow.pop %v3484
    %v3486 = vsel %vm439, %v3485, 0.0
    %3487 = vadd.xlane.f32.xlu0 %v3486
    %v3488 = vpop.xlane.xlu0 %3487
    %v3489 = vrcp.pop %v3488
    %v3490 = vmul.f32 %v3485, %v3489
    %v3491 = vadd.f32 %v3424, %v3490
    %3492 = vrot.lane.b32.xlu0 %v2767, 56
    %v3493 = vpop.permute.xlu0 %3492
    %v3496 = vsel %vm439, %v3490, 0
    %3498 = vmatpush.msra.mxu0 0.0
    %3499 = vmatpush.msra.mxu0 0.0
    %3500 = vmatpush.msra.mxu0 0.0
    %3501 = vmatpush.msra.mxu0 0.0
    %3502 = vmatpush.msra.mxu0 0.0
    %3503 = vmatpush.msra.mxu0 0.0
    %3504 = vmatpush.msra.mxu0 0.0
    %3505 = vmatpush.msra.mxu0 0.0
    %3506 = vmatpush.msra.mxu0 0.0
    %3507 = vmatpush.msra.mxu0 0.0
    %3508 = vmatpush.msra.mxu0 0.0
    %3509 = vmatpush.msra.mxu0 0.0
    %3510 = vmatpush.msra.mxu0 0.0
    %3511 = vmatpush.msra.mxu0 0.0
    %3512 = vmatpush.msra.mxu0 0.0
    %3513 = vmatpush.msra.mxu0 %v3493
    %3514 = vmatmul.f32.gmra.mxu0 %v3496
    %v3515 = vpop.f32.mrf.mxu0
    %v3516 = vadd.f32 0.0, %v3515
    %3517 = vdwg.mxu0
    %v3519 = vsel %vm439, %v3516, 0
    %3521 = vmatpush.msra.mxu0 0.0
    %3522 = vmatpush.msra.mxu0 0.0
    %3523 = vmatpush.msra.mxu0 0.0
    %3524 = vmatpush.msra.mxu0 0.0
    %3525 = vmatpush.msra.mxu0 0.0
    %3526 = vmatpush.msra.mxu0 0.0
    %3527 = vmatpush.msra.mxu0 0.0
    %3528 = vmatpush.msra.mxu0 0.0
    %3529 = vmatpush.msra.mxu0 0.0
    %3530 = vmatpush.msra.mxu0 0.0
    %3531 = vmatpush.msra.mxu0 0.0
    %3532 = vmatpush.msra.mxu0 0.0
    %3533 = vmatpush.msra.mxu0 0.0
    %3534 = vmatpush.msra.mxu0 0.0
    %3535 = vmatpush.msra.mxu0 0.0
    %3536 = vmatpush.msra.mxu0 %v2772
    %3537 = vmatmul.f32.gmra.mxu0 %v3519
    %v3538 = vpop.f32.mrf.mxu0
    %v3539 = vadd.f32 0.0, %v3538
    %3540 = vdwg.mxu0
    %v3542 = vsel %vm439, %v3449, 0
    %3544 = vmatpush.msra.mxu0 0.0
    %3545 = vmatpush.msra.mxu0 0.0
    %3546 = vmatpush.msra.mxu0 0.0
    %3547 = vmatpush.msra.mxu0 0.0
    %3548 = vmatpush.msra.mxu0 0.0
    %3549 = vmatpush.msra.mxu0 0.0
    %3550 = vmatpush.msra.mxu0 0.0
    %3551 = vmatpush.msra.mxu0 0.0
    %3552 = vmatpush.msra.mxu0 0.0
    %3553 = vmatpush.msra.mxu0 0.0
    %3554 = vmatpush.msra.mxu0 0.0
    %3555 = vmatpush.msra.mxu0 0.0
    %3556 = vmatpush.msra.mxu0 0.0
    %3557 = vmatpush.msra.mxu0 0.0
    %3558 = vmatpush.msra.mxu0 0.0
    %3559 = vmatpush.msra.mxu0 %v2771
    %3560 = vmatmul.f32.gmra.mxu0 %v3542
    %v3561 = vpop.f32.mrf.mxu0
    %v3562 = vadd.f32 %v3539, %v3561
    %3563 = vdwg.mxu0
    %3564 = vrot.lane.b32.xlu0 %v2767, 112
    %v3565 = vpop.permute.xlu0 %3564
    %3566 = vrot.lane.b32.xlu0 %v2767, 80
    %v3567 = vpop.permute.xlu0 %3566
    %v3568 = vsel %vm439, %v3565, 0
    %v3570 = vsel %vm439, %v3567, 0
    %3572 = vmatpush.xpose.msra.mxu0 0.0
    %3573 = vmatpush.xpose.msra.mxu0 0.0
    %3574 = vmatpush.xpose.msra.mxu0 0.0
    %3575 = vmatpush.xpose.msra.mxu0 0.0
    %3576 = vmatpush.xpose.msra.mxu0 0.0
    %3577 = vmatpush.xpose.msra.mxu0 0.0
    %3578 = vmatpush.xpose.msra.mxu0 0.0
    %3579 = vmatpush.xpose.msra.mxu0 0.0
    %3580 = vmatpush.xpose.msra.mxu0 0.0
    %3581 = vmatpush.xpose.msra.mxu0 0.0
    %3582 = vmatpush.xpose.msra.mxu0 0.0
    %3583 = vmatpush.xpose.msra.mxu0 0.0
    %3584 = vmatpush.xpose.msra.mxu0 0.0
    %3585 = vmatpush.xpose.msra.mxu0 0.0
    %3586 = vmatpush.xpose.msra.mxu0 0.0
    %3587 = vmatpush.xpose.msra.mxu0 %v3570
    %3588 = vmatmul.f32.gmra.mxu0 %v3568
    %v3589 = vpop.f32.mrf.mxu0
    %v3590 = vadd.f32 0.0, %v3589
    %3591 = vdwg.mxu0
    %v3592 = vmul.f32 %v3590, 0.35355338
    %v3593 = vsel %vm439, %v3592, -inf
    %3594 = vmax.xlane.f32.xlu0 %v3593
    %v3595 = vpop.xlane.xlu0 %3594
    %v3596 = vsub.f32 %v3592, %v3595
    %v3597 = vmul.f32 %v3596, 1.442695
    %v3598 = vpow.pop %v3597
    %v3599 = vsel %vm439, %v3598, 0.0
    %3600 = vadd.xlane.f32.xlu0 %v3599
    %v3601 = vpop.xlane.xlu0 %3600
    %v3602 = vrcp.pop %v3601
    %v3603 = vmul.f32 %v3598, %v3602
    %v3604 = vadd.f32 %v3491, %v3603
    %3605 = vrot.lane.b32.xlu0 %v2767, 48
    %v3606 = vpop.permute.xlu0 %3605
    %v3609 = vsel %vm439, %v3603, 0
    %3611 = vmatpush.msra.mxu0 0.0
    %3612 = vmatpush.msra.mxu0 0.0
    %3613 = vmatpush.msra.mxu0 0.0
    %3614 = vmatpush.msra.mxu0 0.0
    %3615 = vmatpush.msra.mxu0 0.0
    %3616 = vmatpush.msra.mxu0 0.0
    %3617 = vmatpush.msra.mxu0 0.0
    %3618 = vmatpush.msra.mxu0 0.0
    %3619 = vmatpush.msra.mxu0 0.0
    %3620 = vmatpush.msra.mxu0 0.0
    %3621 = vmatpush.msra.mxu0 0.0
    %3622 = vmatpush.msra.mxu0 0.0
    %3623 = vmatpush.msra.mxu0 0.0
    %3624 = vmatpush.msra.mxu0 0.0
    %3625 = vmatpush.msra.mxu0 0.0
    %3626 = vmatpush.msra.mxu0 %v3606
    %3627 = vmatmul.f32.gmra.mxu0 %v3609
    %v3628 = vpop.f32.mrf.mxu0
    %v3629 = vadd.f32 0.0, %v3628
    %3630 = vdwg.mxu0
    %v3632 = vsel %vm439, %v3629, 0
    %3634 = vmatpush.msra.mxu0 0.0
    %3635 = vmatpush.msra.mxu0 0.0
    %3636 = vmatpush.msra.mxu0 0.0
    %3637 = vmatpush.msra.mxu0 0.0
    %3638 = vmatpush.msra.mxu0 0.0
    %3639 = vmatpush.msra.mxu0 0.0
    %3640 = vmatpush.msra.mxu0 0.0
    %3641 = vmatpush.msra.mxu0 0.0
    %3642 = vmatpush.msra.mxu0 0.0
    %3643 = vmatpush.msra.mxu0 0.0
    %3644 = vmatpush.msra.mxu0 0.0
    %3645 = vmatpush.msra.mxu0 0.0
    %3646 = vmatpush.msra.mxu0 0.0
    %3647 = vmatpush.msra.mxu0 0.0
    %3648 = vmatpush.msra.mxu0 0.0
    %3649 = vmatpush.msra.mxu0 %v2773
    %3650 = vmatmul.f32.gmra.mxu0 %v3632
    %v3651 = vpop.f32.mrf.mxu0
    %v3652 = vadd.f32 0.0, %v3651
    %3653 = vdwg.mxu0
    %v3654 = vadd.f32 %v3562, %v3652
    %3655 = vrot.lane.b32.xlu0 %v2767, 104
    %v3656 = vpop.permute.xlu0 %3655
    %3657 = vrot.lane.b32.xlu0 %v2767, 72
    %v3658 = vpop.permute.xlu0 %3657
    %v3659 = vsel %vm439, %v3656, 0
    %v3661 = vsel %vm439, %v3658, 0
    %3663 = vmatpush.xpose.msra.mxu0 0.0
    %3664 = vmatpush.xpose.msra.mxu0 0.0
    %3665 = vmatpush.xpose.msra.mxu0 0.0
    %3666 = vmatpush.xpose.msra.mxu0 0.0
    %3667 = vmatpush.xpose.msra.mxu0 0.0
    %3668 = vmatpush.xpose.msra.mxu0 0.0
    %3669 = vmatpush.xpose.msra.mxu0 0.0
    %3670 = vmatpush.xpose.msra.mxu0 0.0
    %3671 = vmatpush.xpose.msra.mxu0 0.0
    %3672 = vmatpush.xpose.msra.mxu0 0.0
    %3673 = vmatpush.xpose.msra.mxu0 0.0
    %3674 = vmatpush.xpose.msra.mxu0 0.0
    %3675 = vmatpush.xpose.msra.mxu0 0.0
    %3676 = vmatpush.xpose.msra.mxu0 0.0
    %3677 = vmatpush.xpose.msra.mxu0 0.0
    %3678 = vmatpush.xpose.msra.mxu0 %v3661
    %3679 = vmatmul.f32.gmra.mxu0 %v3659
    %v3680 = vpop.f32.mrf.mxu0
    %v3681 = vadd.f32 0.0, %v3680
    %3682 = vdwg.mxu0
    %v3683 = vmul.f32 %v3681, 0.35355338
    %v3684 = vsel %vm439, %v3683, -inf
    %3685 = vmax.xlane.f32.xlu0 %v3684
    %v3686 = vpop.xlane.xlu0 %3685
    %v3687 = vsub.f32 %v3683, %v3686
    %v3688 = vmul.f32 %v3687, 1.442695
    %v3689 = vpow.pop %v3688
    %v3690 = vsel %vm439, %v3689, 0.0
    %3691 = vadd.xlane.f32.xlu0 %v3690
    %v3692 = vpop.xlane.xlu0 %3691
    %v3693 = vrcp.pop %v3692
    %v3694 = vmul.f32 %v3689, %v3693
    %v3695 = vadd.f32 %v3604, %v3694
    %3696 = vrot.lane.b32.xlu0 %v2767, 40
    %v3697 = vpop.permute.xlu0 %3696
    %v3700 = vsel %vm439, %v3694, 0
    %3702 = vmatpush.msra.mxu0 0.0
    %3703 = vmatpush.msra.mxu0 0.0
    %3704 = vmatpush.msra.mxu0 0.0
    %3705 = vmatpush.msra.mxu0 0.0
    %3706 = vmatpush.msra.mxu0 0.0
    %3707 = vmatpush.msra.mxu0 0.0
    %3708 = vmatpush.msra.mxu0 0.0
    %3709 = vmatpush.msra.mxu0 0.0
    %3710 = vmatpush.msra.mxu0 0.0
    %3711 = vmatpush.msra.mxu0 0.0
    %3712 = vmatpush.msra.mxu0 0.0
    %3713 = vmatpush.msra.mxu0 0.0
    %3714 = vmatpush.msra.mxu0 0.0
    %3715 = vmatpush.msra.mxu0 0.0
    %3716 = vmatpush.msra.mxu0 0.0
    %3717 = vmatpush.msra.mxu0 %v3697
    %3718 = vmatmul.f32.gmra.mxu0 %v3700
    %v3719 = vpop.f32.mrf.mxu0
    %v3720 = vadd.f32 0.0, %v3719
    %3721 = vdwg.mxu0
    %v3723 = vsel %vm439, %v3720, 0
    %3725 = vmatpush.msra.mxu0 0.0
    %3726 = vmatpush.msra.mxu0 0.0
    %3727 = vmatpush.msra.mxu0 0.0
    %3728 = vmatpush.msra.mxu0 0.0
    %3729 = vmatpush.msra.mxu0 0.0
    %3730 = vmatpush.msra.mxu0 0.0
    %3731 = vmatpush.msra.mxu0 0.0
    %3732 = vmatpush.msra.mxu0 0.0
    %3733 = vmatpush.msra.mxu0 0.0
    %3734 = vmatpush.msra.mxu0 0.0
    %3735 = vmatpush.msra.mxu0 0.0
    %3736 = vmatpush.msra.mxu0 0.0
    %3737 = vmatpush.msra.mxu0 0.0
    %3738 = vmatpush.msra.mxu0 0.0
    %3739 = vmatpush.msra.mxu0 0.0
    %3740 = vmatpush.msra.mxu0 %v2774
    %3741 = vmatmul.f32.gmra.mxu0 %v3723
    %v3742 = vpop.f32.mrf.mxu0
    %v3743 = vadd.f32 0.0, %v3742
    %3744 = vdwg.mxu0
    %v3745 = vadd.f32 %v3654, %v3743
    %v3746 = vmul.f32 %v3695, 0.25
    %v3747 = vadd.f32 %v2769, %v3745
    %v3748 = vadd.f32 %v3747, %v3140
    %v3749 = vsel %vm408, %v3748, 0.0
    %3750 = vadd.xlane.f32.xlu0 %v3749
    %v3751 = vpop.xlane.xlu0 %3750
    %v3752 = vmul.f32 %v3751, %v815
    %v3753 = vsub.f32 %v3748, %v3752
    %v3754 = vmul.f32 %v3753, %v3753
    %v3755 = vsel %vm408, %v3754, 0.0
    %3756 = vadd.xlane.f32.xlu0 %v3755
    %v3757 = vpop.xlane.xlu0 %3756
    %v3758 = vmul.f32 %v3757, %v815
    %v3759 = vadd.f32 %v3758, 1e-05
    %v3760 = vrsqrt.pop %v3759
    %v3761 = vmul.f32 %v3760, %v3759
    %v3762 = vmul.f32 %v3761, %v3760
    %v3763 = vmul.f32 0.5, %v3762
    %v3764 = vsub.f32 1.5, %v3763
    %v3765 = vmul.f32 %v3760, %v3764
    %vm3766 = vweird.f32 %v3759
    %vm3767 = vweird.f32 %v3760
    %vm3768 = vmor %vm3766, %vm3767
    %v3769 = vsel %vm3768, %v3760, %v3765
    %v3770 = vmul.f32 %v3753, %v3769
    %v3771 = vmul.f32 %v3770, %v3170
    %v3772 = vadd.f32 %v3771, %v3174
    %3774 = vrot.lane.b32.xlu0 %v2761, 96
    %v3775 = vpop.permute.xlu0 %3774
    %v3776 = vsel %vm439, %v2761, 0
    %v3778 = vsel %vm439, %v3775, 0
    %3780 = vmatpush.xpose.msra.mxu0 0.0
    %3781 = vmatpush.xpose.msra.mxu0 0.0
    %3782 = vmatpush.xpose.msra.mxu0 0.0
    %3783 = vmatpush.xpose.msra.mxu0 0.0
    %3784 = vmatpush.xpose.msra.mxu0 0.0
    %3785 = vmatpush.xpose.msra.mxu0 0.0
    %3786 = vmatpush.xpose.msra.mxu0 0.0
    %3787 = vmatpush.xpose.msra.mxu0 0.0
    %3788 = vmatpush.xpose.msra.mxu0 0.0
    %3789 = vmatpush.xpose.msra.mxu0 0.0
    %3790 = vmatpush.xpose.msra.mxu0 0.0
    %3791 = vmatpush.xpose.msra.mxu0 0.0
    %3792 = vmatpush.xpose.msra.mxu0 0.0
    %3793 = vmatpush.xpose.msra.mxu0 0.0
    %3794 = vmatpush.xpose.msra.mxu0 0.0
    %3795 = vmatpush.xpose.msra.mxu0 %v3778
    %3796 = vmatmul.f32.gmra.mxu0 %v3776
    %v3797 = vpop.f32.mrf.mxu0
    %v3798 = vadd.f32 0.0, %v3797
    %3799 = vdwg.mxu0
    %v3800 = vmul.f32 %v3798, 0.35355338
    %v3801 = vsel %vm439, %v3800, -inf
    %3802 = vmax.xlane.f32.xlu0 %v3801
    %v3803 = vpop.xlane.xlu0 %3802
    %v3804 = vsub.f32 %v3800, %v3803
    %v3805 = vmul.f32 %v3804, 1.442695
    %v3806 = vpow.pop %v3805
    %v3807 = vsel %vm439, %v3806, 0.0
    %3808 = vadd.xlane.f32.xlu0 %v3807
    %v3809 = vpop.xlane.xlu0 %3808
    %v3810 = vrcp.pop %v3809
    %v3811 = vmul.f32 %v3806, %v3810
    %3812 = vrot.lane.b32.xlu0 %v2761, 120
    %v3813 = vpop.permute.xlu0 %3812
    %3814 = vrot.lane.b32.xlu0 %v2761, 88
    %v3815 = vpop.permute.xlu0 %3814
    %v3816 = vsel %vm439, %v3813, 0
    %v3818 = vsel %vm439, %v3815, 0
    %3820 = vmatpush.xpose.msra.mxu0 0.0
    %3821 = vmatpush.xpose.msra.mxu0 0.0
    %3822 = vmatpush.xpose.msra.mxu0 0.0
    %3823 = vmatpush.xpose.msra.mxu0 0.0
    %3824 = vmatpush.xpose.msra.mxu0 0.0
    %3825 = vmatpush.xpose.msra.mxu0 0.0
    %3826 = vmatpush.xpose.msra.mxu0 0.0
    %3827 = vmatpush.xpose.msra.mxu0 0.0
    %3828 = vmatpush.xpose.msra.mxu0 0.0
    %3829 = vmatpush.xpose.msra.mxu0 0.0
    %3830 = vmatpush.xpose.msra.mxu0 0.0
    %3831 = vmatpush.xpose.msra.mxu0 0.0
    %3832 = vmatpush.xpose.msra.mxu0 0.0
    %3833 = vmatpush.xpose.msra.mxu0 0.0
    %3834 = vmatpush.xpose.msra.mxu0 0.0
    %3835 = vmatpush.xpose.msra.mxu0 %v3818
    %3836 = vmatmul.f32.gmra.mxu0 %v3816
    %v3837 = vpop.f32.mrf.mxu0
    %v3838 = vadd.f32 0.0, %v3837
    %3839 = vdwg.mxu0
    %v3840 = vmul.f32 %v3838, 0.35355338
    %v3841 = vsel %vm439, %v3840, -inf
    %3842 = vmax.xlane.f32.xlu0 %v3841
    %v3843 = vpop.xlane.xlu0 %3842
    %v3844 = vsub.f32 %v3840, %v3843
    %v3845 = vmul.f32 %v3844, 1.442695
    %v3846 = vpow.pop %v3845
    %v3847 = vsel %vm439, %v3846, 0.0
    %3848 = vadd.xlane.f32.xlu0 %v3847
    %v3849 = vpop.xlane.xlu0 %3848
    %v3850 = vrcp.pop %v3849
    %v3851 = vmul.f32 %v3846, %v3850
    %v3852 = vadd.f32 %v3811, %v3851
    %3853 = vrot.lane.b32.xlu0 %v2761, 112
    %v3854 = vpop.permute.xlu0 %3853
    %3855 = vrot.lane.b32.xlu0 %v2761, 80
    %v3856 = vpop.permute.xlu0 %3855
    %v3857 = vsel %vm439, %v3854, 0
    %v3859 = vsel %vm439, %v3856, 0
    %3861 = vmatpush.xpose.msra.mxu0 0.0
    %3862 = vmatpush.xpose.msra.mxu0 0.0
    %3863 = vmatpush.xpose.msra.mxu0 0.0
    %3864 = vmatpush.xpose.msra.mxu0 0.0
    %3865 = vmatpush.xpose.msra.mxu0 0.0
    %3866 = vmatpush.xpose.msra.mxu0 0.0
    %3867 = vmatpush.xpose.msra.mxu0 0.0
    %3868 = vmatpush.xpose.msra.mxu0 0.0
    %3869 = vmatpush.xpose.msra.mxu0 0.0
    %3870 = vmatpush.xpose.msra.mxu0 0.0
    %3871 = vmatpush.xpose.msra.mxu0 0.0
    %3872 = vmatpush.xpose.msra.mxu0 0.0
    %3873 = vmatpush.xpose.msra.mxu0 0.0
    %3874 = vmatpush.xpose.msra.mxu0 0.0
    %3875 = vmatpush.xpose.msra.mxu0 0.0
    %3876 = vmatpush.xpose.msra.mxu0 %v3859
    %3877 = vmatmul.f32.gmra.mxu0 %v3857
    %v3878 = vpop.f32.mrf.mxu0
    %v3879 = vadd.f32 0.0, %v3878
    %3880 = vdwg.mxu0
    %v3881 = vmul.f32 %v3879, 0.35355338
    %v3882 = vsel %vm439, %v3881, -inf
    %3883 = vmax.xlane.f32.xlu0 %v3882
    %v3884 = vpop.xlane.xlu0 %3883
    %v3885 = vsub.f32 %v3881, %v3884
    %v3886 = vmul.f32 %v3885, 1.442695
    %v3887 = vpow.pop %v3886
    %v3888 = vsel %vm439, %v3887, 0.0
    %3889 = vadd.xlane.f32.xlu0 %v3888
    %v3890 = vpop.xlane.xlu0 %3889
    %v3891 = vrcp.pop %v3890
    %v3892 = vmul.f32 %v3887, %v3891
    %v3893 = vadd.f32 %v3852, %v3892
    %3894 = vrot.lane.b32.xlu0 %v2761, 104
    %v3895 = vpop.permute.xlu0 %3894
    %3896 = vrot.lane.b32.xlu0 %v2761, 72
    %v3897 = vpop.permute.xlu0 %3896
    %v3898 = vsel %vm439, %v3895, 0
    %v3900 = vsel %vm439, %v3897, 0
    %3902 = vmatpush.xpose.msra.mxu0 0.0
    %3903 = vmatpush.xpose.msra.mxu0 0.0
    %3904 = vmatpush.xpose.msra.mxu0 0.0
    %3905 = vmatpush.xpose.msra.mxu0 0.0
    %3906 = vmatpush.xpose.msra.mxu0 0.0
    %3907 = vmatpush.xpose.msra.mxu0 0.0
    %3908 = vmatpush.xpose.msra.mxu0 0.0
    %3909 = vmatpush.xpose.msra.mxu0 0.0
    %3910 = vmatpush.xpose.msra.mxu0 0.0
    %3911 = vmatpush.xpose.msra.mxu0 0.0
    %3912 = vmatpush.xpose.msra.mxu0 0.0
    %3913 = vmatpush.xpose.msra.mxu0 0.0
    %3914 = vmatpush.xpose.msra.mxu0 0.0
    %3915 = vmatpush.xpose.msra.mxu0 0.0
    %3916 = vmatpush.xpose.msra.mxu0 0.0
    %3917 = vmatpush.xpose.msra.mxu0 %v3900
    %3918 = vmatmul.f32.gmra.mxu0 %v3898
    %v3919 = vpop.f32.mrf.mxu0
    %v3920 = vadd.f32 0.0, %v3919
    %3921 = vdwg.mxu0
    %v3922 = vmul.f32 %v3920, 0.35355338
    %v3923 = vsel %vm439, %v3922, -inf
    %3924 = vmax.xlane.f32.xlu0 %v3923
    %v3925 = vpop.xlane.xlu0 %3924
    %v3926 = vsub.f32 %v3922, %v3925
    %v3927 = vmul.f32 %v3926, 1.442695
    %v3928 = vpow.pop %v3927
    %v3929 = vsel %vm439, %v3928, 0.0
    %3930 = vadd.xlane.f32.xlu0 %v3929
    %v3931 = vpop.xlane.xlu0 %3930
    %v3932 = vrcp.pop %v3931
    %v3933 = vmul.f32 %v3928, %v3932
    %v3934 = vadd.f32 %v3893, %v3933
    %v3935 = vmul.f32 %v3934, 0.25
    %v3937 = vsel %vm439, %v3935, 0
    %3939 = vmatpush.msra.mxu0 0.0
    %3940 = vmatpush.msra.mxu0 0.0
    %3941 = vmatpush.msra.mxu0 0.0
    %3942 = vmatpush.msra.mxu0 0.0
    %3943 = vmatpush.msra.mxu0 0.0
    %3944 = vmatpush.msra.mxu0 0.0
    %3945 = vmatpush.msra.mxu0 0.0
    %3946 = vmatpush.msra.mxu0 0.0
    %3947 = vmatpush.msra.mxu0 0.0
    %3948 = vmatpush.msra.mxu0 0.0
    %3949 = vmatpush.msra.mxu0 0.0
    %3950 = vmatpush.msra.mxu0 0.0
    %3951 = vmatpush.msra.mxu0 0.0
    %3952 = vmatpush.msra.mxu0 0.0
    %3953 = vmatpush.msra.mxu0 0.0
    %3954 = vmatpush.msra.mxu0 %v3746
    %3955 = vmatmul.f32.gmra.mxu0 %v3937
    %v3956 = vpop.f32.mrf.mxu0
    %v3957 = vadd.f32 0.0, %v3956
    %3958 = vdwg.mxu0
    %v3960 = vsel %vm439, %v3957, 0
    %3962 = vmatpush.msra.mxu0 0.0
    %3963 = vmatpush.msra.mxu0 0.0
    %3964 = vmatpush.msra.mxu0 0.0
    %3965 = vmatpush.msra.mxu0 0.0
    %3966 = vmatpush.msra.mxu0 0.0
    %3967 = vmatpush.msra.mxu0 0.0
    %3968 = vmatpush.msra.mxu0 0.0
    %3969 = vmatpush.msra.mxu0 0.0
    %3970 = vmatpush.msra.mxu0 0.0
    %3971 = vmatpush.msra.mxu0 0.0
    %3972 = vmatpush.msra.mxu0 0.0
    %3973 = vmatpush.msra.mxu0 0.0
    %3974 = vmatpush.msra.mxu0 0.0
    %3975 = vmatpush.msra.mxu0 0.0
    %3976 = vmatpush.msra.mxu0 0.0
    %3977 = vmatpush.msra.mxu0 %v3772
    %3978 = vmatmul.f32.gmra.mxu0 %v3960
    %v3979 = vpop.f32.mrf.mxu0
    %v3980 = vadd.f32 0.0, %v3979
    %3981 = vdwg.mxu0
    %s3982 = scalar_lea.vmem [#allocation12], 16
    %v3983 = vld [vmem:[%s3982] sm:$0xf]
    %v3984 = vld [vmem:[%s3982 + $0x4] sm:$0xf]
    %v3985 = vld [vmem:[%s3982 + $0x8] sm:$0xf]
    %v3986 = vld [vmem:[%s3982 + $0xc] sm:$0xf]
    %v3987 = vpack.c.bf16 %v3980, %v3384
    %s3988 = scalar_lea.vmem [#allocation13], 1
    %v3989 = vld [vmem:[%s3988] sm:$0x1]
    %v3991 = vperm.slane %v3989, 0
    %v3997 = vunpack.c.l.b16 %v3983
    %v3998 = vunpack.c.l.b16 %v3984
    %v3999 = vunpack.c.l.b16 %v3985
    %v4000 = vunpack.c.l.b16 %v3986
    %v4001 = vpack.c.b16 %v3998, %v3997
    %v4002 = vpack.c.b16 %v4000, %v3999
    %v4006 = vsel %vm408, %v3987, 0
    %4008 = vmatpush.bf16.msra.mxu0 0
    %4009 = vmatpush.bf16.msra.mxu0 0
    %4010 = vmatpush.bf16.msra.mxu0 0
    %4011 = vmatpush.bf16.msra.mxu0 0
    %4012 = vmatpush.bf16.msra.mxu0 0
    %4013 = vmatpush.bf16.msra.mxu0 0
    %4014 = vmatpush.bf16.msra.mxu0 %v4002
    %4015 = vmatpush.bf16.msra.mxu0 %v4001
    %4016 = vmatmul.bf16.gmra.mxu0 %v4006
    %v4017 = vpop.f32.mrf.mxu0
    %v4018 = vadd.f32 %v3991, %v4017
    %v4019 = vpop.f32.mrf.mxu0
    %v4020 = vadd.f32 %v3991, %v4019
    %4021 = vdwg.mxu0
    %s4022 = scalar_lea.vmem [#allocation15], 16
    %v4023 = vld [vmem:[%s4022] sm:$0xf]
    %v4024 = vld [vmem:[%s4022 + $0x4] sm:$0xf]
    %v4025 = vld [vmem:[%s4022 + $0x8] sm:$0xf]
    %v4026 = vld [vmem:[%s4022 + $0xc] sm:$0xf]
    %s4027 = scalar_lea.vmem [#allocation16], 1
    %v4028 = vld [vmem:[%s4027] sm:$0x1]
    %v4030 = vperm.slane %v4028, 0
    %v4036 = vunpack.c.l.b16 %v4023
    %v4037 = vunpack.c.l.b16 %v4024
    %v4038 = vunpack.c.l.b16 %v4025
    %v4039 = vunpack.c.l.b16 %v4026
    %v4040 = vpack.c.b16 %v4037, %v4036
    %v4041 = vpack.c.b16 %v4039, %v4038
    %4044 = vmatpush.bf16.msra.mxu0 0
    %4045 = vmatpush.bf16.msra.mxu0 0
    %4046 = vmatpush.bf16.msra.mxu0 0
    %4047 = vmatpush.bf16.msra.mxu0 0
    %4048 = vmatpush.bf16.msra.mxu0 0
    %4049 = vmatpush.bf16.msra.mxu0 0
    %4050 = vmatpush.bf16.msra.mxu0 %v4041
    %4051 = vmatpush.bf16.msra.mxu0 %v4040
    %4052 = vmatmul.bf16.gmra.mxu0 %v1709
    %v4053 = vpop.f32.mrf.mxu0
    %v4054 = vadd.f32 %v4030, %v4053
    %v4055 = vpop.f32.mrf.mxu0
    %v4056 = vadd.f32 %v4030, %v4055
    %4057 = vmatmul.bf16.gmra.mxu0 %v1712
    %v4058 = vpop.f32.mrf.mxu0
    %v4059 = vadd.f32 %v4030, %v4058
    %v4060 = vpop.f32.mrf.mxu0
    %v4061 = vadd.f32 %v4030, %v4060
    %4062 = vdwg.mxu0
    %s4063 = scalar_lea.vmem [#allocation18], 32
    %v4064 = vld [vmem:[%s4063] sm:$0xff]
    %v4065 = vld [vmem:[%s4063 + $0x8] sm:$0xff]
    %v4066 = vld [vmem:[%s4063 + $0x10] sm:$0xff]
    %v4067 = vld [vmem:[%s4063 + $0x18] sm:$0xff]
    %v4069 = vsel %vm439, %v4018, 0
    %v4072 = vsel %vm439, %v4054, 0
    %v4075 = vsel %vm439, %v4056, 0
    %4077 = vmatpush.xpose.msra.mxu0 0.0
    %4078 = vmatpush.xpose.msra.mxu0 0.0
    %4079 = vmatpush.xpose.msra.mxu0 0.0
    %4080 = vmatpush.xpose.msra.mxu0 0.0
    %4081 = vmatpush.xpose.msra.mxu0 0.0
    %4082 = vmatpush.xpose.msra.mxu0 0.0
    %4083 = vmatpush.xpose.msra.mxu0 0.0
    %4084 = vmatpush.xpose.msra.mxu0 0.0
    %4085 = vmatpush.xpose.msra.mxu0 0.0
    %4086 = vmatpush.xpose.msra.mxu0 0.0
    %4087 = vmatpush.xpose.msra.mxu0 0.0
    %4088 = vmatpush.xpose.msra.mxu0 0.0
    %4089 = vmatpush.xpose.msra.mxu0 0.0
    %4090 = vmatpush.xpose.msra.mxu0 0.0
    %4091 = vmatpush.xpose.msra.mxu0 %v4075
    %4092 = vmatpush.xpose.msra.mxu0 %v4072
    %4093 = vmatmul.f32.gmra.mxu0 %v4069
    %v4094 = vpop.f32.mrf.mxu0
    %v4095 = vadd.f32 0.0, %v4094
    %4096 = vdwg.mxu0
    %v4097 = vmul.f32 %v4095, 0.35355338
    %v4098 = vsel %vm1767, %v4097, -inf
    %4099 = vmax.xlane.f32.xlu0 %v4098
    %v4100 = vpop.xlane.xlu0 %4099
    %v4101 = vsub.f32 %v4097, %v4100
    %v4102 = vmul.f32 %v4101, 1.442695
    %v4103 = vpow.pop %v4102
    %v4104 = vsel %vm1767, %v4103, 0.0
    %4105 = vadd.xlane.f32.xlu0 %v4104
    %v4106 = vpop.xlane.xlu0 %4105
    %v4107 = vrcp.pop %v4106
    %v4108 = vmul.f32 %v4103, %v4107
    %4109 = vrot.lane.b32.xlu0 %v4054, 96
    %v4110 = vpop.permute.xlu0 %4109
    %4111 = vrot.lane.b32.xlu0 %v4056, 96
    %v4112 = vpop.permute.xlu0 %4111
    %v4116 = vsel %vm1767, %v4108, 0
    %4118 = vmatpush.msra.mxu0 0.0
    %4119 = vmatpush.msra.mxu0 0.0
    %4120 = vmatpush.msra.mxu0 0.0
    %4121 = vmatpush.msra.mxu0 0.0
    %4122 = vmatpush.msra.mxu0 0.0
    %4123 = vmatpush.msra.mxu0 0.0
    %4124 = vmatpush.msra.mxu0 0.0
    %4125 = vmatpush.msra.mxu0 0.0
    %4126 = vmatpush.msra.mxu0 0.0
    %4127 = vmatpush.msra.mxu0 0.0
    %4128 = vmatpush.msra.mxu0 0.0
    %4129 = vmatpush.msra.mxu0 0.0
    %4130 = vmatpush.msra.mxu0 0.0
    %4131 = vmatpush.msra.mxu0 0.0
    %4132 = vmatpush.msra.mxu0 %v4112
    %4133 = vmatpush.msra.mxu0 %v4110
    %4134 = vmatmul.f32.gmra.mxu0 %v4116
    %v4135 = vpop.f32.mrf.mxu0
    %v4136 = vadd.f32 0.0, %v4135
    %4137 = vdwg.mxu0
    %4138 = vrot.lane.b32.xlu0 %v4018, 120
    %v4139 = vpop.permute.xlu0 %4138
    %4140 = vrot.lane.b32.xlu0 %v4054, 120
    %v4141 = vpop.permute.xlu0 %4140
    %4142 = vrot.lane.b32.xlu0 %v4056, 120
    %v4143 = vpop.permute.xlu0 %4142
    %v4144 = vsel %vm439, %v4139, 0
    %v4146 = vsel %vm439, %v4141, 0
    %v4148 = vsel %vm439, %v4143, 0
    %4150 = vmatpush.xpose.msra.mxu0 0.0
    %4151 = vmatpush.xpose.msra.mxu0 0.0
    %4152 = vmatpush.xpose.msra.mxu0 0.0
    %4153 = vmatpush.xpose.msra.mxu0 0.0
    %4154 = vmatpush.xpose.msra.mxu0 0.0
    %4155 = vmatpush.xpose.msra.mxu0 0.0
    %4156 = vmatpush.xpose.msra.mxu0 0.0
    %4157 = vmatpush.xpose.msra.mxu0 0.0
    %4158 = vmatpush.xpose.msra.mxu0 0.0
    %4159 = vmatpush.xpose.msra.mxu0 0.0
    %4160 = vmatpush.xpose.msra.mxu0 0.0
    %4161 = vmatpush.xpose.msra.mxu0 0.0
    %4162 = vmatpush.xpose.msra.mxu0 0.0
    %4163 = vmatpush.xpose.msra.mxu0 0.0
    %4164 = vmatpush.xpose.msra.mxu0 %v4148
    %4165 = vmatpush.xpose.msra.mxu0 %v4146
    %4166 = vmatmul.f32.gmra.mxu0 %v4144
    %v4167 = vpop.f32.mrf.mxu0
    %v4168 = vadd.f32 0.0, %v4167
    %4169 = vdwg.mxu0
    %v4170 = vmul.f32 %v4168, 0.35355338
    %v4171 = vsel %vm1767, %v4170, -inf
    %4172 = vmax.xlane.f32.xlu0 %v4171
    %v4173 = vpop.xlane.xlu0 %4172
    %v4174 = vsub.f32 %v4170, %v4173
    %v4175 = vmul.f32 %v4174, 1.442695
    %v4176 = vpow.pop %v4175
    %v4177 = vsel %vm1767, %v4176, 0.0
    %4178 = vadd.xlane.f32.xlu0 %v4177
    %v4179 = vpop.xlane.xlu0 %4178
    %v4180 = vrcp.pop %v4179
    %v4181 = vmul.f32 %v4176, %v4180
    %4182 = vrot.lane.b32.xlu0 %v4054, 88
    %v4183 = vpop.permute.xlu0 %4182
    %4184 = vrot.lane.b32.xlu0 %v4056, 88
    %v4185 = vpop.permute.xlu0 %4184
    %v4189 = vsel %vm1767, %v4181, 0
    %4191 = vmatpush.msra.mxu0 0.0
    %4192 = vmatpush.msra.mxu0 0.0
    %4193 = vmatpush.msra.mxu0 0.0
    %4194 = vmatpush.msra.mxu0 0.0
    %4195 = vmatpush.msra.mxu0 0.0
    %4196 = vmatpush.msra.mxu0 0.0
    %4197 = vmatpush.msra.mxu0 0.0
    %4198 = vmatpush.msra.mxu0 0.0
    %4199 = vmatpush.msra.mxu0 0.0
    %4200 = vmatpush.msra.mxu0 0.0
    %4201 = vmatpush.msra.mxu0 0.0
    %4202 = vmatpush.msra.mxu0 0.0
    %4203 = vmatpush.msra.mxu0 0.0
    %4204 = vmatpush.msra.mxu0 0.0
    %4205 = vmatpush.msra.mxu0 %v4185
    %4206 = vmatpush.msra.mxu0 %v4183
    %4207 = vmatmul.f32.gmra.mxu0 %v4189
    %v4208 = vpop.f32.mrf.mxu0
    %v4209 = vadd.f32 0.0, %v4208
    %4210 = vdwg.mxu0
    %v4212 = vsel %vm439, %v4209, 0
    %4214 = vmatpush.msra.mxu0 0.0
    %4215 = vmatpush.msra.mxu0 0.0
    %4216 = vmatpush.msra.mxu0 0.0
    %4217 = vmatpush.msra.mxu0 0.0
    %4218 = vmatpush.msra.mxu0 0.0
    %4219 = vmatpush.msra.mxu0 0.0
    %4220 = vmatpush.msra.mxu0 0.0
    %4221 = vmatpush.msra.mxu0 0.0
    %4222 = vmatpush.msra.mxu0 0.0
    %4223 = vmatpush.msra.mxu0 0.0
    %4224 = vmatpush.msra.mxu0 0.0
    %4225 = vmatpush.msra.mxu0 0.0
    %4226 = vmatpush.msra.mxu0 0.0
    %4227 = vmatpush.msra.mxu0 0.0
    %4228 = vmatpush.msra.mxu0 0.0
    %4229 = vmatpush.msra.mxu0 %v4065
    %4230 = vmatmul.f32.gmra.mxu0 %v4212
    %v4231 = vpop.f32.mrf.mxu0
    %v4232 = vadd.f32 0.0, %v4231
    %4233 = vdwg.mxu0
    %v4235 = vsel %vm439, %v4136, 0
    %4237 = vmatpush.msra.mxu0 0.0
    %4238 = vmatpush.msra.mxu0 0.0
    %4239 = vmatpush.msra.mxu0 0.0
    %4240 = vmatpush.msra.mxu0 0.0
    %4241 = vmatpush.msra.mxu0 0.0
    %4242 = vmatpush.msra.mxu0 0.0
    %4243 = vmatpush.msra.mxu0 0.0
    %4244 = vmatpush.msra.mxu0 0.0
    %4245 = vmatpush.msra.mxu0 0.0
    %4246 = vmatpush.msra.mxu0 0.0
    %4247 = vmatpush.msra.mxu0 0.0
    %4248 = vmatpush.msra.mxu0 0.0
    %4249 = vmatpush.msra.mxu0 0.0
    %4250 = vmatpush.msra.mxu0 0.0
    %4251 = vmatpush.msra.mxu0 0.0
    %4252 = vmatpush.msra.mxu0 %v4064
    %4253 = vmatmul.f32.gmra.mxu0 %v4235
    %v4254 = vpop.f32.mrf.mxu0
    %v4255 = vadd.f32 %v4232, %v4254
    %4256 = vdwg.mxu0
    %4257 = vrot.lane.b32.xlu0 %v4018, 112
    %v4258 = vpop.permute.xlu0 %4257
    %4259 = vrot.lane.b32.xlu0 %v4054, 112
    %v4260 = vpop.permute.xlu0 %4259
    %4261 = vrot.lane.b32.xlu0 %v4056, 112
    %v4262 = vpop.permute.xlu0 %4261
    %v4263 = vsel %vm439, %v4258, 0
    %v4265 = vsel %vm439, %v4260, 0
    %v4267 = vsel %vm439, %v4262, 0
    %4269 = vmatpush.xpose.msra.mxu0 0.0
    %4270 = vmatpush.xpose.msra.mxu0 0.0
    %4271 = vmatpush.xpose.msra.mxu0 0.0
    %4272 = vmatpush.xpose.msra.mxu0 0.0
    %4273 = vmatpush.xpose.msra.mxu0 0.0
    %4274 = vmatpush.xpose.msra.mxu0 0.0
    %4275 = vmatpush.xpose.msra.mxu0 0.0
    %4276 = vmatpush.xpose.msra.mxu0 0.0
    %4277 = vmatpush.xpose.msra.mxu0 0.0
    %4278 = vmatpush.xpose.msra.mxu0 0.0
    %4279 = vmatpush.xpose.msra.mxu0 0.0
    %4280 = vmatpush.xpose.msra.mxu0 0.0
    %4281 = vmatpush.xpose.msra.mxu0 0.0
    %4282 = vmatpush.xpose.msra.mxu0 0.0
    %4283 = vmatpush.xpose.msra.mxu0 %v4267
    %4284 = vmatpush.xpose.msra.mxu0 %v4265
    %4285 = vmatmul.f32.gmra.mxu0 %v4263
    %v4286 = vpop.f32.mrf.mxu0
    %v4287 = vadd.f32 0.0, %v4286
    %4288 = vdwg.mxu0
    %v4289 = vmul.f32 %v4287, 0.35355338
    %v4290 = vsel %vm1767, %v4289, -inf
    %4291 = vmax.xlane.f32.xlu0 %v4290
    %v4292 = vpop.xlane.xlu0 %4291
    %v4293 = vsub.f32 %v4289, %v4292
    %v4294 = vmul.f32 %v4293, 1.442695
    %v4295 = vpow.pop %v4294
    %v4296 = vsel %vm1767, %v4295, 0.0
    %4297 = vadd.xlane.f32.xlu0 %v4296
    %v4298 = vpop.xlane.xlu0 %4297
    %v4299 = vrcp.pop %v4298
    %v4300 = vmul.f32 %v4295, %v4299
    %4301 = vrot.lane.b32.xlu0 %v4054, 80
    %v4302 = vpop.permute.xlu0 %4301
    %4303 = vrot.lane.b32.xlu0 %v4056, 80
    %v4304 = vpop.permute.xlu0 %4303
    %v4308 = vsel %vm1767, %v4300, 0
    %4310 = vmatpush.msra.mxu0 0.0
    %4311 = vmatpush.msra.mxu0 0.0
    %4312 = vmatpush.msra.mxu0 0.0
    %4313 = vmatpush.msra.mxu0 0.0
    %4314 = vmatpush.msra.mxu0 0.0
    %4315 = vmatpush.msra.mxu0 0.0
    %4316 = vmatpush.msra.mxu0 0.0
    %4317 = vmatpush.msra.mxu0 0.0
    %4318 = vmatpush.msra.mxu0 0.0
    %4319 = vmatpush.msra.mxu0 0.0
    %4320 = vmatpush.msra.mxu0 0.0
    %4321 = vmatpush.msra.mxu0 0.0
    %4322 = vmatpush.msra.mxu0 0.0
    %4323 = vmatpush.msra.mxu0 0.0
    %4324 = vmatpush.msra.mxu0 %v4304
    %4325 = vmatpush.msra.mxu0 %v4302
    %4326 = vmatmul.f32.gmra.mxu0 %v4308
    %v4327 = vpop.f32.mrf.mxu0
    %v4328 = vadd.f32 0.0, %v4327
    %4329 = vdwg.mxu0
    %v4331 = vsel %vm439, %v4328, 0
    %4333 = vmatpush.msra.mxu0 0.0
    %4334 = vmatpush.msra.mxu0 0.0
    %4335 = vmatpush.msra.mxu0 0.0
    %4336 = vmatpush.msra.mxu0 0.0
    %4337 = vmatpush.msra.mxu0 0.0
    %4338 = vmatpush.msra.mxu0 0.0
    %4339 = vmatpush.msra.mxu0 0.0
    %4340 = vmatpush.msra.mxu0 0.0
    %4341 = vmatpush.msra.mxu0 0.0
    %4342 = vmatpush.msra.mxu0 0.0
    %4343 = vmatpush.msra.mxu0 0.0
    %4344 = vmatpush.msra.mxu0 0.0
    %4345 = vmatpush.msra.mxu0 0.0
    %4346 = vmatpush.msra.mxu0 0.0
    %4347 = vmatpush.msra.mxu0 0.0
    %4348 = vmatpush.msra.mxu0 %v4066
    %4349 = vmatmul.f32.gmra.mxu0 %v4331
    %v4350 = vpop.f32.mrf.mxu0
    %v4351 = vadd.f32 0.0, %v4350
    %4352 = vdwg.mxu0
    %v4353 = vadd.f32 %v4255, %v4351
    %4354 = vrot.lane.b32.xlu0 %v4018, 104
    %v4355 = vpop.permute.xlu0 %4354
    %4356 = vrot.lane.b32.xlu0 %v4054, 104
    %v4357 = vpop.permute.xlu0 %4356
    %4358 = vrot.lane.b32.xlu0 %v4056, 104
    %v4359 = vpop.permute.xlu0 %4358
    %v4360 = vsel %vm439, %v4355, 0
    %v4362 = vsel %vm439, %v4357, 0
    %v4364 = vsel %vm439, %v4359, 0
    %4366 = vmatpush.xpose.msra.mxu0 0.0
    %4367 = vmatpush.xpose.msra.mxu0 0.0
    %4368 = vmatpush.xpose.msra.mxu0 0.0
    %4369 = vmatpush.xpose.msra.mxu0 0.0
    %4370 = vmatpush.xpose.msra.mxu0 0.0
    %4371 = vmatpush.xpose.msra.mxu0 0.0
    %4372 = vmatpush.xpose.msra.mxu0 0.0
    %4373 = vmatpush.xpose.msra.mxu0 0.0
    %4374 = vmatpush.xpose.msra.mxu0 0.0
    %4375 = vmatpush.xpose.msra.mxu0 0.0
    %4376 = vmatpush.xpose.msra.mxu0 0.0
    %4377 = vmatpush.xpose.msra.mxu0 0.0
    %4378 = vmatpush.xpose.msra.mxu0 0.0
    %4379 = vmatpush.xpose.msra.mxu0 0.0
    %4380 = vmatpush.xpose.msra.mxu0 %v4364
    %4381 = vmatpush.xpose.msra.mxu0 %v4362
    %4382 = vmatmul.f32.gmra.mxu0 %v4360
    %v4383 = vpop.f32.mrf.mxu0
    %v4384 = vadd.f32 0.0, %v4383
    %4385 = vdwg.mxu0
    %v4386 = vmul.f32 %v4384, 0.35355338
    %v4387 = vsel %vm1767, %v4386, -inf
    %4388 = vmax.xlane.f32.xlu0 %v4387
    %v4389 = vpop.xlane.xlu0 %4388
    %v4390 = vsub.f32 %v4386, %v4389
    %v4391 = vmul.f32 %v4390, 1.442695
    %v4392 = vpow.pop %v4391
    %v4393 = vsel %vm1767, %v4392, 0.0
    %4394 = vadd.xlane.f32.xlu0 %v4393
    %v4395 = vpop.xlane.xlu0 %4394
    %v4396 = vrcp.pop %v4395
    %v4397 = vmul.f32 %v4392, %v4396
    %4398 = vrot.lane.b32.xlu0 %v4054, 72
    %v4399 = vpop.permute.xlu0 %4398
    %4400 = vrot.lane.b32.xlu0 %v4056, 72
    %v4401 = vpop.permute.xlu0 %4400
    %v4405 = vsel %vm1767, %v4397, 0
    %4407 = vmatpush.msra.mxu0 0.0
    %4408 = vmatpush.msra.mxu0 0.0
    %4409 = vmatpush.msra.mxu0 0.0
    %4410 = vmatpush.msra.mxu0 0.0
    %4411 = vmatpush.msra.mxu0 0.0
    %4412 = vmatpush.msra.mxu0 0.0
    %4413 = vmatpush.msra.mxu0 0.0
    %4414 = vmatpush.msra.mxu0 0.0
    %4415 = vmatpush.msra.mxu0 0.0
    %4416 = vmatpush.msra.mxu0 0.0
    %4417 = vmatpush.msra.mxu0 0.0
    %4418 = vmatpush.msra.mxu0 0.0
    %4419 = vmatpush.msra.mxu0 0.0
    %4420 = vmatpush.msra.mxu0 0.0
    %4421 = vmatpush.msra.mxu0 %v4401
    %4422 = vmatpush.msra.mxu0 %v4399
    %4423 = vmatmul.f32.gmra.mxu0 %v4405
    %v4424 = vpop.f32.mrf.mxu0
    %v4425 = vadd.f32 0.0, %v4424
    %4426 = vdwg.mxu0
    %v4428 = vsel %vm439, %v4425, 0
    %4430 = vmatpush.msra.mxu0 0.0
    %4431 = vmatpush.msra.mxu0 0.0
    %4432 = vmatpush.msra.mxu0 0.0
    %4433 = vmatpush.msra.mxu0 0.0
    %4434 = vmatpush.msra.mxu0 0.0
    %4435 = vmatpush.msra.mxu0 0.0
    %4436 = vmatpush.msra.mxu0 0.0
    %4437 = vmatpush.msra.mxu0 0.0
    %4438 = vmatpush.msra.mxu0 0.0
    %4439 = vmatpush.msra.mxu0 0.0
    %4440 = vmatpush.msra.mxu0 0.0
    %4441 = vmatpush.msra.mxu0 0.0
    %4442 = vmatpush.msra.mxu0 0.0
    %4443 = vmatpush.msra.mxu0 0.0
    %4444 = vmatpush.msra.mxu0 0.0
    %4445 = vmatpush.msra.mxu0 %v4067
    %4446 = vmatmul.f32.gmra.mxu0 %v4428
    %v4447 = vpop.f32.mrf.mxu0
    %v4448 = vadd.f32 0.0, %v4447
    %4449 = vdwg.mxu0
    %v4450 = vadd.f32 %v4353, %v4448
    %v4451 = vadd.f32 %v3384, %v4450
    %s4452 = scalar_lea.vmem [#allocation19], 1
    %v4453 = vld [vmem:[%s4452] sm:$0x1]
    %v4455 = vperm.slane %v4453, 0
    %v4457 = vadd.f32 %v4451, %v4455
    %s4458 = scalar_lea.vmem [#allocation21], 1
    %v4459 = vld [vmem:[%s4458] sm:$0x1]
    %s4460 = scalar_lea.vmem [#allocation22], 1
    %v4461 = vld [vmem:[%s4460] sm:$0x1]
    %v4462 = vsel %vm408, %v4457, 0.0
    %4463 = vadd.xlane.f32.xlu0 %v4462
    %v4464 = vpop.xlane.xlu0 %4463
    %v4465 = vmul.f32 %v4464, %v815
    %v4466 = vsub.f32 %v4457, %v4465
    %v4467 = vmul.f32 %v4466, %v4466
    %v4468 = vsel %vm408, %v4467, 0.0
    %4469 = vadd.xlane.f32.xlu0 %v4468
    %v4470 = vpop.xlane.xlu0 %4469
    %v4471 = vmul.f32 %v4470, %v815
    %v4472 = vadd.f32 %v4471, 1e-05
    %v4473 = vrsqrt.pop %v4472
    %v4474 = vmul.f32 %v4473, %v4472
    %v4475 = vmul.f32 %v4474, %v4473
    %v4476 = vmul.f32 0.5, %v4475
    %v4477 = vsub.f32 1.5, %v4476
    %v4478 = vmul.f32 %v4473, %v4477
    %vm4479 = vweird.f32 %v4472
    %vm4480 = vweird.f32 %v4473
    %vm4481 = vmor %vm4479, %vm4480
    %v4482 = vsel %vm4481, %v4473, %v4478
    %v4483 = vmul.f32 %v4466, %v4482
    %v4485 = vperm.slane %v4459, 0
    %v4487 = vmul.f32 %v4483, %v4485
    %v4489 = vperm.slane %v4461, 0
    %v4491 = vadd.f32 %v4487, %v4489
    %v4493 = vsel %vm439, %v4020, 0
    %v4496 = vsel %vm439, %v4059, 0
    %v4499 = vsel %vm439, %v4061, 0
    %4501 = vmatpush.xpose.msra.mxu0 0.0
    %4502 = vmatpush.xpose.msra.mxu0 0.0
    %4503 = vmatpush.xpose.msra.mxu0 0.0
    %4504 = vmatpush.xpose.msra.mxu0 0.0
    %4505 = vmatpush.xpose.msra.mxu0 0.0
    %4506 = vmatpush.xpose.msra.mxu0 0.0
    %4507 = vmatpush.xpose.msra.mxu0 0.0
    %4508 = vmatpush.xpose.msra.mxu0 0.0
    %4509 = vmatpush.xpose.msra.mxu0 0.0
    %4510 = vmatpush.xpose.msra.mxu0 0.0
    %4511 = vmatpush.xpose.msra.mxu0 0.0
    %4512 = vmatpush.xpose.msra.mxu0 0.0
    %4513 = vmatpush.xpose.msra.mxu0 0.0
    %4514 = vmatpush.xpose.msra.mxu0 0.0
    %4515 = vmatpush.xpose.msra.mxu0 %v4499
    %4516 = vmatpush.xpose.msra.mxu0 %v4496
    %4517 = vmatmul.f32.gmra.mxu0 %v4493
    %v4518 = vpop.f32.mrf.mxu0
    %v4519 = vadd.f32 0.0, %v4518
    %4520 = vdwg.mxu0
    %v4521 = vmul.f32 %v4519, 0.35355338
    %v4522 = vsel %vm1767, %v4521, -inf
    %4523 = vmax.xlane.f32.xlu0 %v4522
    %v4524 = vpop.xlane.xlu0 %4523
    %v4525 = vsub.f32 %v4521, %v4524
    %v4526 = vmul.f32 %v4525, 1.442695
    %v4527 = vpow.pop %v4526
    %v4528 = vsel %vm1767, %v4527, 0.0
    %4529 = vadd.xlane.f32.xlu0 %v4528
    %v4530 = vpop.xlane.xlu0 %4529
    %v4531 = vrcp.pop %v4530
    %v4532 = vmul.f32 %v4527, %v4531
    %4533 = vrot.lane.b32.xlu0 %v4059, 96
    %v4534 = vpop.permute.xlu0 %4533
    %4535 = vrot.lane.b32.xlu0 %v4061, 96
    %v4536 = vpop.permute.xlu0 %4535
    %v4540 = vsel %vm1767, %v4532, 0
    %4542 = vmatpush.msra.mxu0 0.0
    %4543 = vmatpush.msra.mxu0 0.0
    %4544 = vmatpush.msra.mxu0 0.0
    %4545 = vmatpush.msra.mxu0 0.0
    %4546 = vmatpush.msra.mxu0 0.0
    %4547 = vmatpush.msra.mxu0 0.0
    %4548 = vmatpush.msra.mxu0 0.0
    %4549 = vmatpush.msra.mxu0 0.0
    %4550 = vmatpush.msra.mxu0 0.0
    %4551 = vmatpush.msra.mxu0 0.0
    %4552 = vmatpush.msra.mxu0 0.0
    %4553 = vmatpush.msra.mxu0 0.0
    %4554 = vmatpush.msra.mxu0 0.0
    %4555 = vmatpush.msra.mxu0 0.0
    %4556 = vmatpush.msra.mxu0 %v4536
    %4557 = vmatpush.msra.mxu0 %v4534
    %4558 = vmatmul.f32.gmra.mxu0 %v4540
    %v4559 = vpop.f32.mrf.mxu0
    %v4560 = vadd.f32 0.0, %v4559
    %4561 = vdwg.mxu0
    %4562 = vrot.lane.b32.xlu0 %v4020, 120
    %v4563 = vpop.permute.xlu0 %4562
    %4564 = vrot.lane.b32.xlu0 %v4059, 120
    %v4565 = vpop.permute.xlu0 %4564
    %4566 = vrot.lane.b32.xlu0 %v4061, 120
    %v4567 = vpop.permute.xlu0 %4566
    %v4568 = vsel %vm439, %v4563, 0
    %v4570 = vsel %vm439, %v4565, 0
    %v4572 = vsel %vm439, %v4567, 0
    %4574 = vmatpush.xpose.msra.mxu0 0.0
    %4575 = vmatpush.xpose.msra.mxu0 0.0
    %4576 = vmatpush.xpose.msra.mxu0 0.0
    %4577 = vmatpush.xpose.msra.mxu0 0.0
    %4578 = vmatpush.xpose.msra.mxu0 0.0
    %4579 = vmatpush.xpose.msra.mxu0 0.0
    %4580 = vmatpush.xpose.msra.mxu0 0.0
    %4581 = vmatpush.xpose.msra.mxu0 0.0
    %4582 = vmatpush.xpose.msra.mxu0 0.0
    %4583 = vmatpush.xpose.msra.mxu0 0.0
    %4584 = vmatpush.xpose.msra.mxu0 0.0
    %4585 = vmatpush.xpose.msra.mxu0 0.0
    %4586 = vmatpush.xpose.msra.mxu0 0.0
    %4587 = vmatpush.xpose.msra.mxu0 0.0
    %4588 = vmatpush.xpose.msra.mxu0 %v4572
    %4589 = vmatpush.xpose.msra.mxu0 %v4570
    %4590 = vmatmul.f32.gmra.mxu0 %v4568
    %v4591 = vpop.f32.mrf.mxu0
    %v4592 = vadd.f32 0.0, %v4591
    %4593 = vdwg.mxu0
    %v4594 = vmul.f32 %v4592, 0.35355338
    %v4595 = vsel %vm1767, %v4594, -inf
    %4596 = vmax.xlane.f32.xlu0 %v4595
    %v4597 = vpop.xlane.xlu0 %4596
    %v4598 = vsub.f32 %v4594, %v4597
    %v4599 = vmul.f32 %v4598, 1.442695
    %v4600 = vpow.pop %v4599
    %v4601 = vsel %vm1767, %v4600, 0.0
    %4602 = vadd.xlane.f32.xlu0 %v4601
    %v4603 = vpop.xlane.xlu0 %4602
    %v4604 = vrcp.pop %v4603
    %v4605 = vmul.f32 %v4600, %v4604
    %4606 = vrot.lane.b32.xlu0 %v4059, 88
    %v4607 = vpop.permute.xlu0 %4606
    %4608 = vrot.lane.b32.xlu0 %v4061, 88
    %v4609 = vpop.permute.xlu0 %4608
    %v4613 = vsel %vm1767, %v4605, 0
    %4615 = vmatpush.msra.mxu0 0.0
    %4616 = vmatpush.msra.mxu0 0.0
    %4617 = vmatpush.msra.mxu0 0.0
    %4618 = vmatpush.msra.mxu0 0.0
    %4619 = vmatpush.msra.mxu0 0.0
    %4620 = vmatpush.msra.mxu0 0.0
    %4621 = vmatpush.msra.mxu0 0.0
    %4622 = vmatpush.msra.mxu0 0.0
    %4623 = vmatpush.msra.mxu0 0.0
    %4624 = vmatpush.msra.mxu0 0.0
    %4625 = vmatpush.msra.mxu0 0.0
    %4626 = vmatpush.msra.mxu0 0.0
    %4627 = vmatpush.msra.mxu0 0.0
    %4628 = vmatpush.msra.mxu0 0.0
    %4629 = vmatpush.msra.mxu0 %v4609
    %4630 = vmatpush.msra.mxu0 %v4607
    %4631 = vmatmul.f32.gmra.mxu0 %v4613
    %v4632 = vpop.f32.mrf.mxu0
    %v4633 = vadd.f32 0.0, %v4632
    %4634 = vdwg.mxu0
    %v4636 = vsel %vm439, %v4633, 0
    %4638 = vmatpush.msra.mxu0 0.0
    %4639 = vmatpush.msra.mxu0 0.0
    %4640 = vmatpush.msra.mxu0 0.0
    %4641 = vmatpush.msra.mxu0 0.0
    %4642 = vmatpush.msra.mxu0 0.0
    %4643 = vmatpush.msra.mxu0 0.0
    %4644 = vmatpush.msra.mxu0 0.0
    %4645 = vmatpush.msra.mxu0 0.0
    %4646 = vmatpush.msra.mxu0 0.0
    %4647 = vmatpush.msra.mxu0 0.0
    %4648 = vmatpush.msra.mxu0 0.0
    %4649 = vmatpush.msra.mxu0 0.0
    %4650 = vmatpush.msra.mxu0 0.0
    %4651 = vmatpush.msra.mxu0 0.0
    %4652 = vmatpush.msra.mxu0 0.0
    %4653 = vmatpush.msra.mxu0 %v4065
    %4654 = vmatmul.f32.gmra.mxu0 %v4636
    %v4655 = vpop.f32.mrf.mxu0
    %v4656 = vadd.f32 0.0, %v4655
    %4657 = vdwg.mxu0
    %v4659 = vsel %vm439, %v4560, 0
    %4661 = vmatpush.msra.mxu0 0.0
    %4662 = vmatpush.msra.mxu0 0.0
    %4663 = vmatpush.msra.mxu0 0.0
    %4664 = vmatpush.msra.mxu0 0.0
    %4665 = vmatpush.msra.mxu0 0.0
    %4666 = vmatpush.msra.mxu0 0.0
    %4667 = vmatpush.msra.mxu0 0.0
    %4668 = vmatpush.msra.mxu0 0.0
    %4669 = vmatpush.msra.mxu0 0.0
    %4670 = vmatpush.msra.mxu0 0.0
    %4671 = vmatpush.msra.mxu0 0.0
    %4672 = vmatpush.msra.mxu0 0.0
    %4673 = vmatpush.msra.mxu0 0.0
    %4674 = vmatpush.msra.mxu0 0.0
    %4675 = vmatpush.msra.mxu0 0.0
    %4676 = vmatpush.msra.mxu0 %v4064
    %4677 = vmatmul.f32.gmra.mxu0 %v4659
    %v4678 = vpop.f32.mrf.mxu0
    %v4679 = vadd.f32 %v4656, %v4678
    %4680 = vdwg.mxu0
    %4681 = vrot.lane.b32.xlu0 %v4020, 112
    %v4682 = vpop.permute.xlu0 %4681
    %4683 = vrot.lane.b32.xlu0 %v4059, 112
    %v4684 = vpop.permute.xlu0 %4683
    %4685 = vrot.lane.b32.xlu0 %v4061, 112
    %v4686 = vpop.permute.xlu0 %4685
    %v4687 = vsel %vm439, %v4682, 0
    %v4689 = vsel %vm439, %v4684, 0
    %v4691 = vsel %vm439, %v4686, 0
    %4693 = vmatpush.xpose.msra.mxu0 0.0
    %4694 = vmatpush.xpose.msra.mxu0 0.0
    %4695 = vmatpush.xpose.msra.mxu0 0.0
    %4696 = vmatpush.xpose.msra.mxu0 0.0
    %4697 = vmatpush.xpose.msra.mxu0 0.0
    %4698 = vmatpush.xpose.msra.mxu0 0.0
    %4699 = vmatpush.xpose.msra.mxu0 0.0
    %4700 = vmatpush.xpose.msra.mxu0 0.0
    %4701 = vmatpush.xpose.msra.mxu0 0.0
    %4702 = vmatpush.xpose.msra.mxu0 0.0
    %4703 = vmatpush.xpose.msra.mxu0 0.0
    %4704 = vmatpush.xpose.msra.mxu0 0.0
    %4705 = vmatpush.xpose.msra.mxu0 0.0
    %4706 = vmatpush.xpose.msra.mxu0 0.0
    %4707 = vmatpush.xpose.msra.mxu0 %v4691
    %4708 = vmatpush.xpose.msra.mxu0 %v4689
    %4709 = vmatmul.f32.gmra.mxu0 %v4687
    %v4710 = vpop.f32.mrf.mxu0
    %v4711 = vadd.f32 0.0, %v4710
    %4712 = vdwg.mxu0
    %v4713 = vmul.f32 %v4711, 0.35355338
    %v4714 = vsel %vm1767, %v4713, -inf
    %4715 = vmax.xlane.f32.xlu0 %v4714
    %v4716 = vpop.xlane.xlu0 %4715
    %v4717 = vsub.f32 %v4713, %v4716
    %v4718 = vmul.f32 %v4717, 1.442695
    %v4719 = vpow.pop %v4718
    %v4720 = vsel %vm1767, %v4719, 0.0
    %4721 = vadd.xlane.f32.xlu0 %v4720
    %v4722 = vpop.xlane.xlu0 %4721
    %v4723 = vrcp.pop %v4722
    %v4724 = vmul.f32 %v4719, %v4723
    %4725 = vrot.lane.b32.xlu0 %v4059, 80
    %v4726 = vpop.permute.xlu0 %4725
    %4727 = vrot.lane.b32.xlu0 %v4061, 80
    %v4728 = vpop.permute.xlu0 %4727
    %v4732 = vsel %vm1767, %v4724, 0
    %4734 = vmatpush.msra.mxu0 0.0
    %4735 = vmatpush.msra.mxu0 0.0
    %4736 = vmatpush.msra.mxu0 0.0
    %4737 = vmatpush.msra.mxu0 0.0
    %4738 = vmatpush.msra.mxu0 0.0
    %4739 = vmatpush.msra.mxu0 0.0
    %4740 = vmatpush.msra.mxu0 0.0
    %4741 = vmatpush.msra.mxu0 0.0
    %4742 = vmatpush.msra.mxu0 0.0
    %4743 = vmatpush.msra.mxu0 0.0
    %4744 = vmatpush.msra.mxu0 0.0
    %4745 = vmatpush.msra.mxu0 0.0
    %4746 = vmatpush.msra.mxu0 0.0
    %4747 = vmatpush.msra.mxu0 0.0
    %4748 = vmatpush.msra.mxu0 %v4728
    %4749 = vmatpush.msra.mxu0 %v4726
    %4750 = vmatmul.f32.gmra.mxu0 %v4732
    %v4751 = vpop.f32.mrf.mxu0
    %v4752 = vadd.f32 0.0, %v4751
    %4753 = vdwg.mxu0
    %v4755 = vsel %vm439, %v4752, 0
    %4757 = vmatpush.msra.mxu0 0.0
    %4758 = vmatpush.msra.mxu0 0.0
    %4759 = vmatpush.msra.mxu0 0.0
    %4760 = vmatpush.msra.mxu0 0.0
    %4761 = vmatpush.msra.mxu0 0.0
    %4762 = vmatpush.msra.mxu0 0.0
    %4763 = vmatpush.msra.mxu0 0.0
    %4764 = vmatpush.msra.mxu0 0.0
    %4765 = vmatpush.msra.mxu0 0.0
    %4766 = vmatpush.msra.mxu0 0.0
    %4767 = vmatpush.msra.mxu0 0.0
    %4768 = vmatpush.msra.mxu0 0.0
    %4769 = vmatpush.msra.mxu0 0.0
    %4770 = vmatpush.msra.mxu0 0.0
    %4771 = vmatpush.msra.mxu0 0.0
    %4772 = vmatpush.msra.mxu0 %v4066
    %4773 = vmatmul.f32.gmra.mxu0 %v4755
    %v4774 = vpop.f32.mrf.mxu0
    %v4775 = vadd.f32 0.0, %v4774
    %4776 = vdwg.mxu0
    %v4777 = vadd.f32 %v4679, %v4775
    %4778 = vrot.lane.b32.xlu0 %v4020, 104
    %v4779 = vpop.permute.xlu0 %4778
    %4780 = vrot.lane.b32.xlu0 %v4059, 104
    %v4781 = vpop.permute.xlu0 %4780
    %4782 = vrot.lane.b32.xlu0 %v4061, 104
    %v4783 = vpop.permute.xlu0 %4782
    %v4784 = vsel %vm439, %v4779, 0
    %v4786 = vsel %vm439, %v4781, 0
    %v4788 = vsel %vm439, %v4783, 0
    %4790 = vmatpush.xpose.msra.mxu0 0.0
    %4791 = vmatpush.xpose.msra.mxu0 0.0
    %4792 = vmatpush.xpose.msra.mxu0 0.0
    %4793 = vmatpush.xpose.msra.mxu0 0.0
    %4794 = vmatpush.xpose.msra.mxu0 0.0
    %4795 = vmatpush.xpose.msra.mxu0 0.0
    %4796 = vmatpush.xpose.msra.mxu0 0.0
    %4797 = vmatpush.xpose.msra.mxu0 0.0
    %4798 = vmatpush.xpose.msra.mxu0 0.0
    %4799 = vmatpush.xpose.msra.mxu0 0.0
    %4800 = vmatpush.xpose.msra.mxu0 0.0
    %4801 = vmatpush.xpose.msra.mxu0 0.0
    %4802 = vmatpush.xpose.msra.mxu0 0.0
    %4803 = vmatpush.xpose.msra.mxu0 0.0
    %4804 = vmatpush.xpose.msra.mxu0 %v4788
    %4805 = vmatpush.xpose.msra.mxu0 %v4786
    %4806 = vmatmul.f32.gmra.mxu0 %v4784
    %v4807 = vpop.f32.mrf.mxu0
    %v4808 = vadd.f32 0.0, %v4807
    %4809 = vdwg.mxu0
    %v4810 = vmul.f32 %v4808, 0.35355338
    %v4811 = vsel %vm1767, %v4810, -inf
    %4812 = vmax.xlane.f32.xlu0 %v4811
    %v4813 = vpop.xlane.xlu0 %4812
    %v4814 = vsub.f32 %v4810, %v4813
    %v4815 = vmul.f32 %v4814, 1.442695
    %v4816 = vpow.pop %v4815
    %v4817 = vsel %vm1767, %v4816, 0.0
    %4818 = vadd.xlane.f32.xlu0 %v4817
    %v4819 = vpop.xlane.xlu0 %4818
    %v4820 = vrcp.pop %v4819
    %v4821 = vmul.f32 %v4816, %v4820
    %4822 = vrot.lane.b32.xlu0 %v4059, 72
    %v4823 = vpop.permute.xlu0 %4822
    %4824 = vrot.lane.b32.xlu0 %v4061, 72
    %v4825 = vpop.permute.xlu0 %4824
    %v4829 = vsel %vm1767, %v4821, 0
    %4831 = vmatpush.msra.mxu0 0.0
    %4832 = vmatpush.msra.mxu0 0.0
    %4833 = vmatpush.msra.mxu0 0.0
    %4834 = vmatpush.msra.mxu0 0.0
    %4835 = vmatpush.msra.mxu0 0.0
    %4836 = vmatpush.msra.mxu0 0.0
    %4837 = vmatpush.msra.mxu0 0.0
    %4838 = vmatpush.msra.mxu0 0.0
    %4839 = vmatpush.msra.mxu0 0.0
    %4840 = vmatpush.msra.mxu0 0.0
    %4841 = vmatpush.msra.mxu0 0.0
    %4842 = vmatpush.msra.mxu0 0.0
    %4843 = vmatpush.msra.mxu0 0.0
    %4844 = vmatpush.msra.mxu0 0.0
    %4845 = vmatpush.msra.mxu0 %v4825
    %4846 = vmatpush.msra.mxu0 %v4823
    %4847 = vmatmul.f32.gmra.mxu0 %v4829
    %v4848 = vpop.f32.mrf.mxu0
    %v4849 = vadd.f32 0.0, %v4848
    %4850 = vdwg.mxu0
    %v4852 = vsel %vm439, %v4849, 0
    %4854 = vmatpush.msra.mxu0 0.0
    %4855 = vmatpush.msra.mxu0 0.0
    %4856 = vmatpush.msra.mxu0 0.0
    %4857 = vmatpush.msra.mxu0 0.0
    %4858 = vmatpush.msra.mxu0 0.0
    %4859 = vmatpush.msra.mxu0 0.0
    %4860 = vmatpush.msra.mxu0 0.0
    %4861 = vmatpush.msra.mxu0 0.0
    %4862 = vmatpush.msra.mxu0 0.0
    %4863 = vmatpush.msra.mxu0 0.0
    %4864 = vmatpush.msra.mxu0 0.0
    %4865 = vmatpush.msra.mxu0 0.0
    %4866 = vmatpush.msra.mxu0 0.0
    %4867 = vmatpush.msra.mxu0 0.0
    %4868 = vmatpush.msra.mxu0 0.0
    %4869 = vmatpush.msra.mxu0 %v4067
    %4870 = vmatmul.f32.gmra.mxu0 %v4852
    %v4871 = vpop.f32.mrf.mxu0
    %v4872 = vadd.f32 0.0, %v4871
    %4873 = vdwg.mxu0
    %v4874 = vadd.f32 %v4777, %v4872
    %v4875 = vadd.f32 %v3980, %v4874
    %v4876 = vadd.f32 %v4875, %v4455
    %v4877 = vsel %vm408, %v4876, 0.0
    %4878 = vadd.xlane.f32.xlu0 %v4877
    %v4879 = vpop.xlane.xlu0 %4878
    %v4880 = vmul.f32 %v4879, %v815
    %v4881 = vsub.f32 %v4876, %v4880
    %v4882 = vmul.f32 %v4881, %v4881
    %v4883 = vsel %vm408, %v4882, 0.0
    %4884 = vadd.xlane.f32.xlu0 %v4883
    %v4885 = vpop.xlane.xlu0 %4884
    %v4886 = vmul.f32 %v4885, %v815
    %v4887 = vadd.f32 %v4886, 1e-05
    %v4888 = vrsqrt.pop %v4887
    %v4889 = vmul.f32 %v4888, %v4887
    %v4890 = vmul.f32 %v4889, %v4888
    %v4891 = vmul.f32 0.5, %v4890
    %v4892 = vsub.f32 1.5, %v4891
    %v4893 = vmul.f32 %v4888, %v4892
    %vm4894 = vweird.f32 %v4887
    %vm4895 = vweird.f32 %v4888
    %vm4896 = vmor %vm4894, %vm4895
    %v4897 = vsel %vm4896, %v4888, %v4893
    %v4898 = vmul.f32 %v4881, %v4897
    %v4899 = vmul.f32 %v4898, %v4485
    %v4900 = vadd.f32 %v4899, %v4489
    %s4901 = scalar_lea.vmem [#allocation24], 16
    %v4902 = vld [vmem:[%s4901] sm:$0xf]
    %v4903 = vld [vmem:[%s4901 + $0x4] sm:$0xf]
    %v4904 = vld [vmem:[%s4901 + $0x8] sm:$0xf]
    %v4905 = vld [vmem:[%s4901 + $0xc] sm:$0xf]
    %s4906 = scalar_lea.vmem [#allocation25], 1
    %v4907 = vld [vmem:[%s4906] sm:$0x1]
    %s4908 = scalar_lea.vmem %s20, 32
    %v4909 = vld [vmem:[%s4908] sm:$0xf]
    %v4910 = vld [vmem:[%s4908 + $0x4] sm:$0xf]
    %v4911 = vld [vmem:[%s4908 + $0x8] sm:$0xf]
    %v4912 = vld [vmem:[%s4908 + $0xc] sm:$0xf]
    %v4913 = vld [vmem:[%s4908 + $0x10] sm:$0xf]
    %v4914 = vld [vmem:[%s4908 + $0x14] sm:$0xf]
    %v4915 = vld [vmem:[%s4908 + $0x18] sm:$0xf]
    %v4916 = vld [vmem:[%s4908 + $0x1c] sm:$0xf]
    %s4917 = scalar_lea.vmem [#allocation27], 1
    %v4918 = vld [vmem:[%s4917] sm:$0x1]
    %s4919 = scalar_lea.vmem [#allocation28], 1
    %v4920 = vld [vmem:[%s4919] sm:$0x1]
    %s4921 = scalar_lea.vmem [#allocation30], 1
    %v4922 = vld [vmem:[%s4921] sm:$0x1]
    %v4923 = vpack.c.bf16 %v4900, %v4491
    %v4925 = vperm.slane %v4907, 0
    %v4931 = vunpack.c.l.b16 %v4902
    %v4932 = vunpack.c.l.b16 %v4903
    %v4933 = vunpack.c.l.b16 %v4904
    %v4934 = vunpack.c.l.b16 %v4905
    %v4935 = vpack.c.b16 %v4932, %v4931
    %v4936 = vpack.c.b16 %v4934, %v4933
    %v4940 = vsel %vm408, %v4923, 0
    %4942 = vmatpush.bf16.msra.mxu0 0
    %4943 = vmatpush.bf16.msra.mxu0 0
    %4944 = vmatpush.bf16.msra.mxu0 0
    %4945 = vmatpush.bf16.msra.mxu0 0
    %4946 = vmatpush.bf16.msra.mxu0 0
    %4947 = vmatpush.bf16.msra.mxu0 0
    %4948 = vmatpush.bf16.msra.mxu0 %v4936
    %4949 = vmatpush.bf16.msra.mxu0 %v4935
    %4950 = vmatmul.bf16.gmra.mxu0 %v4940
    %v4951 = vpop.f32.mrf.mxu0
    %v4952 = vadd.f32 %v4925, %v4951
    %v4953 = vpop.f32.mrf.mxu0
    %v4954 = vadd.f32 %v4925, %v4953
    %4955 = vdwg.mxu0
    %v4956 = vmax.f32 %v4952, 0.0
    %v4957 = vmax.f32 %v4954, 0.0
    %v4958 = vpack.c.bf16 %v4957, %v4956
    %v4967 = vunpack.c.l.b16 %v4909
    %v4968 = vunpack.c.l.b16 %v4910
    %v4969 = vunpack.c.l.b16 %v4911
    %v4970 = vunpack.c.l.b16 %v4912
    %v4971 = vunpack.c.l.b16 %v4913
    %v4972 = vunpack.c.l.b16 %v4914
    %v4973 = vunpack.c.l.b16 %v4915
    %v4974 = vunpack.c.l.b16 %v4916
    %v4975 = vpack.c.b16 %v4968, %v4967
    %v4976 = vpack.c.b16 %v4970, %v4969
    %v4977 = vpack.c.b16 %v4972, %v4971
    %v4978 = vpack.c.b16 %v4974, %v4973
    %v4984 = vsel %vm2644, %v4958, 0
    %4986 = vmatpush.bf16.msra.mxu0 0
    %4987 = vmatpush.bf16.msra.mxu0 0
    %4988 = vmatpush.bf16.msra.mxu0 0
    %4989 = vmatpush.bf16.msra.mxu0 0
    %4990 = vmatpush.bf16.msra.mxu0 %v4978
    %4991 = vmatpush.bf16.msra.mxu0 %v4977
    %4992 = vmatpush.bf16.msra.mxu0 %v4976
    %4993 = vmatpush.bf16.msra.mxu0 %v4975
    %4994 = vmatmul.bf16.gmra.mxu0 %v4984
    %v4995 = vpop.f32.mrf.mxu0
    %v4996 = vadd.f32 0.0, %v4995
    %v4997 = vpop.f32.mrf.mxu0
    %v4998 = vadd.f32 0.0, %v4997
    %4999 = vdwg.mxu0
    %v5000 = vadd.f32 %v4491, %v4996
    %v5001 = vadd.f32 %v4900, %v4998
    %v5003 = vperm.slane %v4918, 0
    %v5005 = vadd.f32 %v5000, %v5003
    %v5006 = vadd.f32 %v5001, %v5003
    %v5007 = vsel %vm408, %v5005, 0.0
    %5008 = vadd.xlane.f32.xlu0 %v5007
    %v5009 = vpop.xlane.xlu0 %5008
    %v5010 = vsel %vm408, %v5006, 0.0
    %5011 = vadd.xlane.f32.xlu0 %v5010
    %v5012 = vpop.xlane.xlu0 %5011
    %v5013 = vmul.f32 %v5009, %v815
    %v5014 = vmul.f32 %v5012, %v815
    %v5015 = vsub.f32 %v5005, %v5013
    %v5016 = vsub.f32 %v5006, %v5014
    %v5017 = vmul.f32 %v5015, %v5015
    %v5018 = vmul.f32 %v5016, %v5016
    %v5019 = vsel %vm408, %v5017, 0.0
    %5020 = vadd.xlane.f32.xlu0 %v5019
    %v5021 = vpop.xlane.xlu0 %5020
    %v5022 = vsel %vm408, %v5018, 0.0
    %5023 = vadd.xlane.f32.xlu0 %v5022
    %v5024 = vpop.xlane.xlu0 %5023
    %v5025 = vmul.f32 %v5021, %v815
    %v5026 = vmul.f32 %v5024, %v815
    %v5027 = vadd.f32 %v5025, 1e-05
    %v5028 = vadd.f32 %v5026, 1e-05
    %v5029 = vrsqrt.pop %v5027
    %v5030 = vmul.f32 %v5029, %v5027
    %v5031 = vmul.f32 %v5030, %v5029
    %v5032 = vmul.f32 0.5, %v5031
    %v5033 = vsub.f32 1.5, %v5032
    %v5034 = vmul.f32 %v5029, %v5033
    %vm5035 = vweird.f32 %v5027
    %vm5036 = vweird.f32 %v5029
    %vm5037 = vmor %vm5035, %vm5036
    %v5038 = vsel %vm5037, %v5029, %v5034
    %v5039 = vrsqrt.pop %v5028
    %v5040 = vmul.f32 %v5039, %v5028
    %v5041 = vmul.f32 %v5040, %v5039
    %v5042 = vmul.f32 0.5, %v5041
    %v5043 = vsub.f32 1.5, %v5042
    %v5044 = vmul.f32 %v5039, %v5043
    %vm5045 = vweird.f32 %v5028
    %vm5046 = vweird.f32 %v5039
    %vm5047 = vmor %vm5045, %vm5046
    %v5048 = vsel %vm5047, %v5039, %v5044
    %v5049 = vmul.f32 %v5015, %v5038
    %v5050 = vmul.f32 %v5016, %v5048
    %v5052 = vperm.slane %v4920, 0
    %v5054 = vmul.f32 %v5049, %v5052
    %v5055 = vmul.f32 %v5050, %v5052
    %v5057 = vperm.slane %v4922, 0
    %v5059 = vadd.f32 %v5054, %v5057
    %v5060 = vadd.f32 %v5055, %v5057
    %v5061 = vld [vmem:[%s24] sm:$0xf]
    %v5062 = vld [vmem:[%s24 + $0x4] sm:$0xf]
    %v5063 = vld [vmem:[%s24 + $0x8] sm:$0xf]
    %v5064 = vld [vmem:[%s24 + $0xc] sm:$0xf]
    %v5065 = vpack.c.bf16 %v5060, %v5059
    %v5066 = vld [vmem:[%s25] sm:$0x1]
    %v5068 = vperm.slane %v5066, 0
    %v5074 = vunpack.c.l.b16 %v5061
    %v5075 = vunpack.c.l.b16 %v5062
    %v5076 = vunpack.c.l.b16 %v5063
    %v5077 = vunpack.c.l.b16 %v5064
    %v5078 = vpack.c.b16 %v5075, %v5074
    %v5079 = vpack.c.b16 %v5077, %v5076
    %v5083 = vsel %vm408, %v5065, 0
    %5085 = vmatpush.bf16.msra.mxu0 0
    %5086 = vmatpush.bf16.msra.mxu0 0
    %5087 = vmatpush.bf16.msra.mxu0 0
    %5088 = vmatpush.bf16.msra.mxu0 0
    %5089 = vmatpush.bf16.msra.mxu0 0
    %5090 = vmatpush.bf16.msra.mxu0 0
    %5091 = vmatpush.bf16.msra.mxu0 %v5079
    %5092 = vmatpush.bf16.msra.mxu0 %v5078
    %5093 = vmatmul.bf16.gmra.mxu0 %v5083
    %v5094 = vpop.f32.mrf.mxu0
    %v5095 = vadd.f32 %v5068, %v5094
    %v5096 = vpop.f32.mrf.mxu0
    %v5097 = vadd.f32 %v5068, %v5096
    %5098 = vdwg.mxu0
    %vm5099 = vcmask 31744
    %5100 = vst.msk [vmem:[%s26] sm:$0xff] %vm5099, %v5095
    %5101 = vst.msk [vmem:[%s26 + $0x8] sm:$0xff] %vm5099, %v5097
    // Predicated region
    $region182: #{tpu_custom_call.1} parent=1 // pred_check
      _
    $region183: #{tpu_custom_call.1} parent=1 // pred_check_branch
      %5103 = sbr.rel (0) target = $region185
    $region184: #{tpu_custom_call.1} parent=1 // pred_region
      _
    $region185: #{tpu_custom_call.1} parent=1 // pred_fallthru
      _
    // Predicated region
    $region186: #{tpu_custom_call.1} parent=1 // pred_check
      _
    $region187: #{tpu_custom_call.1} parent=1 // pred_check_branch
      %5105 = sbr.rel (0) target = $region189
    $region188: #{tpu_custom_call.1} parent=1 // pred_region
      _
    $region189: #{tpu_custom_call.1} parent=1 // pred_fallthru
      _
    %5106 = vsyncpa [#allocation3], 1
    %5107 = vsyncpa [#allocation5], 1
    %5108 = vsyncpa [#allocation8], 1
    %5109 = vsyncpa [#allocation11], 1
    %5110 = vsyncpa [#allocation14], 1
    %5111 = vsyncpa [#allocation17], 1
    %5112 = vsyncpa [#allocation20], 1
    %5113 = vsyncpa [#allocation23], 1
    %5114 = vsyncpa [#allocation26], 1
    %5115 = vsyncpa [#allocation29], 1

</llo_original>
